<compile_context>
chip_gen: v7x
topology: tpu7x:2x2x1
jax: 0.10.0
libtpu: 0.0.40
codegen_flags: <defaults>
</compile_context>

<pallas_src>
import numpy as np
import jax
import jax.numpy as jnp
from jax.experimental import pallas as pl
from jax.experimental.pallas import tpu as pltpu

BN_EPS = 1e-5
C_TRUNK = 64  # channel width of the residual trunk


# --------------------------------------------------------------------------- #
# Trunk kernel: first conv + all residual blocks, one pallas_call, grid=(L,)   #
# --------------------------------------------------------------------------- #
def make_trunk_kernel(M, n_blocks):
    C = C_TRUNK

    def bn_cols(acc, gamma, beta):
        # Training-mode BatchNorm: batch statistics over the N*H*W row axis,
        # per output channel (column), biased variance (PyTorch forward).
        # NOTE: stats are over the FULL (N*H*W) row block -- this relies on the
        # row dimension never being tiled across grid steps / cores.
        mean = jnp.mean(acc, axis=0, keepdims=True)
        var = jnp.mean((acc - mean) ** 2, axis=0, keepdims=True)
        return (acc - mean) * jax.lax.rsqrt(var + BN_EPS) * gamma + beta

    def kernel(flags_ref,                          # SMEM (L,) int32: 1 iff block has conv shortcut
               w1_ref, w2_ref, wsc_ref, bnp_ref,   # streamed per residual block
               s_ref, x0_ref, w0_ref, bn0_ref,     # resident (constant index maps)
               out_ref, xcur_ref):
        b = pl.program_id(0)

        # -- prologue at block 0: fused first 5x5 conv (pre-im2col'd input) + BN + ReLU
        @pl.when(b == 0)
        def _():
            bn0 = bn0_ref[...]                                    # (2, C) f32
            acc0 = jnp.dot(x0_ref[...], w0_ref[...],
                           preferred_element_type=jnp.float32)
            h0 = bn_cols(acc0, bn0[0:1, :], bn0[1:2, :])
            xcur_ref[...] = jnp.maximum(h0, 0.0)

        x_in = xcur_ref[...]                                      # (M, C) f32, VMEM-resident
        x_b16 = x_in.astype(jnp.bfloat16)                         # MXU operand

        def conv3x3(x_b, w_ref):
            # In-VMEM im2col: tap t of the 3x3 conv is (S_t @ x), where S_t is a
            # 0/1 shift-and-mask matrix ('same' zero padding built in).
            acc = jnp.zeros((M, C), jnp.float32)
            for t in range(9):
                if t == 4:
                    xt = x_b                                      # centre tap == identity shift
                else:
                    xt = jnp.dot(s_ref[t], x_b,
                                 preferred_element_type=jnp.float32
                                 ).astype(jnp.bfloat16)           # exact (pure 0/1 gather)
                acc = acc + jnp.dot(xt, w_ref[0, t],
                                    preferred_element_type=jnp.float32)
            return acc

        bnp = bnp_ref[0]                                          # (6, C) f32
        g1, b1 = bnp[0:1, :], bnp[1:2, :]
        g2, b2 = bnp[2:3, :], bnp[3:4, :]
        gs, bs = bnp[4:5, :], bnp[5:6, :]

        # left branch: conv3x3 + BN + ReLU  ->  conv3x3 + BN
        h1 = jnp.maximum(bn_cols(conv3x3(x_b16, w1_ref), g1, b1), 0.0)
        h2 = bn_cols(conv3x3(h1.astype(jnp.bfloat16), w2_ref), g2, b2)

        # shortcut branch: 1x1 conv + BN (first block of each layer) or identity.
        # Computed unconditionally (tiny) and blended with a per-block flag.
        sc = bn_cols(jnp.dot(x_b16, wsc_ref[0], preferred_element_type=jnp.float32),
                     gs, bs)
        fm = (flags_ref[b] == 1).astype(jnp.float32)
        res = fm * sc + (1.0 - fm) * x_in

        out = jnp.maximum(h2 + res, 0.0)
        xcur_ref[...] = out                                       # stays in VMEM for next block

        @pl.when(b == n_blocks - 1)
        def _():
            out_ref[...] = out                                    # single HBM writeback

    return kernel


# --------------------------------------------------------------------------- #
# Heads kernel: policy + value heads fused into one pallas_call                #
# --------------------------------------------------------------------------- #
def make_heads_kernel(N, HW, out_size):
    C = C_TRUNK

    def mean_all(x):  # mean over all elements of (N, HW), keepdims -> (1, 1)
        return jnp.mean(jnp.mean(x, axis=1, keepdims=True), axis=0, keepdims=True)

    def bn_all(p, gamma, beta):  # BatchNorm2d with a single channel map (N, HW)
        m = mean_all(p)
        v = mean_all((p - m) ** 2)
        return (p - m) * jax.lax.rsqrt(v + BN_EPS) * gamma + beta

    def kernel(x_ref, wa_ref, abn_ref, wfa_ref, bfa_ref,
               wv_ref, vbn_ref, wv1_ref, bv1_ref, wv2_ref, bv2_ref,
               act_ref, val_ref):
        x3 = x_ref[...]                                           # (N, HW, C) f32

        # ---- policy head ----
        # NOTE: the nn.Conv2d biases of act_conv1 / val_conv1 are cancelled
        # exactly by the training-mode BatchNorm mean subtraction, so omitted.
        wa = wa_ref[...]                                          # (2, C)
        pa0 = jnp.sum(x3 * wa[0:1, :].reshape(1, 1, C), axis=-1)  # (N, HW)
        pa1 = jnp.sum(x3 * wa[1:2, :].reshape(1, 1, C), axis=-1)
        abn = abn_ref[...]                                        # (2, 2): [gamma; beta]
        pa0 = jnp.maximum(bn_all(pa0, abn[0:1, 0:1], abn[1:2, 0:1]), 0.0)
        pa1 = jnp.maximum(bn_all(pa1, abn[0:1, 1:2], abn[1:2, 1:2]), 0.0)

        # act_fc1 over torch's NCHW flatten order (index = c*HW + hw)
        wfa = wfa_ref[...]                                        # (2*HW, out)
        logits = (jnp.dot(pa0, wfa[0:HW, :], preferred_element_type=jnp.float32)
                  + jnp.dot(pa1, wfa[HW:2 * HW, :], preferred_element_type=jnp.float32)
                  + bfa_ref[...])
        mx = jnp.max(logits, axis=-1, keepdims=True)
        sh = logits - mx
        lse = jnp.log(jnp.sum(jnp.exp(sh), axis=-1, keepdims=True))
        act_ref[...] = sh - lse                                   # log_softmax

        # ---- value head ----
        wv = wv_ref[...]                                          # (1, C)
        pv = jnp.sum(x3 * wv.reshape(1, 1, C), axis=-1)           # (N, HW)
        vbn = vbn_ref[...]                                        # (2, 1)
        pv = jnp.maximum(bn_all(pv, vbn[0:1, 0:1], vbn[1:2, 0:1]), 0.0)
        h = jnp.maximum(jnp.dot(pv, wv1_ref[...], preferred_element_type=jnp.float32)
                        + bv1_ref[...], 0.0)
        v = jnp.tanh(jnp.dot(h, wv2_ref[...], preferred_element_type=jnp.float32)
                     + bv2_ref[...])
        val_ref[...] = v

    return kernel


# --------------------------------------------------------------------------- #
# One-time host-side prep (shift matrices, first-conv im2col, weight packing)  #
# --------------------------------------------------------------------------- #
def build_shift_matrices(N, H, W):
    """S[t] (t = 3*(dy+1)+(dx+1)) maps row (n,h,w) -> row (n,h+dy,w+dx); rows whose
    source falls off the board are zero ('same' zero padding)."""
    M = N * H * W
    idx = np.arange(M)
    n, h, w = idx // (H * W), (idx // W) % H, idx % W
    mats = np.zeros((9, M, M), np.float32)
    taps = [(dy, dx) for dy in (-1, 0, 1) for dx in (-1, 0, 1)]
    for t, (dy, dx) in enumerate(taps):
        hs, ws = h + dy, w + dx
        valid = (hs >= 0) & (hs < H) & (ws >= 0) & (ws < W)
        src = n * H * W + hs * W + ws
        mats[t, idx[valid], src[valid]] = 1.0
    return jnp.asarray(mats, dtype=jnp.bfloat16)


def first_conv_im2col(x_nhwc, kh=5, kw=5):
    """'same' padding patch extraction for the one-time 5x5 first conv, K padded to 128."""
    N, H, W, C = x_nhwc.shape
    ph, pw = (kh - 1) // 2, (kw - 1) // 2
    xp = jnp.pad(x_nhwc, ((0, 0), (ph, ph), (pw, pw), (0, 0)))
    cols = [xp[:, dy:dy + H, dx:dx + W, :] for dy in range(kh) for dx in range(kw)]
    pat = jnp.concatenate(cols, axis=-1).reshape(N * H * W, kh * kw * C)
    pat = jnp.pad(pat, ((0, 0), (0, -pat.shape[1] % 128)))
    return pat.astype(jnp.bfloat16)


# ----------------------------- parameters ---------------------------------- #
def _conv_w(key, kh, kw, cin, cout):
    return 0.1 * jax.random.normal(key, (kh, kw, cin, cout), jnp.float32)


def init_params(key, input_size, output_size):
    keys = iter(jax.random.split(key, 128))
    C = C_TRUNK
    p = {}
    p["first_conv_w"] = _conv_w(next(keys), 5, 5, 4, C)
    p["first_bn"] = (jnp.ones(C, jnp.float32), jnp.zeros(C, jnp.float32))

    layers = []
    for n_blocks in (3, 4, 4, 3):           # conv1..conv4
        blocks = []
        for bidx in range(n_blocks):
            blk = {
                "w1": _conv_w(next(keys), 3, 3, C, C),
                "bn1": (jnp.ones(C, jnp.float32), jnp.zeros(C, jnp.float32)),
                "w2": _conv_w(next(keys), 3, 3, C, C),
                "bn2": (jnp.ones(C, jnp.float32), jnp.zeros(C, jnp.float32)),
            }
            if bidx == 0:                   # first block of each layer: 1x1 conv + BN shortcut
                blk["sc_w"] = _conv_w(next(keys), 1, 1, C, C)
                blk["sc_bn"] = (jnp.ones(C, jnp.float32), jnp.zeros(C, jnp.float32))
            blocks.append(blk)
        layers.append(blocks)
    p["layers"] = layers

    p["act_conv_w"] = _conv_w(next(keys), 1, 1, C, 2)
    p["act_bn"] = (jnp.ones(2, jnp.float32), jnp.zeros(2, jnp.float32))
    p["act_fc_w"] = 0.1 * jax.random.normal(next(keys), (2 * input_size, output_size), jnp.float32)
    p["act_fc_b"] = jnp.zeros(output_size, jnp.float32)

    p["val_conv_w"] = _conv_w(next(keys), 1, 1, C, 1)
    p["val_bn"] = (jnp.ones(1, jnp.float32), jnp.zeros(1, jnp.float32))
    p["val_fc1_w"] = 0.1 * jax.random.normal(next(keys), (input_size, C), jnp.float32)
    p["val_fc1_b"] = jnp.zeros(C, jnp.float32)
    p["val_fc2_w"] = 0.1 * jax.random.normal(next(keys), (C, 1), jnp.float32)
    p["val_fc2_b"] = jnp.zeros(1, jnp.float32)
    return p


def pack_params(p, N, H, W):
    """Pre-reshape / pre-cast everything ONCE into the kernel-friendly layout."""
    C = C_TRUNK
    blocks = [blk for layer in p["layers"] for blk in layer]
    ones_c = jnp.ones(C, jnp.float32)
    zeros_c = jnp.zeros(C, jnp.float32)

    W1 = jnp.stack([blk["w1"].reshape(9, C, C) for blk in blocks]).astype(jnp.bfloat16)
    W2 = jnp.stack([blk["w2"].reshape(9, C, C) for blk in blocks]).astype(jnp.bfloat16)
    WSC = jnp.stack([
        (blk["sc_w"][0, 0] if "sc_w" in blk else jnp.zeros((C, C), jnp.float32))
        for blk in blocks]).astype(jnp.bfloat16)
    BNP = jnp.stack([
        jnp.stack([blk["bn1"][0], blk["bn1"][1], blk["bn2"][0], blk["bn2"][1],
                   *(blk["sc_bn"] if "sc_bn" in blk else (ones_c, zeros_c))])
        for blk in blocks]).astype(jnp.float32)                   # (L, 6, C)
    flags = jnp.array([1 if "sc_w" in blk else 0 for blk in blocks], jnp.int32)

    kh, kw, cin, _ = p["first_conv_w"].shape
    w0 = p["first_conv_w"].reshape(kh * kw * cin, C)
    w0 = jnp.pad(w0, ((0, -w0.shape[0] % 128), (0, 0))).astype(jnp.bfloat16)
    bn0 = jnp.stack(p["first_bn"]).astype(jnp.float32)            # (2, C)

    return {
        "flags": flags, "W1": W1, "W2": W2, "WSC": WSC, "BNP": BNP,
        "S": build_shift_matrices(N, H, W), "W0": w0, "BN0": bn0,
        # heads (tiny, kept f32: they feed VPU reductions / small GEMMs)
        "WA": p["act_conv_w"].reshape(C, 2).T,                    # (2, C)
        "ABN": jnp.stack(p["act_bn"]),                            # (2, 2)
        "WFA": p["act_fc_w"],                                     # (2*HW, out)
        "BFA": p["act_fc_b"].reshape(1, -1),
        "WV": p["val_conv_w"].reshape(C, 1).T,                    # (1, C)
        "VBN": jnp.stack(p["val_bn"]),                            # (2, 1)
        "WV1": p["val_fc1_w"], "BV1": p["val_fc1_b"].reshape(1, -1),
        "WV2": p["val_fc2_w"], "BV2": p["val_fc2_b"].reshape(1, 1),
    }


# ----------------------------- forward pass -------------------------------- #
def net_forward(packed, x_nchw):
    N, _, H, W = x_nchw.shape
    M = N * H * W
    L = packed["W1"].shape[0]
    C = C_TRUNK

    x = jnp.transpose(x_nchw, (0, 2, 3, 1))           # NCHW -> NHWC
    x0col = first_conv_im2col(x)                      # (M, K0p) bf16, done ONCE
    k0p = packed["W0"].shape[0]

    trunk_out = pl.pallas_call(
        make_trunk_kernel(M, L),
        out_shape=jax.ShapeDtypeStruct((M, C), jnp.float32),
        grid_spec=pltpu.PrefetchScalarGridSpec(
            num_scalar_prefetch=1,
            grid=(L,),
            in_specs=[
                pl.BlockSpec((1, 9, C, C), lambda b, f: (b, 0, 0, 0)),   # W1  (streamed)
                pl.BlockSpec((1, 9, C, C), lambda b, f: (b, 0, 0, 0)),   # W2  (streamed)
                pl.BlockSpec((1, C, C), lambda b, f: (b, 0, 0)),         # WSC (streamed)
                pl.BlockSpec((1, 6, C), lambda b, f: (b, 0, 0)),         # BNP (streamed)
                pl.BlockSpec((9, M, M), lambda b, f: (0, 0, 0)),         # S   (resident)
                pl.BlockSpec((M, k0p), lambda b, f: (0, 0)),             # x0  (resident)
                pl.BlockSpec((k0p, C), lambda b, f: (0, 0)),             # W0  (resident)
                pl.BlockSpec((2, C), lambda b, f: (0, 0)),               # BN0 (resident)
            ],
            out_specs=pl.BlockSpec((M, C), lambda b, f: (0, 0)),
            scratch_shapes=[pltpu.VMEM((M, C), jnp.float32)],            # resident activation
        ),
        compiler_params=pltpu.CompilerParams(dimension_semantics=("arbitrary",)),
    )(packed["flags"], packed["W1"], packed["W2"], packed["WSC"], packed["BNP"],
      packed["S"], x0col, packed["W0"], packed["BN0"])

    HW = H * W
    out_size = packed["WFA"].shape[1]
    x3 = trunk_out.reshape(N, HW, C)                  # metadata-only reshape in XLA

    def full_spec(shape):
        nd = len(shape)
        return pl.BlockSpec(shape, lambda i, nd=nd: (0,) * nd)

    heads_in = (x3, packed["WA"], packed["ABN"], packed["WFA"], packed["BFA"],
                packed["WV"], packed["VBN"], packed["WV1"], packed["BV1"],
                packed["WV2"], packed["BV2"])
    x_act, x_val = pl.pallas_call(
        make_heads_kernel(N, HW, out_size),
        out_shape=(jax.ShapeDtypeStruct((N, out_size), jnp.float32),
                   jax.ShapeDtypeStruct((N, 1), jnp.float32)),
        grid=(1,),
        in_specs=[full_spec(a.shape) for a in heads_in],
        out_specs=(full_spec((N, out_size)), full_spec((N, 1))),
        compiler_params=pltpu.CompilerParams(dimension_semantics=("arbitrary",)),
    )(*heads_in)
    return x_act, x_val


# --------------------------------- main ------------------------------------ #
if __name__ == "__main__":
    H = W = 8
    input_size = H * W        # Linear in-features per channel (board positions)
    output_size = H * W       # policy logits (one per board position)
    N = 2

    key = jax.random.PRNGKey(0)
    pkey, xkey = jax.random.split(key)
    params = init_params(pkey, input_size, output_size)
    packed = pack_params(params, N, H, W)             # one-time weight packing (bf16 + stacking)
    x = jax.random.normal(xkey, (N, 4, H, W), jnp.float32)  # NCHW, like PyTorch

    fwd = jax.jit(net_forward)
    x_act, x_val = fwd(packed, x)
    jax.block_until_ready((x_act, x_val))

    assert x_act.shape == (N, output_size) and x_act.dtype == jnp.float32
    assert x_val.shape == (N, 1) and x_val.dtype == jnp.float32
    # log_softmax rows exponentiate-and-sum to 1; tanh output in [-1, 1]
    assert jnp.allclose(jnp.exp(x_act).sum(axis=1), 1.0, atol=1e-4)
    assert jnp.all(jnp.abs(x_val) <= 1.0)
    assert jnp.all(jnp.isfinite(x_act)) and jnp.all(jnp.isfinite(x_val))

    print("KERNEL_OK")
</pallas_src>

<mosaic_0001>
module attributes {stable_mosaic.version = 11 : i64} {
  func.func @kernel(%arg0: i32, %arg1: memref<14xi32, #tpu.memory_space<smem>>, %arg2: memref<1x9x64x64xbf16, #tpu.memory_space<vmem>>, %arg3: memref<1x9x64x64xbf16, #tpu.memory_space<vmem>>, %arg4: memref<1x64x64xbf16, #tpu.memory_space<vmem>>, %arg5: memref<1x6x64xf32, #tpu.memory_space<vmem>>, %arg6: memref<9x128x128xbf16, #tpu.memory_space<vmem>>, %arg7: memref<128x128xbf16, #tpu.memory_space<vmem>>, %arg8: memref<128x64xbf16, #tpu.memory_space<vmem>>, %arg9: memref<2x64xf32, #tpu.memory_space<vmem>>, %arg10: memref<128x64xf32, #tpu.memory_space<vmem>>, %arg11: memref<128x64xf32, #tpu.memory_space<vmem>>) attributes {dimension_semantics = [#tpu.dimension_semantics<arbitrary>], iteration_bounds = array<i64: 14>, scalar_prefetch = 1 : i64, scratch_operands = 1 : i64, tpu.core_type = #tpu.core_type<tc>, window_params = [{transform_indices = @transform_0, window_bounds = array<i64: 1, 9, 64, 64>}, {transform_indices = @transform_1, window_bounds = array<i64: 1, 9, 64, 64>}, {transform_indices = @transform_2, window_bounds = array<i64: 1, 64, 64>}, {transform_indices = @transform_3, window_bounds = array<i64: 1, 6, 64>}, {pipeline_mode = #tpu.pipeline_mode<synchronous>, transform_indices = @transform_4, window_bounds = array<i64: 9, 128, 128>}, {pipeline_mode = #tpu.pipeline_mode<synchronous>, transform_indices = @transform_5, window_bounds = array<i64: 128, 128>}, {pipeline_mode = #tpu.pipeline_mode<synchronous>, transform_indices = @transform_6, window_bounds = array<i64: 128, 64>}, {pipeline_mode = #tpu.pipeline_mode<synchronous>, transform_indices = @transform_7, window_bounds = array<i64: 2, 64>}, {pipeline_mode = #tpu.pipeline_mode<synchronous>, transform_indices = @transform_8, window_bounds = array<i64: 128, 64>}]} {
    %c0_i32 = arith.constant 0 : i32
    %0 = arith.cmpi eq, %arg0, %c0_i32 : i32
    %1 = arith.extui %0 : i1 to i32
    %c0_i32_0 = arith.constant 0 : i32
    %2 = arith.cmpi ne, %1, %c0_i32_0 : i32
    scf.if %2 {
      %c0_177 = arith.constant 0 : index
      %c0_178 = arith.constant 0 : index
      %241 = vector.load %arg9[%c0_177, %c0_178] : memref<2x64xf32, #tpu.memory_space<vmem>>, vector<2x64xf32>
      %c0_179 = arith.constant 0 : index
      %c0_180 = arith.constant 0 : index
      %242 = vector.load %arg7[%c0_179, %c0_180] : memref<128x128xbf16, #tpu.memory_space<vmem>>, vector<128x128xbf16>
      %c0_181 = arith.constant 0 : index
      %c0_182 = arith.constant 0 : index
      %243 = vector.load %arg8[%c0_181, %c0_182] : memref<128x64xbf16, #tpu.memory_space<vmem>>, vector<128x64xbf16>
      %cst_183 = arith.constant dense<0.000000e+00> : vector<128x64xf32>
      %244 = tpu.matmul %242, %243, %cst_183 {dimension_numbers = #tpu.dot_dimension_numbers<[1], [0], [0], [1], [0, 0, 1, 1], [], []>} : vector<128x128xbf16>, vector<128x64xbf16>, vector<128x64xf32> -> vector<128x64xf32>
      %245 = vector.extract_strided_slice %241 {offsets = [0, 0], sizes = [1, 64], strides = [1, 1]} : vector<2x64xf32> to vector<1x64xf32>
      %246 = vector.extract_strided_slice %241 {offsets = [1, 0], sizes = [1, 64], strides = [1, 1]} : vector<2x64xf32> to vector<1x64xf32>
      %cst_184 = arith.constant dense<0.000000e+00> : vector<64xf32>
      %247 = vector.multi_reduction <add>, %244, %cst_184 [0] : vector<128x64xf32> to vector<64xf32>
      %248 = vector.shape_cast %247 : vector<64xf32> to vector<1x64xf32>
      %cst_185 = arith.constant 1.280000e+02 : f32
      %249 = vector.broadcast %cst_185 : f32 to vector<1x64xf32>
      %250 = arith.divf %248, %249 : vector<1x64xf32>
      %251 = vector.broadcast %250 : vector<1x64xf32> to vector<128x64xf32>
      %252 = arith.subf %244, %251 : vector<128x64xf32>
      %253 = arith.mulf %252, %252 : vector<128x64xf32>
      %cst_186 = arith.constant dense<0.000000e+00> : vector<64xf32>
      %254 = vector.multi_reduction <add>, %253, %cst_186 [0] : vector<128x64xf32> to vector<64xf32>
      %255 = vector.shape_cast %254 : vector<64xf32> to vector<1x64xf32>
      %cst_187 = arith.constant 1.280000e+02 : f32
      %256 = vector.broadcast %cst_187 : f32 to vector<1x64xf32>
      %257 = arith.divf %255, %256 : vector<1x64xf32>
      %258 = vector.broadcast %250 : vector<1x64xf32> to vector<128x64xf32>
      %259 = arith.subf %244, %258 : vector<128x64xf32>
      %cst_188 = arith.constant 9.99999974E-6 : f32
      %260 = vector.broadcast %cst_188 : f32 to vector<1x64xf32>
      %261 = arith.addf %257, %260 : vector<1x64xf32>
      %262 = math.rsqrt %261 : vector<1x64xf32>
      %263 = vector.broadcast %262 : vector<1x64xf32> to vector<128x64xf32>
      %264 = arith.mulf %259, %263 : vector<128x64xf32>
      %265 = vector.broadcast %245 : vector<1x64xf32> to vector<128x64xf32>
      %266 = arith.mulf %264, %265 : vector<128x64xf32>
      %267 = vector.broadcast %246 : vector<1x64xf32> to vector<128x64xf32>
      %268 = arith.addf %266, %267 : vector<128x64xf32>
      %cst_189 = arith.constant 0.000000e+00 : f32
      %269 = vector.broadcast %cst_189 : f32 to vector<128x64xf32>
      %270 = arith.maximumf %268, %269 : vector<128x64xf32>
      %c0_190 = arith.constant 0 : index
      %c0_191 = arith.constant 0 : index
      %271 = vector.load %arg11[%c0_190, %c0_191] : memref<128x64xf32, #tpu.memory_space<vmem>>, vector<128x64xf32>
      tpu.vector_store %arg11[%c0_190, %c0_191], %270 {strides = array<i32>} : memref<128x64xf32, #tpu.memory_space<vmem>>, vector<128x64xf32>,
    } else {
    }
    %c0 = arith.constant 0 : index
    %c0_1 = arith.constant 0 : index
    %3 = vector.load %arg11[%c0, %c0_1] : memref<128x64xf32, #tpu.memory_space<vmem>>, vector<128x64xf32>
    %4 = arith.truncf %3 : vector<128x64xf32> to vector<128x64xbf16>
    %c0_2 = arith.constant 0 : index
    %c0_3 = arith.constant 0 : index
    %c0_4 = arith.constant 0 : index
    %5 = vector.load %arg5[%c0_2, %c0_3, %c0_4] : memref<1x6x64xf32, #tpu.memory_space<vmem>>, vector<1x6x64xf32>
    %6 = vector.shape_cast %5 : vector<1x6x64xf32> to vector<6x64xf32>
    %7 = vector.extract_strided_slice %6 {offsets = [0, 0], sizes = [1, 64], strides = [1, 1]} : vector<6x64xf32> to vector<1x64xf32>
    %8 = vector.extract_strided_slice %6 {offsets = [1, 0], sizes = [1, 64], strides = [1, 1]} : vector<6x64xf32> to vector<1x64xf32>
    %9 = vector.extract_strided_slice %6 {offsets = [2, 0], sizes = [1, 64], strides = [1, 1]} : vector<6x64xf32> to vector<1x64xf32>
    %10 = vector.extract_strided_slice %6 {offsets = [3, 0], sizes = [1, 64], strides = [1, 1]} : vector<6x64xf32> to vector<1x64xf32>
    %11 = vector.extract_strided_slice %6 {offsets = [4, 0], sizes = [1, 64], strides = [1, 1]} : vector<6x64xf32> to vector<1x64xf32>
    %12 = vector.extract_strided_slice %6 {offsets = [5, 0], sizes = [1, 64], strides = [1, 1]} : vector<6x64xf32> to vector<1x64xf32>
    %cst = arith.constant 0.000000e+00 : f32
    %13 = vector.broadcast %cst : f32 to vector<128x64xf32>
    %c0_5 = arith.constant 0 : index
    %c0_6 = arith.constant 0 : index
    %c0_7 = arith.constant 0 : index
    %14 = vector.load %arg6[%c0_5, %c0_6, %c0_7] : memref<9x128x128xbf16, #tpu.memory_space<vmem>>, vector<1x128x128xbf16>
    %15 = vector.shape_cast %14 : vector<1x128x128xbf16> to vector<128x128xbf16>
    %cst_8 = arith.constant dense<0.000000e+00> : vector<128x64xf32>
    %16 = tpu.matmul %15, %4, %cst_8 {dimension_numbers = #tpu.dot_dimension_numbers<[1], [0], [0], [1], [0, 0, 1, 1], [], []>} : vector<128x128xbf16>, vector<128x64xbf16>, vector<128x64xf32> -> vector<128x64xf32>
    %17 = arith.truncf %16 : vector<128x64xf32> to vector<128x64xbf16>
    %c0_9 = arith.constant 0 : index
    %c0_10 = arith.constant 0 : index
    %c0_11 = arith.constant 0 : index
    %c0_12 = arith.constant 0 : index
    %18 = vector.load %arg2[%c0_9, %c0_10, %c0_11, %c0_12] : memref<1x9x64x64xbf16, #tpu.memory_space<vmem>>, vector<1x1x64x64xbf16>
    %19 = vector.shape_cast %18 : vector<1x1x64x64xbf16> to vector<64x64xbf16>
    %cst_13 = arith.constant dense<0.000000e+00> : vector<128x64xf32>
    %20 = tpu.matmul %17, %19, %cst_13 {dimension_numbers = #tpu.dot_dimension_numbers<[1], [0], [0], [1], [0, 0, 1, 1], [], []>} : vector<128x64xbf16>, vector<64x64xbf16>, vector<128x64xf32> -> vector<128x64xf32>
    %21 = arith.addf %13, %20 : vector<128x64xf32>
    %c1 = arith.constant 1 : index
    %c0_14 = arith.constant 0 : index
    %c0_15 = arith.constant 0 : index
    %22 = vector.load %arg6[%c1, %c0_14, %c0_15] : memref<9x128x128xbf16, #tpu.memory_space<vmem>>, vector<1x128x128xbf16>
    %23 = vector.shape_cast %22 : vector<1x128x128xbf16> to vector<128x128xbf16>
    %cst_16 = arith.constant dense<0.000000e+00> : vector<128x64xf32>
    %24 = tpu.matmul %23, %4, %cst_16 {dimension_numbers = #tpu.dot_dimension_numbers<[1], [0], [0], [1], [0, 0, 1, 1], [], []>} : vector<128x128xbf16>, vector<128x64xbf16>, vector<128x64xf32> -> vector<128x64xf32>
    %25 = arith.truncf %24 : vector<128x64xf32> to vector<128x64xbf16>
    %c0_17 = arith.constant 0 : index
    %c1_18 = arith.constant 1 : index
    %c0_19 = arith.constant 0 : index
    %c0_20 = arith.constant 0 : index
    %26 = vector.load %arg2[%c0_17, %c1_18, %c0_19, %c0_20] : memref<1x9x64x64xbf16, #tpu.memory_space<vmem>>, vector<1x1x64x64xbf16>
    %27 = vector.shape_cast %26 : vector<1x1x64x64xbf16> to vector<64x64xbf16>
    %cst_21 = arith.constant dense<0.000000e+00> : vector<128x64xf32>
    %28 = tpu.matmul %25, %27, %cst_21 {dimension_numbers = #tpu.dot_dimension_numbers<[1], [0], [0], [1], [0, 0, 1, 1], [], []>} : vector<128x64xbf16>, vector<64x64xbf16>, vector<128x64xf32> -> vector<128x64xf32>
    %29 = arith.addf %21, %28 : vector<128x64xf32>
    %c2 = arith.constant 2 : index
    %c0_22 = arith.constant 0 : index
    %c0_23 = arith.constant 0 : index
    %30 = vector.load %arg6[%c2, %c0_22, %c0_23] : memref<9x128x128xbf16, #tpu.memory_space<vmem>>, vector<1x128x128xbf16>
    %31 = vector.shape_cast %30 : vector<1x128x128xbf16> to vector<128x128xbf16>
    %cst_24 = arith.constant dense<0.000000e+00> : vector<128x64xf32>
    %32 = tpu.matmul %31, %4, %cst_24 {dimension_numbers = #tpu.dot_dimension_numbers<[1], [0], [0], [1], [0, 0, 1, 1], [], []>} : vector<128x128xbf16>, vector<128x64xbf16>, vector<128x64xf32> -> vector<128x64xf32>
    %33 = arith.truncf %32 : vector<128x64xf32> to vector<128x64xbf16>
    %c0_25 = arith.constant 0 : index
    %c2_26 = arith.constant 2 : index
    %c0_27 = arith.constant 0 : index
    %c0_28 = arith.constant 0 : index
    %34 = vector.load %arg2[%c0_25, %c2_26, %c0_27, %c0_28] : memref<1x9x64x64xbf16, #tpu.memory_space<vmem>>, vector<1x1x64x64xbf16>
    %35 = vector.shape_cast %34 : vector<1x1x64x64xbf16> to vector<64x64xbf16>
    %cst_29 = arith.constant dense<0.000000e+00> : vector<128x64xf32>
    %36 = tpu.matmul %33, %35, %cst_29 {dimension_numbers = #tpu.dot_dimension_numbers<[1], [0], [0], [1], [0, 0, 1, 1], [], []>} : vector<128x64xbf16>, vector<64x64xbf16>, vector<128x64xf32> -> vector<128x64xf32>
    %37 = arith.addf %29, %36 : vector<128x64xf32>
    %c3 = arith.constant 3 : index
    %c0_30 = arith.constant 0 : index
    %c0_31 = arith.constant 0 : index
    %38 = vector.load %arg6[%c3, %c0_30, %c0_31] : memref<9x128x128xbf16, #tpu.memory_space<vmem>>, vector<1x128x128xbf16>
    %39 = vector.shape_cast %38 : vector<1x128x128xbf16> to vector<128x128xbf16>
    %cst_32 = arith.constant dense<0.000000e+00> : vector<128x64xf32>
    %40 = tpu.matmul %39, %4, %cst_32 {dimension_numbers = #tpu.dot_dimension_numbers<[1], [0], [0], [1], [0, 0, 1, 1], [], []>} : vector<128x128xbf16>, vector<128x64xbf16>, vector<128x64xf32> -> vector<128x64xf32>
    %41 = arith.truncf %40 : vector<128x64xf32> to vector<128x64xbf16>
    %c0_33 = arith.constant 0 : index
    %c3_34 = arith.constant 3 : index
    %c0_35 = arith.constant 0 : index
    %c0_36 = arith.constant 0 : index
    %42 = vector.load %arg2[%c0_33, %c3_34, %c0_35, %c0_36] : memref<1x9x64x64xbf16, #tpu.memory_space<vmem>>, vector<1x1x64x64xbf16>
    %43 = vector.shape_cast %42 : vector<1x1x64x64xbf16> to vector<64x64xbf16>
    %cst_37 = arith.constant dense<0.000000e+00> : vector<128x64xf32>
    %44 = tpu.matmul %41, %43, %cst_37 {dimension_numbers = #tpu.dot_dimension_numbers<[1], [0], [0], [1], [0, 0, 1, 1], [], []>} : vector<128x64xbf16>, vector<64x64xbf16>, vector<128x64xf32> -> vector<128x64xf32>
    %45 = arith.addf %37, %44 : vector<128x64xf32>
    %c0_38 = arith.constant 0 : index
    %c4 = arith.constant 4 : index
    %c0_39 = arith.constant 0 : index
    %c0_40 = arith.constant 0 : index
    %46 = vector.load %arg2[%c0_38, %c4, %c0_39, %c0_40] : memref<1x9x64x64xbf16, #tpu.memory_space<vmem>>, vector<1x1x64x64xbf16>
    %47 = vector.shape_cast %46 : vector<1x1x64x64xbf16> to vector<64x64xbf16>
    %cst_41 = arith.constant dense<0.000000e+00> : vector<128x64xf32>
    %48 = tpu.matmul %4, %47, %cst_41 {dimension_numbers = #tpu.dot_dimension_numbers<[1], [0], [0], [1], [0, 0, 1, 1], [], []>} : vector<128x64xbf16>, vector<64x64xbf16>, vector<128x64xf32> -> vector<128x64xf32>
    %49 = arith.addf %45, %48 : vector<128x64xf32>
    %c5 = arith.constant 5 : index
    %c0_42 = arith.constant 0 : index
    %c0_43 = arith.constant 0 : index
    %50 = vector.load %arg6[%c5, %c0_42, %c0_43] : memref<9x128x128xbf16, #tpu.memory_space<vmem>>, vector<1x128x128xbf16>
    %51 = vector.shape_cast %50 : vector<1x128x128xbf16> to vector<128x128xbf16>
    %cst_44 = arith.constant dense<0.000000e+00> : vector<128x64xf32>
    %52 = tpu.matmul %51, %4, %cst_44 {dimension_numbers = #tpu.dot_dimension_numbers<[1], [0], [0], [1], [0, 0, 1, 1], [], []>} : vector<128x128xbf16>, vector<128x64xbf16>, vector<128x64xf32> -> vector<128x64xf32>
    %53 = arith.truncf %52 : vector<128x64xf32> to vector<128x64xbf16>
    %c0_45 = arith.constant 0 : index
    %c5_46 = arith.constant 5 : index
    %c0_47 = arith.constant 0 : index
    %c0_48 = arith.constant 0 : index
    %54 = vector.load %arg2[%c0_45, %c5_46, %c0_47, %c0_48] : memref<1x9x64x64xbf16, #tpu.memory_space<vmem>>, vector<1x1x64x64xbf16>
    %55 = vector.shape_cast %54 : vector<1x1x64x64xbf16> to vector<64x64xbf16>
    %cst_49 = arith.constant dense<0.000000e+00> : vector<128x64xf32>
    %56 = tpu.matmul %53, %55, %cst_49 {dimension_numbers = #tpu.dot_dimension_numbers<[1], [0], [0], [1], [0, 0, 1, 1], [], []>} : vector<128x64xbf16>, vector<64x64xbf16>, vector<128x64xf32> -> vector<128x64xf32>
    %57 = arith.addf %49, %56 : vector<128x64xf32>
    %c6 = arith.constant 6 : index
    %c0_50 = arith.constant 0 : index
    %c0_51 = arith.constant 0 : index
    %58 = vector.load %arg6[%c6, %c0_50, %c0_51] : memref<9x128x128xbf16, #tpu.memory_space<vmem>>, vector<1x128x128xbf16>
    %59 = vector.shape_cast %58 : vector<1x128x128xbf16> to vector<128x128xbf16>
    %cst_52 = arith.constant dense<0.000000e+00> : vector<128x64xf32>
    %60 = tpu.matmul %59, %4, %cst_52 {dimension_numbers = #tpu.dot_dimension_numbers<[1], [0], [0], [1], [0, 0, 1, 1], [], []>} : vector<128x128xbf16>, vector<128x64xbf16>, vector<128x64xf32> -> vector<128x64xf32>
    %61 = arith.truncf %60 : vector<128x64xf32> to vector<128x64xbf16>
    %c0_53 = arith.constant 0 : index
    %c6_54 = arith.constant 6 : index
    %c0_55 = arith.constant 0 : index
    %c0_56 = arith.constant 0 : index
    %62 = vector.load %arg2[%c0_53, %c6_54, %c0_55, %c0_56] : memref<1x9x64x64xbf16, #tpu.memory_space<vmem>>, vector<1x1x64x64xbf16>
    %63 = vector.shape_cast %62 : vector<1x1x64x64xbf16> to vector<64x64xbf16>
    %cst_57 = arith.constant dense<0.000000e+00> : vector<128x64xf32>
    %64 = tpu.matmul %61, %63, %cst_57 {dimension_numbers = #tpu.dot_dimension_numbers<[1], [0], [0], [1], [0, 0, 1, 1], [], []>} : vector<128x64xbf16>, vector<64x64xbf16>, vector<128x64xf32> -> vector<128x64xf32>
    %65 = arith.addf %57, %64 : vector<128x64xf32>
    %c7 = arith.constant 7 : index
    %c0_58 = arith.constant 0 : index
    %c0_59 = arith.constant 0 : index
    %66 = vector.load %arg6[%c7, %c0_58, %c0_59] : memref<9x128x128xbf16, #tpu.memory_space<vmem>>, vector<1x128x128xbf16>
    %67 = vector.shape_cast %66 : vector<1x128x128xbf16> to vector<128x128xbf16>
    %cst_60 = arith.constant dense<0.000000e+00> : vector<128x64xf32>
    %68 = tpu.matmul %67, %4, %cst_60 {dimension_numbers = #tpu.dot_dimension_numbers<[1], [0], [0], [1], [0, 0, 1, 1], [], []>} : vector<128x128xbf16>, vector<128x64xbf16>, vector<128x64xf32> -> vector<128x64xf32>
    %69 = arith.truncf %68 : vector<128x64xf32> to vector<128x64xbf16>
    %c0_61 = arith.constant 0 : index
    %c7_62 = arith.constant 7 : index
    %c0_63 = arith.constant 0 : index
    %c0_64 = arith.constant 0 : index
    %70 = vector.load %arg2[%c0_61, %c7_62, %c0_63, %c0_64] : memref<1x9x64x64xbf16, #tpu.memory_space<vmem>>, vector<1x1x64x64xbf16>
    %71 = vector.shape_cast %70 : vector<1x1x64x64xbf16> to vector<64x64xbf16>
    %cst_65 = arith.constant dense<0.000000e+00> : vector<128x64xf32>
    %72 = tpu.matmul %69, %71, %cst_65 {dimension_numbers = #tpu.dot_dimension_numbers<[1], [0], [0], [1], [0, 0, 1, 1], [], []>} : vector<128x64xbf16>, vector<64x64xbf16>, vector<128x64xf32> -> vector<128x64xf32>
    %73 = arith.addf %65, %72 : vector<128x64xf32>
    %c8 = arith.constant 8 : index
    %c0_66 = arith.constant 0 : index
    %c0_67 = arith.constant 0 : index
    %74 = vector.load %arg6[%c8, %c0_66, %c0_67] : memref<9x128x128xbf16, #tpu.memory_space<vmem>>, vector<1x128x128xbf16>
    %75 = vector.shape_cast %74 : vector<1x128x128xbf16> to vector<128x128xbf16>
    %cst_68 = arith.constant dense<0.000000e+00> : vector<128x64xf32>
    %76 = tpu.matmul %75, %4, %cst_68 {dimension_numbers = #tpu.dot_dimension_numbers<[1], [0], [0], [1], [0, 0, 1, 1], [], []>} : vector<128x128xbf16>, vector<128x64xbf16>, vector<128x64xf32> -> vector<128x64xf32>
    %77 = arith.truncf %76 : vector<128x64xf32> to vector<128x64xbf16>
    %c0_69 = arith.constant 0 : index
    %c8_70 = arith.constant 8 : index
    %c0_71 = arith.constant 0 : index
    %c0_72 = arith.constant 0 : index
    %78 = vector.load %arg2[%c0_69, %c8_70, %c0_71, %c0_72] : memref<1x9x64x64xbf16, #tpu.memory_space<vmem>>, vector<1x1x64x64xbf16>
    %79 = vector.shape_cast %78 : vector<1x1x64x64xbf16> to vector<64x64xbf16>
    %cst_73 = arith.constant dense<0.000000e+00> : vector<128x64xf32>
    %80 = tpu.matmul %77, %79, %cst_73 {dimension_numbers = #tpu.dot_dimension_numbers<[1], [0], [0], [1], [0, 0, 1, 1], [], []>} : vector<128x64xbf16>, vector<64x64xbf16>, vector<128x64xf32> -> vector<128x64xf32>
    %81 = arith.addf %73, %80 : vector<128x64xf32>
    %cst_74 = arith.constant dense<0.000000e+00> : vector<64xf32>
    %82 = vector.multi_reduction <add>, %81, %cst_74 [0] : vector<128x64xf32> to vector<64xf32>
    %83 = vector.shape_cast %82 : vector<64xf32> to vector<1x64xf32>
    %cst_75 = arith.constant 1.280000e+02 : f32
    %84 = vector.broadcast %cst_75 : f32 to vector<1x64xf32>
    %85 = arith.divf %83, %84 : vector<1x64xf32>
    %86 = vector.broadcast %85 : vector<1x64xf32> to vector<128x64xf32>
    %87 = arith.subf %81, %86 : vector<128x64xf32>
    %88 = arith.mulf %87, %87 : vector<128x64xf32>
    %cst_76 = arith.constant dense<0.000000e+00> : vector<64xf32>
    %89 = vector.multi_reduction <add>, %88, %cst_76 [0] : vector<128x64xf32> to vector<64xf32>
    %90 = vector.shape_cast %89 : vector<64xf32> to vector<1x64xf32>
    %cst_77 = arith.constant 1.280000e+02 : f32
    %91 = vector.broadcast %cst_77 : f32 to vector<1x64xf32>
    %92 = arith.divf %90, %91 : vector<1x64xf32>
    %93 = vector.broadcast %85 : vector<1x64xf32> to vector<128x64xf32>
    %94 = arith.subf %81, %93 : vector<128x64xf32>
    %cst_78 = arith.constant 9.99999974E-6 : f32
    %95 = vector.broadcast %cst_78 : f32 to vector<1x64xf32>
    %96 = arith.addf %92, %95 : vector<1x64xf32>
    %97 = math.rsqrt %96 : vector<1x64xf32>
    %98 = vector.broadcast %97 : vector<1x64xf32> to vector<128x64xf32>
    %99 = arith.mulf %94, %98 : vector<128x64xf32>
    %100 = vector.broadcast %7 : vector<1x64xf32> to vector<128x64xf32>
    %101 = arith.mulf %99, %100 : vector<128x64xf32>
    %102 = vector.broadcast %8 : vector<1x64xf32> to vector<128x64xf32>
    %103 = arith.addf %101, %102 : vector<128x64xf32>
    %cst_79 = arith.constant 0.000000e+00 : f32
    %104 = vector.broadcast %cst_79 : f32 to vector<128x64xf32>
    %105 = arith.maximumf %103, %104 : vector<128x64xf32>
    %106 = arith.truncf %105 : vector<128x64xf32> to vector<128x64xbf16>
    %cst_80 = arith.constant 0.000000e+00 : f32
    %107 = vector.broadcast %cst_80 : f32 to vector<128x64xf32>
    %c0_81 = arith.constant 0 : index
    %c0_82 = arith.constant 0 : index
    %c0_83 = arith.constant 0 : index
    %108 = vector.load %arg6[%c0_81, %c0_82, %c0_83] : memref<9x128x128xbf16, #tpu.memory_space<vmem>>, vector<1x128x128xbf16>
    %109 = vector.shape_cast %108 : vector<1x128x128xbf16> to vector<128x128xbf16>
    %cst_84 = arith.constant dense<0.000000e+00> : vector<128x64xf32>
    %110 = tpu.matmul %109, %106, %cst_84 {dimension_numbers = #tpu.dot_dimension_numbers<[1], [0], [0], [1], [0, 0, 1, 1], [], []>} : vector<128x128xbf16>, vector<128x64xbf16>, vector<128x64xf32> -> vector<128x64xf32>
    %111 = arith.truncf %110 : vector<128x64xf32> to vector<128x64xbf16>
    %c0_85 = arith.constant 0 : index
    %c0_86 = arith.constant 0 : index
    %c0_87 = arith.constant 0 : index
    %c0_88 = arith.constant 0 : index
    %112 = vector.load %arg3[%c0_85, %c0_86, %c0_87, %c0_88] : memref<1x9x64x64xbf16, #tpu.memory_space<vmem>>, vector<1x1x64x64xbf16>
    %113 = vector.shape_cast %112 : vector<1x1x64x64xbf16> to vector<64x64xbf16>
    %cst_89 = arith.constant dense<0.000000e+00> : vector<128x64xf32>
    %114 = tpu.matmul %111, %113, %cst_89 {dimension_numbers = #tpu.dot_dimension_numbers<[1], [0], [0], [1], [0, 0, 1, 1], [], []>} : vector<128x64xbf16>, vector<64x64xbf16>, vector<128x64xf32> -> vector<128x64xf32>
    %115 = arith.addf %107, %114 : vector<128x64xf32>
    %c1_90 = arith.constant 1 : index
    %c0_91 = arith.constant 0 : index
    %c0_92 = arith.constant 0 : index
    %116 = vector.load %arg6[%c1_90, %c0_91, %c0_92] : memref<9x128x128xbf16, #tpu.memory_space<vmem>>, vector<1x128x128xbf16>
    %117 = vector.shape_cast %116 : vector<1x128x128xbf16> to vector<128x128xbf16>
    %cst_93 = arith.constant dense<0.000000e+00> : vector<128x64xf32>
    %118 = tpu.matmul %117, %106, %cst_93 {dimension_numbers = #tpu.dot_dimension_numbers<[1], [0], [0], [1], [0, 0, 1, 1], [], []>} : vector<128x128xbf16>, vector<128x64xbf16>, vector<128x64xf32> -> vector<128x64xf32>
    %119 = arith.truncf %118 : vector<128x64xf32> to vector<128x64xbf16>
    %c0_94 = arith.constant 0 : index
    %c1_95 = arith.constant 1 : index
    %c0_96 = arith.constant 0 : index
    %c0_97 = arith.constant 0 : index
    %120 = vector.load %arg3[%c0_94, %c1_95, %c0_96, %c0_97] : memref<1x9x64x64xbf16, #tpu.memory_space<vmem>>, vector<1x1x64x64xbf16>
    %121 = vector.shape_cast %120 : vector<1x1x64x64xbf16> to vector<64x64xbf16>
    %cst_98 = arith.constant dense<0.000000e+00> : vector<128x64xf32>
    %122 = tpu.matmul %119, %121, %cst_98 {dimension_numbers = #tpu.dot_dimension_numbers<[1], [0], [0], [1], [0, 0, 1, 1], [], []>} : vector<128x64xbf16>, vector<64x64xbf16>, vector<128x64xf32> -> vector<128x64xf32>
    %123 = arith.addf %115, %122 : vector<128x64xf32>
    %c2_99 = arith.constant 2 : index
    %c0_100 = arith.constant 0 : index
    %c0_101 = arith.constant 0 : index
    %124 = vector.load %arg6[%c2_99, %c0_100, %c0_101] : memref<9x128x128xbf16, #tpu.memory_space<vmem>>, vector<1x128x128xbf16>
    %125 = vector.shape_cast %124 : vector<1x128x128xbf16> to vector<128x128xbf16>
    %cst_102 = arith.constant dense<0.000000e+00> : vector<128x64xf32>
    %126 = tpu.matmul %125, %106, %cst_102 {dimension_numbers = #tpu.dot_dimension_numbers<[1], [0], [0], [1], [0, 0, 1, 1], [], []>} : vector<128x128xbf16>, vector<128x64xbf16>, vector<128x64xf32> -> vector<128x64xf32>
    %127 = arith.truncf %126 : vector<128x64xf32> to vector<128x64xbf16>
    %c0_103 = arith.constant 0 : index
    %c2_104 = arith.constant 2 : index
    %c0_105 = arith.constant 0 : index
    %c0_106 = arith.constant 0 : index
    %128 = vector.load %arg3[%c0_103, %c2_104, %c0_105, %c0_106] : memref<1x9x64x64xbf16, #tpu.memory_space<vmem>>, vector<1x1x64x64xbf16>
    %129 = vector.shape_cast %128 : vector<1x1x64x64xbf16> to vector<64x64xbf16>
    %cst_107 = arith.constant dense<0.000000e+00> : vector<128x64xf32>
    %130 = tpu.matmul %127, %129, %cst_107 {dimension_numbers = #tpu.dot_dimension_numbers<[1], [0], [0], [1], [0, 0, 1, 1], [], []>} : vector<128x64xbf16>, vector<64x64xbf16>, vector<128x64xf32> -> vector<128x64xf32>
    %131 = arith.addf %123, %130 : vector<128x64xf32>
    %c3_108 = arith.constant 3 : index
    %c0_109 = arith.constant 0 : index
    %c0_110 = arith.constant 0 : index
    %132 = vector.load %arg6[%c3_108, %c0_109, %c0_110] : memref<9x128x128xbf16, #tpu.memory_space<vmem>>, vector<1x128x128xbf16>
    %133 = vector.shape_cast %132 : vector<1x128x128xbf16> to vector<128x128xbf16>
    %cst_111 = arith.constant dense<0.000000e+00> : vector<128x64xf32>
    %134 = tpu.matmul %133, %106, %cst_111 {dimension_numbers = #tpu.dot_dimension_numbers<[1], [0], [0], [1], [0, 0, 1, 1], [], []>} : vector<128x128xbf16>, vector<128x64xbf16>, vector<128x64xf32> -> vector<128x64xf32>
    %135 = arith.truncf %134 : vector<128x64xf32> to vector<128x64xbf16>
    %c0_112 = arith.constant 0 : index
    %c3_113 = arith.constant 3 : index
    %c0_114 = arith.constant 0 : index
    %c0_115 = arith.constant 0 : index
    %136 = vector.load %arg3[%c0_112, %c3_113, %c0_114, %c0_115] : memref<1x9x64x64xbf16, #tpu.memory_space<vmem>>, vector<1x1x64x64xbf16>
    %137 = vector.shape_cast %136 : vector<1x1x64x64xbf16> to vector<64x64xbf16>
    %cst_116 = arith.constant dense<0.000000e+00> : vector<128x64xf32>
    %138 = tpu.matmul %135, %137, %cst_116 {dimension_numbers = #tpu.dot_dimension_numbers<[1], [0], [0], [1], [0, 0, 1, 1], [], []>} : vector<128x64xbf16>, vector<64x64xbf16>, vector<128x64xf32> -> vector<128x64xf32>
    %139 = arith.addf %131, %138 : vector<128x64xf32>
    %c0_117 = arith.constant 0 : index
    %c4_118 = arith.constant 4 : index
    %c0_119 = arith.constant 0 : index
    %c0_120 = arith.constant 0 : index
    %140 = vector.load %arg3[%c0_117, %c4_118, %c0_119, %c0_120] : memref<1x9x64x64xbf16, #tpu.memory_space<vmem>>, vector<1x1x64x64xbf16>
    %141 = vector.shape_cast %140 : vector<1x1x64x64xbf16> to vector<64x64xbf16>
    %cst_121 = arith.constant dense<0.000000e+00> : vector<128x64xf32>
    %142 = tpu.matmul %106, %141, %cst_121 {dimension_numbers = #tpu.dot_dimension_numbers<[1], [0], [0], [1], [0, 0, 1, 1], [], []>} : vector<128x64xbf16>, vector<64x64xbf16>, vector<128x64xf32> -> vector<128x64xf32>
    %143 = arith.addf %139, %142 : vector<128x64xf32>
    %c5_122 = arith.constant 5 : index
    %c0_123 = arith.constant 0 : index
    %c0_124 = arith.constant 0 : index
    %144 = vector.load %arg6[%c5_122, %c0_123, %c0_124] : memref<9x128x128xbf16, #tpu.memory_space<vmem>>, vector<1x128x128xbf16>
    %145 = vector.shape_cast %144 : vector<1x128x128xbf16> to vector<128x128xbf16>
    %cst_125 = arith.constant dense<0.000000e+00> : vector<128x64xf32>
    %146 = tpu.matmul %145, %106, %cst_125 {dimension_numbers = #tpu.dot_dimension_numbers<[1], [0], [0], [1], [0, 0, 1, 1], [], []>} : vector<128x128xbf16>, vector<128x64xbf16>, vector<128x64xf32> -> vector<128x64xf32>
    %147 = arith.truncf %146 : vector<128x64xf32> to vector<128x64xbf16>
    %c0_126 = arith.constant 0 : index
    %c5_127 = arith.constant 5 : index
    %c0_128 = arith.constant 0 : index
    %c0_129 = arith.constant 0 : index
    %148 = vector.load %arg3[%c0_126, %c5_127, %c0_128, %c0_129] : memref<1x9x64x64xbf16, #tpu.memory_space<vmem>>, vector<1x1x64x64xbf16>
    %149 = vector.shape_cast %148 : vector<1x1x64x64xbf16> to vector<64x64xbf16>
    %cst_130 = arith.constant dense<0.000000e+00> : vector<128x64xf32>
    %150 = tpu.matmul %147, %149, %cst_130 {dimension_numbers = #tpu.dot_dimension_numbers<[1], [0], [0], [1], [0, 0, 1, 1], [], []>} : vector<128x64xbf16>, vector<64x64xbf16>, vector<128x64xf32> -> vector<128x64xf32>
    %151 = arith.addf %143, %150 : vector<128x64xf32>
    %c6_131 = arith.constant 6 : index
    %c0_132 = arith.constant 0 : index
    %c0_133 = arith.constant 0 : index
    %152 = vector.load %arg6[%c6_131, %c0_132, %c0_133] : memref<9x128x128xbf16, #tpu.memory_space<vmem>>, vector<1x128x128xbf16>
    %153 = vector.shape_cast %152 : vector<1x128x128xbf16> to vector<128x128xbf16>
    %cst_134 = arith.constant dense<0.000000e+00> : vector<128x64xf32>
    %154 = tpu.matmul %153, %106, %cst_134 {dimension_numbers = #tpu.dot_dimension_numbers<[1], [0], [0], [1], [0, 0, 1, 1], [], []>} : vector<128x128xbf16>, vector<128x64xbf16>, vector<128x64xf32> -> vector<128x64xf32>
    %155 = arith.truncf %154 : vector<128x64xf32> to vector<128x64xbf16>
    %c0_135 = arith.constant 0 : index
    %c6_136 = arith.constant 6 : index
    %c0_137 = arith.constant 0 : index
    %c0_138 = arith.constant 0 : index
    %156 = vector.load %arg3[%c0_135, %c6_136, %c0_137, %c0_138] : memref<1x9x64x64xbf16, #tpu.memory_space<vmem>>, vector<1x1x64x64xbf16>
    %157 = vector.shape_cast %156 : vector<1x1x64x64xbf16> to vector<64x64xbf16>
    %cst_139 = arith.constant dense<0.000000e+00> : vector<128x64xf32>
    %158 = tpu.matmul %155, %157, %cst_139 {dimension_numbers = #tpu.dot_dimension_numbers<[1], [0], [0], [1], [0, 0, 1, 1], [], []>} : vector<128x64xbf16>, vector<64x64xbf16>, vector<128x64xf32> -> vector<128x64xf32>
    %159 = arith.addf %151, %158 : vector<128x64xf32>
    %c7_140 = arith.constant 7 : index
    %c0_141 = arith.constant 0 : index
    %c0_142 = arith.constant 0 : index
    %160 = vector.load %arg6[%c7_140, %c0_141, %c0_142] : memref<9x128x128xbf16, #tpu.memory_space<vmem>>, vector<1x128x128xbf16>
    %161 = vector.shape_cast %160 : vector<1x128x128xbf16> to vector<128x128xbf16>
    %cst_143 = arith.constant dense<0.000000e+00> : vector<128x64xf32>
    %162 = tpu.matmul %161, %106, %cst_143 {dimension_numbers = #tpu.dot_dimension_numbers<[1], [0], [0], [1], [0, 0, 1, 1], [], []>} : vector<128x128xbf16>, vector<128x64xbf16>, vector<128x64xf32> -> vector<128x64xf32>
    %163 = arith.truncf %162 : vector<128x64xf32> to vector<128x64xbf16>
    %c0_144 = arith.constant 0 : index
    %c7_145 = arith.constant 7 : index
    %c0_146 = arith.constant 0 : index
    %c0_147 = arith.constant 0 : index
    %164 = vector.load %arg3[%c0_144, %c7_145, %c0_146, %c0_147] : memref<1x9x64x64xbf16, #tpu.memory_space<vmem>>, vector<1x1x64x64xbf16>
    %165 = vector.shape_cast %164 : vector<1x1x64x64xbf16> to vector<64x64xbf16>
    %cst_148 = arith.constant dense<0.000000e+00> : vector<128x64xf32>
    %166 = tpu.matmul %163, %165, %cst_148 {dimension_numbers = #tpu.dot_dimension_numbers<[1], [0], [0], [1], [0, 0, 1, 1], [], []>} : vector<128x64xbf16>, vector<64x64xbf16>, vector<128x64xf32> -> vector<128x64xf32>
    %167 = arith.addf %159, %166 : vector<128x64xf32>
    %c8_149 = arith.constant 8 : index
    %c0_150 = arith.constant 0 : index
    %c0_151 = arith.constant 0 : index
    %168 = vector.load %arg6[%c8_149, %c0_150, %c0_151] : memref<9x128x128xbf16, #tpu.memory_space<vmem>>, vector<1x128x128xbf16>
    %169 = vector.shape_cast %168 : vector<1x128x128xbf16> to vector<128x128xbf16>
    %cst_152 = arith.constant dense<0.000000e+00> : vector<128x64xf32>
    %170 = tpu.matmul %169, %106, %cst_152 {dimension_numbers = #tpu.dot_dimension_numbers<[1], [0], [0], [1], [0, 0, 1, 1], [], []>} : vector<128x128xbf16>, vector<128x64xbf16>, vector<128x64xf32> -> vector<128x64xf32>
    %171 = arith.truncf %170 : vector<128x64xf32> to vector<128x64xbf16>
    %c0_153 = arith.constant 0 : index
    %c8_154 = arith.constant 8 : index
    %c0_155 = arith.constant 0 : index
    %c0_156 = arith.constant 0 : index
    %172 = vector.load %arg3[%c0_153, %c8_154, %c0_155, %c0_156] : memref<1x9x64x64xbf16, #tpu.memory_space<vmem>>, vector<1x1x64x64xbf16>
    %173 = vector.shape_cast %172 : vector<1x1x64x64xbf16> to vector<64x64xbf16>
    %cst_157 = arith.constant dense<0.000000e+00> : vector<128x64xf32>
    %174 = tpu.matmul %171, %173, %cst_157 {dimension_numbers = #tpu.dot_dimension_numbers<[1], [0], [0], [1], [0, 0, 1, 1], [], []>} : vector<128x64xbf16>, vector<64x64xbf16>, vector<128x64xf32> -> vector<128x64xf32>
    %175 = arith.addf %167, %174 : vector<128x64xf32>
    %cst_158 = arith.constant dense<0.000000e+00> : vector<64xf32>
    %176 = vector.multi_reduction <add>, %175, %cst_158 [0] : vector<128x64xf32> to vector<64xf32>
    %177 = vector.shape_cast %176 : vector<64xf32> to vector<1x64xf32>
    %cst_159 = arith.constant 1.280000e+02 : f32
    %178 = vector.broadcast %cst_159 : f32 to vector<1x64xf32>
    %179 = arith.divf %177, %178 : vector<1x64xf32>
    %180 = vector.broadcast %179 : vector<1x64xf32> to vector<128x64xf32>
    %181 = arith.subf %175, %180 : vector<128x64xf32>
    %182 = arith.mulf %181, %181 : vector<128x64xf32>
    %cst_160 = arith.constant dense<0.000000e+00> : vector<64xf32>
    %183 = vector.multi_reduction <add>, %182, %cst_160 [0] : vector<128x64xf32> to vector<64xf32>
    %184 = vector.shape_cast %183 : vector<64xf32> to vector<1x64xf32>
    %cst_161 = arith.constant 1.280000e+02 : f32
    %185 = vector.broadcast %cst_161 : f32 to vector<1x64xf32>
    %186 = arith.divf %184, %185 : vector<1x64xf32>
    %187 = vector.broadcast %179 : vector<1x64xf32> to vector<128x64xf32>
    %188 = arith.subf %175, %187 : vector<128x64xf32>
    %cst_162 = arith.constant 9.99999974E-6 : f32
    %189 = vector.broadcast %cst_162 : f32 to vector<1x64xf32>
    %190 = arith.addf %186, %189 : vector<1x64xf32>
    %191 = math.rsqrt %190 : vector<1x64xf32>
    %192 = vector.broadcast %191 : vector<1x64xf32> to vector<128x64xf32>
    %193 = arith.mulf %188, %192 : vector<128x64xf32>
    %194 = vector.broadcast %9 : vector<1x64xf32> to vector<128x64xf32>
    %195 = arith.mulf %193, %194 : vector<128x64xf32>
    %196 = vector.broadcast %10 : vector<1x64xf32> to vector<128x64xf32>
    %197 = arith.addf %195, %196 : vector<128x64xf32>
    %c0_163 = arith.constant 0 : index
    %c0_164 = arith.constant 0 : index
    %c0_165 = arith.constant 0 : index
    %198 = vector.load %arg4[%c0_163, %c0_164, %c0_165] : memref<1x64x64xbf16, #tpu.memory_space<vmem>>, vector<1x64x64xbf16>
    %199 = vector.shape_cast %198 : vector<1x64x64xbf16> to vector<64x64xbf16>
    %cst_166 = arith.constant dense<0.000000e+00> : vector<128x64xf32>
    %200 = tpu.matmul %4, %199, %cst_166 {dimension_numbers = #tpu.dot_dimension_numbers<[1], [0], [0], [1], [0, 0, 1, 1], [], []>} : vector<128x64xbf16>, vector<64x64xbf16>, vector<128x64xf32> -> vector<128x64xf32>
    %cst_167 = arith.constant dense<0.000000e+00> : vector<64xf32>
    %201 = vector.multi_reduction <add>, %200, %cst_167 [0] : vector<128x64xf32> to vector<64xf32>
    %202 = vector.shape_cast %201 : vector<64xf32> to vector<1x64xf32>
    %cst_168 = arith.constant 1.280000e+02 : f32
    %203 = vector.broadcast %cst_168 : f32 to vector<1x64xf32>
    %204 = arith.divf %202, %203 : vector<1x64xf32>
    %205 = vector.broadcast %204 : vector<1x64xf32> to vector<128x64xf32>
    %206 = arith.subf %200, %205 : vector<128x64xf32>
    %207 = arith.mulf %206, %206 : vector<128x64xf32>
    %cst_169 = arith.constant dense<0.000000e+00> : vector<64xf32>
    %208 = vector.multi_reduction <add>, %207, %cst_169 [0] : vector<128x64xf32> to vector<64xf32>
    %209 = vector.shape_cast %208 : vector<64xf32> to vector<1x64xf32>
    %cst_170 = arith.constant 1.280000e+02 : f32
    %210 = vector.broadcast %cst_170 : f32 to vector<1x64xf32>
    %211 = arith.divf %209, %210 : vector<1x64xf32>
    %212 = vector.broadcast %204 : vector<1x64xf32> to vector<128x64xf32>
    %213 = arith.subf %200, %212 : vector<128x64xf32>
    %cst_171 = arith.constant 9.99999974E-6 : f32
    %214 = vector.broadcast %cst_171 : f32 to vector<1x64xf32>
    %215 = arith.addf %211, %214 : vector<1x64xf32>
    %216 = math.rsqrt %215 : vector<1x64xf32>
    %217 = vector.broadcast %216 : vector<1x64xf32> to vector<128x64xf32>
    %218 = arith.mulf %213, %217 : vector<128x64xf32>
    %219 = vector.broadcast %11 : vector<1x64xf32> to vector<128x64xf32>
    %220 = arith.mulf %218, %219 : vector<128x64xf32>
    %221 = vector.broadcast %12 : vector<1x64xf32> to vector<128x64xf32>
    %222 = arith.addf %220, %221 : vector<128x64xf32>
    %223 = arith.index_cast %arg0 : i32 to index
    %224 = memref.load %arg1[%223] : memref<14xi32, #tpu.memory_space<smem>>
    %c1_i32 = arith.constant 1 : i32
    %225 = arith.cmpi eq, %224, %c1_i32 : i32
    %226 = arith.extui %225 : i1 to i32
    %227 = arith.sitofp %226 : i32 to f32
    %228 = vector.broadcast %227 : f32 to vector<128x64xf32>
    %229 = arith.mulf %228, %222 : vector<128x64xf32>
    %cst_172 = arith.constant 1.000000e+00 : f32
    %230 = arith.subf %cst_172, %227 : f32
    %231 = vector.broadcast %230 : f32 to vector<128x64xf32>
    %232 = arith.mulf %231, %3 : vector<128x64xf32>
    %233 = arith.addf %229, %232 : vector<128x64xf32>
    %234 = arith.addf %197, %233 : vector<128x64xf32>
    %cst_173 = arith.constant 0.000000e+00 : f32
    %235 = vector.broadcast %cst_173 : f32 to vector<128x64xf32>
    %236 = arith.maximumf %234, %235 : vector<128x64xf32>
    %c0_174 = arith.constant 0 : index
    %c0_175 = arith.constant 0 : index
    %237 = vector.load %arg11[%c0_174, %c0_175] : memref<128x64xf32, #tpu.memory_space<vmem>>, vector<128x64xf32>
    tpu.vector_store %arg11[%c0_174, %c0_175], %236 {strides = array<i32>} : memref<128x64xf32, #tpu.memory_space<vmem>>, vector<128x64xf32>,
    %c13_i32 = arith.constant 13 : i32
    %238 = arith.cmpi eq, %arg0, %c13_i32 : i32
    %239 = arith.extui %238 : i1 to i32
    %c0_i32_176 = arith.constant 0 : i32
    %240 = arith.cmpi ne, %239, %c0_i32_176 : i32
    scf.if %240 {
      %c0_177 = arith.constant 0 : index
      %c0_178 = arith.constant 0 : index
      %241 = vector.load %arg10[%c0_177, %c0_178] : memref<128x64xf32, #tpu.memory_space<vmem>>, vector<128x64xf32>
      tpu.vector_store %arg10[%c0_177, %c0_178], %236 {strides = array<i32>} : memref<128x64xf32, #tpu.memory_space<vmem>>, vector<128x64xf32>,
    } else {
    }
    return
  }
  func.func @transform_0(%arg0: i32, %arg1: memref<14xi32, #tpu.memory_space<smem>>) -> (i32, i32, i32, i32) {
    %c0_i32 = arith.constant 0 : i32
    %c0_i32_0 = arith.constant 0 : i32
    %c0_i32_1 = arith.constant 0 : i32
    %c0_i32_2 = arith.constant 0 : i32
    return %arg0, %c0_i32, %c0_i32_0, %c0_i32_1 : i32, i32, i32, i32
  }
  func.func @transform_1(%arg0: i32, %arg1: memref<14xi32, #tpu.memory_space<smem>>) -> (i32, i32, i32, i32) {
    %c0_i32 = arith.constant 0 : i32
    %c0_i32_0 = arith.constant 0 : i32
    %c0_i32_1 = arith.constant 0 : i32
    %c0_i32_2 = arith.constant 0 : i32
    return %arg0, %c0_i32, %c0_i32_0, %c0_i32_1 : i32, i32, i32, i32
  }
  func.func @transform_2(%arg0: i32, %arg1: memref<14xi32, #tpu.memory_space<smem>>) -> (i32, i32, i32) {
    %c0_i32 = arith.constant 0 : i32
    %c0_i32_0 = arith.constant 0 : i32
    %c0_i32_1 = arith.constant 0 : i32
    return %arg0, %c0_i32, %c0_i32_0 : i32, i32, i32
  }
  func.func @transform_3(%arg0: i32, %arg1: memref<14xi32, #tpu.memory_space<smem>>) -> (i32, i32, i32) {
    %c0_i32 = arith.constant 0 : i32
    %c0_i32_0 = arith.constant 0 : i32
    %c0_i32_1 = arith.constant 0 : i32
    return %arg0, %c0_i32, %c0_i32_0 : i32, i32, i32
  }
  func.func @transform_4(%arg0: i32, %arg1: memref<14xi32, #tpu.memory_space<smem>>) -> (i32, i32, i32) {
    %c0_i32 = arith.constant 0 : i32
    %c0_i32_0 = arith.constant 0 : i32
    %c0_i32_1 = arith.constant 0 : i32
    %c0_i32_2 = arith.constant 0 : i32
    return %c0_i32, %c0_i32_0, %c0_i32_1 : i32, i32, i32
  }
  func.func @transform_5(%arg0: i32, %arg1: memref<14xi32, #tpu.memory_space<smem>>) -> (i32, i32) {
    %c0_i32 = arith.constant 0 : i32
    %c0_i32_0 = arith.constant 0 : i32
    %c0_i32_1 = arith.constant 0 : i32
    return %c0_i32, %c0_i32_0 : i32, i32
  }
  func.func @transform_6(%arg0: i32, %arg1: memref<14xi32, #tpu.memory_space<smem>>) -> (i32, i32) {
    %c0_i32 = arith.constant 0 : i32
    %c0_i32_0 = arith.constant 0 : i32
    %c0_i32_1 = arith.constant 0 : i32
    return %c0_i32, %c0_i32_0 : i32, i32
  }
  func.func @transform_7(%arg0: i32, %arg1: memref<14xi32, #tpu.memory_space<smem>>) -> (i32, i32) {
    %c0_i32 = arith.constant 0 : i32
    %c0_i32_0 = arith.constant 0 : i32
    %c0_i32_1 = arith.constant 0 : i32
    return %c0_i32, %c0_i32_0 : i32, i32
  }
  func.func @transform_8(%arg0: i32, %arg1: memref<14xi32, #tpu.memory_space<smem>>) -> (i32, i32) {
    %c0_i32 = arith.constant 0 : i32
    %c0_i32_0 = arith.constant 0 : i32
    %c0_i32_1 = arith.constant 0 : i32
    return %c0_i32, %c0_i32_0 : i32, i32
  }
}

module attributes {stable_mosaic.version = 11 : i64} {
  func.func @kernel(%arg0: i32, %arg1: memref<2x64x64xf32, #tpu.memory_space<vmem>>, %arg2: memref<2x64xf32, #tpu.memory_space<vmem>>, %arg3: memref<2x2xf32, #tpu.memory_space<vmem>>, %arg4: memref<128x64xf32, #tpu.memory_space<vmem>>, %arg5: memref<1x64xf32, #tpu.memory_space<vmem>>, %arg6: memref<1x64xf32, #tpu.memory_space<vmem>>, %arg7: memref<2x1xf32, #tpu.memory_space<vmem>>, %arg8: memref<64x64xf32, #tpu.memory_space<vmem>>, %arg9: memref<1x64xf32, #tpu.memory_space<vmem>>, %arg10: memref<64x1xf32, #tpu.memory_space<vmem>>, %arg11: memref<1x1xf32, #tpu.memory_space<vmem>>, %arg12: memref<2x64xf32, #tpu.memory_space<vmem>>, %arg13: memref<2x1xf32, #tpu.memory_space<vmem>>) attributes {dimension_semantics = [#tpu.dimension_semantics<arbitrary>], iteration_bounds = array<i64: 1>, scalar_prefetch = 0 : i64, scratch_operands = 0 : i64, tpu.core_type = #tpu.core_type<tc>, window_params = [{pipeline_mode = #tpu.pipeline_mode<synchronous>, transform_indices = @transform_0, window_bounds = array<i64: 2, 64, 64>}, {pipeline_mode = #tpu.pipeline_mode<synchronous>, transform_indices = @transform_1, window_bounds = array<i64: 2, 64>}, {pipeline_mode = #tpu.pipeline_mode<synchronous>, transform_indices = @transform_2, window_bounds = array<i64: 2, 2>}, {pipeline_mode = #tpu.pipeline_mode<synchronous>, transform_indices = @transform_3, window_bounds = array<i64: 128, 64>}, {pipeline_mode = #tpu.pipeline_mode<synchronous>, transform_indices = @transform_4, window_bounds = array<i64: 1, 64>}, {pipeline_mode = #tpu.pipeline_mode<synchronous>, transform_indices = @transform_5, window_bounds = array<i64: 1, 64>}, {pipeline_mode = #tpu.pipeline_mode<synchronous>, transform_indices = @transform_6, window_bounds = array<i64: 2, 1>}, {pipeline_mode = #tpu.pipeline_mode<synchronous>, transform_indices = @transform_7, window_bounds = array<i64: 64, 64>}, {pipeline_mode = #tpu.pipeline_mode<synchronous>, transform_indices = @transform_8, window_bounds = array<i64: 1, 64>}, {pipeline_mode = #tpu.pipeline_mode<synchronous>, transform_indices = @transform_9, window_bounds = array<i64: 64, 1>}, {pipeline_mode = #tpu.pipeline_mode<synchronous>, transform_indices = @transform_10, window_bounds = array<i64: 1, 1>}, {pipeline_mode = #tpu.pipeline_mode<synchronous>, transform_indices = @transform_11, window_bounds = array<i64: 2, 64>}, {pipeline_mode = #tpu.pipeline_mode<synchronous>, transform_indices = @transform_12, window_bounds = array<i64: 2, 1>}]} {
    %c0 = arith.constant 0 : index
    %c0_0 = arith.constant 0 : index
    %c0_1 = arith.constant 0 : index
    %0 = vector.load %arg1[%c0, %c0_0, %c0_1] : memref<2x64x64xf32, #tpu.memory_space<vmem>>, vector<2x64x64xf32>
    %c0_2 = arith.constant 0 : index
    %c0_3 = arith.constant 0 : index
    %1 = vector.load %arg2[%c0_2, %c0_3] : memref<2x64xf32, #tpu.memory_space<vmem>>, vector<2x64xf32>
    %2 = vector.extract_strided_slice %1 {offsets = [0, 0], sizes = [1, 64], strides = [1, 1]} : vector<2x64xf32> to vector<1x64xf32>
    %3 = vector.shape_cast %2 : vector<1x64xf32> to vector<1x1x64xf32>
    %4 = vector.broadcast %3 : vector<1x1x64xf32> to vector<2x64x64xf32>
    %5 = arith.mulf %0, %4 : vector<2x64x64xf32>
    %cst = arith.constant dense<0.000000e+00> : vector<2x64xf32>
    %6 = vector.multi_reduction <add>, %5, %cst [2] : vector<2x64x64xf32> to vector<2x64xf32>
    %7 = vector.extract_strided_slice %1 {offsets = [1, 0], sizes = [1, 64], strides = [1, 1]} : vector<2x64xf32> to vector<1x64xf32>
    %8 = vector.shape_cast %7 : vector<1x64xf32> to vector<1x1x64xf32>
    %9 = vector.broadcast %8 : vector<1x1x64xf32> to vector<2x64x64xf32>
    %10 = arith.mulf %0, %9 : vector<2x64x64xf32>
    %cst_4 = arith.constant dense<0.000000e+00> : vector<2x64xf32>
    %11 = vector.multi_reduction <add>, %10, %cst_4 [2] : vector<2x64x64xf32> to vector<2x64xf32>
    %c0_5 = arith.constant 0 : index
    %c0_6 = arith.constant 0 : index
    %12 = vector.load %arg3[%c0_5, %c0_6] : memref<2x2xf32, #tpu.memory_space<vmem>>, vector<2x2xf32>
    %13 = vector.extract_strided_slice %12 {offsets = [0, 0], sizes = [1, 1], strides = [1, 1]} : vector<2x2xf32> to vector<1x1xf32>
    %14 = vector.extract_strided_slice %12 {offsets = [1, 0], sizes = [1, 1], strides = [1, 1]} : vector<2x2xf32> to vector<1x1xf32>
    %cst_7 = arith.constant dense<0.000000e+00> : vector<2xf32>
    %15 = vector.multi_reduction <add>, %6, %cst_7 [1] : vector<2x64xf32> to vector<2xf32>
    %16 = vector.shape_cast %15 : vector<2xf32> to vector<2x1xf32>
    %cst_8 = arith.constant 6.400000e+01 : f32
    %17 = vector.broadcast %cst_8 : f32 to vector<2x1xf32>
    %18 = arith.divf %16, %17 : vector<2x1xf32>
    %cst_9 = arith.constant dense<0.000000e+00> : vector<1xf32>
    %19 = vector.multi_reduction <add>, %18, %cst_9 [0] : vector<2x1xf32> to vector<1xf32>
    %20 = vector.shape_cast %19 : vector<1xf32> to vector<1x1xf32>
    %cst_10 = arith.constant 2.000000e+00 : f32
    %21 = vector.broadcast %cst_10 : f32 to vector<1x1xf32>
    %22 = arith.divf %20, %21 : vector<1x1xf32>
    %23 = vector.broadcast %22 : vector<1x1xf32> to vector<2x64xf32>
    %24 = arith.subf %6, %23 : vector<2x64xf32>
    %25 = arith.mulf %24, %24 : vector<2x64xf32>
    %cst_11 = arith.constant dense<0.000000e+00> : vector<2xf32>
    %26 = vector.multi_reduction <add>, %25, %cst_11 [1] : vector<2x64xf32> to vector<2xf32>
    %27 = vector.shape_cast %26 : vector<2xf32> to vector<2x1xf32>
    %cst_12 = arith.constant 6.400000e+01 : f32
    %28 = vector.broadcast %cst_12 : f32 to vector<2x1xf32>
    %29 = arith.divf %27, %28 : vector<2x1xf32>
    %cst_13 = arith.constant dense<0.000000e+00> : vector<1xf32>
    %30 = vector.multi_reduction <add>, %29, %cst_13 [0] : vector<2x1xf32> to vector<1xf32>
    %31 = vector.shape_cast %30 : vector<1xf32> to vector<1x1xf32>
    %cst_14 = arith.constant 2.000000e+00 : f32
    %32 = vector.broadcast %cst_14 : f32 to vector<1x1xf32>
    %33 = arith.divf %31, %32 : vector<1x1xf32>
    %34 = vector.broadcast %22 : vector<1x1xf32> to vector<2x64xf32>
    %35 = arith.subf %6, %34 : vector<2x64xf32>
    %cst_15 = arith.constant 9.99999974E-6 : f32
    %36 = vector.broadcast %cst_15 : f32 to vector<1x1xf32>
    %37 = arith.addf %33, %36 : vector<1x1xf32>
    %38 = math.rsqrt %37 : vector<1x1xf32>
    %39 = vector.broadcast %38 : vector<1x1xf32> to vector<2x64xf32>
    %40 = arith.mulf %35, %39 : vector<2x64xf32>
    %41 = vector.broadcast %13 : vector<1x1xf32> to vector<2x64xf32>
    %42 = arith.mulf %40, %41 : vector<2x64xf32>
    %43 = vector.broadcast %14 : vector<1x1xf32> to vector<2x64xf32>
    %44 = arith.addf %42, %43 : vector<2x64xf32>
    %cst_16 = arith.constant 0.000000e+00 : f32
    %45 = vector.broadcast %cst_16 : f32 to vector<2x64xf32>
    %46 = arith.maximumf %44, %45 : vector<2x64xf32>
    %47 = vector.extract_strided_slice %12 {offsets = [0, 1], sizes = [1, 1], strides = [1, 1]} : vector<2x2xf32> to vector<1x1xf32>
    %48 = vector.extract_strided_slice %12 {offsets = [1, 1], sizes = [1, 1], strides = [1, 1]} : vector<2x2xf32> to vector<1x1xf32>
    %cst_17 = arith.constant dense<0.000000e+00> : vector<2xf32>
    %49 = vector.multi_reduction <add>, %11, %cst_17 [1] : vector<2x64xf32> to vector<2xf32>
    %50 = vector.shape_cast %49 : vector<2xf32> to vector<2x1xf32>
    %cst_18 = arith.constant 6.400000e+01 : f32
    %51 = vector.broadcast %cst_18 : f32 to vector<2x1xf32>
    %52 = arith.divf %50, %51 : vector<2x1xf32>
    %cst_19 = arith.constant dense<0.000000e+00> : vector<1xf32>
    %53 = vector.multi_reduction <add>, %52, %cst_19 [0] : vector<2x1xf32> to vector<1xf32>
    %54 = vector.shape_cast %53 : vector<1xf32> to vector<1x1xf32>
    %cst_20 = arith.constant 2.000000e+00 : f32
    %55 = vector.broadcast %cst_20 : f32 to vector<1x1xf32>
    %56 = arith.divf %54, %55 : vector<1x1xf32>
    %57 = vector.broadcast %56 : vector<1x1xf32> to vector<2x64xf32>
    %58 = arith.subf %11, %57 : vector<2x64xf32>
    %59 = arith.mulf %58, %58 : vector<2x64xf32>
    %cst_21 = arith.constant dense<0.000000e+00> : vector<2xf32>
    %60 = vector.multi_reduction <add>, %59, %cst_21 [1] : vector<2x64xf32> to vector<2xf32>
    %61 = vector.shape_cast %60 : vector<2xf32> to vector<2x1xf32>
    %cst_22 = arith.constant 6.400000e+01 : f32
    %62 = vector.broadcast %cst_22 : f32 to vector<2x1xf32>
    %63 = arith.divf %61, %62 : vector<2x1xf32>
    %cst_23 = arith.constant dense<0.000000e+00> : vector<1xf32>
    %64 = vector.multi_reduction <add>, %63, %cst_23 [0] : vector<2x1xf32> to vector<1xf32>
    %65 = vector.shape_cast %64 : vector<1xf32> to vector<1x1xf32>
    %cst_24 = arith.constant 2.000000e+00 : f32
    %66 = vector.broadcast %cst_24 : f32 to vector<1x1xf32>
    %67 = arith.divf %65, %66 : vector<1x1xf32>
    %68 = vector.broadcast %56 : vector<1x1xf32> to vector<2x64xf32>
    %69 = arith.subf %11, %68 : vector<2x64xf32>
    %cst_25 = arith.constant 9.99999974E-6 : f32
    %70 = vector.broadcast %cst_25 : f32 to vector<1x1xf32>
    %71 = arith.addf %67, %70 : vector<1x1xf32>
    %72 = math.rsqrt %71 : vector<1x1xf32>
    %73 = vector.broadcast %72 : vector<1x1xf32> to vector<2x64xf32>
    %74 = arith.mulf %69, %73 : vector<2x64xf32>
    %75 = vector.broadcast %47 : vector<1x1xf32> to vector<2x64xf32>
    %76 = arith.mulf %74, %75 : vector<2x64xf32>
    %77 = vector.broadcast %48 : vector<1x1xf32> to vector<2x64xf32>
    %78 = arith.addf %76, %77 : vector<2x64xf32>
    %cst_26 = arith.constant 0.000000e+00 : f32
    %79 = vector.broadcast %cst_26 : f32 to vector<2x64xf32>
    %80 = arith.maximumf %78, %79 : vector<2x64xf32>
    %c0_27 = arith.constant 0 : index
    %c0_28 = arith.constant 0 : index
    %81 = vector.load %arg4[%c0_27, %c0_28] : memref<128x64xf32, #tpu.memory_space<vmem>>, vector<128x64xf32>
    %82 = vector.extract_strided_slice %81 {offsets = [0, 0], sizes = [64, 64], strides = [1, 1]} : vector<128x64xf32> to vector<64x64xf32>
    %cst_29 = arith.constant dense<0.000000e+00> : vector<2x64xf32>
    %83 = tpu.matmul %46, %82, %cst_29 {dimension_numbers = #tpu.dot_dimension_numbers<[1], [0], [0], [1], [0, 0, 1, 1], [], []>} : vector<2x64xf32>, vector<64x64xf32>, vector<2x64xf32> -> vector<2x64xf32>
    %84 = vector.extract_strided_slice %81 {offsets = [64, 0], sizes = [64, 64], strides = [1, 1]} : vector<128x64xf32> to vector<64x64xf32>
    %cst_30 = arith.constant dense<0.000000e+00> : vector<2x64xf32>
    %85 = tpu.matmul %80, %84, %cst_30 {dimension_numbers = #tpu.dot_dimension_numbers<[1], [0], [0], [1], [0, 0, 1, 1], [], []>} : vector<2x64xf32>, vector<64x64xf32>, vector<2x64xf32> -> vector<2x64xf32>
    %86 = arith.addf %83, %85 : vector<2x64xf32>
    %c0_31 = arith.constant 0 : index
    %c0_32 = arith.constant 0 : index
    %87 = vector.load %arg5[%c0_31, %c0_32] : memref<1x64xf32, #tpu.memory_space<vmem>>, vector<1x64xf32>
    %88 = vector.broadcast %87 : vector<1x64xf32> to vector<2x64xf32>
    %89 = arith.addf %86, %88 : vector<2x64xf32>
    %cst_33 = arith.constant dense<0xFF800000> : vector<2xf32>
    %90 = vector.multi_reduction <maximumf>, %89, %cst_33 [1] : vector<2x64xf32> to vector<2xf32>
    %91 = vector.shape_cast %90 : vector<2xf32> to vector<2x1xf32>
    %92 = vector.broadcast %91 : vector<2x1xf32> to vector<2x64xf32>
    %93 = arith.subf %89, %92 : vector<2x64xf32>
    %94 = math.exp %93 : vector<2x64xf32>
    %cst_34 = arith.constant dense<0.000000e+00> : vector<2xf32>
    %95 = vector.multi_reduction <add>, %94, %cst_34 [1] : vector<2x64xf32> to vector<2xf32>
    %96 = vector.shape_cast %95 : vector<2xf32> to vector<2x1xf32>
    %97 = math.log %96 : vector<2x1xf32>
    %98 = vector.broadcast %97 : vector<2x1xf32> to vector<2x64xf32>
    %99 = arith.subf %93, %98 : vector<2x64xf32>
    %c0_35 = arith.constant 0 : index
    %c0_36 = arith.constant 0 : index
    %100 = vector.load %arg12[%c0_35, %c0_36] : memref<2x64xf32, #tpu.memory_space<vmem>>, vector<2x64xf32>
    tpu.vector_store %arg12[%c0_35, %c0_36], %99 {strides = array<i32>} : memref<2x64xf32, #tpu.memory_space<vmem>>, vector<2x64xf32>,
    %c0_37 = arith.constant 0 : index
    %c0_38 = arith.constant 0 : index
    %101 = vector.load %arg6[%c0_37, %c0_38] : memref<1x64xf32, #tpu.memory_space<vmem>>, vector<1x64xf32>
    %102 = vector.shape_cast %101 : vector<1x64xf32> to vector<1x1x64xf32>
    %103 = vector.broadcast %102 : vector<1x1x64xf32> to vector<2x64x64xf32>
    %104 = arith.mulf %0, %103 : vector<2x64x64xf32>
    %cst_39 = arith.constant dense<0.000000e+00> : vector<2x64xf32>
    %105 = vector.multi_reduction <add>, %104, %cst_39 [2] : vector<2x64x64xf32> to vector<2x64xf32>
    %c0_40 = arith.constant 0 : index
    %c0_41 = arith.constant 0 : index
    %106 = vector.load %arg7[%c0_40, %c0_41] : memref<2x1xf32, #tpu.memory_space<vmem>>, vector<2x1xf32>
    %107 = vector.extract_strided_slice %106 {offsets = [0, 0], sizes = [1, 1], strides = [1, 1]} : vector<2x1xf32> to vector<1x1xf32>
    %108 = vector.extract_strided_slice %106 {offsets = [1, 0], sizes = [1, 1], strides = [1, 1]} : vector<2x1xf32> to vector<1x1xf32>
    %cst_42 = arith.constant dense<0.000000e+00> : vector<2xf32>
    %109 = vector.multi_reduction <add>, %105, %cst_42 [1] : vector<2x64xf32> to vector<2xf32>
    %110 = vector.shape_cast %109 : vector<2xf32> to vector<2x1xf32>
    %cst_43 = arith.constant 6.400000e+01 : f32
    %111 = vector.broadcast %cst_43 : f32 to vector<2x1xf32>
    %112 = arith.divf %110, %111 : vector<2x1xf32>
    %cst_44 = arith.constant dense<0.000000e+00> : vector<1xf32>
    %113 = vector.multi_reduction <add>, %112, %cst_44 [0] : vector<2x1xf32> to vector<1xf32>
    %114 = vector.shape_cast %113 : vector<1xf32> to vector<1x1xf32>
    %cst_45 = arith.constant 2.000000e+00 : f32
    %115 = vector.broadcast %cst_45 : f32 to vector<1x1xf32>
    %116 = arith.divf %114, %115 : vector<1x1xf32>
    %117 = vector.broadcast %116 : vector<1x1xf32> to vector<2x64xf32>
    %118 = arith.subf %105, %117 : vector<2x64xf32>
    %119 = arith.mulf %118, %118 : vector<2x64xf32>
    %cst_46 = arith.constant dense<0.000000e+00> : vector<2xf32>
    %120 = vector.multi_reduction <add>, %119, %cst_46 [1] : vector<2x64xf32> to vector<2xf32>
    %121 = vector.shape_cast %120 : vector<2xf32> to vector<2x1xf32>
    %cst_47 = arith.constant 6.400000e+01 : f32
    %122 = vector.broadcast %cst_47 : f32 to vector<2x1xf32>
    %123 = arith.divf %121, %122 : vector<2x1xf32>
    %cst_48 = arith.constant dense<0.000000e+00> : vector<1xf32>
    %124 = vector.multi_reduction <add>, %123, %cst_48 [0] : vector<2x1xf32> to vector<1xf32>
    %125 = vector.shape_cast %124 : vector<1xf32> to vector<1x1xf32>
    %cst_49 = arith.constant 2.000000e+00 : f32
    %126 = vector.broadcast %cst_49 : f32 to vector<1x1xf32>
    %127 = arith.divf %125, %126 : vector<1x1xf32>
    %128 = vector.broadcast %116 : vector<1x1xf32> to vector<2x64xf32>
    %129 = arith.subf %105, %128 : vector<2x64xf32>
    %cst_50 = arith.constant 9.99999974E-6 : f32
    %130 = vector.broadcast %cst_50 : f32 to vector<1x1xf32>
    %131 = arith.addf %127, %130 : vector<1x1xf32>
    %132 = math.rsqrt %131 : vector<1x1xf32>
    %133 = vector.broadcast %132 : vector<1x1xf32> to vector<2x64xf32>
    %134 = arith.mulf %129, %133 : vector<2x64xf32>
    %135 = vector.broadcast %107 : vector<1x1xf32> to vector<2x64xf32>
    %136 = arith.mulf %134, %135 : vector<2x64xf32>
    %137 = vector.broadcast %108 : vector<1x1xf32> to vector<2x64xf32>
    %138 = arith.addf %136, %137 : vector<2x64xf32>
    %cst_51 = arith.constant 0.000000e+00 : f32
    %139 = vector.broadcast %cst_51 : f32 to vector<2x64xf32>
    %140 = arith.maximumf %138, %139 : vector<2x64xf32>
    %c0_52 = arith.constant 0 : index
    %c0_53 = arith.constant 0 : index
    %141 = vector.load %arg8[%c0_52, %c0_53] : memref<64x64xf32, #tpu.memory_space<vmem>>, vector<64x64xf32>
    %cst_54 = arith.constant dense<0.000000e+00> : vector<2x64xf32>
    %142 = tpu.matmul %140, %141, %cst_54 {dimension_numbers = #tpu.dot_dimension_numbers<[1], [0], [0], [1], [0, 0, 1, 1], [], []>} : vector<2x64xf32>, vector<64x64xf32>, vector<2x64xf32> -> vector<2x64xf32>
    %c0_55 = arith.constant 0 : index
    %c0_56 = arith.constant 0 : index
    %143 = vector.load %arg9[%c0_55, %c0_56] : memref<1x64xf32, #tpu.memory_space<vmem>>, vector<1x64xf32>
    %144 = vector.broadcast %143 : vector<1x64xf32> to vector<2x64xf32>
    %145 = arith.addf %142, %144 : vector<2x64xf32>
    %cst_57 = arith.constant 0.000000e+00 : f32
    %146 = vector.broadcast %cst_57 : f32 to vector<2x64xf32>
    %147 = arith.maximumf %145, %146 : vector<2x64xf32>
    %c0_58 = arith.constant 0 : index
    %c0_59 = arith.constant 0 : index
    %148 = vector.load %arg10[%c0_58, %c0_59] : memref<64x1xf32, #tpu.memory_space<vmem>>, vector<64x1xf32>
    %cst_60 = arith.constant dense<0.000000e+00> : vector<2x1xf32>
    %149 = tpu.matmul %147, %148, %cst_60 {dimension_numbers = #tpu.dot_dimension_numbers<[1], [0], [0], [1], [0, 0, 1, 1], [], []>} : vector<2x64xf32>, vector<64x1xf32>, vector<2x1xf32> -> vector<2x1xf32>
    %c0_61 = arith.constant 0 : index
    %c0_62 = arith.constant 0 : index
    %150 = vector.load %arg11[%c0_61, %c0_62] : memref<1x1xf32, #tpu.memory_space<vmem>>, vector<1x1xf32>
    %151 = vector.broadcast %150 : vector<1x1xf32> to vector<2x1xf32>
    %152 = arith.addf %149, %151 : vector<2x1xf32>
    %153 = math.tanh %152 : vector<2x1xf32>
    %c0_63 = arith.constant 0 : index
    %c0_64 = arith.constant 0 : index
    %154 = vector.load %arg13[%c0_63, %c0_64] : memref<2x1xf32, #tpu.memory_space<vmem>>, vector<2x1xf32>
    tpu.vector_store %arg13[%c0_63, %c0_64], %153 {strides = array<i32>} : memref<2x1xf32, #tpu.memory_space<vmem>>, vector<2x1xf32>,
    return
  }
  func.func @transform_0(%arg0: i32) -> (i32, i32, i32) {
    %c0_i32 = arith.constant 0 : i32
    %c0_i32_0 = arith.constant 0 : i32
    %c0_i32_1 = arith.constant 0 : i32
    %c0_i32_2 = arith.constant 0 : i32
    return %c0_i32, %c0_i32_0, %c0_i32_1 : i32, i32, i32
  }
  func.func @transform_1(%arg0: i32) -> (i32, i32) {
    %c0_i32 = arith.constant 0 : i32
    %c0_i32_0 = arith.constant 0 : i32
    %c0_i32_1 = arith.constant 0 : i32
    return %c0_i32, %c0_i32_0 : i32, i32
  }
  func.func @transform_2(%arg0: i32) -> (i32, i32) {
    %c0_i32 = arith.constant 0 : i32
    %c0_i32_0 = arith.constant 0 : i32
    %c0_i32_1 = arith.constant 0 : i32
    return %c0_i32, %c0_i32_0 : i32, i32
  }
  func.func @transform_3(%arg0: i32) -> (i32, i32) {
    %c0_i32 = arith.constant 0 : i32
    %c0_i32_0 = arith.constant 0 : i32
    %c0_i32_1 = arith.constant 0 : i32
    return %c0_i32, %c0_i32_0 : i32, i32
  }
  func.func @transform_4(%arg0: i32) -> (i32, i32) {
    %c0_i32 = arith.constant 0 : i32
    %c0_i32_0 = arith.constant 0 : i32
    %c0_i32_1 = arith.constant 0 : i32
    return %c0_i32, %c0_i32_0 : i32, i32
  }
  func.func @transform_5(%arg0: i32) -> (i32, i32) {
    %c0_i32 = arith.constant 0 : i32
    %c0_i32_0 = arith.constant 0 : i32
    %c0_i32_1 = arith.constant 0 : i32
    return %c0_i32, %c0_i32_0 : i32, i32
  }
  func.func @transform_6(%arg0: i32) -> (i32, i32) {
    %c0_i32 = arith.constant 0 : i32
    %c0_i32_0 = arith.constant 0 : i32
    %c0_i32_1 = arith.constant 0 : i32
    return %c0_i32, %c0_i32_0 : i32, i32
  }
  func.func @transform_7(%arg0: i32) -> (i32, i32) {
    %c0_i32 = arith.constant 0 : i32
    %c0_i32_0 = arith.constant 0 : i32
    %c0_i32_1 = arith.constant 0 : i32
    return %c0_i32, %c0_i32_0 : i32, i32
  }
  func.func @transform_8(%arg0: i32) -> (i32, i32) {
    %c0_i32 = arith.constant 0 : i32
    %c0_i32_0 = arith.constant 0 : i32
    %c0_i32_1 = arith.constant 0 : i32
    return %c0_i32, %c0_i32_0 : i32, i32
  }
  func.func @transform_9(%arg0: i32) -> (i32, i32) {
    %c0_i32 = arith.constant 0 : i32
    %c0_i32_0 = arith.constant 0 : i32
    %c0_i32_1 = arith.constant 0 : i32
    return %c0_i32, %c0_i32_0 : i32, i32
  }
  func.func @transform_10(%arg0: i32) -> (i32, i32) {
    %c0_i32 = arith.constant 0 : i32
    %c0_i32_0 = arith.constant 0 : i32
    %c0_i32_1 = arith.constant 0 : i32
    return %c0_i32, %c0_i32_0 : i32, i32
  }
  func.func @transform_11(%arg0: i32) -> (i32, i32) {
    %c0_i32 = arith.constant 0 : i32
    %c0_i32_0 = arith.constant 0 : i32
    %c0_i32_1 = arith.constant 0 : i32
    return %c0_i32, %c0_i32_0 : i32, i32
  }
  func.func @transform_12(%arg0: i32) -> (i32, i32) {
    %c0_i32 = arith.constant 0 : i32
    %c0_i32_0 = arith.constant 0 : i32
    %c0_i32_1 = arith.constant 0 : i32
    return %c0_i32, %c0_i32_0 : i32, i32
  }
}

</mosaic_0001>

<llo_original>
// kernel: net_forward.3
$region0: #{net_forward.3}
  #allocation0 [shape = 'u32[]', space=smem, size = 0x4, offset = 0x4, fixed_abs, tag = 'smem constant byte address 0x4 - core index']
  #allocation1 [shape = 'u32[144,128]{1,0:T(1,128)}', space=vmem, size = 0x12000, scoped, tag = 'internal scratch']
  #allocation2 [shape = 'f32[1,1]{1,0:T(1,128)S(1)}', space=vmem, size = 0x200, scoped, tag = 'scoped memory for net_forward.3']
  %s0 = inlined_call_operand.vmem [shape: f32[2,64,64], index: 0, kind: input, shape index: {}]
  %s1 = inlined_call_operand.vmem [shape: f32[2,64], index: 1, kind: input, shape index: {}]
  %s2 = inlined_call_operand.vmem [shape: f32[2,2], index: 2, kind: input, shape index: {}]
  %s3 = inlined_call_operand.vmem [shape: f32[128,64], index: 3, kind: input, shape index: {}]
  %s4 = inlined_call_operand.vmem [shape: f32[1,64], index: 4, kind: input, shape index: {}]
  %s5 = inlined_call_operand.vmem [shape: f32[1,64], index: 5, kind: input, shape index: {}]
  %s6 = inlined_call_operand.vmem [shape: f32[2,1], index: 6, kind: input, shape index: {}]
  %s7 = inlined_call_operand.vmem [shape: f32[64,64], index: 7, kind: input, shape index: {}]
  %s8 = inlined_call_operand.vmem [shape: f32[1,64], index: 8, kind: input, shape index: {}]
  %s9 = inlined_call_operand.vmem [shape: f32[64,1], index: 9, kind: input, shape index: {}]
  %s10 = inlined_call_operand.<no memory space> [shape: f32[1,1], index: 10, kind: input, shape index: {}]
  %s11 = inlined_call_operand.hbm [shape: f32[2,64], index: 11, kind: output, shape index: {0}]
  %s12 = inlined_call_operand.vmem [shape: f32[2,1], index: 12, kind: output, shape index: {1}]
  %13 = xla_tuple %s11, %s12
  %s14 = sld [smem:[#allocation0]]
  $region62: #{net_forward.3} parent=0
    _
  %s16 = ssub.s32 1, %s14
  %s17 = scalar_select 0, %s16, %s14
  %v18 = vstv %s10
  %19 = vst [vmem:[#allocation2] sm:$0x1] %v18
  $region1: #{net_forward.3} parent=0
    #allocation3 [shape = 'u8[1024]{0}', space=vmem, size = 0x400, scoped, tag = 'output window, operand 0, single buffered']
    #allocation4 [shape = 's32[1]{0}', space=sflag, size = 0x4, scoped, tag = 'scoped memory for net_forward.3']
    %20 = vsyncpa [#allocation4], 0
    // Predicated region
    $region2: #{net_forward.3} parent=1 // pred_check
      _
    $region3: #{net_forward.3} parent=1 // pred_check_branch
      %22 = sbr.rel (0) target = $region5
    $region4: #{net_forward.3} parent=1 // pred_region
      _
    $region5: #{net_forward.3} parent=1 // pred_fallthru
      _
    // Predicated region
    $region6: #{net_forward.3} parent=1 // pred_check
      _
    $region7: #{net_forward.3} parent=1 // pred_check_branch
      %24 = sbr.rel (0) target = $region9
    $region8: #{net_forward.3} parent=1 // pred_region
      _
    $region9: #{net_forward.3} parent=1 // pred_fallthru
      _
    // Predicated region
    $region10: #{net_forward.3} parent=1 // pred_check
      _
    $region11: #{net_forward.3} parent=1 // pred_check_branch
      %26 = sbr.rel (0) target = $region13
    $region12: #{net_forward.3} parent=1 // pred_region
      _
    $region13: #{net_forward.3} parent=1 // pred_fallthru
      _
    // Predicated region
    $region14: #{net_forward.3} parent=1 // pred_check
      _
    $region15: #{net_forward.3} parent=1 // pred_check_branch
      %28 = sbr.rel (0) target = $region17
    $region16: #{net_forward.3} parent=1 // pred_region
      _
    $region17: #{net_forward.3} parent=1 // pred_fallthru
      _
    // Predicated region
    $region18: #{net_forward.3} parent=1 // pred_check
      _
    $region19: #{net_forward.3} parent=1 // pred_check_branch
      %30 = sbr.rel (0) target = $region21
    $region20: #{net_forward.3} parent=1 // pred_region
      _
    $region21: #{net_forward.3} parent=1 // pred_fallthru
      _
    // Predicated region
    $region22: #{net_forward.3} parent=1 // pred_check
      _
    $region23: #{net_forward.3} parent=1 // pred_check_branch
      %32 = sbr.rel (0) target = $region25
    $region24: #{net_forward.3} parent=1 // pred_region
      _
    $region25: #{net_forward.3} parent=1 // pred_fallthru
      _
    // Predicated region
    $region26: #{net_forward.3} parent=1 // pred_check
      _
    $region27: #{net_forward.3} parent=1 // pred_check_branch
      %34 = sbr.rel (0) target = $region29
    $region28: #{net_forward.3} parent=1 // pred_region
      _
    $region29: #{net_forward.3} parent=1 // pred_fallthru
      _
    // Predicated region
    $region30: #{net_forward.3} parent=1 // pred_check
      _
    $region31: #{net_forward.3} parent=1 // pred_check_branch
      %36 = sbr.rel (0) target = $region33
    $region32: #{net_forward.3} parent=1 // pred_region
      _
    $region33: #{net_forward.3} parent=1 // pred_fallthru
      _
    // Predicated region
    $region34: #{net_forward.3} parent=1 // pred_check
      _
    $region35: #{net_forward.3} parent=1 // pred_check_branch
      %38 = sbr.rel (0) target = $region37
    $region36: #{net_forward.3} parent=1 // pred_region
      _
    $region37: #{net_forward.3} parent=1 // pred_fallthru
      _
    // Predicated region
    $region38: #{net_forward.3} parent=1 // pred_check
      _
    $region39: #{net_forward.3} parent=1 // pred_check_branch
      %40 = sbr.rel (0) target = $region41
    $region40: #{net_forward.3} parent=1 // pred_region
      _
    $region41: #{net_forward.3} parent=1 // pred_fallthru
      _
    // Predicated region
    $region42: #{net_forward.3} parent=1 // pred_check
      _
    $region43: #{net_forward.3} parent=1 // pred_check_branch
      %42 = sbr.rel (0) target = $region45
    $region44: #{net_forward.3} parent=1 // pred_region
      _
    $region45: #{net_forward.3} parent=1 // pred_fallthru
      _
    %v43 = vld [vmem:[%s0] sm:$0xff]
    %v44 = vld [vmem:[%s0 + $0x8] sm:$0xff]
    %v45 = vld [vmem:[%s0 + $0x10] sm:$0xff]
    %v46 = vld [vmem:[%s0 + $0x18] sm:$0xff]
    %v47 = vld [vmem:[%s0 + $0x20] sm:$0xff]
    %v48 = vld [vmem:[%s0 + $0x28] sm:$0xff]
    %v49 = vld [vmem:[%s0 + $0x30] sm:$0xff]
    %v50 = vld [vmem:[%s0 + $0x38] sm:$0xff]
    %v51 = vld [vmem:[%s0 + $0x40] sm:$0xff]
    %v52 = vld [vmem:[%s0 + $0x48] sm:$0xff]
    %v53 = vld [vmem:[%s0 + $0x50] sm:$0xff]
    %v54 = vld [vmem:[%s0 + $0x58] sm:$0xff]
    %v55 = vld [vmem:[%s0 + $0x60] sm:$0xff]
    %v56 = vld [vmem:[%s0 + $0x68] sm:$0xff]
    %v57 = vld [vmem:[%s0 + $0x70] sm:$0xff]
    %v58 = vld [vmem:[%s0 + $0x78] sm:$0xff]
    %v59 = vld [vmem:[%s1] sm:$0x3]
    %v60 = vlaneseq
    %v61 = vshrl.u32 %v60, 7
    %v62 = vsub.s32 0, %v61
    %v63 = vrot.slane %v59, %v62
    %v64 = vmul.f32 %v43, %v63
    %v65 = vmul.f32 %v44, %v63
    %v66 = vmul.f32 %v45, %v63
    %v67 = vmul.f32 %v46, %v63
    %v68 = vmul.f32 %v47, %v63
    %v69 = vmul.f32 %v48, %v63
    %v70 = vmul.f32 %v49, %v63
    %v71 = vmul.f32 %v50, %v63
    %v72 = vmul.f32 %v51, %v63
    %v73 = vmul.f32 %v52, %v63
    %v74 = vmul.f32 %v53, %v63
    %v75 = vmul.f32 %v54, %v63
    %v76 = vmul.f32 %v55, %v63
    %v77 = vmul.f32 %v56, %v63
    %v78 = vmul.f32 %v57, %v63
    %v79 = vmul.f32 %v58, %v63
    %vm80 = vcmask 523264
    %v81 = vsel %vm80, %v64, 0.0
    %82 = vadd.xlane.f32.xlu0 %v81
    %v83 = vpop.xlane.xlu0 %82
    %v84 = vsel %vm80, %v65, 0.0
    %85 = vadd.xlane.f32.xlu0 %v84
    %v86 = vpop.xlane.xlu0 %85
    %v87 = vsel %vm80, %v66, 0.0
    %88 = vadd.xlane.f32.xlu0 %v87
    %v89 = vpop.xlane.xlu0 %88
    %v90 = vsel %vm80, %v67, 0.0
    %91 = vadd.xlane.f32.xlu0 %v90
    %v92 = vpop.xlane.xlu0 %91
    %v93 = vsel %vm80, %v68, 0.0
    %94 = vadd.xlane.f32.xlu0 %v93
    %v95 = vpop.xlane.xlu0 %94
    %v96 = vsel %vm80, %v69, 0.0
    %97 = vadd.xlane.f32.xlu0 %v96
    %v98 = vpop.xlane.xlu0 %97
    %v99 = vsel %vm80, %v70, 0.0
    %100 = vadd.xlane.f32.xlu0 %v99
    %v101 = vpop.xlane.xlu0 %100
    %v102 = vsel %vm80, %v71, 0.0
    %103 = vadd.xlane.f32.xlu0 %v102
    %v104 = vpop.xlane.xlu0 %103
    %v105 = vsel %vm80, %v72, 0.0
    %106 = vadd.xlane.f32.xlu0 %v105
    %v107 = vpop.xlane.xlu0 %106
    %v108 = vsel %vm80, %v73, 0.0
    %109 = vadd.xlane.f32.xlu0 %v108
    %v110 = vpop.xlane.xlu0 %109
    %v111 = vsel %vm80, %v74, 0.0
    %112 = vadd.xlane.f32.xlu0 %v111
    %v113 = vpop.xlane.xlu0 %112
    %v114 = vsel %vm80, %v75, 0.0
    %115 = vadd.xlane.f32.xlu0 %v114
    %v116 = vpop.xlane.xlu0 %115
    %v117 = vsel %vm80, %v76, 0.0
    %118 = vadd.xlane.f32.xlu0 %v117
    %v119 = vpop.xlane.xlu0 %118
    %v120 = vsel %vm80, %v77, 0.0
    %121 = vadd.xlane.f32.xlu0 %v120
    %v122 = vpop.xlane.xlu0 %121
    %v123 = vsel %vm80, %v78, 0.0
    %124 = vadd.xlane.f32.xlu0 %v123
    %v125 = vpop.xlane.xlu0 %124
    %v126 = vsel %vm80, %v79, 0.0
    %127 = vadd.xlane.f32.xlu0 %v126
    %v128 = vpop.xlane.xlu0 %127
    %v129 = vlaneseq
    %v130 = vshrl.u32 %v129, 7
    %v131 = vsub.s32 1, %v130
    %v132 = vrot.slane %v59, %v131
    %v133 = vmul.f32 %v43, %v132
    %v134 = vmul.f32 %v44, %v132
    %v135 = vmul.f32 %v45, %v132
    %v136 = vmul.f32 %v46, %v132
    %v137 = vmul.f32 %v47, %v132
    %v138 = vmul.f32 %v48, %v132
    %v139 = vmul.f32 %v49, %v132
    %v140 = vmul.f32 %v50, %v132
    %v141 = vmul.f32 %v51, %v132
    %v142 = vmul.f32 %v52, %v132
    %v143 = vmul.f32 %v53, %v132
    %v144 = vmul.f32 %v54, %v132
    %v145 = vmul.f32 %v55, %v132
    %v146 = vmul.f32 %v56, %v132
    %v147 = vmul.f32 %v57, %v132
    %v148 = vmul.f32 %v58, %v132
    %v149 = vsel %vm80, %v133, 0.0
    %150 = vadd.xlane.f32.xlu0 %v149
    %v151 = vpop.xlane.xlu0 %150
    %v152 = vsel %vm80, %v134, 0.0
    %153 = vadd.xlane.f32.xlu0 %v152
    %v154 = vpop.xlane.xlu0 %153
    %v155 = vsel %vm80, %v135, 0.0
    %156 = vadd.xlane.f32.xlu0 %v155
    %v157 = vpop.xlane.xlu0 %156
    %v158 = vsel %vm80, %v136, 0.0
    %159 = vadd.xlane.f32.xlu0 %v158
    %v160 = vpop.xlane.xlu0 %159
    %v161 = vsel %vm80, %v137, 0.0
    %162 = vadd.xlane.f32.xlu0 %v161
    %v163 = vpop.xlane.xlu0 %162
    %v164 = vsel %vm80, %v138, 0.0
    %165 = vadd.xlane.f32.xlu0 %v164
    %v166 = vpop.xlane.xlu0 %165
    %v167 = vsel %vm80, %v139, 0.0
    %168 = vadd.xlane.f32.xlu0 %v167
    %v169 = vpop.xlane.xlu0 %168
    %v170 = vsel %vm80, %v140, 0.0
    %171 = vadd.xlane.f32.xlu0 %v170
    %v172 = vpop.xlane.xlu0 %171
    %v173 = vsel %vm80, %v141, 0.0
    %174 = vadd.xlane.f32.xlu0 %v173
    %v175 = vpop.xlane.xlu0 %174
    %v176 = vsel %vm80, %v142, 0.0
    %177 = vadd.xlane.f32.xlu0 %v176
    %v178 = vpop.xlane.xlu0 %177
    %v179 = vsel %vm80, %v143, 0.0
    %180 = vadd.xlane.f32.xlu0 %v179
    %v181 = vpop.xlane.xlu0 %180
    %v182 = vsel %vm80, %v144, 0.0
    %183 = vadd.xlane.f32.xlu0 %v182
    %v184 = vpop.xlane.xlu0 %183
    %v185 = vsel %vm80, %v145, 0.0
    %186 = vadd.xlane.f32.xlu0 %v185
    %v187 = vpop.xlane.xlu0 %186
    %v188 = vsel %vm80, %v146, 0.0
    %189 = vadd.xlane.f32.xlu0 %v188
    %v190 = vpop.xlane.xlu0 %189
    %v191 = vsel %vm80, %v147, 0.0
    %192 = vadd.xlane.f32.xlu0 %v191
    %v193 = vpop.xlane.xlu0 %192
    %v194 = vsel %vm80, %v148, 0.0
    %195 = vadd.xlane.f32.xlu0 %v194
    %v196 = vpop.xlane.xlu0 %195
    %v197 = vld [vmem:[%s2] sm:$0x3]
    %v214 = vlaneseq
    %v215 = vand.u32 %v214, 127
    %v216 = vlaneseq
    %v217 = vshrl.u32 %v216, 7
    %v218 = vsub.s32 %v215, %v217
    %v219 = vrot.slane %v83, %v218
    %v220 = vadd.s32 %v215, 4294967288
    %v221 = vlaneseq
    %v222 = vshrl.u32 %v221, 7
    %v223 = vsub.s32 %v220, %v222
    %v224 = vrot.slane %v86, %v223
    %vm225 = vcmask 130112
    %v226 = vsel %vm225, %v224, %v219
    %v227 = vadd.s32 %v215, 4294967280
    %v228 = vlaneseq
    %v229 = vshrl.u32 %v228, 7
    %v230 = vsub.s32 %v227, %v229
    %v231 = vrot.slane %v89, %v230
    %vm232 = vcmask 195712
    %v233 = vsel %vm232, %v231, %v226
    %v234 = vadd.s32 %v215, 4294967272
    %v235 = vlaneseq
    %v236 = vshrl.u32 %v235, 7
    %v237 = vsub.s32 %v234, %v236
    %v238 = vrot.slane %v92, %v237
    %vm239 = vcmask 261312
    %v240 = vsel %vm239, %v238, %v233
    %v241 = vadd.s32 %v215, 4294967264
    %v242 = vlaneseq
    %v243 = vshrl.u32 %v242, 7
    %v244 = vsub.s32 %v241, %v243
    %v245 = vrot.slane %v95, %v244
    %vm246 = vcmask 326912
    %v247 = vsel %vm246, %v245, %v240
    %v248 = vadd.s32 %v215, 4294967256
    %v249 = vlaneseq
    %v250 = vshrl.u32 %v249, 7
    %v251 = vsub.s32 %v248, %v250
    %v252 = vrot.slane %v98, %v251
    %vm253 = vcmask 392512
    %v254 = vsel %vm253, %v252, %v247
    %v255 = vadd.s32 %v215, 4294967248
    %v256 = vlaneseq
    %v257 = vshrl.u32 %v256, 7
    %v258 = vsub.s32 %v255, %v257
    %v259 = vrot.slane %v101, %v258
    %vm260 = vcmask 458112
    %v261 = vsel %vm260, %v259, %v254
    %v262 = vadd.s32 %v215, 4294967240
    %v263 = vlaneseq
    %v264 = vshrl.u32 %v263, 7
    %v265 = vsub.s32 %v262, %v264
    %v266 = vrot.slane %v104, %v265
    %vm267 = vcmask 523712
    %v268 = vsel %vm267, %v266, %v261
    %v269 = vlaneseq
    %v270 = vshrl.u32 %v269, 7
    %v271 = vsub.s32 %v215, %v270
    %v272 = vrot.slane %v107, %v271
    %v273 = vlaneseq
    %v274 = vshrl.u32 %v273, 7
    %v275 = vsub.s32 %v220, %v274
    %v276 = vrot.slane %v110, %v275
    %v277 = vsel %vm225, %v276, %v272
    %v278 = vlaneseq
    %v279 = vshrl.u32 %v278, 7
    %v280 = vsub.s32 %v227, %v279
    %v281 = vrot.slane %v113, %v280
    %v282 = vsel %vm232, %v281, %v277
    %v283 = vlaneseq
    %v284 = vshrl.u32 %v283, 7
    %v285 = vsub.s32 %v234, %v284
    %v286 = vrot.slane %v116, %v285
    %v287 = vsel %vm239, %v286, %v282
    %v288 = vlaneseq
    %v289 = vshrl.u32 %v288, 7
    %v290 = vsub.s32 %v241, %v289
    %v291 = vrot.slane %v119, %v290
    %v292 = vsel %vm246, %v291, %v287
    %v293 = vlaneseq
    %v294 = vshrl.u32 %v293, 7
    %v295 = vsub.s32 %v248, %v294
    %v296 = vrot.slane %v122, %v295
    %v297 = vsel %vm253, %v296, %v292
    %v298 = vlaneseq
    %v299 = vshrl.u32 %v298, 7
    %v300 = vsub.s32 %v255, %v299
    %v301 = vrot.slane %v125, %v300
    %v302 = vsel %vm260, %v301, %v297
    %v303 = vlaneseq
    %v304 = vshrl.u32 %v303, 7
    %v305 = vsub.s32 %v262, %v304
    %v306 = vrot.slane %v128, %v305
    %v307 = vsel %vm267, %v306, %v302
    %vm308 = vcmask 1041409
    %v309 = vsel %vm308, %v307, %v268
    %vm311 = vcmask 517120
    %v312 = vsel %vm311, %v309, 0.0
    %313 = vadd.xlane.f32.xlu0 %v312
    %v314 = vpop.xlane.xlu0 %313
    %v315 = vrcp.pop 64.0
    %v316 = vmul.f32 %v314, %v315
    %vm317 = vcmask 1041408
    %v318 = vsel %vm317, %v316, 0.0
    %v319 = vrot.slane %v318, 4
    %v320 = vadd.f32 %v318, %v319
    %v321 = vrot.slane %v320, 2
    %v322 = vadd.f32 %v320, %v321
    %v323 = vrot.slane %v322, 1
    %v324 = vadd.f32 %v322, %v323
    %v325 = vrcp.pop 2.0
    %v326 = vmul.f32 %v324, %v325
    %v327 = vsub.f32 %v83, %v326
    %v328 = vsub.f32 %v86, %v326
    %v329 = vsub.f32 %v89, %v326
    %v330 = vsub.f32 %v92, %v326
    %v331 = vsub.f32 %v95, %v326
    %v332 = vsub.f32 %v98, %v326
    %v333 = vsub.f32 %v101, %v326
    %v334 = vsub.f32 %v104, %v326
    %v335 = vsub.f32 %v107, %v326
    %v336 = vsub.f32 %v110, %v326
    %v337 = vsub.f32 %v113, %v326
    %v338 = vsub.f32 %v116, %v326
    %v339 = vsub.f32 %v119, %v326
    %v340 = vsub.f32 %v122, %v326
    %v341 = vsub.f32 %v125, %v326
    %v342 = vsub.f32 %v128, %v326
    %v343 = vmul.f32 %v327, %v327
    %v344 = vmul.f32 %v328, %v328
    %v345 = vmul.f32 %v329, %v329
    %v346 = vmul.f32 %v330, %v330
    %v347 = vmul.f32 %v331, %v331
    %v348 = vmul.f32 %v332, %v332
    %v349 = vmul.f32 %v333, %v333
    %v350 = vmul.f32 %v334, %v334
    %v351 = vmul.f32 %v335, %v335
    %v352 = vmul.f32 %v336, %v336
    %v353 = vmul.f32 %v337, %v337
    %v354 = vmul.f32 %v338, %v338
    %v355 = vmul.f32 %v339, %v339
    %v356 = vmul.f32 %v340, %v340
    %v357 = vmul.f32 %v341, %v341
    %v358 = vmul.f32 %v342, %v342
    %v375 = vlaneseq
    %v376 = vshrl.u32 %v375, 7
    %v377 = vsub.s32 %v215, %v376
    %v378 = vrot.slane %v343, %v377
    %v379 = vlaneseq
    %v380 = vshrl.u32 %v379, 7
    %v381 = vsub.s32 %v220, %v380
    %v382 = vrot.slane %v344, %v381
    %v383 = vsel %vm225, %v382, %v378
    %v384 = vlaneseq
    %v385 = vshrl.u32 %v384, 7
    %v386 = vsub.s32 %v227, %v385
    %v387 = vrot.slane %v345, %v386
    %v388 = vsel %vm232, %v387, %v383
    %v389 = vlaneseq
    %v390 = vshrl.u32 %v389, 7
    %v391 = vsub.s32 %v234, %v390
    %v392 = vrot.slane %v346, %v391
    %v393 = vsel %vm239, %v392, %v388
    %v394 = vlaneseq
    %v395 = vshrl.u32 %v394, 7
    %v396 = vsub.s32 %v241, %v395
    %v397 = vrot.slane %v347, %v396
    %v398 = vsel %vm246, %v397, %v393
    %v399 = vlaneseq
    %v400 = vshrl.u32 %v399, 7
    %v401 = vsub.s32 %v248, %v400
    %v402 = vrot.slane %v348, %v401
    %v403 = vsel %vm253, %v402, %v398
    %v404 = vlaneseq
    %v405 = vshrl.u32 %v404, 7
    %v406 = vsub.s32 %v255, %v405
    %v407 = vrot.slane %v349, %v406
    %v408 = vsel %vm260, %v407, %v403
    %v409 = vlaneseq
    %v410 = vshrl.u32 %v409, 7
    %v411 = vsub.s32 %v262, %v410
    %v412 = vrot.slane %v350, %v411
    %v413 = vsel %vm267, %v412, %v408
    %v414 = vlaneseq
    %v415 = vshrl.u32 %v414, 7
    %v416 = vsub.s32 %v215, %v415
    %v417 = vrot.slane %v351, %v416
    %v418 = vlaneseq
    %v419 = vshrl.u32 %v418, 7
    %v420 = vsub.s32 %v220, %v419
    %v421 = vrot.slane %v352, %v420
    %v422 = vsel %vm225, %v421, %v417
    %v423 = vlaneseq
    %v424 = vshrl.u32 %v423, 7
    %v425 = vsub.s32 %v227, %v424
    %v426 = vrot.slane %v353, %v425
    %v427 = vsel %vm232, %v426, %v422
    %v428 = vlaneseq
    %v429 = vshrl.u32 %v428, 7
    %v430 = vsub.s32 %v234, %v429
    %v431 = vrot.slane %v354, %v430
    %v432 = vsel %vm239, %v431, %v427
    %v433 = vlaneseq
    %v434 = vshrl.u32 %v433, 7
    %v435 = vsub.s32 %v241, %v434
    %v436 = vrot.slane %v355, %v435
    %v437 = vsel %vm246, %v436, %v432
    %v438 = vlaneseq
    %v439 = vshrl.u32 %v438, 7
    %v440 = vsub.s32 %v248, %v439
    %v441 = vrot.slane %v356, %v440
    %v442 = vsel %vm253, %v441, %v437
    %v443 = vlaneseq
    %v444 = vshrl.u32 %v443, 7
    %v445 = vsub.s32 %v255, %v444
    %v446 = vrot.slane %v357, %v445
    %v447 = vsel %vm260, %v446, %v442
    %v448 = vlaneseq
    %v449 = vshrl.u32 %v448, 7
    %v450 = vsub.s32 %v262, %v449
    %v451 = vrot.slane %v358, %v450
    %v452 = vsel %vm267, %v451, %v447
    %v453 = vsel %vm308, %v452, %v413
    %v455 = vsel %vm311, %v453, 0.0
    %456 = vadd.xlane.f32.xlu0 %v455
    %v457 = vpop.xlane.xlu0 %456
    %v458 = vmul.f32 %v457, %v315
    %v459 = vsel %vm317, %v458, 0.0
    %v460 = vrot.slane %v459, 4
    %v461 = vadd.f32 %v459, %v460
    %v462 = vrot.slane %v461, 2
    %v463 = vadd.f32 %v461, %v462
    %v464 = vrot.slane %v463, 1
    %v465 = vadd.f32 %v463, %v464
    %v466 = vmul.f32 %v465, %v325
    %v467 = vadd.f32 %v466, 1e-05
    %v468 = vrsqrt.pop %v467
    %v469 = vmul.f32 %v327, %v468
    %v470 = vmul.f32 %v328, %v468
    %v471 = vmul.f32 %v329, %v468
    %v472 = vmul.f32 %v330, %v468
    %v473 = vmul.f32 %v331, %v468
    %v474 = vmul.f32 %v332, %v468
    %v475 = vmul.f32 %v333, %v468
    %v476 = vmul.f32 %v334, %v468
    %v477 = vmul.f32 %v335, %v468
    %v478 = vmul.f32 %v336, %v468
    %v479 = vmul.f32 %v337, %v468
    %v480 = vmul.f32 %v338, %v468
    %v481 = vmul.f32 %v339, %v468
    %v482 = vmul.f32 %v340, %v468
    %v483 = vmul.f32 %v341, %v468
    %v484 = vmul.f32 %v342, %v468
    %s486 = vtos %v197
    %v487 = vstv %s486
    %v489 = vmul.f32 %v469, %v487
    %v490 = vmul.f32 %v470, %v487
    %v491 = vmul.f32 %v471, %v487
    %v492 = vmul.f32 %v472, %v487
    %v493 = vmul.f32 %v473, %v487
    %v494 = vmul.f32 %v474, %v487
    %v495 = vmul.f32 %v475, %v487
    %v496 = vmul.f32 %v476, %v487
    %v497 = vmul.f32 %v477, %v487
    %v498 = vmul.f32 %v478, %v487
    %v499 = vmul.f32 %v479, %v487
    %v500 = vmul.f32 %v480, %v487
    %v501 = vmul.f32 %v481, %v487
    %v502 = vmul.f32 %v482, %v487
    %v503 = vmul.f32 %v483, %v487
    %v504 = vmul.f32 %v484, %v487
    %v505 = vrot.slane %v197, 1
    %s506 = vtos %v505
    %v507 = vstv %s506
    %v509 = vadd.f32 %v489, %v507
    %v510 = vadd.f32 %v490, %v507
    %v511 = vadd.f32 %v491, %v507
    %v512 = vadd.f32 %v492, %v507
    %v513 = vadd.f32 %v493, %v507
    %v514 = vadd.f32 %v494, %v507
    %v515 = vadd.f32 %v495, %v507
    %v516 = vadd.f32 %v496, %v507
    %v517 = vadd.f32 %v497, %v507
    %v518 = vadd.f32 %v498, %v507
    %v519 = vadd.f32 %v499, %v507
    %v520 = vadd.f32 %v500, %v507
    %v521 = vadd.f32 %v501, %v507
    %v522 = vadd.f32 %v502, %v507
    %v523 = vadd.f32 %v503, %v507
    %v524 = vadd.f32 %v504, %v507
    %v525 = vmax.f32 %v509, 0.0
    %v526 = vmax.f32 %v510, 0.0
    %v527 = vmax.f32 %v511, 0.0
    %v528 = vmax.f32 %v512, 0.0
    %v529 = vmax.f32 %v513, 0.0
    %v530 = vmax.f32 %v514, 0.0
    %v531 = vmax.f32 %v515, 0.0
    %v532 = vmax.f32 %v516, 0.0
    %v533 = vmax.f32 %v517, 0.0
    %v534 = vmax.f32 %v518, 0.0
    %v535 = vmax.f32 %v519, 0.0
    %v536 = vmax.f32 %v520, 0.0
    %v537 = vmax.f32 %v521, 0.0
    %v538 = vmax.f32 %v522, 0.0
    %v539 = vmax.f32 %v523, 0.0
    %v540 = vmax.f32 %v524, 0.0
    %v557 = vlaneseq
    %v558 = vshrl.u32 %v557, 7
    %v559 = vsub.s32 %v215, %v558
    %v560 = vrot.slane %v151, %v559
    %v561 = vlaneseq
    %v562 = vshrl.u32 %v561, 7
    %v563 = vsub.s32 %v220, %v562
    %v564 = vrot.slane %v154, %v563
    %v565 = vsel %vm225, %v564, %v560
    %v566 = vlaneseq
    %v567 = vshrl.u32 %v566, 7
    %v568 = vsub.s32 %v227, %v567
    %v569 = vrot.slane %v157, %v568
    %v570 = vsel %vm232, %v569, %v565
    %v571 = vlaneseq
    %v572 = vshrl.u32 %v571, 7
    %v573 = vsub.s32 %v234, %v572
    %v574 = vrot.slane %v160, %v573
    %v575 = vsel %vm239, %v574, %v570
    %v576 = vlaneseq
    %v577 = vshrl.u32 %v576, 7
    %v578 = vsub.s32 %v241, %v577
    %v579 = vrot.slane %v163, %v578
    %v580 = vsel %vm246, %v579, %v575
    %v581 = vlaneseq
    %v582 = vshrl.u32 %v581, 7
    %v583 = vsub.s32 %v248, %v582
    %v584 = vrot.slane %v166, %v583
    %v585 = vsel %vm253, %v584, %v580
    %v586 = vlaneseq
    %v587 = vshrl.u32 %v586, 7
    %v588 = vsub.s32 %v255, %v587
    %v589 = vrot.slane %v169, %v588
    %v590 = vsel %vm260, %v589, %v585
    %v591 = vlaneseq
    %v592 = vshrl.u32 %v591, 7
    %v593 = vsub.s32 %v262, %v592
    %v594 = vrot.slane %v172, %v593
    %v595 = vsel %vm267, %v594, %v590
    %v596 = vlaneseq
    %v597 = vshrl.u32 %v596, 7
    %v598 = vsub.s32 %v215, %v597
    %v599 = vrot.slane %v175, %v598
    %v600 = vlaneseq
    %v601 = vshrl.u32 %v600, 7
    %v602 = vsub.s32 %v220, %v601
    %v603 = vrot.slane %v178, %v602
    %v604 = vsel %vm225, %v603, %v599
    %v605 = vlaneseq
    %v606 = vshrl.u32 %v605, 7
    %v607 = vsub.s32 %v227, %v606
    %v608 = vrot.slane %v181, %v607
    %v609 = vsel %vm232, %v608, %v604
    %v610 = vlaneseq
    %v611 = vshrl.u32 %v610, 7
    %v612 = vsub.s32 %v234, %v611
    %v613 = vrot.slane %v184, %v612
    %v614 = vsel %vm239, %v613, %v609
    %v615 = vlaneseq
    %v616 = vshrl.u32 %v615, 7
    %v617 = vsub.s32 %v241, %v616
    %v618 = vrot.slane %v187, %v617
    %v619 = vsel %vm246, %v618, %v614
    %v620 = vlaneseq
    %v621 = vshrl.u32 %v620, 7
    %v622 = vsub.s32 %v248, %v621
    %v623 = vrot.slane %v190, %v622
    %v624 = vsel %vm253, %v623, %v619
    %v625 = vlaneseq
    %v626 = vshrl.u32 %v625, 7
    %v627 = vsub.s32 %v255, %v626
    %v628 = vrot.slane %v193, %v627
    %v629 = vsel %vm260, %v628, %v624
    %v630 = vlaneseq
    %v631 = vshrl.u32 %v630, 7
    %v632 = vsub.s32 %v262, %v631
    %v633 = vrot.slane %v196, %v632
    %v634 = vsel %vm267, %v633, %v629
    %v635 = vsel %vm308, %v634, %v595
    %v637 = vsel %vm311, %v635, 0.0
    %638 = vadd.xlane.f32.xlu0 %v637
    %v639 = vpop.xlane.xlu0 %638
    %v640 = vmul.f32 %v639, %v315
    %v641 = vsel %vm317, %v640, 0.0
    %v642 = vrot.slane %v641, 4
    %v643 = vadd.f32 %v641, %v642
    %v644 = vrot.slane %v643, 2
    %v645 = vadd.f32 %v643, %v644
    %v646 = vrot.slane %v645, 1
    %v647 = vadd.f32 %v645, %v646
    %v648 = vmul.f32 %v647, %v325
    %v649 = vsub.f32 %v151, %v648
    %v650 = vsub.f32 %v154, %v648
    %v651 = vsub.f32 %v157, %v648
    %v652 = vsub.f32 %v160, %v648
    %v653 = vsub.f32 %v163, %v648
    %v654 = vsub.f32 %v166, %v648
    %v655 = vsub.f32 %v169, %v648
    %v656 = vsub.f32 %v172, %v648
    %v657 = vsub.f32 %v175, %v648
    %v658 = vsub.f32 %v178, %v648
    %v659 = vsub.f32 %v181, %v648
    %v660 = vsub.f32 %v184, %v648
    %v661 = vsub.f32 %v187, %v648
    %v662 = vsub.f32 %v190, %v648
    %v663 = vsub.f32 %v193, %v648
    %v664 = vsub.f32 %v196, %v648
    %v665 = vmul.f32 %v649, %v649
    %v666 = vmul.f32 %v650, %v650
    %v667 = vmul.f32 %v651, %v651
    %v668 = vmul.f32 %v652, %v652
    %v669 = vmul.f32 %v653, %v653
    %v670 = vmul.f32 %v654, %v654
    %v671 = vmul.f32 %v655, %v655
    %v672 = vmul.f32 %v656, %v656
    %v673 = vmul.f32 %v657, %v657
    %v674 = vmul.f32 %v658, %v658
    %v675 = vmul.f32 %v659, %v659
    %v676 = vmul.f32 %v660, %v660
    %v677 = vmul.f32 %v661, %v661
    %v678 = vmul.f32 %v662, %v662
    %v679 = vmul.f32 %v663, %v663
    %v680 = vmul.f32 %v664, %v664
    %v697 = vlaneseq
    %v698 = vshrl.u32 %v697, 7
    %v699 = vsub.s32 %v215, %v698
    %v700 = vrot.slane %v665, %v699
    %v701 = vlaneseq
    %v702 = vshrl.u32 %v701, 7
    %v703 = vsub.s32 %v220, %v702
    %v704 = vrot.slane %v666, %v703
    %v705 = vsel %vm225, %v704, %v700
    %v706 = vlaneseq
    %v707 = vshrl.u32 %v706, 7
    %v708 = vsub.s32 %v227, %v707
    %v709 = vrot.slane %v667, %v708
    %v710 = vsel %vm232, %v709, %v705
    %v711 = vlaneseq
    %v712 = vshrl.u32 %v711, 7
    %v713 = vsub.s32 %v234, %v712
    %v714 = vrot.slane %v668, %v713
    %v715 = vsel %vm239, %v714, %v710
    %v716 = vlaneseq
    %v717 = vshrl.u32 %v716, 7
    %v718 = vsub.s32 %v241, %v717
    %v719 = vrot.slane %v669, %v718
    %v720 = vsel %vm246, %v719, %v715
    %v721 = vlaneseq
    %v722 = vshrl.u32 %v721, 7
    %v723 = vsub.s32 %v248, %v722
    %v724 = vrot.slane %v670, %v723
    %v725 = vsel %vm253, %v724, %v720
    %v726 = vlaneseq
    %v727 = vshrl.u32 %v726, 7
    %v728 = vsub.s32 %v255, %v727
    %v729 = vrot.slane %v671, %v728
    %v730 = vsel %vm260, %v729, %v725
    %v731 = vlaneseq
    %v732 = vshrl.u32 %v731, 7
    %v733 = vsub.s32 %v262, %v732
    %v734 = vrot.slane %v672, %v733
    %v735 = vsel %vm267, %v734, %v730
    %v736 = vlaneseq
    %v737 = vshrl.u32 %v736, 7
    %v738 = vsub.s32 %v215, %v737
    %v739 = vrot.slane %v673, %v738
    %v740 = vlaneseq
    %v741 = vshrl.u32 %v740, 7
    %v742 = vsub.s32 %v220, %v741
    %v743 = vrot.slane %v674, %v742
    %v744 = vsel %vm225, %v743, %v739
    %v745 = vlaneseq
    %v746 = vshrl.u32 %v745, 7
    %v747 = vsub.s32 %v227, %v746
    %v748 = vrot.slane %v675, %v747
    %v749 = vsel %vm232, %v748, %v744
    %v750 = vlaneseq
    %v751 = vshrl.u32 %v750, 7
    %v752 = vsub.s32 %v234, %v751
    %v753 = vrot.slane %v676, %v752
    %v754 = vsel %vm239, %v753, %v749
    %v755 = vlaneseq
    %v756 = vshrl.u32 %v755, 7
    %v757 = vsub.s32 %v241, %v756
    %v758 = vrot.slane %v677, %v757
    %v759 = vsel %vm246, %v758, %v754
    %v760 = vlaneseq
    %v761 = vshrl.u32 %v760, 7
    %v762 = vsub.s32 %v248, %v761
    %v763 = vrot.slane %v678, %v762
    %v764 = vsel %vm253, %v763, %v759
    %v765 = vlaneseq
    %v766 = vshrl.u32 %v765, 7
    %v767 = vsub.s32 %v255, %v766
    %v768 = vrot.slane %v679, %v767
    %v769 = vsel %vm260, %v768, %v764
    %v770 = vlaneseq
    %v771 = vshrl.u32 %v770, 7
    %v772 = vsub.s32 %v262, %v771
    %v773 = vrot.slane %v680, %v772
    %v774 = vsel %vm267, %v773, %v769
    %v775 = vsel %vm308, %v774, %v735
    %v777 = vsel %vm311, %v775, 0.0
    %778 = vadd.xlane.f32.xlu0 %v777
    %v779 = vpop.xlane.xlu0 %778
    %v780 = vmul.f32 %v779, %v315
    %v781 = vsel %vm317, %v780, 0.0
    %v782 = vrot.slane %v781, 4
    %v783 = vadd.f32 %v781, %v782
    %v784 = vrot.slane %v783, 2
    %v785 = vadd.f32 %v783, %v784
    %v786 = vrot.slane %v785, 1
    %v787 = vadd.f32 %v785, %v786
    %v788 = vmul.f32 %v787, %v325
    %v789 = vadd.f32 %v788, 1e-05
    %v790 = vrsqrt.pop %v789
    %v791 = vmul.f32 %v649, %v790
    %v792 = vmul.f32 %v650, %v790
    %v793 = vmul.f32 %v651, %v790
    %v794 = vmul.f32 %v652, %v790
    %v795 = vmul.f32 %v653, %v790
    %v796 = vmul.f32 %v654, %v790
    %v797 = vmul.f32 %v655, %v790
    %v798 = vmul.f32 %v656, %v790
    %v799 = vmul.f32 %v657, %v790
    %v800 = vmul.f32 %v658, %v790
    %v801 = vmul.f32 %v659, %v790
    %v802 = vmul.f32 %v660, %v790
    %v803 = vmul.f32 %v661, %v790
    %v804 = vmul.f32 %v662, %v790
    %v805 = vmul.f32 %v663, %v790
    %v806 = vmul.f32 %v664, %v790
    %807 = vrot.lane.b32.xlu0 %v197, 127
    %v808 = vpop.permute.xlu0 %807
    %s809 = vtos %v808
    %v810 = vstv %s809
    %v812 = vmul.f32 %v791, %v810
    %v813 = vmul.f32 %v792, %v810
    %v814 = vmul.f32 %v793, %v810
    %v815 = vmul.f32 %v794, %v810
    %v816 = vmul.f32 %v795, %v810
    %v817 = vmul.f32 %v796, %v810
    %v818 = vmul.f32 %v797, %v810
    %v819 = vmul.f32 %v798, %v810
    %v820 = vmul.f32 %v799, %v810
    %v821 = vmul.f32 %v800, %v810
    %v822 = vmul.f32 %v801, %v810
    %v823 = vmul.f32 %v802, %v810
    %v824 = vmul.f32 %v803, %v810
    %v825 = vmul.f32 %v804, %v810
    %v826 = vmul.f32 %v805, %v810
    %v827 = vmul.f32 %v806, %v810
    %828 = vrot.lane.b32.xlu0 %v505, 127
    %v829 = vpop.permute.xlu0 %828
    %s830 = vtos %v829
    %v831 = vstv %s830
    %v833 = vadd.f32 %v812, %v831
    %v834 = vadd.f32 %v813, %v831
    %v835 = vadd.f32 %v814, %v831
    %v836 = vadd.f32 %v815, %v831
    %v837 = vadd.f32 %v816, %v831
    %v838 = vadd.f32 %v817, %v831
    %v839 = vadd.f32 %v818, %v831
    %v840 = vadd.f32 %v819, %v831
    %v841 = vadd.f32 %v820, %v831
    %v842 = vadd.f32 %v821, %v831
    %v843 = vadd.f32 %v822, %v831
    %v844 = vadd.f32 %v823, %v831
    %v845 = vadd.f32 %v824, %v831
    %v846 = vadd.f32 %v825, %v831
    %v847 = vadd.f32 %v826, %v831
    %v848 = vadd.f32 %v827, %v831
    %v849 = vmax.f32 %v833, 0.0
    %v850 = vmax.f32 %v834, 0.0
    %v851 = vmax.f32 %v835, 0.0
    %v852 = vmax.f32 %v836, 0.0
    %v853 = vmax.f32 %v837, 0.0
    %v854 = vmax.f32 %v838, 0.0
    %v855 = vmax.f32 %v839, 0.0
    %v856 = vmax.f32 %v840, 0.0
    %v857 = vmax.f32 %v841, 0.0
    %v858 = vmax.f32 %v842, 0.0
    %v859 = vmax.f32 %v843, 0.0
    %v860 = vmax.f32 %v844, 0.0
    %v861 = vmax.f32 %v845, 0.0
    %v862 = vmax.f32 %v846, 0.0
    %v863 = vmax.f32 %v847, 0.0
    %v864 = vmax.f32 %v848, 0.0
    %v865 = vld [vmem:[%s3] sm:$0xff]
    %v866 = vld [vmem:[%s3 + $0x8] sm:$0xff]
    %v867 = vld [vmem:[%s3 + $0x10] sm:$0xff]
    %v868 = vld [vmem:[%s3 + $0x18] sm:$0xff]
    %v869 = vld [vmem:[%s3 + $0x20] sm:$0xff]
    %v870 = vld [vmem:[%s3 + $0x28] sm:$0xff]
    %v871 = vld [vmem:[%s3 + $0x30] sm:$0xff]
    %v872 = vld [vmem:[%s3 + $0x38] sm:$0xff]
    %v873 = vld [vmem:[%s3 + $0x40] sm:$0xff]
    %v874 = vld [vmem:[%s3 + $0x48] sm:$0xff]
    %v875 = vld [vmem:[%s3 + $0x50] sm:$0xff]
    %v876 = vld [vmem:[%s3 + $0x58] sm:$0xff]
    %v877 = vld [vmem:[%s3 + $0x60] sm:$0xff]
    %v878 = vld [vmem:[%s3 + $0x68] sm:$0xff]
    %v879 = vld [vmem:[%s3 + $0x70] sm:$0xff]
    %v880 = vld [vmem:[%s3 + $0x78] sm:$0xff]
    %v897 = vlaneseq
    %v898 = vshrl.u32 %v897, 7
    %v899 = vsub.s32 %v215, %v898
    %v900 = vrot.slane %v849, %v899
    %v901 = vlaneseq
    %v902 = vshrl.u32 %v901, 7
    %v903 = vsub.s32 %v220, %v902
    %v904 = vrot.slane %v850, %v903
    %v905 = vsel %vm225, %v904, %v900
    %v906 = vlaneseq
    %v907 = vshrl.u32 %v906, 7
    %v908 = vsub.s32 %v227, %v907
    %v909 = vrot.slane %v851, %v908
    %v910 = vsel %vm232, %v909, %v905
    %v911 = vlaneseq
    %v912 = vshrl.u32 %v911, 7
    %v913 = vsub.s32 %v234, %v912
    %v914 = vrot.slane %v852, %v913
    %v915 = vsel %vm239, %v914, %v910
    %v916 = vlaneseq
    %v917 = vshrl.u32 %v916, 7
    %v918 = vsub.s32 %v241, %v917
    %v919 = vrot.slane %v853, %v918
    %v920 = vsel %vm246, %v919, %v915
    %v921 = vlaneseq
    %v922 = vshrl.u32 %v921, 7
    %v923 = vsub.s32 %v248, %v922
    %v924 = vrot.slane %v854, %v923
    %v925 = vsel %vm253, %v924, %v920
    %v926 = vlaneseq
    %v927 = vshrl.u32 %v926, 7
    %v928 = vsub.s32 %v255, %v927
    %v929 = vrot.slane %v855, %v928
    %v930 = vsel %vm260, %v929, %v925
    %v931 = vlaneseq
    %v932 = vshrl.u32 %v931, 7
    %v933 = vsub.s32 %v262, %v932
    %v934 = vrot.slane %v856, %v933
    %v935 = vsel %vm267, %v934, %v930
    %v936 = vlaneseq
    %v937 = vshrl.u32 %v936, 7
    %v938 = vsub.s32 %v215, %v937
    %v939 = vrot.slane %v857, %v938
    %v940 = vlaneseq
    %v941 = vshrl.u32 %v940, 7
    %v942 = vsub.s32 %v220, %v941
    %v943 = vrot.slane %v858, %v942
    %v944 = vsel %vm225, %v943, %v939
    %v945 = vlaneseq
    %v946 = vshrl.u32 %v945, 7
    %v947 = vsub.s32 %v227, %v946
    %v948 = vrot.slane %v859, %v947
    %v949 = vsel %vm232, %v948, %v944
    %v950 = vlaneseq
    %v951 = vshrl.u32 %v950, 7
    %v952 = vsub.s32 %v234, %v951
    %v953 = vrot.slane %v860, %v952
    %v954 = vsel %vm239, %v953, %v949
    %v955 = vlaneseq
    %v956 = vshrl.u32 %v955, 7
    %v957 = vsub.s32 %v241, %v956
    %v958 = vrot.slane %v861, %v957
    %v959 = vsel %vm246, %v958, %v954
    %v960 = vlaneseq
    %v961 = vshrl.u32 %v960, 7
    %v962 = vsub.s32 %v248, %v961
    %v963 = vrot.slane %v862, %v962
    %v964 = vsel %vm253, %v963, %v959
    %v965 = vlaneseq
    %v966 = vshrl.u32 %v965, 7
    %v967 = vsub.s32 %v255, %v966
    %v968 = vrot.slane %v863, %v967
    %v969 = vsel %vm260, %v968, %v964
    %v970 = vlaneseq
    %v971 = vshrl.u32 %v970, 7
    %v972 = vsub.s32 %v262, %v971
    %v973 = vrot.slane %v864, %v972
    %v974 = vsel %vm267, %v973, %v969
    %v975 = vsel %vm308, %v974, %v935
    %v976 = vsel %vm80, %v975, 0
    %978 = vmatprep.subr.mxu0 0.0
    %979 = vmatpush1.msra.mxu0 %v873
    %980 = vmatprep.subr.mxu0 0.0
    %981 = vmatpush1.msra.mxu0 %v874
    %982 = vmatprep.subr.mxu0 0.0
    %983 = vmatpush1.msra.mxu0 %v875
    %984 = vmatprep.subr.mxu0 0.0
    %985 = vmatpush1.msra.mxu0 %v876
    %986 = vmatprep.subr.mxu0 0.0
    %987 = vmatpush1.msra.mxu0 %v877
    %988 = vmatprep.subr.mxu0 0.0
    %989 = vmatpush1.msra.mxu0 %v878
    %990 = vmatprep.subr.mxu0 0.0
    %991 = vmatpush1.msra.mxu0 %v879
    %992 = vmatprep.subr.mxu0 0.0
    %993 = vmatpush1.msra.mxu0 %v880
    %994 = vmatprep.subr.mxu0 0.0
    %995 = vmatpush1.msra.mxu0 0.0
    %996 = vmatprep.subr.mxu0 0.0
    %997 = vmatpush1.msra.mxu0 0.0
    %998 = vmatprep.subr.mxu0 0.0
    %999 = vmatpush1.msra.mxu0 0.0
    %1000 = vmatprep.subr.mxu0 0.0
    %1001 = vmatpush1.msra.mxu0 0.0
    %1002 = vmatprep.subr.mxu0 0.0
    %1003 = vmatpush1.msra.mxu0 0.0
    %1004 = vmatprep.subr.mxu0 0.0
    %1005 = vmatpush1.msra.mxu0 0.0
    %1006 = vmatprep.subr.mxu0 0.0
    %1007 = vmatpush1.msra.mxu0 0.0
    %1008 = vmatprep.subr.mxu0 0.0
    %1009 = vmatpush1.msra.mxu0 0.0
    %1010 = vmatprep.subr.mxu0 0.0
    %1011 = vmatpush1.msra.mxu0 0.0
    %1012 = vmatprep.subr.mxu0 0.0
    %1013 = vmatpush1.msra.mxu0 0.0
    %1014 = vmatprep.subr.mxu0 0.0
    %1015 = vmatpush1.msra.mxu0 0.0
    %1016 = vmatprep.subr.mxu0 0.0
    %1017 = vmatpush1.msra.mxu0 0.0
    %1018 = vmatprep.subr.mxu0 0.0
    %1019 = vmatpush1.msra.mxu0 0.0
    %1020 = vmatprep.subr.mxu0 0.0
    %1021 = vmatpush1.msra.mxu0 0.0
    %1022 = vmatprep.subr.mxu0 0.0
    %1023 = vmatpush1.msra.mxu0 0.0
    %1024 = vmatprep.subr.mxu0 0.0
    %1025 = vmatpush1.msra.mxu0 0.0
    %1026 = vmatprep.subr.mxu0 0.0
    %1027 = vmatpush1.msra.mxu0 0.0
    %1028 = vmatprep.subr.mxu0 0.0
    %1029 = vmatpush1.msra.mxu0 0.0
    %1030 = vmatprep.subr.mxu0 0.0
    %1031 = vmatpush1.msra.mxu0 0.0
    %1032 = vmatprep.subr.mxu0 0.0
    %1033 = vmatpush1.msra.mxu0 0.0
    %1034 = vmatprep.subr.mxu0 0.0
    %1035 = vmatpush1.msra.mxu0 0.0
    %1036 = vmatprep.subr.mxu0 0.0
    %1037 = vmatpush1.msra.mxu0 0.0
    %1038 = vmatprep.subr.mxu0 0.0
    %1039 = vmatpush1.msra.mxu0 0.0
    %1040 = vmatprep.subr.mxu0 0.0
    %1041 = vmatpush1.msra.mxu0 0.0
    %1042 = vmatprep.mubr.f32.mxu0 0.0
    %1043 = vmatmul.mubr.f32.gmra.mrb[0].mxu0 %v976
    %v1044 = vpop.f32.mrb[0].mxu0
    %v1045 = vadd.f32 0.0, %v1044
    %v1046 = vpop.f32.mrb[0].mxu0
    %1047 = vdwg.mxu0
    %v1064 = vlaneseq
    %v1065 = vshrl.u32 %v1064, 7
    %v1066 = vsub.s32 %v215, %v1065
    %v1067 = vrot.slane %v525, %v1066
    %v1068 = vlaneseq
    %v1069 = vshrl.u32 %v1068, 7
    %v1070 = vsub.s32 %v220, %v1069
    %v1071 = vrot.slane %v526, %v1070
    %v1072 = vsel %vm225, %v1071, %v1067
    %v1073 = vlaneseq
    %v1074 = vshrl.u32 %v1073, 7
    %v1075 = vsub.s32 %v227, %v1074
    %v1076 = vrot.slane %v527, %v1075
    %v1077 = vsel %vm232, %v1076, %v1072
    %v1078 = vlaneseq
    %v1079 = vshrl.u32 %v1078, 7
    %v1080 = vsub.s32 %v234, %v1079
    %v1081 = vrot.slane %v528, %v1080
    %v1082 = vsel %vm239, %v1081, %v1077
    %v1083 = vlaneseq
    %v1084 = vshrl.u32 %v1083, 7
    %v1085 = vsub.s32 %v241, %v1084
    %v1086 = vrot.slane %v529, %v1085
    %v1087 = vsel %vm246, %v1086, %v1082
    %v1088 = vlaneseq
    %v1089 = vshrl.u32 %v1088, 7
    %v1090 = vsub.s32 %v248, %v1089
    %v1091 = vrot.slane %v530, %v1090
    %v1092 = vsel %vm253, %v1091, %v1087
    %v1093 = vlaneseq
    %v1094 = vshrl.u32 %v1093, 7
    %v1095 = vsub.s32 %v255, %v1094
    %v1096 = vrot.slane %v531, %v1095
    %v1097 = vsel %vm260, %v1096, %v1092
    %v1098 = vlaneseq
    %v1099 = vshrl.u32 %v1098, 7
    %v1100 = vsub.s32 %v262, %v1099
    %v1101 = vrot.slane %v532, %v1100
    %v1102 = vsel %vm267, %v1101, %v1097
    %v1103 = vlaneseq
    %v1104 = vshrl.u32 %v1103, 7
    %v1105 = vsub.s32 %v215, %v1104
    %v1106 = vrot.slane %v533, %v1105
    %v1107 = vlaneseq
    %v1108 = vshrl.u32 %v1107, 7
    %v1109 = vsub.s32 %v220, %v1108
    %v1110 = vrot.slane %v534, %v1109
    %v1111 = vsel %vm225, %v1110, %v1106
    %v1112 = vlaneseq
    %v1113 = vshrl.u32 %v1112, 7
    %v1114 = vsub.s32 %v227, %v1113
    %v1115 = vrot.slane %v535, %v1114
    %v1116 = vsel %vm232, %v1115, %v1111
    %v1117 = vlaneseq
    %v1118 = vshrl.u32 %v1117, 7
    %v1119 = vsub.s32 %v234, %v1118
    %v1120 = vrot.slane %v536, %v1119
    %v1121 = vsel %vm239, %v1120, %v1116
    %v1122 = vlaneseq
    %v1123 = vshrl.u32 %v1122, 7
    %v1124 = vsub.s32 %v241, %v1123
    %v1125 = vrot.slane %v537, %v1124
    %v1126 = vsel %vm246, %v1125, %v1121
    %v1127 = vlaneseq
    %v1128 = vshrl.u32 %v1127, 7
    %v1129 = vsub.s32 %v248, %v1128
    %v1130 = vrot.slane %v538, %v1129
    %v1131 = vsel %vm253, %v1130, %v1126
    %v1132 = vlaneseq
    %v1133 = vshrl.u32 %v1132, 7
    %v1134 = vsub.s32 %v255, %v1133
    %v1135 = vrot.slane %v539, %v1134
    %v1136 = vsel %vm260, %v1135, %v1131
    %v1137 = vlaneseq
    %v1138 = vshrl.u32 %v1137, 7
    %v1139 = vsub.s32 %v262, %v1138
    %v1140 = vrot.slane %v540, %v1139
    %v1141 = vsel %vm267, %v1140, %v1136
    %v1142 = vsel %vm308, %v1141, %v1102
    %v1143 = vsel %vm80, %v1142, 0
    %1145 = vmatprep.subr.mxu0 0.0
    %1146 = vmatpush1.msra.mxu0 %v865
    %1147 = vmatprep.subr.mxu0 0.0
    %1148 = vmatpush1.msra.mxu0 %v866
    %1149 = vmatprep.subr.mxu0 0.0
    %1150 = vmatpush1.msra.mxu0 %v867
    %1151 = vmatprep.subr.mxu0 0.0
    %1152 = vmatpush1.msra.mxu0 %v868
    %1153 = vmatprep.subr.mxu0 0.0
    %1154 = vmatpush1.msra.mxu0 %v869
    %1155 = vmatprep.subr.mxu0 0.0
    %1156 = vmatpush1.msra.mxu0 %v870
    %1157 = vmatprep.subr.mxu0 0.0
    %1158 = vmatpush1.msra.mxu0 %v871
    %1159 = vmatprep.subr.mxu0 0.0
    %1160 = vmatpush1.msra.mxu0 %v872
    %1161 = vmatprep.subr.mxu0 0.0
    %1162 = vmatpush1.msra.mxu0 0.0
    %1163 = vmatprep.subr.mxu0 0.0
    %1164 = vmatpush1.msra.mxu0 0.0
    %1165 = vmatprep.subr.mxu0 0.0
    %1166 = vmatpush1.msra.mxu0 0.0
    %1167 = vmatprep.subr.mxu0 0.0
    %1168 = vmatpush1.msra.mxu0 0.0
    %1169 = vmatprep.subr.mxu0 0.0
    %1170 = vmatpush1.msra.mxu0 0.0
    %1171 = vmatprep.subr.mxu0 0.0
    %1172 = vmatpush1.msra.mxu0 0.0
    %1173 = vmatprep.subr.mxu0 0.0
    %1174 = vmatpush1.msra.mxu0 0.0
    %1175 = vmatprep.subr.mxu0 0.0
    %1176 = vmatpush1.msra.mxu0 0.0
    %1177 = vmatprep.subr.mxu0 0.0
    %1178 = vmatpush1.msra.mxu0 0.0
    %1179 = vmatprep.subr.mxu0 0.0
    %1180 = vmatpush1.msra.mxu0 0.0
    %1181 = vmatprep.subr.mxu0 0.0
    %1182 = vmatpush1.msra.mxu0 0.0
    %1183 = vmatprep.subr.mxu0 0.0
    %1184 = vmatpush1.msra.mxu0 0.0
    %1185 = vmatprep.subr.mxu0 0.0
    %1186 = vmatpush1.msra.mxu0 0.0
    %1187 = vmatprep.subr.mxu0 0.0
    %1188 = vmatpush1.msra.mxu0 0.0
    %1189 = vmatprep.subr.mxu0 0.0
    %1190 = vmatpush1.msra.mxu0 0.0
    %1191 = vmatprep.subr.mxu0 0.0
    %1192 = vmatpush1.msra.mxu0 0.0
    %1193 = vmatprep.subr.mxu0 0.0
    %1194 = vmatpush1.msra.mxu0 0.0
    %1195 = vmatprep.subr.mxu0 0.0
    %1196 = vmatpush1.msra.mxu0 0.0
    %1197 = vmatprep.subr.mxu0 0.0
    %1198 = vmatpush1.msra.mxu0 0.0
    %1199 = vmatprep.subr.mxu0 0.0
    %1200 = vmatpush1.msra.mxu0 0.0
    %1201 = vmatprep.subr.mxu0 0.0
    %1202 = vmatpush1.msra.mxu0 0.0
    %1203 = vmatprep.subr.mxu0 0.0
    %1204 = vmatpush1.msra.mxu0 0.0
    %1205 = vmatprep.subr.mxu0 0.0
    %1206 = vmatpush1.msra.mxu0 0.0
    %1207 = vmatprep.subr.mxu0 0.0
    %1208 = vmatpush1.msra.mxu0 0.0
    %1209 = vmatprep.mubr.f32.mxu0 0.0
    %1210 = vmatmul.mubr.f32.gmra.mrb[0].mxu0 %v1143
    %v1211 = vpop.f32.mrb[0].mxu0
    %v1212 = vadd.f32 %v1045, %v1211
    %v1213 = vpop.f32.mrb[0].mxu0
    %1214 = vdwg.mxu0
    %v1215 = vld [vmem:[%s4] sm:$0x1]
    %v1217 = vlaneseq
    %v1218 = vshrl.u32 %v1217, 7
    %v1219 = vsub.s32 0, %v1218
    %v1220 = vrot.slane %v1215, %v1219
    %v1222 = vadd.f32 %v1212, %v1220
    %v1223 = vsel %vm311, %v1222, -inf
    %1224 = vmax.xlane.f32.xlu0 %v1223
    %v1225 = vpop.xlane.xlu0 %1224
    %v1226 = vsub.f32 %v1222, %v1225
    %v1227 = vmul.f32 %v1226, 1.442695
    %v1228 = vpow.pop %v1227
    %v1229 = vsel %vm311, %v1228, 0.0
    %1230 = vadd.xlane.f32.xlu0 %v1229
    %v1231 = vpop.xlane.xlu0 %1230
    %v1232 = vlog2.pop %v1231
    %v1233 = vmul.f32 %v1232, 0.6931472
    %v1234 = vsub.f32 %v1226, %v1233
    %1235 = vst.msk [vmem:[#allocation3] sm:$0x3] %vm311, %v1234
    %v1236 = vld [vmem:[%s5] sm:$0x1]
    %v1238 = vlaneseq
    %v1239 = vshrl.u32 %v1238, 7
    %v1240 = vsub.s32 0, %v1239
    %v1241 = vrot.slane %v1236, %v1240
    %v1243 = vmul.f32 %v43, %v1241
    %v1244 = vmul.f32 %v44, %v1241
    %v1245 = vmul.f32 %v45, %v1241
    %v1246 = vmul.f32 %v46, %v1241
    %v1247 = vmul.f32 %v47, %v1241
    %v1248 = vmul.f32 %v48, %v1241
    %v1249 = vmul.f32 %v49, %v1241
    %v1250 = vmul.f32 %v50, %v1241
    %v1251 = vmul.f32 %v51, %v1241
    %v1252 = vmul.f32 %v52, %v1241
    %v1253 = vmul.f32 %v53, %v1241
    %v1254 = vmul.f32 %v54, %v1241
    %v1255 = vmul.f32 %v55, %v1241
    %v1256 = vmul.f32 %v56, %v1241
    %v1257 = vmul.f32 %v57, %v1241
    %v1258 = vmul.f32 %v58, %v1241
    %v1259 = vsel %vm80, %v1243, 0.0
    %1260 = vadd.xlane.f32.xlu0 %v1259
    %v1261 = vpop.xlane.xlu0 %1260
    %v1262 = vsel %vm80, %v1244, 0.0
    %1263 = vadd.xlane.f32.xlu0 %v1262
    %v1264 = vpop.xlane.xlu0 %1263
    %v1265 = vsel %vm80, %v1245, 0.0
    %1266 = vadd.xlane.f32.xlu0 %v1265
    %v1267 = vpop.xlane.xlu0 %1266
    %v1268 = vsel %vm80, %v1246, 0.0
    %1269 = vadd.xlane.f32.xlu0 %v1268
    %v1270 = vpop.xlane.xlu0 %1269
    %v1271 = vsel %vm80, %v1247, 0.0
    %1272 = vadd.xlane.f32.xlu0 %v1271
    %v1273 = vpop.xlane.xlu0 %1272
    %v1274 = vsel %vm80, %v1248, 0.0
    %1275 = vadd.xlane.f32.xlu0 %v1274
    %v1276 = vpop.xlane.xlu0 %1275
    %v1277 = vsel %vm80, %v1249, 0.0
    %1278 = vadd.xlane.f32.xlu0 %v1277
    %v1279 = vpop.xlane.xlu0 %1278
    %v1280 = vsel %vm80, %v1250, 0.0
    %1281 = vadd.xlane.f32.xlu0 %v1280
    %v1282 = vpop.xlane.xlu0 %1281
    %v1283 = vsel %vm80, %v1251, 0.0
    %1284 = vadd.xlane.f32.xlu0 %v1283
    %v1285 = vpop.xlane.xlu0 %1284
    %v1286 = vsel %vm80, %v1252, 0.0
    %1287 = vadd.xlane.f32.xlu0 %v1286
    %v1288 = vpop.xlane.xlu0 %1287
    %v1289 = vsel %vm80, %v1253, 0.0
    %1290 = vadd.xlane.f32.xlu0 %v1289
    %v1291 = vpop.xlane.xlu0 %1290
    %v1292 = vsel %vm80, %v1254, 0.0
    %1293 = vadd.xlane.f32.xlu0 %v1292
    %v1294 = vpop.xlane.xlu0 %1293
    %v1295 = vsel %vm80, %v1255, 0.0
    %1296 = vadd.xlane.f32.xlu0 %v1295
    %v1297 = vpop.xlane.xlu0 %1296
    %v1298 = vsel %vm80, %v1256, 0.0
    %1299 = vadd.xlane.f32.xlu0 %v1298
    %v1300 = vpop.xlane.xlu0 %1299
    %v1301 = vsel %vm80, %v1257, 0.0
    %1302 = vadd.xlane.f32.xlu0 %v1301
    %v1303 = vpop.xlane.xlu0 %1302
    %v1304 = vsel %vm80, %v1258, 0.0
    %1305 = vadd.xlane.f32.xlu0 %v1304
    %v1306 = vpop.xlane.xlu0 %1305
    %v1307 = vld [vmem:[%s6] sm:$0x3]
    %v1324 = vlaneseq
    %v1325 = vshrl.u32 %v1324, 7
    %v1326 = vsub.s32 %v215, %v1325
    %v1327 = vrot.slane %v1261, %v1326
    %v1328 = vlaneseq
    %v1329 = vshrl.u32 %v1328, 7
    %v1330 = vsub.s32 %v220, %v1329
    %v1331 = vrot.slane %v1264, %v1330
    %v1332 = vsel %vm225, %v1331, %v1327
    %v1333 = vlaneseq
    %v1334 = vshrl.u32 %v1333, 7
    %v1335 = vsub.s32 %v227, %v1334
    %v1336 = vrot.slane %v1267, %v1335
    %v1337 = vsel %vm232, %v1336, %v1332
    %v1338 = vlaneseq
    %v1339 = vshrl.u32 %v1338, 7
    %v1340 = vsub.s32 %v234, %v1339
    %v1341 = vrot.slane %v1270, %v1340
    %v1342 = vsel %vm239, %v1341, %v1337
    %v1343 = vlaneseq
    %v1344 = vshrl.u32 %v1343, 7
    %v1345 = vsub.s32 %v241, %v1344
    %v1346 = vrot.slane %v1273, %v1345
    %v1347 = vsel %vm246, %v1346, %v1342
    %v1348 = vlaneseq
    %v1349 = vshrl.u32 %v1348, 7
    %v1350 = vsub.s32 %v248, %v1349
    %v1351 = vrot.slane %v1276, %v1350
    %v1352 = vsel %vm253, %v1351, %v1347
    %v1353 = vlaneseq
    %v1354 = vshrl.u32 %v1353, 7
    %v1355 = vsub.s32 %v255, %v1354
    %v1356 = vrot.slane %v1279, %v1355
    %v1357 = vsel %vm260, %v1356, %v1352
    %v1358 = vlaneseq
    %v1359 = vshrl.u32 %v1358, 7
    %v1360 = vsub.s32 %v262, %v1359
    %v1361 = vrot.slane %v1282, %v1360
    %v1362 = vsel %vm267, %v1361, %v1357
    %v1363 = vlaneseq
    %v1364 = vshrl.u32 %v1363, 7
    %v1365 = vsub.s32 %v215, %v1364
    %v1366 = vrot.slane %v1285, %v1365
    %v1367 = vlaneseq
    %v1368 = vshrl.u32 %v1367, 7
    %v1369 = vsub.s32 %v220, %v1368
    %v1370 = vrot.slane %v1288, %v1369
    %v1371 = vsel %vm225, %v1370, %v1366
    %v1372 = vlaneseq
    %v1373 = vshrl.u32 %v1372, 7
    %v1374 = vsub.s32 %v227, %v1373
    %v1375 = vrot.slane %v1291, %v1374
    %v1376 = vsel %vm232, %v1375, %v1371
    %v1377 = vlaneseq
    %v1378 = vshrl.u32 %v1377, 7
    %v1379 = vsub.s32 %v234, %v1378
    %v1380 = vrot.slane %v1294, %v1379
    %v1381 = vsel %vm239, %v1380, %v1376
    %v1382 = vlaneseq
    %v1383 = vshrl.u32 %v1382, 7
    %v1384 = vsub.s32 %v241, %v1383
    %v1385 = vrot.slane %v1297, %v1384
    %v1386 = vsel %vm246, %v1385, %v1381
    %v1387 = vlaneseq
    %v1388 = vshrl.u32 %v1387, 7
    %v1389 = vsub.s32 %v248, %v1388
    %v1390 = vrot.slane %v1300, %v1389
    %v1391 = vsel %vm253, %v1390, %v1386
    %v1392 = vlaneseq
    %v1393 = vshrl.u32 %v1392, 7
    %v1394 = vsub.s32 %v255, %v1393
    %v1395 = vrot.slane %v1303, %v1394
    %v1396 = vsel %vm260, %v1395, %v1391
    %v1397 = vlaneseq
    %v1398 = vshrl.u32 %v1397, 7
    %v1399 = vsub.s32 %v262, %v1398
    %v1400 = vrot.slane %v1306, %v1399
    %v1401 = vsel %vm267, %v1400, %v1396
    %v1402 = vsel %vm308, %v1401, %v1362
    %v1404 = vsel %vm311, %v1402, 0.0
    %1405 = vadd.xlane.f32.xlu0 %v1404
    %v1406 = vpop.xlane.xlu0 %1405
    %v1407 = vmul.f32 %v1406, %v315
    %v1408 = vsel %vm317, %v1407, 0.0
    %v1409 = vrot.slane %v1408, 4
    %v1410 = vadd.f32 %v1408, %v1409
    %v1411 = vrot.slane %v1410, 2
    %v1412 = vadd.f32 %v1410, %v1411
    %v1413 = vrot.slane %v1412, 1
    %v1414 = vadd.f32 %v1412, %v1413
    %v1415 = vmul.f32 %v1414, %v325
    %v1416 = vsub.f32 %v1261, %v1415
    %v1417 = vsub.f32 %v1264, %v1415
    %v1418 = vsub.f32 %v1267, %v1415
    %v1419 = vsub.f32 %v1270, %v1415
    %v1420 = vsub.f32 %v1273, %v1415
    %v1421 = vsub.f32 %v1276, %v1415
    %v1422 = vsub.f32 %v1279, %v1415
    %v1423 = vsub.f32 %v1282, %v1415
    %v1424 = vsub.f32 %v1285, %v1415
    %v1425 = vsub.f32 %v1288, %v1415
    %v1426 = vsub.f32 %v1291, %v1415
    %v1427 = vsub.f32 %v1294, %v1415
    %v1428 = vsub.f32 %v1297, %v1415
    %v1429 = vsub.f32 %v1300, %v1415
    %v1430 = vsub.f32 %v1303, %v1415
    %v1431 = vsub.f32 %v1306, %v1415
    %v1432 = vmul.f32 %v1416, %v1416
    %v1433 = vmul.f32 %v1417, %v1417
    %v1434 = vmul.f32 %v1418, %v1418
    %v1435 = vmul.f32 %v1419, %v1419
    %v1436 = vmul.f32 %v1420, %v1420
    %v1437 = vmul.f32 %v1421, %v1421
    %v1438 = vmul.f32 %v1422, %v1422
    %v1439 = vmul.f32 %v1423, %v1423
    %v1440 = vmul.f32 %v1424, %v1424
    %v1441 = vmul.f32 %v1425, %v1425
    %v1442 = vmul.f32 %v1426, %v1426
    %v1443 = vmul.f32 %v1427, %v1427
    %v1444 = vmul.f32 %v1428, %v1428
    %v1445 = vmul.f32 %v1429, %v1429
    %v1446 = vmul.f32 %v1430, %v1430
    %v1447 = vmul.f32 %v1431, %v1431
    %v1464 = vlaneseq
    %v1465 = vshrl.u32 %v1464, 7
    %v1466 = vsub.s32 %v215, %v1465
    %v1467 = vrot.slane %v1432, %v1466
    %v1468 = vlaneseq
    %v1469 = vshrl.u32 %v1468, 7
    %v1470 = vsub.s32 %v220, %v1469
    %v1471 = vrot.slane %v1433, %v1470
    %v1472 = vsel %vm225, %v1471, %v1467
    %v1473 = vlaneseq
    %v1474 = vshrl.u32 %v1473, 7
    %v1475 = vsub.s32 %v227, %v1474
    %v1476 = vrot.slane %v1434, %v1475
    %v1477 = vsel %vm232, %v1476, %v1472
    %v1478 = vlaneseq
    %v1479 = vshrl.u32 %v1478, 7
    %v1480 = vsub.s32 %v234, %v1479
    %v1481 = vrot.slane %v1435, %v1480
    %v1482 = vsel %vm239, %v1481, %v1477
    %v1483 = vlaneseq
    %v1484 = vshrl.u32 %v1483, 7
    %v1485 = vsub.s32 %v241, %v1484
    %v1486 = vrot.slane %v1436, %v1485
    %v1487 = vsel %vm246, %v1486, %v1482
    %v1488 = vlaneseq
    %v1489 = vshrl.u32 %v1488, 7
    %v1490 = vsub.s32 %v248, %v1489
    %v1491 = vrot.slane %v1437, %v1490
    %v1492 = vsel %vm253, %v1491, %v1487
    %v1493 = vlaneseq
    %v1494 = vshrl.u32 %v1493, 7
    %v1495 = vsub.s32 %v255, %v1494
    %v1496 = vrot.slane %v1438, %v1495
    %v1497 = vsel %vm260, %v1496, %v1492
    %v1498 = vlaneseq
    %v1499 = vshrl.u32 %v1498, 7
    %v1500 = vsub.s32 %v262, %v1499
    %v1501 = vrot.slane %v1439, %v1500
    %v1502 = vsel %vm267, %v1501, %v1497
    %v1503 = vlaneseq
    %v1504 = vshrl.u32 %v1503, 7
    %v1505 = vsub.s32 %v215, %v1504
    %v1506 = vrot.slane %v1440, %v1505
    %v1507 = vlaneseq
    %v1508 = vshrl.u32 %v1507, 7
    %v1509 = vsub.s32 %v220, %v1508
    %v1510 = vrot.slane %v1441, %v1509
    %v1511 = vsel %vm225, %v1510, %v1506
    %v1512 = vlaneseq
    %v1513 = vshrl.u32 %v1512, 7
    %v1514 = vsub.s32 %v227, %v1513
    %v1515 = vrot.slane %v1442, %v1514
    %v1516 = vsel %vm232, %v1515, %v1511
    %v1517 = vlaneseq
    %v1518 = vshrl.u32 %v1517, 7
    %v1519 = vsub.s32 %v234, %v1518
    %v1520 = vrot.slane %v1443, %v1519
    %v1521 = vsel %vm239, %v1520, %v1516
    %v1522 = vlaneseq
    %v1523 = vshrl.u32 %v1522, 7
    %v1524 = vsub.s32 %v241, %v1523
    %v1525 = vrot.slane %v1444, %v1524
    %v1526 = vsel %vm246, %v1525, %v1521
    %v1527 = vlaneseq
    %v1528 = vshrl.u32 %v1527, 7
    %v1529 = vsub.s32 %v248, %v1528
    %v1530 = vrot.slane %v1445, %v1529
    %v1531 = vsel %vm253, %v1530, %v1526
    %v1532 = vlaneseq
    %v1533 = vshrl.u32 %v1532, 7
    %v1534 = vsub.s32 %v255, %v1533
    %v1535 = vrot.slane %v1446, %v1534
    %v1536 = vsel %vm260, %v1535, %v1531
    %v1537 = vlaneseq
    %v1538 = vshrl.u32 %v1537, 7
    %v1539 = vsub.s32 %v262, %v1538
    %v1540 = vrot.slane %v1447, %v1539
    %v1541 = vsel %vm267, %v1540, %v1536
    %v1542 = vsel %vm308, %v1541, %v1502
    %v1544 = vsel %vm311, %v1542, 0.0
    %1545 = vadd.xlane.f32.xlu0 %v1544
    %v1546 = vpop.xlane.xlu0 %1545
    %v1547 = vmul.f32 %v1546, %v315
    %v1548 = vsel %vm317, %v1547, 0.0
    %v1549 = vrot.slane %v1548, 4
    %v1550 = vadd.f32 %v1548, %v1549
    %v1551 = vrot.slane %v1550, 2
    %v1552 = vadd.f32 %v1550, %v1551
    %v1553 = vrot.slane %v1552, 1
    %v1554 = vadd.f32 %v1552, %v1553
    %v1555 = vmul.f32 %v1554, %v325
    %v1556 = vadd.f32 %v1555, 1e-05
    %v1557 = vrsqrt.pop %v1556
    %v1558 = vmul.f32 %v1416, %v1557
    %v1559 = vmul.f32 %v1417, %v1557
    %v1560 = vmul.f32 %v1418, %v1557
    %v1561 = vmul.f32 %v1419, %v1557
    %v1562 = vmul.f32 %v1420, %v1557
    %v1563 = vmul.f32 %v1421, %v1557
    %v1564 = vmul.f32 %v1422, %v1557
    %v1565 = vmul.f32 %v1423, %v1557
    %v1566 = vmul.f32 %v1424, %v1557
    %v1567 = vmul.f32 %v1425, %v1557
    %v1568 = vmul.f32 %v1426, %v1557
    %v1569 = vmul.f32 %v1427, %v1557
    %v1570 = vmul.f32 %v1428, %v1557
    %v1571 = vmul.f32 %v1429, %v1557
    %v1572 = vmul.f32 %v1430, %v1557
    %v1573 = vmul.f32 %v1431, %v1557
    %s1575 = vtos %v1307
    %v1576 = vstv %s1575
    %v1578 = vmul.f32 %v1558, %v1576
    %v1579 = vmul.f32 %v1559, %v1576
    %v1580 = vmul.f32 %v1560, %v1576
    %v1581 = vmul.f32 %v1561, %v1576
    %v1582 = vmul.f32 %v1562, %v1576
    %v1583 = vmul.f32 %v1563, %v1576
    %v1584 = vmul.f32 %v1564, %v1576
    %v1585 = vmul.f32 %v1565, %v1576
    %v1586 = vmul.f32 %v1566, %v1576
    %v1587 = vmul.f32 %v1567, %v1576
    %v1588 = vmul.f32 %v1568, %v1576
    %v1589 = vmul.f32 %v1569, %v1576
    %v1590 = vmul.f32 %v1570, %v1576
    %v1591 = vmul.f32 %v1571, %v1576
    %v1592 = vmul.f32 %v1572, %v1576
    %v1593 = vmul.f32 %v1573, %v1576
    %v1594 = vrot.slane %v1307, 1
    %s1595 = vtos %v1594
    %v1596 = vstv %s1595
    %v1598 = vadd.f32 %v1578, %v1596
    %v1599 = vadd.f32 %v1579, %v1596
    %v1600 = vadd.f32 %v1580, %v1596
    %v1601 = vadd.f32 %v1581, %v1596
    %v1602 = vadd.f32 %v1582, %v1596
    %v1603 = vadd.f32 %v1583, %v1596
    %v1604 = vadd.f32 %v1584, %v1596
    %v1605 = vadd.f32 %v1585, %v1596
    %v1606 = vadd.f32 %v1586, %v1596
    %v1607 = vadd.f32 %v1587, %v1596
    %v1608 = vadd.f32 %v1588, %v1596
    %v1609 = vadd.f32 %v1589, %v1596
    %v1610 = vadd.f32 %v1590, %v1596
    %v1611 = vadd.f32 %v1591, %v1596
    %v1612 = vadd.f32 %v1592, %v1596
    %v1613 = vadd.f32 %v1593, %v1596
    %v1614 = vmax.f32 %v1598, 0.0
    %v1615 = vmax.f32 %v1599, 0.0
    %v1616 = vmax.f32 %v1600, 0.0
    %v1617 = vmax.f32 %v1601, 0.0
    %v1618 = vmax.f32 %v1602, 0.0
    %v1619 = vmax.f32 %v1603, 0.0
    %v1620 = vmax.f32 %v1604, 0.0
    %v1621 = vmax.f32 %v1605, 0.0
    %v1622 = vmax.f32 %v1606, 0.0
    %v1623 = vmax.f32 %v1607, 0.0
    %v1624 = vmax.f32 %v1608, 0.0
    %v1625 = vmax.f32 %v1609, 0.0
    %v1626 = vmax.f32 %v1610, 0.0
    %v1627 = vmax.f32 %v1611, 0.0
    %v1628 = vmax.f32 %v1612, 0.0
    %v1629 = vmax.f32 %v1613, 0.0
    %v1630 = vld [vmem:[%s7] sm:$0xff]
    %v1631 = vld [vmem:[%s7 + $0x8] sm:$0xff]
    %v1632 = vld [vmem:[%s7 + $0x10] sm:$0xff]
    %v1633 = vld [vmem:[%s7 + $0x18] sm:$0xff]
    %v1634 = vld [vmem:[%s7 + $0x20] sm:$0xff]
    %v1635 = vld [vmem:[%s7 + $0x28] sm:$0xff]
    %v1636 = vld [vmem:[%s7 + $0x30] sm:$0xff]
    %v1637 = vld [vmem:[%s7 + $0x38] sm:$0xff]
    %v1638 = vld [vmem:[%s8] sm:$0x1]
    %v1640 = vlaneseq
    %v1641 = vshrl.u32 %v1640, 7
    %v1642 = vsub.s32 0, %v1641
    %v1643 = vrot.slane %v1638, %v1642
    %v1661 = vlaneseq
    %v1662 = vshrl.u32 %v1661, 7
    %v1663 = vsub.s32 %v215, %v1662
    %v1664 = vrot.slane %v1614, %v1663
    %v1665 = vlaneseq
    %v1666 = vshrl.u32 %v1665, 7
    %v1667 = vsub.s32 %v220, %v1666
    %v1668 = vrot.slane %v1615, %v1667
    %v1669 = vsel %vm225, %v1668, %v1664
    %v1670 = vlaneseq
    %v1671 = vshrl.u32 %v1670, 7
    %v1672 = vsub.s32 %v227, %v1671
    %v1673 = vrot.slane %v1616, %v1672
    %v1674 = vsel %vm232, %v1673, %v1669
    %v1675 = vlaneseq
    %v1676 = vshrl.u32 %v1675, 7
    %v1677 = vsub.s32 %v234, %v1676
    %v1678 = vrot.slane %v1617, %v1677
    %v1679 = vsel %vm239, %v1678, %v1674
    %v1680 = vlaneseq
    %v1681 = vshrl.u32 %v1680, 7
    %v1682 = vsub.s32 %v241, %v1681
    %v1683 = vrot.slane %v1618, %v1682
    %v1684 = vsel %vm246, %v1683, %v1679
    %v1685 = vlaneseq
    %v1686 = vshrl.u32 %v1685, 7
    %v1687 = vsub.s32 %v248, %v1686
    %v1688 = vrot.slane %v1619, %v1687
    %v1689 = vsel %vm253, %v1688, %v1684
    %v1690 = vlaneseq
    %v1691 = vshrl.u32 %v1690, 7
    %v1692 = vsub.s32 %v255, %v1691
    %v1693 = vrot.slane %v1620, %v1692
    %v1694 = vsel %vm260, %v1693, %v1689
    %v1695 = vlaneseq
    %v1696 = vshrl.u32 %v1695, 7
    %v1697 = vsub.s32 %v262, %v1696
    %v1698 = vrot.slane %v1621, %v1697
    %v1699 = vsel %vm267, %v1698, %v1694
    %v1700 = vlaneseq
    %v1701 = vshrl.u32 %v1700, 7
    %v1702 = vsub.s32 %v215, %v1701
    %v1703 = vrot.slane %v1622, %v1702
    %v1704 = vlaneseq
    %v1705 = vshrl.u32 %v1704, 7
    %v1706 = vsub.s32 %v220, %v1705
    %v1707 = vrot.slane %v1623, %v1706
    %v1708 = vsel %vm225, %v1707, %v1703
    %v1709 = vlaneseq
    %v1710 = vshrl.u32 %v1709, 7
    %v1711 = vsub.s32 %v227, %v1710
    %v1712 = vrot.slane %v1624, %v1711
    %v1713 = vsel %vm232, %v1712, %v1708
    %v1714 = vlaneseq
    %v1715 = vshrl.u32 %v1714, 7
    %v1716 = vsub.s32 %v234, %v1715
    %v1717 = vrot.slane %v1625, %v1716
    %v1718 = vsel %vm239, %v1717, %v1713
    %v1719 = vlaneseq
    %v1720 = vshrl.u32 %v1719, 7
    %v1721 = vsub.s32 %v241, %v1720
    %v1722 = vrot.slane %v1626, %v1721
    %v1723 = vsel %vm246, %v1722, %v1718
    %v1724 = vlaneseq
    %v1725 = vshrl.u32 %v1724, 7
    %v1726 = vsub.s32 %v248, %v1725
    %v1727 = vrot.slane %v1627, %v1726
    %v1728 = vsel %vm253, %v1727, %v1723
    %v1729 = vlaneseq
    %v1730 = vshrl.u32 %v1729, 7
    %v1731 = vsub.s32 %v255, %v1730
    %v1732 = vrot.slane %v1628, %v1731
    %v1733 = vsel %vm260, %v1732, %v1728
    %v1734 = vlaneseq
    %v1735 = vshrl.u32 %v1734, 7
    %v1736 = vsub.s32 %v262, %v1735
    %v1737 = vrot.slane %v1629, %v1736
    %v1738 = vsel %vm267, %v1737, %v1733
    %v1739 = vsel %vm308, %v1738, %v1699
    %v1740 = vsel %vm80, %v1739, 0
    %1742 = vmatprep.subr.mxu0 0.0
    %1743 = vmatpush1.msra.mxu0 %v1630
    %1744 = vmatprep.subr.mxu0 0.0
    %1745 = vmatpush1.msra.mxu0 %v1631
    %1746 = vmatprep.subr.mxu0 0.0
    %1747 = vmatpush1.msra.mxu0 %v1632
    %1748 = vmatprep.subr.mxu0 0.0
    %1749 = vmatpush1.msra.mxu0 %v1633
    %1750 = vmatprep.subr.mxu0 0.0
    %1751 = vmatpush1.msra.mxu0 %v1634
    %1752 = vmatprep.subr.mxu0 0.0
    %1753 = vmatpush1.msra.mxu0 %v1635
    %1754 = vmatprep.subr.mxu0 0.0
    %1755 = vmatpush1.msra.mxu0 %v1636
    %1756 = vmatprep.subr.mxu0 0.0
    %1757 = vmatpush1.msra.mxu0 %v1637
    %1758 = vmatprep.subr.mxu0 0.0
    %1759 = vmatpush1.msra.mxu0 0.0
    %1760 = vmatprep.subr.mxu0 0.0
    %1761 = vmatpush1.msra.mxu0 0.0
    %1762 = vmatprep.subr.mxu0 0.0
    %1763 = vmatpush1.msra.mxu0 0.0
    %1764 = vmatprep.subr.mxu0 0.0
    %1765 = vmatpush1.msra.mxu0 0.0
    %1766 = vmatprep.subr.mxu0 0.0
    %1767 = vmatpush1.msra.mxu0 0.0
    %1768 = vmatprep.subr.mxu0 0.0
    %1769 = vmatpush1.msra.mxu0 0.0
    %1770 = vmatprep.subr.mxu0 0.0
    %1771 = vmatpush1.msra.mxu0 0.0
    %1772 = vmatprep.subr.mxu0 0.0
    %1773 = vmatpush1.msra.mxu0 0.0
    %1774 = vmatprep.subr.mxu0 0.0
    %1775 = vmatpush1.msra.mxu0 0.0
    %1776 = vmatprep.subr.mxu0 0.0
    %1777 = vmatpush1.msra.mxu0 0.0
    %1778 = vmatprep.subr.mxu0 0.0
    %1779 = vmatpush1.msra.mxu0 0.0
    %1780 = vmatprep.subr.mxu0 0.0
    %1781 = vmatpush1.msra.mxu0 0.0
    %1782 = vmatprep.subr.mxu0 0.0
    %1783 = vmatpush1.msra.mxu0 0.0
    %1784 = vmatprep.subr.mxu0 0.0
    %1785 = vmatpush1.msra.mxu0 0.0
    %1786 = vmatprep.subr.mxu0 0.0
    %1787 = vmatpush1.msra.mxu0 0.0
    %1788 = vmatprep.subr.mxu0 0.0
    %1789 = vmatpush1.msra.mxu0 0.0
    %1790 = vmatprep.subr.mxu0 0.0
    %1791 = vmatpush1.msra.mxu0 0.0
    %1792 = vmatprep.subr.mxu0 0.0
    %1793 = vmatpush1.msra.mxu0 0.0
    %1794 = vmatprep.subr.mxu0 0.0
    %1795 = vmatpush1.msra.mxu0 0.0
    %1796 = vmatprep.subr.mxu0 0.0
    %1797 = vmatpush1.msra.mxu0 0.0
    %1798 = vmatprep.subr.mxu0 0.0
    %1799 = vmatpush1.msra.mxu0 0.0
    %1800 = vmatprep.subr.mxu0 0.0
    %1801 = vmatpush1.msra.mxu0 0.0
    %1802 = vmatprep.subr.mxu0 0.0
    %1803 = vmatpush1.msra.mxu0 0.0
    %1804 = vmatprep.subr.mxu0 0.0
    %1805 = vmatpush1.msra.mxu0 0.0
    %1806 = vmatprep.mubr.f32.mxu0 0.0
    %1807 = vmatmul.mubr.f32.gmra.mrb[0].mxu0 %v1740
    %v1808 = vpop.f32.mrb[0].mxu0
    %v1809 = vadd.f32 %v1643, %v1808
    %v1810 = vpop.f32.mrb[0].mxu0
    %1811 = vdwg.mxu0
    %v1812 = vmax.f32 %v1809, 0.0
    %v1813 = vld [vmem:[%s9] sm:$0xff]
    %v1814 = vld [vmem:[%s9 + $0x8] sm:$0xff]
    %v1815 = vld [vmem:[%s9 + $0x10] sm:$0xff]
    %v1816 = vld [vmem:[%s9 + $0x18] sm:$0xff]
    %v1817 = vld [vmem:[%s9 + $0x20] sm:$0xff]
    %v1818 = vld [vmem:[%s9 + $0x28] sm:$0xff]
    %v1819 = vld [vmem:[%s9 + $0x30] sm:$0xff]
    %v1820 = vld [vmem:[%s9 + $0x38] sm:$0xff]
    %v1821 = vld [vmem:[#allocation2] sm:$0x1]
    %v1823 = vlaneseq
    %v1824 = vshrl.u32 %v1823, 7
    %v1825 = vsub.s32 0, %v1824
    %v1826 = vrot.slane %v1821, %v1825
    %v1829 = vsel %vm80, %v1812, 0
    %1831 = vmatprep.subr.mxu0 0.0
    %1832 = vmatpush1.msra.mxu0 %v1813
    %1833 = vmatprep.subr.mxu0 0.0
    %1834 = vmatpush1.msra.mxu0 %v1814
    %1835 = vmatprep.subr.mxu0 0.0
    %1836 = vmatpush1.msra.mxu0 %v1815
    %1837 = vmatprep.subr.mxu0 0.0
    %1838 = vmatpush1.msra.mxu0 %v1816
    %1839 = vmatprep.subr.mxu0 0.0
    %1840 = vmatpush1.msra.mxu0 %v1817
    %1841 = vmatprep.subr.mxu0 0.0
    %1842 = vmatpush1.msra.mxu0 %v1818
    %1843 = vmatprep.subr.mxu0 0.0
    %1844 = vmatpush1.msra.mxu0 %v1819
    %1845 = vmatprep.subr.mxu0 0.0
    %1846 = vmatpush1.msra.mxu0 %v1820
    %1847 = vmatprep.subr.mxu0 0.0
    %1848 = vmatpush1.msra.mxu0 0.0
    %1849 = vmatprep.subr.mxu0 0.0
    %1850 = vmatpush1.msra.mxu0 0.0
    %1851 = vmatprep.subr.mxu0 0.0
    %1852 = vmatpush1.msra.mxu0 0.0
    %1853 = vmatprep.subr.mxu0 0.0
    %1854 = vmatpush1.msra.mxu0 0.0
    %1855 = vmatprep.subr.mxu0 0.0
    %1856 = vmatpush1.msra.mxu0 0.0
    %1857 = vmatprep.subr.mxu0 0.0
    %1858 = vmatpush1.msra.mxu0 0.0
    %1859 = vmatprep.subr.mxu0 0.0
    %1860 = vmatpush1.msra.mxu0 0.0
    %1861 = vmatprep.subr.mxu0 0.0
    %1862 = vmatpush1.msra.mxu0 0.0
    %1863 = vmatprep.subr.mxu0 0.0
    %1864 = vmatpush1.msra.mxu0 0.0
    %1865 = vmatprep.subr.mxu0 0.0
    %1866 = vmatpush1.msra.mxu0 0.0
    %1867 = vmatprep.subr.mxu0 0.0
    %1868 = vmatpush1.msra.mxu0 0.0
    %1869 = vmatprep.subr.mxu0 0.0
    %1870 = vmatpush1.msra.mxu0 0.0
    %1871 = vmatprep.subr.mxu0 0.0
    %1872 = vmatpush1.msra.mxu0 0.0
    %1873 = vmatprep.subr.mxu0 0.0
    %1874 = vmatpush1.msra.mxu0 0.0
    %1875 = vmatprep.subr.mxu0 0.0
    %1876 = vmatpush1.msra.mxu0 0.0
    %1877 = vmatprep.subr.mxu0 0.0
    %1878 = vmatpush1.msra.mxu0 0.0
    %1879 = vmatprep.subr.mxu0 0.0
    %1880 = vmatpush1.msra.mxu0 0.0
    %1881 = vmatprep.subr.mxu0 0.0
    %1882 = vmatpush1.msra.mxu0 0.0
    %1883 = vmatprep.subr.mxu0 0.0
    %1884 = vmatpush1.msra.mxu0 0.0
    %1885 = vmatprep.subr.mxu0 0.0
    %1886 = vmatpush1.msra.mxu0 0.0
    %1887 = vmatprep.subr.mxu0 0.0
    %1888 = vmatpush1.msra.mxu0 0.0
    %1889 = vmatprep.subr.mxu0 0.0
    %1890 = vmatpush1.msra.mxu0 0.0
    %1891 = vmatprep.subr.mxu0 0.0
    %1892 = vmatpush1.msra.mxu0 0.0
    %1893 = vmatprep.subr.mxu0 0.0
    %1894 = vmatpush1.msra.mxu0 0.0
    %1895 = vmatprep.mubr.f32.mxu0 0.0
    %1896 = vmatmul.mubr.f32.gmra.mrb[0].mxu0 %v1829
    %v1897 = vpop.f32.mrb[0].mxu0
    %v1898 = vadd.f32 %v1826, %v1897
    %v1899 = vpop.f32.mrb[0].mxu0
    %1900 = vdwg.mxu0
    %v1901 = vtanh.pop %v1898
    %vm1902 = vcmask 1024
    %1903 = vst.msk [vmem:[%s12] sm:$0x3] %vm1902, %v1901
    // Predicated region
    $region46: #{net_forward.3} parent=1 // pred_check
      _
    $region47: #{net_forward.3} parent=1 // pred_check_branch
      %1905 = sbr.rel (0) target = $region49
    $region48: #{net_forward.3} parent=1 // pred_region
      %s1907 = ssub.s32 32, 32
      %1908 = vsyncadd [#allocation4], %s1907
      %s1910 = sshll.u32 [#allocation3], 4
      %s1911 = int_to_ptr.vmem [resolvable:$true] %s1910
      %1913 = dma.vmem_to_hbm [thread:$0]  %s1911, 32, %s11, [#allocation4]
    $region49: #{net_forward.3} parent=1 // pred_fallthru
      _
    // Predicated region
    $region50: #{net_forward.3} parent=1 // pred_check
      _
    $region51: #{net_forward.3} parent=1 // pred_check_branch
      %1915 = sbr.rel (0) target = $region53
    $region52: #{net_forward.3} parent=1 // pred_region
      _
    $region53: #{net_forward.3} parent=1 // pred_fallthru
      _
    // Predicated region
    $region54: #{net_forward.3} parent=1 // pred_check
      _
    $region55: #{net_forward.3} parent=1 // pred_check_branch
      %1917 = sbr.rel (0) target = $region57
    $region56: #{net_forward.3} parent=1 // pred_region
      %1918 = dma.done [#allocation4], 32
    $region57: #{net_forward.3} parent=1 // pred_fallthru
      _
    // Predicated region
    $region58: #{net_forward.3} parent=1 // pred_check
      _
    $region59: #{net_forward.3} parent=1 // pred_check_branch
      %1920 = sbr.rel (0) target = $region61
    $region60: #{net_forward.3} parent=1 // pred_region
      _
    $region61: #{net_forward.3} parent=1 // pred_fallthru
      _
    %1921 = vsyncpa [#allocation4], 1

// kernel: net_forward.2
$region0: #{net_forward.2}
  #allocation0 [shape = 'u32[]', space=smem, size = 0x4, offset = 0x4, fixed_abs, tag = 'smem constant byte address 0x4 - core index']
  #allocation1 [shape = 'u32[144,128]{1,0:T(1,128)}', space=vmem, size = 0x12000, scoped, tag = 'internal scratch']
  #allocation2 [shape = 'f32[128,64]{1,0:T(8,128)}', space=vmem, size = 0x10000, scoped, tag = 'scratch operand']
  #allocation3 [shape = 's32[1]{0}', space=sflag, size = 0x4, scoped, tag = 'scoped memory for net_forward.2']
  #allocation4 [shape = 'u8[512]{0}', space=smem, size = 0x200, scoped, tag = 'prefetched SMEM operand 0']
  %s0 = inlined_call_operand.vmem [shape: s32[14], index: 0, kind: input, shape index: {}]
  %s1 = inlined_call_operand.vmem [shape: bf16[14,9,64,64], index: 1, kind: input, shape index: {}]
  %s2 = inlined_call_operand.hbm [shape: bf16[14,9,64,64], index: 2, kind: input, shape index: {}]
  %s3 = inlined_call_operand.vmem [shape: bf16[14,64,64], index: 3, kind: input, shape index: {}]
  %s4 = inlined_call_operand.vmem [shape: f32[14,6,64], index: 4, kind: input, shape index: {}]
  %s5 = inlined_call_operand.vmem [shape: bf16[9,128,128], index: 5, kind: input, shape index: {}]
  %s6 = inlined_call_operand.vmem [shape: bf16[128,128], index: 6, kind: input, shape index: {}]
  %s7 = inlined_call_operand.vmem [shape: bf16[128,64], index: 7, kind: input, shape index: {}]
  %s8 = inlined_call_operand.vmem [shape: f32[2,64], index: 8, kind: input, shape index: {}]
  %s9 = inlined_call_operand.vmem [shape: f32[128,64], index: 9, kind: output, shape index: {}]
  %s10 = sld [smem:[#allocation0]]
  $region77: #{net_forward.2} parent=0
    _
  %s12 = ssub.s32 1, %s10
  %s13 = scalar_select 0, %s12, %s10
  %s14 = sshll.u32 %s0, 4
  %s15 = int_to_ptr.vmem [resolvable:$true] %s14
  %17 = dma.vmem_to_smem %s15, 16, [#allocation4], [#allocation3]
  %18 = dma.done [#allocation3], 16
  %19 = sfence
  $region1: #{net_forward.2} parent=0
    #allocation5 [shape = 'u8[294912]{0}', space=vmem, size = 0x48000, scoped, tag = 'input window, operand 2']
    #allocation6 [shape = 's32[2]{0}', space=sflag, size = 0x8, scoped, tag = 'scoped memory for net_forward.2']
    %20 = vsyncpa [#allocation6], 0
    %s21 = scalar_lea.sflag [#allocation6], 1
    %22 = vsyncpa %s21, 0
    loop: start=0, step=1, limit=16
    $region2: #{net_forward.2} parent=1 // loop_pre_header
      _
    $region3: #{net_forward.2} parent=1 // loop_header
      %s24 = sphi 0, %s28
      %p25 = scmp.ge.s32.totalorder %s24, 16
      %s34 = sphi 0, %s36
      %s37 = sphi 0, %s34
      %s38 = sphi 0, %s37
      %s54 = sphi 0, %s38
      %s60 = sphi 0, %s62
      %s63 = sphi 0, %s60
      %s64 = sphi 0, %s63
      %s80 = sphi 0, %s64
      %s86 = sphi 0, %s88
      %s89 = sphi 0, %s86
      %s90 = sphi 0, %s89
      %s106 = sphi 0, %s90
      %s112 = sphi 0, %s114
      %s115 = sphi 0, %s112
      %s116 = sphi 0, %s115
      %s132 = sphi 0, %s116
      %s136 = sphi 0, %s136
      %s138 = sphi 0, %s136
      %s139 = sphi 0, %s138
      %s153 = sphi 0, %s139
      %s157 = sphi 0, %s157
      %s159 = sphi 0, %s157
      %s160 = sphi 0, %s159
      %s174 = sphi 0, %s160
      %s178 = sphi 0, %s178
      %s180 = sphi 0, %s178
      %s181 = sphi 0, %s180
      %s195 = sphi 0, %s181
      %s199 = sphi 0, %s199
      %s201 = sphi 0, %s199
      %s202 = sphi 0, %s201
      %s216 = sphi 0, %s202
      %s220 = sphi 0, %s220
      %s222 = sphi 0, %s220
      %s223 = sphi 0, %s222
      %s237 = sphi 0, %s223
    $region4: #{net_forward.2} parent=1 // loop_header_branch
      %27 = sbr.rel (%p25) target = $region8
    $region5: #{net_forward.2} parent=1 // loop_body
      %s29 = ssub.s32 %s24, 1
      %s30 = ssub.s32 %s24, 2
      %s31 = sadd.s32 %s24, 1
      %s32 = ssub.s32 %s24, %s31
      %p33 = scmp.eq.s32.totalorder %s32, 0
      %s35 = sadd.s32 %s34, 1
      %s36 = scalar_select %p33, %s34, %s35
      %p39 = pneg %p33
      %p40 = scmp.eq.s32.totalorder %s24, 13
      %p41 = por %p39, %p40
      %p42 = scmp.ne.s32.totalorder %s34, %s37
      %p43 = scmp.eq.s32.totalorder %s24, 0
      %p44 = por %p42, %p43
      %p45 = scmp.ne.s32.totalorder %s34, %s37
      %p46 = scmp.eq.s32.totalorder %s29, 13
      %p47 = por %p45, %p46
      %p48 = scmp.ne.s32.totalorder %s37, %s38
      %p49 = scmp.eq.s32.totalorder %s29, 0
      %p50 = por %p48, %p49
      %p51 = scmp.ne.s32.totalorder %s37, %s38
      %p52 = scmp.eq.s32.totalorder %s30, 13
      %p53 = por %p51, %p52
      %p55 = scmp.ne.s32.totalorder %s38, %s54
      %p56 = scmp.eq.s32.totalorder %s30, 0
      %p57 = por %p55, %p56
      %s58 = ssub.s32 %s24, %s31
      %p59 = scmp.eq.s32.totalorder %s58, 0
      %s61 = sadd.s32 %s60, 1
      %s62 = scalar_select %p59, %s60, %s61
      %p65 = pneg %p59
      %p66 = scmp.eq.s32.totalorder %s24, 13
      %p67 = por %p65, %p66
      %p68 = scmp.ne.s32.totalorder %s60, %s63
      %p69 = scmp.eq.s32.totalorder %s24, 0
      %p70 = por %p68, %p69
      %p71 = scmp.ne.s32.totalorder %s60, %s63
      %p72 = scmp.eq.s32.totalorder %s29, 13
      %p73 = por %p71, %p72
      %p74 = scmp.ne.s32.totalorder %s63, %s64
      %p75 = scmp.eq.s32.totalorder %s29, 0
      %p76 = por %p74, %p75
      %p77 = scmp.ne.s32.totalorder %s63, %s64
      %p78 = scmp.eq.s32.totalorder %s30, 13
      %p79 = por %p77, %p78
      %p81 = scmp.ne.s32.totalorder %s64, %s80
      %p82 = scmp.eq.s32.totalorder %s30, 0
      %p83 = por %p81, %p82
      %s84 = ssub.s32 %s24, %s31
      %p85 = scmp.eq.s32.totalorder %s84, 0
      %s87 = sadd.s32 %s86, 1
      %s88 = scalar_select %p85, %s86, %s87
      %p91 = pneg %p85
      %p92 = scmp.eq.s32.totalorder %s24, 13
      %p93 = por %p91, %p92
      %p94 = scmp.ne.s32.totalorder %s86, %s89
      %p95 = scmp.eq.s32.totalorder %s24, 0
      %p96 = por %p94, %p95
      %p97 = scmp.ne.s32.totalorder %s86, %s89
      %p98 = scmp.eq.s32.totalorder %s29, 13
      %p99 = por %p97, %p98
      %p100 = scmp.ne.s32.totalorder %s89, %s90
      %p101 = scmp.eq.s32.totalorder %s29, 0
      %p102 = por %p100, %p101
      %p103 = scmp.ne.s32.totalorder %s89, %s90
      %p104 = scmp.eq.s32.totalorder %s30, 13
      %p105 = por %p103, %p104
      %p107 = scmp.ne.s32.totalorder %s90, %s106
      %p108 = scmp.eq.s32.totalorder %s30, 0
      %p109 = por %p107, %p108
      %s110 = ssub.s32 %s24, %s31
      %p111 = scmp.eq.s32.totalorder %s110, 0
      %s113 = sadd.s32 %s112, 1
      %s114 = scalar_select %p111, %s112, %s113
      %p117 = pneg %p111
      %p118 = scmp.eq.s32.totalorder %s24, 13
      %p119 = por %p117, %p118
      %p120 = scmp.ne.s32.totalorder %s112, %s115
      %p121 = scmp.eq.s32.totalorder %s24, 0
      %p122 = por %p120, %p121
      %p123 = scmp.ne.s32.totalorder %s112, %s115
      %p124 = scmp.eq.s32.totalorder %s29, 13
      %p125 = por %p123, %p124
      %p126 = scmp.ne.s32.totalorder %s115, %s116
      %p127 = scmp.eq.s32.totalorder %s29, 0
      %p128 = por %p126, %p127
      %p129 = scmp.ne.s32.totalorder %s115, %s116
      %p130 = scmp.eq.s32.totalorder %s30, 13
      %p131 = por %p129, %p130
      %p133 = scmp.ne.s32.totalorder %s116, %s132
      %p134 = scmp.eq.s32.totalorder %s30, 0
      %p135 = por %p133, %p134
      %s137 = sadd.s32 %s136, 1
      %p140 = scmp.eq.s32.totalorder %s24, 13
      %p141 = scmp.ne.s32.totalorder %s136, %s138
      %p142 = scmp.eq.s32.totalorder %s24, 0
      %p143 = por %p141, %p142
      %p144 = scmp.ne.s32.totalorder %s136, %s138
      %p145 = scmp.eq.s32.totalorder %s29, 13
      %p146 = por %p144, %p145
      %p147 = scmp.ne.s32.totalorder %s138, %s139
      %p148 = scmp.eq.s32.totalorder %s29, 0
      %p149 = por %p147, %p148
      %p150 = scmp.ne.s32.totalorder %s138, %s139
      %p151 = scmp.eq.s32.totalorder %s30, 13
      %p152 = por %p150, %p151
      %p154 = scmp.ne.s32.totalorder %s139, %s153
      %p155 = scmp.eq.s32.totalorder %s30, 0
      %p156 = por %p154, %p155
      %s158 = sadd.s32 %s157, 1
      %p161 = scmp.eq.s32.totalorder %s24, 13
      %p162 = scmp.ne.s32.totalorder %s157, %s159
      %p163 = scmp.eq.s32.totalorder %s24, 0
      %p164 = por %p162, %p163
      %p165 = scmp.ne.s32.totalorder %s157, %s159
      %p166 = scmp.eq.s32.totalorder %s29, 13
      %p167 = por %p165, %p166
      %p168 = scmp.ne.s32.totalorder %s159, %s160
      %p169 = scmp.eq.s32.totalorder %s29, 0
      %p170 = por %p168, %p169
      %p171 = scmp.ne.s32.totalorder %s159, %s160
      %p172 = scmp.eq.s32.totalorder %s30, 13
      %p173 = por %p171, %p172
      %p175 = scmp.ne.s32.totalorder %s160, %s174
      %p176 = scmp.eq.s32.totalorder %s30, 0
      %p177 = por %p175, %p176
      %s179 = sadd.s32 %s178, 1
      %p182 = scmp.eq.s32.totalorder %s24, 13
      %p183 = scmp.ne.s32.totalorder %s178, %s180
      %p184 = scmp.eq.s32.totalorder %s24, 0
      %p185 = por %p183, %p184
      %p186 = scmp.ne.s32.totalorder %s178, %s180
      %p187 = scmp.eq.s32.totalorder %s29, 13
      %p188 = por %p186, %p187
      %p189 = scmp.ne.s32.totalorder %s180, %s181
      %p190 = scmp.eq.s32.totalorder %s29, 0
      %p191 = por %p189, %p190
      %p192 = scmp.ne.s32.totalorder %s180, %s181
      %p193 = scmp.eq.s32.totalorder %s30, 13
      %p194 = por %p192, %p193
      %p196 = scmp.ne.s32.totalorder %s181, %s195
      %p197 = scmp.eq.s32.totalorder %s30, 0
      %p198 = por %p196, %p197
      %s200 = sadd.s32 %s199, 1
      %p203 = scmp.eq.s32.totalorder %s24, 13
      %p204 = scmp.ne.s32.totalorder %s199, %s201
      %p205 = scmp.eq.s32.totalorder %s24, 0
      %p206 = por %p204, %p205
      %p207 = scmp.ne.s32.totalorder %s199, %s201
      %p208 = scmp.eq.s32.totalorder %s29, 13
      %p209 = por %p207, %p208
      %p210 = scmp.ne.s32.totalorder %s201, %s202
      %p211 = scmp.eq.s32.totalorder %s29, 0
      %p212 = por %p210, %p211
      %p213 = scmp.ne.s32.totalorder %s201, %s202
      %p214 = scmp.eq.s32.totalorder %s30, 13
      %p215 = por %p213, %p214
      %p217 = scmp.ne.s32.totalorder %s202, %s216
      %p218 = scmp.eq.s32.totalorder %s30, 0
      %p219 = por %p217, %p218
      %s221 = sadd.s32 %s220, 1
      %p224 = scmp.eq.s32.totalorder %s24, 13
      %p225 = scmp.ne.s32.totalorder %s220, %s222
      %p226 = scmp.eq.s32.totalorder %s24, 0
      %p227 = por %p225, %p226
      %p228 = scmp.ne.s32.totalorder %s220, %s222
      %p229 = scmp.eq.s32.totalorder %s29, 13
      %p230 = por %p228, %p229
      %p231 = scmp.ne.s32.totalorder %s222, %s223
      %p232 = scmp.eq.s32.totalorder %s29, 0
      %p233 = por %p231, %p232
      %p234 = scmp.ne.s32.totalorder %s222, %s223
      %p235 = scmp.eq.s32.totalorder %s30, 13
      %p236 = por %p234, %p235
      %p238 = scmp.ne.s32.totalorder %s223, %s237
      %p239 = scmp.eq.s32.totalorder %s30, 0
      %p240 = por %p238, %p239
      %p241 = scmp.le.s32.totalorder 1, %s24
      %p242 = scmp.lt.s32.totalorder %s24, 15
      %p243 = pnand %p241, %p242
      %p244 = pneg %p243
      // Predicated region
      $region9: #{net_forward.2} parent=5 // pred_check
        _
      $region10: #{net_forward.2} parent=5 // pred_check_branch
        %246 = sbr.rel (%p243) target = $region12
      $region11: #{net_forward.2} parent=5 // pred_region
        %s247 = ssub.s32 %s24, 1
        // Predicated region
        $region13: #{net_forward.2} parent=11 // pred_check
          %p248 = pneg %p149
        $region14: #{net_forward.2} parent=11 // pred_check_branch
          %250 = sbr.rel (%p248) target = $region16
        $region15: #{net_forward.2} parent=11 // pred_region
          _
        $region16: #{net_forward.2} parent=11 // pred_fallthru
          _
        // Predicated region
        $region17: #{net_forward.2} parent=11 // pred_check
          %p251 = pneg %p170
        $region18: #{net_forward.2} parent=11 // pred_check_branch
          %253 = sbr.rel (%p251) target = $region20
        $region19: #{net_forward.2} parent=11 // pred_region
          _
        $region20: #{net_forward.2} parent=11 // pred_fallthru
          _
        // Predicated region
        $region21: #{net_forward.2} parent=11 // pred_check
          %p254 = pneg %p191
        $region22: #{net_forward.2} parent=11 // pred_check_branch
          %256 = sbr.rel (%p254) target = $region24
        $region23: #{net_forward.2} parent=11 // pred_region
          _
        $region24: #{net_forward.2} parent=11 // pred_fallthru
          _
        // Predicated region
        $region25: #{net_forward.2} parent=11 // pred_check
          %p257 = pneg %p212
        $region26: #{net_forward.2} parent=11 // pred_check_branch
          %259 = sbr.rel (%p257) target = $region28
        $region27: #{net_forward.2} parent=11 // pred_region
          _
        $region28: #{net_forward.2} parent=11 // pred_fallthru
          _
      $region12: #{net_forward.2} parent=5 // pred_fallthru
        _
      %p260 = scmp.lt.s32.totalorder %s24, 14
      // Predicated region
      $region29: #{net_forward.2} parent=5 // pred_check
        %p261 = pneg %p260
      $region30: #{net_forward.2} parent=5 // pred_check_branch
        %263 = sbr.rel (%p261) target = $region32
      $region31: #{net_forward.2} parent=5 // pred_region
        // Predicated region
        $region33: #{net_forward.2} parent=31 // pred_check
          %p264 = pneg %p44
        $region34: #{net_forward.2} parent=31 // pred_check_branch
          %266 = sbr.rel (%p264) target = $region36
        $region35: #{net_forward.2} parent=31 // pred_region
          %p267 = scmp.lt.s32.totalorder %s24, 13
          %s268 = scalar_select %p267, %s24, 13
          %s269 = smul.addr %s268, 72
          %s270 = smul.addr %s269, 4
          %s271 = scalar_lea.vmem %s1, %s270
        $region36: #{net_forward.2} parent=31 // pred_fallthru
          _
        // Predicated region
        $region37: #{net_forward.2} parent=31 // pred_check
          %p272 = pneg %p70
        $region38: #{net_forward.2} parent=31 // pred_check_branch
          %274 = sbr.rel (%p272) target = $region40
        $region39: #{net_forward.2} parent=31 // pred_region
          %s275 = sand.u32 %s60, 1
          %s276 = scalar_lea.sflag [#allocation6], %s275
          %s277 = sand.u32 %s60, 1
          %s278 = smul.addr %s277, 288
          %s279 = scalar_lea.vmem [#allocation5], %s278
          %s281 = ssub.s32 4608, 4608
          %282 = vsyncadd %s276, %s281
          %s283 = smul.addr %s24, 72
          %s284 = smul.addr %s283, 64
          %s285 = scalar_lea.hbm %s2, %s284
          %s286 = sshll.u32 %s279, 4
          %s287 = int_to_ptr.vmem [resolvable:$true] %s286
          %292 = dma.hbm_to_vmem [thread:$0]  %s285, 4608, %s287, %s276, 64, 64, 4
        $region40: #{net_forward.2} parent=31 // pred_fallthru
          _
        // Predicated region
        $region41: #{net_forward.2} parent=31 // pred_check
          %p293 = pneg %p96
        $region42: #{net_forward.2} parent=31 // pred_check_branch
          %295 = sbr.rel (%p293) target = $region44
        $region43: #{net_forward.2} parent=31 // pred_region
          %p296 = scmp.lt.s32.totalorder %s24, 13
          %s297 = scalar_select %p296, %s24, 13
          %s298 = smul.addr %s297, 8
          %s299 = smul.addr %s298, 4
          %s300 = scalar_lea.vmem %s3, %s299
        $region44: #{net_forward.2} parent=31 // pred_fallthru
          _
        // Predicated region
        $region45: #{net_forward.2} parent=31 // pred_check
          %p301 = pneg %p122
        $region46: #{net_forward.2} parent=31 // pred_check_branch
          %303 = sbr.rel (%p301) target = $region48
        $region47: #{net_forward.2} parent=31 // pred_region
          %p304 = scmp.lt.s32.totalorder %s24, 13
          %s305 = scalar_select %p304, %s24, 13
          %s306 = smul.addr %s305, 8
          %s307 = scalar_lea.vmem %s4, %s306
        $region48: #{net_forward.2} parent=31 // pred_fallthru
          _
      $region32: #{net_forward.2} parent=5 // pred_fallthru
        _
      %p308 = scmp.le.s32.totalorder 1, %s24
      %p309 = scmp.lt.s32.totalorder %s24, 15
      %p310 = pnand %p308, %p309
      %p311 = pneg %p310
      // Predicated region
      $region49: #{net_forward.2} parent=5 // pred_check
        _
      $region50: #{net_forward.2} parent=5 // pred_check_branch
        %313 = sbr.rel (%p310) target = $region52
      $region51: #{net_forward.2} parent=5 // pred_region
        %s314 = ssub.s32 %s24, 1
        %s315 = sand.u32 %s63, 1
        %s316 = scalar_lea.sflag [#allocation6], %s315
        %s317 = sand.u32 %s63, 1
        %s318 = smul.addr %s317, 288
        %s319 = scalar_lea.vmem [#allocation5], %s318
        // Predicated region
        $region53: #{net_forward.2} parent=51 // pred_check
          %p320 = pneg %p76
        $region54: #{net_forward.2} parent=51 // pred_check_branch
          %322 = sbr.rel (%p320) target = $region56
        $region55: #{net_forward.2} parent=51 // pred_region
          %323 = dma.done %s316, 4608
        $region56: #{net_forward.2} parent=51 // pred_fallthru
          _
        %p324 = scmp.lt.s32.totalorder %s29, 13
        %s325 = scalar_select %p324, %s29, 13
        %s326 = smul.addr %s325, 72
        %s327 = smul.addr %s326, 4
        %s328 = scalar_lea.vmem %s1, %s327
        %p329 = pneg %p50
        %p330 = pneg %p47
        %s331 = sand.u32 %s63, 1
        %s332 = scalar_lea.sflag [#allocation6], %s331
        %s333 = sand.u32 %s63, 1
        %s334 = smul.addr %s333, 288
        %s335 = scalar_lea.vmem [#allocation5], %s334
        %p336 = pneg %p76
        %p337 = pneg %p73
        %p338 = scmp.lt.s32.totalorder %s29, 13
        %s339 = scalar_select %p338, %s29, 13
        %s340 = smul.addr %s339, 8
        %s341 = smul.addr %s340, 4
        %s342 = scalar_lea.vmem %s3, %s341
        %p343 = pneg %p102
        %p344 = pneg %p99
        %p345 = scmp.lt.s32.totalorder %s29, 13
        %s346 = scalar_select %p345, %s29, 13
        %s347 = smul.addr %s346, 8
        %s348 = scalar_lea.vmem %s4, %s347
        %p349 = pneg %p128
        %p350 = pneg %p125
        %p351 = pneg %p149
        %p352 = pneg %p146
        %p353 = pneg %p170
        %p354 = pneg %p167
        %p355 = pneg %p191
        %p356 = pneg %p188
        %p357 = pneg %p212
        %p358 = pneg %p209
        %p359 = pneg %p233
        %p360 = pneg %p230
        %p361 = scmp.lt.s32.totalorder %s29, 13
        %s362 = scalar_select %p361, %s29, 13
        %s363 = smul.addr %s362, 72
        %s364 = smul.addr %s363, 4
        %s365 = scalar_lea.vmem %s1, %s364
        %p366 = scmp.lt.s32.totalorder %s29, 13
        %s367 = scalar_select %p366, %s29, 13
        %s368 = smul.addr %s367, 8
        %s369 = smul.addr %s368, 4
        %s370 = scalar_lea.vmem %s3, %s369
        %p371 = scmp.lt.s32.totalorder %s29, 13
        %s372 = scalar_select %p371, %s29, 13
        %s373 = smul.addr %s372, 8
        %s374 = scalar_lea.vmem %s4, %s373
        %p376 = scmp.eq.s32.totalorder %s29, 0
        // Predicated region
        $region57: #{net_forward.2} parent=51 // pred_check
          %p377 = pneg %p376
        $region58: #{net_forward.2} parent=51 // pred_check_branch
          %379 = sbr.rel (%p377) target = $region60
        $region59: #{net_forward.2} parent=51 // pred_region
          %v380 = vld [vmem:[%s8] sm:$0x3]
          %v381 = vld [vmem:[%s6] sm:$0xf]
          %v382 = vld [vmem:[%s6 + $0x4] sm:$0xf]
          %v383 = vld [vmem:[%s6 + $0x8] sm:$0xf]
          %v384 = vld [vmem:[%s6 + $0xc] sm:$0xf]
          %v385 = vld [vmem:[%s6 + $0x10] sm:$0xf]
          %v386 = vld [vmem:[%s6 + $0x14] sm:$0xf]
          %v387 = vld [vmem:[%s6 + $0x18] sm:$0xf]
          %v388 = vld [vmem:[%s6 + $0x1c] sm:$0xf]
          %v389 = vld [vmem:[%s6 + $0x20] sm:$0xf]
          %v390 = vld [vmem:[%s6 + $0x24] sm:$0xf]
          %v391 = vld [vmem:[%s6 + $0x28] sm:$0xf]
          %v392 = vld [vmem:[%s6 + $0x2c] sm:$0xf]
          %v393 = vld [vmem:[%s6 + $0x30] sm:$0xf]
          %v394 = vld [vmem:[%s6 + $0x34] sm:$0xf]
          %v395 = vld [vmem:[%s6 + $0x38] sm:$0xf]
          %v396 = vld [vmem:[%s6 + $0x3c] sm:$0xf]
          %v397 = vld [vmem:[%s7] sm:$0xf]
          %v398 = vld [vmem:[%s7 + $0x4] sm:$0xf]
          %v399 = vld [vmem:[%s7 + $0x8] sm:$0xf]
          %v400 = vld [vmem:[%s7 + $0xc] sm:$0xf]
          %v401 = vld [vmem:[%s7 + $0x10] sm:$0xf]
          %v402 = vld [vmem:[%s7 + $0x14] sm:$0xf]
          %v403 = vld [vmem:[%s7 + $0x18] sm:$0xf]
          %v404 = vld [vmem:[%s7 + $0x1c] sm:$0xf]
          %v405 = vld [vmem:[%s7 + $0x20] sm:$0xf]
          %v406 = vld [vmem:[%s7 + $0x24] sm:$0xf]
          %v407 = vld [vmem:[%s7 + $0x28] sm:$0xf]
          %v408 = vld [vmem:[%s7 + $0x2c] sm:$0xf]
          %v409 = vld [vmem:[%s7 + $0x30] sm:$0xf]
          %v410 = vld [vmem:[%s7 + $0x34] sm:$0xf]
          %v411 = vld [vmem:[%s7 + $0x38] sm:$0xf]
          %v412 = vld [vmem:[%s7 + $0x3c] sm:$0xf]
          %v429 = vunpack.c.l.b16 %v381
          %v430 = vunpack.c.l.b16 %v382
          %v431 = vunpack.c.l.b16 %v383
          %v432 = vunpack.c.l.b16 %v384
          %v433 = vunpack.c.l.b16 %v385
          %v434 = vunpack.c.l.b16 %v386
          %v435 = vunpack.c.l.b16 %v387
          %v436 = vunpack.c.l.b16 %v388
          %v437 = vunpack.c.l.b16 %v389
          %v438 = vunpack.c.l.b16 %v390
          %v439 = vunpack.c.l.b16 %v391
          %v440 = vunpack.c.l.b16 %v392
          %v441 = vunpack.c.l.b16 %v393
          %v442 = vunpack.c.l.b16 %v394
          %v443 = vunpack.c.l.b16 %v395
          %v444 = vunpack.c.l.b16 %v396
          %v445 = vpack.c.b16 %v430, %v429
          %v446 = vpack.c.b16 %v432, %v431
          %v447 = vpack.c.b16 %v434, %v433
          %v448 = vpack.c.b16 %v436, %v435
          %v449 = vpack.c.b16 %v438, %v437
          %v450 = vpack.c.b16 %v440, %v439
          %v451 = vpack.c.b16 %v442, %v441
          %v452 = vpack.c.b16 %v444, %v443
          %v477 = vunpack.c.l.b16 %v397
          %v478 = vunpack.c.l.b16 %v398
          %v479 = vunpack.c.l.b16 %v399
          %v480 = vunpack.c.l.b16 %v400
          %v481 = vunpack.c.l.b16 %v401
          %v482 = vunpack.c.l.b16 %v402
          %v483 = vunpack.c.l.b16 %v403
          %v484 = vunpack.c.l.b16 %v404
          %v485 = vunpack.c.l.b16 %v405
          %v486 = vunpack.c.l.b16 %v406
          %v487 = vunpack.c.l.b16 %v407
          %v488 = vunpack.c.l.b16 %v408
          %v489 = vunpack.c.l.b16 %v409
          %v490 = vunpack.c.l.b16 %v410
          %v491 = vunpack.c.l.b16 %v411
          %v492 = vunpack.c.l.b16 %v412
          %v493 = vpack.c.b16 %v478, %v477
          %v494 = vpack.c.b16 %v480, %v479
          %v495 = vpack.c.b16 %v482, %v481
          %v496 = vpack.c.b16 %v484, %v483
          %v497 = vpack.c.b16 %v486, %v485
          %v498 = vpack.c.b16 %v488, %v487
          %v499 = vpack.c.b16 %v490, %v489
          %v500 = vpack.c.b16 %v492, %v491
          %509 = vmatprep.subr.bf16.mxu0 0
          %510 = vmatpush1.bf16.msra.mxu0 %v493
          %511 = vmatprep.subr.bf16.mxu0 0
          %512 = vmatpush1.bf16.msra.mxu0 %v494
          %513 = vmatprep.subr.bf16.mxu0 0
          %514 = vmatpush1.bf16.msra.mxu0 %v495
          %515 = vmatprep.subr.bf16.mxu0 0
          %516 = vmatpush1.bf16.msra.mxu0 %v496
          %517 = vmatprep.subr.bf16.mxu0 0
          %518 = vmatpush1.bf16.msra.mxu0 %v497
          %519 = vmatprep.subr.bf16.mxu0 0
          %520 = vmatpush1.bf16.msra.mxu0 %v498
          %521 = vmatprep.subr.bf16.mxu0 0
          %522 = vmatpush1.bf16.msra.mxu0 %v499
          %523 = vmatprep.subr.bf16.mxu0 0
          %524 = vmatpush1.bf16.msra.mxu0 %v500
          %525 = vmatprep.subr.bf16.mxu0 0
          %526 = vmatpush1.bf16.msra.mxu0 0
          %527 = vmatprep.subr.bf16.mxu0 0
          %528 = vmatpush1.bf16.msra.mxu0 0
          %529 = vmatprep.subr.bf16.mxu0 0
          %530 = vmatpush1.bf16.msra.mxu0 0
          %531 = vmatprep.subr.bf16.mxu0 0
          %532 = vmatpush1.bf16.msra.mxu0 0
          %533 = vmatprep.subr.bf16.mxu0 0
          %534 = vmatpush1.bf16.msra.mxu0 0
          %535 = vmatprep.subr.bf16.mxu0 0
          %536 = vmatpush1.bf16.msra.mxu0 0
          %537 = vmatprep.subr.bf16.mxu0 0
          %538 = vmatpush1.bf16.msra.mxu0 0
          %539 = vmatprep.subr.bf16.mxu0 0
          %540 = vmatpush1.bf16.msra.mxu0 0
          %541 = vmatprep.mubr.bf16.mxu0 0
          %542 = vmatmul.mubr.bf16.gmra.mrb[0].mxu0 %v445
          %v543 = vpop.f32.mrb[0].mxu0
          %v544 = vadd.f32 0.0, %v543
          %v545 = vpop.f32.mrb[0].mxu0
          %v546 = vpop.f32.mrb[0].mxu0
          %v547 = vadd.f32 0.0, %v546
          %v548 = vpop.f32.mrb[0].mxu0
          %549 = vmatprep.mubr.bf16.mxu0 0
          %550 = vmatmul.mubr.bf16.gmra.mrb[0].mxu0 %v446
          %v551 = vpop.f32.mrb[0].mxu0
          %v552 = vadd.f32 0.0, %v551
          %v553 = vpop.f32.mrb[0].mxu0
          %v554 = vpop.f32.mrb[0].mxu0
          %v555 = vadd.f32 0.0, %v554
          %v556 = vpop.f32.mrb[0].mxu0
          %557 = vmatprep.mubr.bf16.mxu0 0
          %558 = vmatmul.mubr.bf16.gmra.mrb[0].mxu0 %v447
          %v559 = vpop.f32.mrb[0].mxu0
          %v560 = vadd.f32 0.0, %v559
          %v561 = vpop.f32.mrb[0].mxu0
          %v562 = vpop.f32.mrb[0].mxu0
          %v563 = vadd.f32 0.0, %v562
          %v564 = vpop.f32.mrb[0].mxu0
          %565 = vmatprep.mubr.bf16.mxu0 0
          %566 = vmatmul.mubr.bf16.gmra.mrb[0].mxu0 %v448
          %v567 = vpop.f32.mrb[0].mxu0
          %v568 = vadd.f32 0.0, %v567
          %v569 = vpop.f32.mrb[0].mxu0
          %v570 = vpop.f32.mrb[0].mxu0
          %v571 = vadd.f32 0.0, %v570
          %v572 = vpop.f32.mrb[0].mxu0
          %573 = vmatprep.mubr.bf16.mxu0 0
          %574 = vmatmul.mubr.bf16.gmra.mrb[0].mxu0 %v449
          %v575 = vpop.f32.mrb[0].mxu0
          %v576 = vadd.f32 0.0, %v575
          %v577 = vpop.f32.mrb[0].mxu0
          %v578 = vpop.f32.mrb[0].mxu0
          %v579 = vadd.f32 0.0, %v578
          %v580 = vpop.f32.mrb[0].mxu0
          %581 = vmatprep.mubr.bf16.mxu0 0
          %582 = vmatmul.mubr.bf16.gmra.mrb[0].mxu0 %v450
          %v583 = vpop.f32.mrb[0].mxu0
          %v584 = vadd.f32 0.0, %v583
          %v585 = vpop.f32.mrb[0].mxu0
          %v586 = vpop.f32.mrb[0].mxu0
          %v587 = vadd.f32 0.0, %v586
          %v588 = vpop.f32.mrb[0].mxu0
          %589 = vmatprep.mubr.bf16.mxu0 0
          %590 = vmatmul.mubr.bf16.gmra.mrb[0].mxu0 %v451
          %v591 = vpop.f32.mrb[0].mxu0
          %v592 = vadd.f32 0.0, %v591
          %v593 = vpop.f32.mrb[0].mxu0
          %v594 = vpop.f32.mrb[0].mxu0
          %v595 = vadd.f32 0.0, %v594
          %v596 = vpop.f32.mrb[0].mxu0
          %597 = vmatprep.mubr.bf16.mxu0 0
          %598 = vmatmul.mubr.bf16.gmra.mrb[0].mxu0 %v452
          %v599 = vpop.f32.mrb[0].mxu0
          %v600 = vadd.f32 0.0, %v599
          %v601 = vpop.f32.mrb[0].mxu0
          %v602 = vpop.f32.mrb[0].mxu0
          %v603 = vadd.f32 0.0, %v602
          %v604 = vpop.f32.mrb[0].mxu0
          %605 = vdwg.mxu0
          %vm606 = vcmask 523264
          %v607 = vsel %vm606, %v544, 0.0
          %v608 = vsel %vm606, %v547, 0.0
          %v609 = vadd.f32 %v607, %v608
          %v610 = vsel %vm606, %v552, 0.0
          %v611 = vadd.f32 %v609, %v610
          %v612 = vsel %vm606, %v555, 0.0
          %v613 = vadd.f32 %v611, %v612
          %v614 = vsel %vm606, %v560, 0.0
          %v615 = vadd.f32 %v613, %v614
          %v616 = vsel %vm606, %v563, 0.0
          %v617 = vadd.f32 %v615, %v616
          %v618 = vsel %vm606, %v568, 0.0
          %v619 = vadd.f32 %v617, %v618
          %v620 = vsel %vm606, %v571, 0.0
          %v621 = vadd.f32 %v619, %v620
          %v622 = vsel %vm606, %v576, 0.0
          %v623 = vadd.f32 %v621, %v622
          %v624 = vsel %vm606, %v579, 0.0
          %v625 = vadd.f32 %v623, %v624
          %v626 = vsel %vm606, %v584, 0.0
          %v627 = vadd.f32 %v625, %v626
          %v628 = vsel %vm606, %v587, 0.0
          %v629 = vadd.f32 %v627, %v628
          %v630 = vsel %vm606, %v592, 0.0
          %v631 = vadd.f32 %v629, %v630
          %v632 = vsel %vm606, %v595, 0.0
          %v633 = vadd.f32 %v631, %v632
          %v634 = vsel %vm606, %v600, 0.0
          %v635 = vadd.f32 %v633, %v634
          %v636 = vsel %vm606, %v603, 0.0
          %v637 = vadd.f32 %v635, %v636
          %v638 = vrot.slane %v637, 4
          %v639 = vadd.f32 %v637, %v638
          %v640 = vrot.slane %v639, 2
          %v641 = vadd.f32 %v639, %v640
          %v642 = vrot.slane %v641, 1
          %v643 = vadd.f32 %v641, %v642
          %v644 = vrcp.pop 128.0
          %v645 = vmul.f32 %v643, %v644
          %v646 = vsub.f32 %v544, %v645
          %v647 = vsub.f32 %v547, %v645
          %v648 = vsub.f32 %v552, %v645
          %v649 = vsub.f32 %v555, %v645
          %v650 = vsub.f32 %v560, %v645
          %v651 = vsub.f32 %v563, %v645
          %v652 = vsub.f32 %v568, %v645
          %v653 = vsub.f32 %v571, %v645
          %v654 = vsub.f32 %v576, %v645
          %v655 = vsub.f32 %v579, %v645
          %v656 = vsub.f32 %v584, %v645
          %v657 = vsub.f32 %v587, %v645
          %v658 = vsub.f32 %v592, %v645
          %v659 = vsub.f32 %v595, %v645
          %v660 = vsub.f32 %v600, %v645
          %v661 = vsub.f32 %v603, %v645
          %v662 = vmul.f32 %v646, %v646
          %v663 = vmul.f32 %v647, %v647
          %v664 = vmul.f32 %v648, %v648
          %v665 = vmul.f32 %v649, %v649
          %v666 = vmul.f32 %v650, %v650
          %v667 = vmul.f32 %v651, %v651
          %v668 = vmul.f32 %v652, %v652
          %v669 = vmul.f32 %v653, %v653
          %v670 = vmul.f32 %v654, %v654
          %v671 = vmul.f32 %v655, %v655
          %v672 = vmul.f32 %v656, %v656
          %v673 = vmul.f32 %v657, %v657
          %v674 = vmul.f32 %v658, %v658
          %v675 = vmul.f32 %v659, %v659
          %v676 = vmul.f32 %v660, %v660
          %v677 = vmul.f32 %v661, %v661
          %v678 = vsel %vm606, %v662, 0.0
          %v679 = vsel %vm606, %v663, 0.0
          %v680 = vadd.f32 %v678, %v679
          %v681 = vsel %vm606, %v664, 0.0
          %v682 = vadd.f32 %v680, %v681
          %v683 = vsel %vm606, %v665, 0.0
          %v684 = vadd.f32 %v682, %v683
          %v685 = vsel %vm606, %v666, 0.0
          %v686 = vadd.f32 %v684, %v685
          %v687 = vsel %vm606, %v667, 0.0
          %v688 = vadd.f32 %v686, %v687
          %v689 = vsel %vm606, %v668, 0.0
          %v690 = vadd.f32 %v688, %v689
          %v691 = vsel %vm606, %v669, 0.0
          %v692 = vadd.f32 %v690, %v691
          %v693 = vsel %vm606, %v670, 0.0
          %v694 = vadd.f32 %v692, %v693
          %v695 = vsel %vm606, %v671, 0.0
          %v696 = vadd.f32 %v694, %v695
          %v697 = vsel %vm606, %v672, 0.0
          %v698 = vadd.f32 %v696, %v697
          %v699 = vsel %vm606, %v673, 0.0
          %v700 = vadd.f32 %v698, %v699
          %v701 = vsel %vm606, %v674, 0.0
          %v702 = vadd.f32 %v700, %v701
          %v703 = vsel %vm606, %v675, 0.0
          %v704 = vadd.f32 %v702, %v703
          %v705 = vsel %vm606, %v676, 0.0
          %v706 = vadd.f32 %v704, %v705
          %v707 = vsel %vm606, %v677, 0.0
          %v708 = vadd.f32 %v706, %v707
          %v709 = vrot.slane %v708, 4
          %v710 = vadd.f32 %v708, %v709
          %v711 = vrot.slane %v710, 2
          %v712 = vadd.f32 %v710, %v711
          %v713 = vrot.slane %v712, 1
          %v714 = vadd.f32 %v712, %v713
          %v715 = vmul.f32 %v714, %v644
          %v716 = vadd.f32 %v715, 1e-05
          %v717 = vrsqrt.pop %v716
          %v718 = vmul.f32 %v646, %v717
          %v719 = vmul.f32 %v647, %v717
          %v720 = vmul.f32 %v648, %v717
          %v721 = vmul.f32 %v649, %v717
          %v722 = vmul.f32 %v650, %v717
          %v723 = vmul.f32 %v651, %v717
          %v724 = vmul.f32 %v652, %v717
          %v725 = vmul.f32 %v653, %v717
          %v726 = vmul.f32 %v654, %v717
          %v727 = vmul.f32 %v655, %v717
          %v728 = vmul.f32 %v656, %v717
          %v729 = vmul.f32 %v657, %v717
          %v730 = vmul.f32 %v658, %v717
          %v731 = vmul.f32 %v659, %v717
          %v732 = vmul.f32 %v660, %v717
          %v733 = vmul.f32 %v661, %v717
          %v734 = vlaneseq
          %v735 = vshrl.u32 %v734, 7
          %v736 = vsub.s32 0, %v735
          %v737 = vrot.slane %v380, %v736
          %v738 = vmul.f32 %v718, %v737
          %v739 = vmul.f32 %v719, %v737
          %v740 = vmul.f32 %v720, %v737
          %v741 = vmul.f32 %v721, %v737
          %v742 = vmul.f32 %v722, %v737
          %v743 = vmul.f32 %v723, %v737
          %v744 = vmul.f32 %v724, %v737
          %v745 = vmul.f32 %v725, %v737
          %v746 = vmul.f32 %v726, %v737
          %v747 = vmul.f32 %v727, %v737
          %v748 = vmul.f32 %v728, %v737
          %v749 = vmul.f32 %v729, %v737
          %v750 = vmul.f32 %v730, %v737
          %v751 = vmul.f32 %v731, %v737
          %v752 = vmul.f32 %v732, %v737
          %v753 = vmul.f32 %v733, %v737
          %v754 = vlaneseq
          %v755 = vshrl.u32 %v754, 7
          %v756 = vsub.s32 1, %v755
          %v757 = vrot.slane %v380, %v756
          %v758 = vadd.f32 %v738, %v757
          %v759 = vadd.f32 %v739, %v757
          %v760 = vadd.f32 %v740, %v757
          %v761 = vadd.f32 %v741, %v757
          %v762 = vadd.f32 %v742, %v757
          %v763 = vadd.f32 %v743, %v757
          %v764 = vadd.f32 %v744, %v757
          %v765 = vadd.f32 %v745, %v757
          %v766 = vadd.f32 %v746, %v757
          %v767 = vadd.f32 %v747, %v757
          %v768 = vadd.f32 %v748, %v757
          %v769 = vadd.f32 %v749, %v757
          %v770 = vadd.f32 %v750, %v757
          %v771 = vadd.f32 %v751, %v757
          %v772 = vadd.f32 %v752, %v757
          %v773 = vadd.f32 %v753, %v757
          %v774 = vmax.f32 %v758, 0.0
          %v775 = vmax.f32 %v759, 0.0
          %v776 = vmax.f32 %v760, 0.0
          %v777 = vmax.f32 %v761, 0.0
          %v778 = vmax.f32 %v762, 0.0
          %v779 = vmax.f32 %v763, 0.0
          %v780 = vmax.f32 %v764, 0.0
          %v781 = vmax.f32 %v765, 0.0
          %v782 = vmax.f32 %v766, 0.0
          %v783 = vmax.f32 %v767, 0.0
          %v784 = vmax.f32 %v768, 0.0
          %v785 = vmax.f32 %v769, 0.0
          %v786 = vmax.f32 %v770, 0.0
          %v787 = vmax.f32 %v771, 0.0
          %v788 = vmax.f32 %v772, 0.0
          %v789 = vmax.f32 %v773, 0.0
          %790 = vst.msk [vmem:[#allocation2] sm:$0xff] %vm606, %v774
          %791 = vst.msk [vmem:[#allocation2 + $0x8] sm:$0xff] %vm606, %v775
          %792 = vst.msk [vmem:[#allocation2 + $0x10] sm:$0xff] %vm606, %v776
          %793 = vst.msk [vmem:[#allocation2 + $0x18] sm:$0xff] %vm606, %v777
          %794 = vst.msk [vmem:[#allocation2 + $0x20] sm:$0xff] %vm606, %v778
          %795 = vst.msk [vmem:[#allocation2 + $0x28] sm:$0xff] %vm606, %v779
          %796 = vst.msk [vmem:[#allocation2 + $0x30] sm:$0xff] %vm606, %v780
          %797 = vst.msk [vmem:[#allocation2 + $0x38] sm:$0xff] %vm606, %v781
          %798 = vst.msk [vmem:[#allocation2 + $0x40] sm:$0xff] %vm606, %v782
          %799 = vst.msk [vmem:[#allocation2 + $0x48] sm:$0xff] %vm606, %v783
          %800 = vst.msk [vmem:[#allocation2 + $0x50] sm:$0xff] %vm606, %v784
          %801 = vst.msk [vmem:[#allocation2 + $0x58] sm:$0xff] %vm606, %v785
          %802 = vst.msk [vmem:[#allocation2 + $0x60] sm:$0xff] %vm606, %v786
          %803 = vst.msk [vmem:[#allocation2 + $0x68] sm:$0xff] %vm606, %v787
          %804 = vst.msk [vmem:[#allocation2 + $0x70] sm:$0xff] %vm606, %v788
          %805 = vst.msk [vmem:[#allocation2 + $0x78] sm:$0xff] %vm606, %v789
        $region60: #{net_forward.2} parent=51 // pred_fallthru
          _
        %v806 = vld [vmem:[#allocation2] sm:$0xff]
        %v807 = vld [vmem:[#allocation2 + $0x8] sm:$0xff]
        %v808 = vld [vmem:[#allocation2 + $0x10] sm:$0xff]
        %v809 = vld [vmem:[#allocation2 + $0x18] sm:$0xff]
        %v810 = vld [vmem:[#allocation2 + $0x20] sm:$0xff]
        %v811 = vld [vmem:[#allocation2 + $0x28] sm:$0xff]
        %v812 = vld [vmem:[#allocation2 + $0x30] sm:$0xff]
        %v813 = vld [vmem:[#allocation2 + $0x38] sm:$0xff]
        %v814 = vld [vmem:[#allocation2 + $0x40] sm:$0xff]
        %v815 = vld [vmem:[#allocation2 + $0x48] sm:$0xff]
        %v816 = vld [vmem:[#allocation2 + $0x50] sm:$0xff]
        %v817 = vld [vmem:[#allocation2 + $0x58] sm:$0xff]
        %v818 = vld [vmem:[#allocation2 + $0x60] sm:$0xff]
        %v819 = vld [vmem:[#allocation2 + $0x68] sm:$0xff]
        %v820 = vld [vmem:[#allocation2 + $0x70] sm:$0xff]
        %v821 = vld [vmem:[#allocation2 + $0x78] sm:$0xff]
        %v822 = vpack.c.bf16 %v807, %v806
        %v823 = vpack.c.bf16 %v809, %v808
        %v824 = vpack.c.bf16 %v811, %v810
        %v825 = vpack.c.bf16 %v813, %v812
        %v826 = vpack.c.bf16 %v815, %v814
        %v827 = vpack.c.bf16 %v817, %v816
        %v828 = vpack.c.bf16 %v819, %v818
        %v829 = vpack.c.bf16 %v821, %v820
        %v830 = vld [vmem:[%s374] sm:$0x3f]
        %v831 = vld [vmem:[%s5] sm:$0xf]
        %v832 = vld [vmem:[%s5 + $0x4] sm:$0xf]
        %v833 = vld [vmem:[%s5 + $0x8] sm:$0xf]
        %v834 = vld [vmem:[%s5 + $0xc] sm:$0xf]
        %v835 = vld [vmem:[%s5 + $0x10] sm:$0xf]
        %v836 = vld [vmem:[%s5 + $0x14] sm:$0xf]
        %v837 = vld [vmem:[%s5 + $0x18] sm:$0xf]
        %v838 = vld [vmem:[%s5 + $0x1c] sm:$0xf]
        %v839 = vld [vmem:[%s5 + $0x20] sm:$0xf]
        %v840 = vld [vmem:[%s5 + $0x24] sm:$0xf]
        %v841 = vld [vmem:[%s5 + $0x28] sm:$0xf]
        %v842 = vld [vmem:[%s5 + $0x2c] sm:$0xf]
        %v843 = vld [vmem:[%s5 + $0x30] sm:$0xf]
        %v844 = vld [vmem:[%s5 + $0x34] sm:$0xf]
        %v845 = vld [vmem:[%s5 + $0x38] sm:$0xf]
        %v846 = vld [vmem:[%s5 + $0x3c] sm:$0xf]
        %v863 = vunpack.c.l.b16 %v831
        %v864 = vunpack.c.l.b16 %v832
        %v865 = vunpack.c.l.b16 %v833
        %v866 = vunpack.c.l.b16 %v834
        %v867 = vunpack.c.l.b16 %v835
        %v868 = vunpack.c.l.b16 %v836
        %v869 = vunpack.c.l.b16 %v837
        %v870 = vunpack.c.l.b16 %v838
        %v871 = vunpack.c.l.b16 %v839
        %v872 = vunpack.c.l.b16 %v840
        %v873 = vunpack.c.l.b16 %v841
        %v874 = vunpack.c.l.b16 %v842
        %v875 = vunpack.c.l.b16 %v843
        %v876 = vunpack.c.l.b16 %v844
        %v877 = vunpack.c.l.b16 %v845
        %v878 = vunpack.c.l.b16 %v846
        %v879 = vpack.c.b16 %v864, %v863
        %v880 = vpack.c.b16 %v866, %v865
        %v881 = vpack.c.b16 %v868, %v867
        %v882 = vpack.c.b16 %v870, %v869
        %v883 = vpack.c.b16 %v872, %v871
        %v884 = vpack.c.b16 %v874, %v873
        %v885 = vpack.c.b16 %v876, %v875
        %v886 = vpack.c.b16 %v878, %v877
        %895 = vmatprep.subr.bf16.mxu0 0
        %896 = vmatpush1.bf16.msra.mxu0 %v822
        %897 = vmatprep.subr.bf16.mxu0 0
        %898 = vmatpush1.bf16.msra.mxu0 %v823
        %899 = vmatprep.subr.bf16.mxu0 0
        %900 = vmatpush1.bf16.msra.mxu0 %v824
        %901 = vmatprep.subr.bf16.mxu0 0
        %902 = vmatpush1.bf16.msra.mxu0 %v825
        %903 = vmatprep.subr.bf16.mxu0 0
        %904 = vmatpush1.bf16.msra.mxu0 %v826
        %905 = vmatprep.subr.bf16.mxu0 0
        %906 = vmatpush1.bf16.msra.mxu0 %v827
        %907 = vmatprep.subr.bf16.mxu0 0
        %908 = vmatpush1.bf16.msra.mxu0 %v828
        %909 = vmatprep.subr.bf16.mxu0 0
        %910 = vmatpush1.bf16.msra.mxu0 %v829
        %911 = vmatprep.subr.bf16.mxu0 0
        %912 = vmatpush1.bf16.msra.mxu0 0
        %913 = vmatprep.subr.bf16.mxu0 0
        %914 = vmatpush1.bf16.msra.mxu0 0
        %915 = vmatprep.subr.bf16.mxu0 0
        %916 = vmatpush1.bf16.msra.mxu0 0
        %917 = vmatprep.subr.bf16.mxu0 0
        %918 = vmatpush1.bf16.msra.mxu0 0
        %919 = vmatprep.subr.bf16.mxu0 0
        %920 = vmatpush1.bf16.msra.mxu0 0
        %921 = vmatprep.subr.bf16.mxu0 0
        %922 = vmatpush1.bf16.msra.mxu0 0
        %923 = vmatprep.subr.bf16.mxu0 0
        %924 = vmatpush1.bf16.msra.mxu0 0
        %925 = vmatprep.subr.bf16.mxu0 0
        %926 = vmatpush1.bf16.msra.mxu0 0
        %927 = vmatprep.mubr.bf16.mxu0 0
        %928 = vmatmul.mubr.bf16.gmra.mrb[0].mxu0 %v879
        %v929 = vpop.f32.mrb[0].mxu0
        %v930 = vadd.f32 0.0, %v929
        %v931 = vpop.f32.mrb[0].mxu0
        %v932 = vpop.f32.mrb[0].mxu0
        %v933 = vadd.f32 0.0, %v932
        %v934 = vpop.f32.mrb[0].mxu0
        %935 = vmatprep.mubr.bf16.mxu0 0
        %936 = vmatmul.mubr.bf16.gmra.mrb[0].mxu0 %v880
        %v937 = vpop.f32.mrb[0].mxu0
        %v938 = vadd.f32 0.0, %v937
        %v939 = vpop.f32.mrb[0].mxu0
        %v940 = vpop.f32.mrb[0].mxu0
        %v941 = vadd.f32 0.0, %v940
        %v942 = vpop.f32.mrb[0].mxu0
        %943 = vmatprep.mubr.bf16.mxu0 0
        %944 = vmatmul.mubr.bf16.gmra.mrb[0].mxu0 %v881
        %v945 = vpop.f32.mrb[0].mxu0
        %v946 = vadd.f32 0.0, %v945
        %v947 = vpop.f32.mrb[0].mxu0
        %v948 = vpop.f32.mrb[0].mxu0
        %v949 = vadd.f32 0.0, %v948
        %v950 = vpop.f32.mrb[0].mxu0
        %951 = vmatprep.mubr.bf16.mxu0 0
        %952 = vmatmul.mubr.bf16.gmra.mrb[0].mxu0 %v882
        %v953 = vpop.f32.mrb[0].mxu0
        %v954 = vadd.f32 0.0, %v953
        %v955 = vpop.f32.mrb[0].mxu0
        %v956 = vpop.f32.mrb[0].mxu0
        %v957 = vadd.f32 0.0, %v956
        %v958 = vpop.f32.mrb[0].mxu0
        %959 = vmatprep.mubr.bf16.mxu0 0
        %960 = vmatmul.mubr.bf16.gmra.mrb[0].mxu0 %v883
        %v961 = vpop.f32.mrb[0].mxu0
        %v962 = vadd.f32 0.0, %v961
        %v963 = vpop.f32.mrb[0].mxu0
        %v964 = vpop.f32.mrb[0].mxu0
        %v965 = vadd.f32 0.0, %v964
        %v966 = vpop.f32.mrb[0].mxu0
        %967 = vmatprep.mubr.bf16.mxu0 0
        %968 = vmatmul.mubr.bf16.gmra.mrb[0].mxu0 %v884
        %v969 = vpop.f32.mrb[0].mxu0
        %v970 = vadd.f32 0.0, %v969
        %v971 = vpop.f32.mrb[0].mxu0
        %v972 = vpop.f32.mrb[0].mxu0
        %v973 = vadd.f32 0.0, %v972
        %v974 = vpop.f32.mrb[0].mxu0
        %975 = vmatprep.mubr.bf16.mxu0 0
        %976 = vmatmul.mubr.bf16.gmra.mrb[0].mxu0 %v885
        %v977 = vpop.f32.mrb[0].mxu0
        %v978 = vadd.f32 0.0, %v977
        %v979 = vpop.f32.mrb[0].mxu0
        %v980 = vpop.f32.mrb[0].mxu0
        %v981 = vadd.f32 0.0, %v980
        %v982 = vpop.f32.mrb[0].mxu0
        %983 = vmatprep.mubr.bf16.mxu0 0
        %984 = vmatmul.mubr.bf16.gmra.mrb[0].mxu0 %v886
        %v985 = vpop.f32.mrb[0].mxu0
        %v986 = vadd.f32 0.0, %v985
        %v987 = vpop.f32.mrb[0].mxu0
        %v988 = vpop.f32.mrb[0].mxu0
        %v989 = vadd.f32 0.0, %v988
        %v990 = vpop.f32.mrb[0].mxu0
        %991 = vdwg.mxu0
        %v992 = vpack.c.bf16 %v933, %v930
        %v993 = vpack.c.bf16 %v941, %v938
        %v994 = vpack.c.bf16 %v949, %v946
        %v995 = vpack.c.bf16 %v957, %v954
        %v996 = vpack.c.bf16 %v965, %v962
        %v997 = vpack.c.bf16 %v973, %v970
        %v998 = vpack.c.bf16 %v981, %v978
        %v999 = vpack.c.bf16 %v989, %v986
        %v1000 = vld [vmem:[%s365] sm:$0xf]
        %v1001 = vld [vmem:[%s365 + $0x4] sm:$0xf]
        %v1002 = vld [vmem:[%s365 + $0x8] sm:$0xf]
        %v1003 = vld [vmem:[%s365 + $0xc] sm:$0xf]
        %v1004 = vld [vmem:[%s365 + $0x10] sm:$0xf]
        %v1005 = vld [vmem:[%s365 + $0x14] sm:$0xf]
        %v1006 = vld [vmem:[%s365 + $0x18] sm:$0xf]
        %v1007 = vld [vmem:[%s365 + $0x1c] sm:$0xf]
        %s1008 = scalar_lea.vmem %s5, 64
        %v1009 = vld [vmem:[%s1008] sm:$0xf]
        %v1010 = vld [vmem:[%s1008 + $0x4] sm:$0xf]
        %v1011 = vld [vmem:[%s1008 + $0x8] sm:$0xf]
        %v1012 = vld [vmem:[%s1008 + $0xc] sm:$0xf]
        %v1013 = vld [vmem:[%s1008 + $0x10] sm:$0xf]
        %v1014 = vld [vmem:[%s1008 + $0x14] sm:$0xf]
        %v1015 = vld [vmem:[%s1008 + $0x18] sm:$0xf]
        %v1016 = vld [vmem:[%s1008 + $0x1c] sm:$0xf]
        %v1017 = vld [vmem:[%s1008 + $0x20] sm:$0xf]
        %v1018 = vld [vmem:[%s1008 + $0x24] sm:$0xf]
        %v1019 = vld [vmem:[%s1008 + $0x28] sm:$0xf]
        %v1020 = vld [vmem:[%s1008 + $0x2c] sm:$0xf]
        %v1021 = vld [vmem:[%s1008 + $0x30] sm:$0xf]
        %v1022 = vld [vmem:[%s1008 + $0x34] sm:$0xf]
        %v1023 = vld [vmem:[%s1008 + $0x38] sm:$0xf]
        %v1024 = vld [vmem:[%s1008 + $0x3c] sm:$0xf]
        %v1041 = vunpack.c.l.b16 %v1009
        %v1042 = vunpack.c.l.b16 %v1010
        %v1043 = vunpack.c.l.b16 %v1011
        %v1044 = vunpack.c.l.b16 %v1012
        %v1045 = vunpack.c.l.b16 %v1013
        %v1046 = vunpack.c.l.b16 %v1014
        %v1047 = vunpack.c.l.b16 %v1015
        %v1048 = vunpack.c.l.b16 %v1016
        %v1049 = vunpack.c.l.b16 %v1017
        %v1050 = vunpack.c.l.b16 %v1018
        %v1051 = vunpack.c.l.b16 %v1019
        %v1052 = vunpack.c.l.b16 %v1020
        %v1053 = vunpack.c.l.b16 %v1021
        %v1054 = vunpack.c.l.b16 %v1022
        %v1055 = vunpack.c.l.b16 %v1023
        %v1056 = vunpack.c.l.b16 %v1024
        %v1057 = vpack.c.b16 %v1042, %v1041
        %v1058 = vpack.c.b16 %v1044, %v1043
        %v1059 = vpack.c.b16 %v1046, %v1045
        %v1060 = vpack.c.b16 %v1048, %v1047
        %v1061 = vpack.c.b16 %v1050, %v1049
        %v1062 = vpack.c.b16 %v1052, %v1051
        %v1063 = vpack.c.b16 %v1054, %v1053
        %v1064 = vpack.c.b16 %v1056, %v1055
        %1073 = vmatprep.subr.bf16.mxu0 0
        %1074 = vmatpush1.bf16.msra.mxu0 %v822
        %1075 = vmatprep.subr.bf16.mxu0 0
        %1076 = vmatpush1.bf16.msra.mxu0 %v823
        %1077 = vmatprep.subr.bf16.mxu0 0
        %1078 = vmatpush1.bf16.msra.mxu0 %v824
        %1079 = vmatprep.subr.bf16.mxu0 0
        %1080 = vmatpush1.bf16.msra.mxu0 %v825
        %1081 = vmatprep.subr.bf16.mxu0 0
        %1082 = vmatpush1.bf16.msra.mxu0 %v826
        %1083 = vmatprep.subr.bf16.mxu0 0
        %1084 = vmatpush1.bf16.msra.mxu0 %v827
        %1085 = vmatprep.subr.bf16.mxu0 0
        %1086 = vmatpush1.bf16.msra.mxu0 %v828
        %1087 = vmatprep.subr.bf16.mxu0 0
        %1088 = vmatpush1.bf16.msra.mxu0 %v829
        %1089 = vmatprep.subr.bf16.mxu0 0
        %1090 = vmatpush1.bf16.msra.mxu0 0
        %1091 = vmatprep.subr.bf16.mxu0 0
        %1092 = vmatpush1.bf16.msra.mxu0 0
        %1093 = vmatprep.subr.bf16.mxu0 0
        %1094 = vmatpush1.bf16.msra.mxu0 0
        %1095 = vmatprep.subr.bf16.mxu0 0
        %1096 = vmatpush1.bf16.msra.mxu0 0
        %1097 = vmatprep.subr.bf16.mxu0 0
        %1098 = vmatpush1.bf16.msra.mxu0 0
        %1099 = vmatprep.subr.bf16.mxu0 0
        %1100 = vmatpush1.bf16.msra.mxu0 0
        %1101 = vmatprep.subr.bf16.mxu0 0
        %1102 = vmatpush1.bf16.msra.mxu0 0
        %1103 = vmatprep.subr.bf16.mxu0 0
        %1104 = vmatpush1.bf16.msra.mxu0 0
        %1105 = vmatprep.mubr.bf16.mxu0 0
        %1106 = vmatmul.mubr.bf16.gmra.mrb[0].mxu0 %v1057
        %v1107 = vpop.f32.mrb[0].mxu0
        %v1108 = vadd.f32 0.0, %v1107
        %v1109 = vpop.f32.mrb[0].mxu0
        %v1110 = vpop.f32.mrb[0].mxu0
        %v1111 = vadd.f32 0.0, %v1110
        %v1112 = vpop.f32.mrb[0].mxu0
        %1113 = vmatprep.mubr.bf16.mxu0 0
        %1114 = vmatmul.mubr.bf16.gmra.mrb[0].mxu0 %v1058
        %v1115 = vpop.f32.mrb[0].mxu0
        %v1116 = vadd.f32 0.0, %v1115
        %v1117 = vpop.f32.mrb[0].mxu0
        %v1118 = vpop.f32.mrb[0].mxu0
        %v1119 = vadd.f32 0.0, %v1118
        %v1120 = vpop.f32.mrb[0].mxu0
        %1121 = vmatprep.mubr.bf16.mxu0 0
        %1122 = vmatmul.mubr.bf16.gmra.mrb[0].mxu0 %v1059
        %v1123 = vpop.f32.mrb[0].mxu0
        %v1124 = vadd.f32 0.0, %v1123
        %v1125 = vpop.f32.mrb[0].mxu0
        %v1126 = vpop.f32.mrb[0].mxu0
        %v1127 = vadd.f32 0.0, %v1126
        %v1128 = vpop.f32.mrb[0].mxu0
        %1129 = vmatprep.mubr.bf16.mxu0 0
        %1130 = vmatmul.mubr.bf16.gmra.mrb[0].mxu0 %v1060
        %v1131 = vpop.f32.mrb[0].mxu0
        %v1132 = vadd.f32 0.0, %v1131
        %v1133 = vpop.f32.mrb[0].mxu0
        %v1134 = vpop.f32.mrb[0].mxu0
        %v1135 = vadd.f32 0.0, %v1134
        %v1136 = vpop.f32.mrb[0].mxu0
        %1137 = vmatprep.mubr.bf16.mxu0 0
        %1138 = vmatmul.mubr.bf16.gmra.mrb[0].mxu0 %v1061
        %v1139 = vpop.f32.mrb[0].mxu0
        %v1140 = vadd.f32 0.0, %v1139
        %v1141 = vpop.f32.mrb[0].mxu0
        %v1142 = vpop.f32.mrb[0].mxu0
        %v1143 = vadd.f32 0.0, %v1142
        %v1144 = vpop.f32.mrb[0].mxu0
        %1145 = vmatprep.mubr.bf16.mxu0 0
        %1146 = vmatmul.mubr.bf16.gmra.mrb[0].mxu0 %v1062
        %v1147 = vpop.f32.mrb[0].mxu0
        %v1148 = vadd.f32 0.0, %v1147
        %v1149 = vpop.f32.mrb[0].mxu0
        %v1150 = vpop.f32.mrb[0].mxu0
        %v1151 = vadd.f32 0.0, %v1150
        %v1152 = vpop.f32.mrb[0].mxu0
        %1153 = vmatprep.mubr.bf16.mxu0 0
        %1154 = vmatmul.mubr.bf16.gmra.mrb[0].mxu0 %v1063
        %v1155 = vpop.f32.mrb[0].mxu0
        %v1156 = vadd.f32 0.0, %v1155
        %v1157 = vpop.f32.mrb[0].mxu0
        %v1158 = vpop.f32.mrb[0].mxu0
        %v1159 = vadd.f32 0.0, %v1158
        %v1160 = vpop.f32.mrb[0].mxu0
        %1161 = vmatprep.mubr.bf16.mxu0 0
        %1162 = vmatmul.mubr.bf16.gmra.mrb[0].mxu0 %v1064
        %v1163 = vpop.f32.mrb[0].mxu0
        %v1164 = vadd.f32 0.0, %v1163
        %v1165 = vpop.f32.mrb[0].mxu0
        %v1166 = vpop.f32.mrb[0].mxu0
        %v1167 = vadd.f32 0.0, %v1166
        %v1168 = vpop.f32.mrb[0].mxu0
        %1169 = vdwg.mxu0
        %v1170 = vpack.c.bf16 %v1111, %v1108
        %v1171 = vpack.c.bf16 %v1119, %v1116
        %v1172 = vpack.c.bf16 %v1127, %v1124
        %v1173 = vpack.c.bf16 %v1135, %v1132
        %v1174 = vpack.c.bf16 %v1143, %v1140
        %v1175 = vpack.c.bf16 %v1151, %v1148
        %v1176 = vpack.c.bf16 %v1159, %v1156
        %v1177 = vpack.c.bf16 %v1167, %v1164
        %s1178 = scalar_lea.vmem %s365, 32
        %v1179 = vld [vmem:[%s1178] sm:$0xf]
        %v1180 = vld [vmem:[%s1178 + $0x4] sm:$0xf]
        %v1181 = vld [vmem:[%s1178 + $0x8] sm:$0xf]
        %v1182 = vld [vmem:[%s1178 + $0xc] sm:$0xf]
        %v1183 = vld [vmem:[%s1178 + $0x10] sm:$0xf]
        %v1184 = vld [vmem:[%s1178 + $0x14] sm:$0xf]
        %v1185 = vld [vmem:[%s1178 + $0x18] sm:$0xf]
        %v1186 = vld [vmem:[%s1178 + $0x1c] sm:$0xf]
        %v1195 = vunpack.c.l.b16 %v1179
        %v1196 = vunpack.c.l.b16 %v1180
        %v1197 = vunpack.c.l.b16 %v1181
        %v1198 = vunpack.c.l.b16 %v1182
        %v1199 = vunpack.c.l.b16 %v1183
        %v1200 = vunpack.c.l.b16 %v1184
        %v1201 = vunpack.c.l.b16 %v1185
        %v1202 = vunpack.c.l.b16 %v1186
        %v1203 = vpack.c.b16 %v1196, %v1195
        %v1204 = vpack.c.b16 %v1198, %v1197
        %v1205 = vpack.c.b16 %v1200, %v1199
        %v1206 = vpack.c.b16 %v1202, %v1201
        %vm1211 = vcmask 523264
        %v1213 = vsel %vm1211, %v1170, 0
        %v1216 = vsel %vm1211, %v1171, 0
        %v1219 = vsel %vm1211, %v1172, 0
        %v1222 = vsel %vm1211, %v1173, 0
        %v1225 = vsel %vm1211, %v1174, 0
        %v1228 = vsel %vm1211, %v1175, 0
        %v1231 = vsel %vm1211, %v1176, 0
        %v1234 = vsel %vm1211, %v1177, 0
        %1236 = vmatprep.subr.bf16.mxu0 0
        %1237 = vmatpush1.bf16.msra.mxu0 %v1203
        %1238 = vmatprep.subr.bf16.mxu0 0
        %1239 = vmatpush1.bf16.msra.mxu0 %v1204
        %1240 = vmatprep.subr.bf16.mxu0 0
        %1241 = vmatpush1.bf16.msra.mxu0 %v1205
        %1242 = vmatprep.subr.bf16.mxu0 0
        %1243 = vmatpush1.bf16.msra.mxu0 %v1206
        %1244 = vmatprep.subr.bf16.mxu0 0
        %1245 = vmatpush1.bf16.msra.mxu0 0
        %1246 = vmatprep.subr.bf16.mxu0 0
        %1247 = vmatpush1.bf16.msra.mxu0 0
        %1248 = vmatprep.subr.bf16.mxu0 0
        %1249 = vmatpush1.bf16.msra.mxu0 0
        %1250 = vmatprep.subr.bf16.mxu0 0
        %1251 = vmatpush1.bf16.msra.mxu0 0
        %1252 = vmatprep.subr.bf16.mxu0 0
        %1253 = vmatpush1.bf16.msra.mxu0 0
        %1254 = vmatprep.subr.bf16.mxu0 0
        %1255 = vmatpush1.bf16.msra.mxu0 0
        %1256 = vmatprep.subr.bf16.mxu0 0
        %1257 = vmatpush1.bf16.msra.mxu0 0
        %1258 = vmatprep.subr.bf16.mxu0 0
        %1259 = vmatpush1.bf16.msra.mxu0 0
        %1260 = vmatprep.subr.bf16.mxu0 0
        %1261 = vmatpush1.bf16.msra.mxu0 0
        %1262 = vmatprep.subr.bf16.mxu0 0
        %1263 = vmatpush1.bf16.msra.mxu0 0
        %1264 = vmatprep.subr.bf16.mxu0 0
        %1265 = vmatpush1.bf16.msra.mxu0 0
        %1266 = vmatprep.subr.bf16.mxu0 0
        %1267 = vmatpush1.bf16.msra.mxu0 0
        %1268 = vmatprep.mubr.bf16.mxu0 0
        %1269 = vmatmul.mubr.bf16.gmra.mrb[0].mxu0 %v1213
        %v1270 = vpop.f32.mrb[0].mxu0
        %v1271 = vadd.f32 0.0, %v1270
        %v1272 = vpop.f32.mrb[0].mxu0
        %v1273 = vpop.f32.mrb[0].mxu0
        %v1274 = vadd.f32 0.0, %v1273
        %v1275 = vpop.f32.mrb[0].mxu0
        %1276 = vmatprep.mubr.bf16.mxu0 0
        %1277 = vmatmul.mubr.bf16.gmra.mrb[0].mxu0 %v1216
        %v1278 = vpop.f32.mrb[0].mxu0
        %v1279 = vadd.f32 0.0, %v1278
        %v1280 = vpop.f32.mrb[0].mxu0
        %v1281 = vpop.f32.mrb[0].mxu0
        %v1282 = vadd.f32 0.0, %v1281
        %v1283 = vpop.f32.mrb[0].mxu0
        %1284 = vmatprep.mubr.bf16.mxu0 0
        %1285 = vmatmul.mubr.bf16.gmra.mrb[0].mxu0 %v1219
        %v1286 = vpop.f32.mrb[0].mxu0
        %v1287 = vadd.f32 0.0, %v1286
        %v1288 = vpop.f32.mrb[0].mxu0
        %v1289 = vpop.f32.mrb[0].mxu0
        %v1290 = vadd.f32 0.0, %v1289
        %v1291 = vpop.f32.mrb[0].mxu0
        %1292 = vmatprep.mubr.bf16.mxu0 0
        %1293 = vmatmul.mubr.bf16.gmra.mrb[0].mxu0 %v1222
        %v1294 = vpop.f32.mrb[0].mxu0
        %v1295 = vadd.f32 0.0, %v1294
        %v1296 = vpop.f32.mrb[0].mxu0
        %v1297 = vpop.f32.mrb[0].mxu0
        %v1298 = vadd.f32 0.0, %v1297
        %v1299 = vpop.f32.mrb[0].mxu0
        %1300 = vmatprep.mubr.bf16.mxu0 0
        %1301 = vmatmul.mubr.bf16.gmra.mrb[0].mxu0 %v1225
        %v1302 = vpop.f32.mrb[0].mxu0
        %v1303 = vadd.f32 0.0, %v1302
        %v1304 = vpop.f32.mrb[0].mxu0
        %v1305 = vpop.f32.mrb[0].mxu0
        %v1306 = vadd.f32 0.0, %v1305
        %v1307 = vpop.f32.mrb[0].mxu0
        %1308 = vmatprep.mubr.bf16.mxu0 0
        %1309 = vmatmul.mubr.bf16.gmra.mrb[0].mxu0 %v1228
        %v1310 = vpop.f32.mrb[0].mxu0
        %v1311 = vadd.f32 0.0, %v1310
        %v1312 = vpop.f32.mrb[0].mxu0
        %v1313 = vpop.f32.mrb[0].mxu0
        %v1314 = vadd.f32 0.0, %v1313
        %v1315 = vpop.f32.mrb[0].mxu0
        %1316 = vmatprep.mubr.bf16.mxu0 0
        %1317 = vmatmul.mubr.bf16.gmra.mrb[0].mxu0 %v1231
        %v1318 = vpop.f32.mrb[0].mxu0
        %v1319 = vadd.f32 0.0, %v1318
        %v1320 = vpop.f32.mrb[0].mxu0
        %v1321 = vpop.f32.mrb[0].mxu0
        %v1322 = vadd.f32 0.0, %v1321
        %v1323 = vpop.f32.mrb[0].mxu0
        %1324 = vmatprep.mubr.bf16.mxu0 0
        %1325 = vmatmul.mubr.bf16.gmra.mrb[0].mxu0 %v1234
        %v1326 = vpop.f32.mrb[0].mxu0
        %v1327 = vadd.f32 0.0, %v1326
        %v1328 = vpop.f32.mrb[0].mxu0
        %v1329 = vpop.f32.mrb[0].mxu0
        %v1330 = vadd.f32 0.0, %v1329
        %v1331 = vpop.f32.mrb[0].mxu0
        %1332 = vdwg.mxu0
        %v1341 = vunpack.c.l.b16 %v1000
        %v1342 = vunpack.c.l.b16 %v1001
        %v1343 = vunpack.c.l.b16 %v1002
        %v1344 = vunpack.c.l.b16 %v1003
        %v1345 = vunpack.c.l.b16 %v1004
        %v1346 = vunpack.c.l.b16 %v1005
        %v1347 = vunpack.c.l.b16 %v1006
        %v1348 = vunpack.c.l.b16 %v1007
        %v1349 = vpack.c.b16 %v1342, %v1341
        %v1350 = vpack.c.b16 %v1344, %v1343
        %v1351 = vpack.c.b16 %v1346, %v1345
        %v1352 = vpack.c.b16 %v1348, %v1347
        %v1358 = vsel %vm1211, %v992, 0
        %v1361 = vsel %vm1211, %v993, 0
        %v1364 = vsel %vm1211, %v994, 0
        %v1367 = vsel %vm1211, %v995, 0
        %v1370 = vsel %vm1211, %v996, 0
        %v1373 = vsel %vm1211, %v997, 0
        %v1376 = vsel %vm1211, %v998, 0
        %v1379 = vsel %vm1211, %v999, 0
        %1381 = vmatprep.subr.bf16.mxu0 0
        %1382 = vmatpush1.bf16.msra.mxu0 %v1349
        %1383 = vmatprep.subr.bf16.mxu0 0
        %1384 = vmatpush1.bf16.msra.mxu0 %v1350
        %1385 = vmatprep.subr.bf16.mxu0 0
        %1386 = vmatpush1.bf16.msra.mxu0 %v1351
        %1387 = vmatprep.subr.bf16.mxu0 0
        %1388 = vmatpush1.bf16.msra.mxu0 %v1352
        %1389 = vmatprep.subr.bf16.mxu0 0
        %1390 = vmatpush1.bf16.msra.mxu0 0
        %1391 = vmatprep.subr.bf16.mxu0 0
        %1392 = vmatpush1.bf16.msra.mxu0 0
        %1393 = vmatprep.subr.bf16.mxu0 0
        %1394 = vmatpush1.bf16.msra.mxu0 0
        %1395 = vmatprep.subr.bf16.mxu0 0
        %1396 = vmatpush1.bf16.msra.mxu0 0
        %1397 = vmatprep.subr.bf16.mxu0 0
        %1398 = vmatpush1.bf16.msra.mxu0 0
        %1399 = vmatprep.subr.bf16.mxu0 0
        %1400 = vmatpush1.bf16.msra.mxu0 0
        %1401 = vmatprep.subr.bf16.mxu0 0
        %1402 = vmatpush1.bf16.msra.mxu0 0
        %1403 = vmatprep.subr.bf16.mxu0 0
        %1404 = vmatpush1.bf16.msra.mxu0 0
        %1405 = vmatprep.subr.bf16.mxu0 0
        %1406 = vmatpush1.bf16.msra.mxu0 0
        %1407 = vmatprep.subr.bf16.mxu0 0
        %1408 = vmatpush1.bf16.msra.mxu0 0
        %1409 = vmatprep.subr.bf16.mxu0 0
        %1410 = vmatpush1.bf16.msra.mxu0 0
        %1411 = vmatprep.subr.bf16.mxu0 0
        %1412 = vmatpush1.bf16.msra.mxu0 0
        %1413 = vmatprep.mubr.bf16.mxu0 0
        %1414 = vmatmul.mubr.bf16.gmra.mrb[0].mxu0 %v1358
        %v1415 = vpop.f32.mrb[0].mxu0
        %v1416 = vadd.f32 %v1271, %v1415
        %v1417 = vpop.f32.mrb[0].mxu0
        %v1418 = vpop.f32.mrb[0].mxu0
        %v1419 = vadd.f32 %v1274, %v1418
        %v1420 = vpop.f32.mrb[0].mxu0
        %1421 = vmatprep.mubr.bf16.mxu0 0
        %1422 = vmatmul.mubr.bf16.gmra.mrb[0].mxu0 %v1361
        %v1423 = vpop.f32.mrb[0].mxu0
        %v1424 = vadd.f32 %v1279, %v1423
        %v1425 = vpop.f32.mrb[0].mxu0
        %v1426 = vpop.f32.mrb[0].mxu0
        %v1427 = vadd.f32 %v1282, %v1426
        %v1428 = vpop.f32.mrb[0].mxu0
        %1429 = vmatprep.mubr.bf16.mxu0 0
        %1430 = vmatmul.mubr.bf16.gmra.mrb[0].mxu0 %v1364
        %v1431 = vpop.f32.mrb[0].mxu0
        %v1432 = vadd.f32 %v1287, %v1431
        %v1433 = vpop.f32.mrb[0].mxu0
        %v1434 = vpop.f32.mrb[0].mxu0
        %v1435 = vadd.f32 %v1290, %v1434
        %v1436 = vpop.f32.mrb[0].mxu0
        %1437 = vmatprep.mubr.bf16.mxu0 0
        %1438 = vmatmul.mubr.bf16.gmra.mrb[0].mxu0 %v1367
        %v1439 = vpop.f32.mrb[0].mxu0
        %v1440 = vadd.f32 %v1295, %v1439
        %v1441 = vpop.f32.mrb[0].mxu0
        %v1442 = vpop.f32.mrb[0].mxu0
        %v1443 = vadd.f32 %v1298, %v1442
        %v1444 = vpop.f32.mrb[0].mxu0
        %1445 = vmatprep.mubr.bf16.mxu0 0
        %1446 = vmatmul.mubr.bf16.gmra.mrb[0].mxu0 %v1370
        %v1447 = vpop.f32.mrb[0].mxu0
        %v1448 = vadd.f32 %v1303, %v1447
        %v1449 = vpop.f32.mrb[0].mxu0
        %v1450 = vpop.f32.mrb[0].mxu0
        %v1451 = vadd.f32 %v1306, %v1450
        %v1452 = vpop.f32.mrb[0].mxu0
        %1453 = vmatprep.mubr.bf16.mxu0 0
        %1454 = vmatmul.mubr.bf16.gmra.mrb[0].mxu0 %v1373
        %v1455 = vpop.f32.mrb[0].mxu0
        %v1456 = vadd.f32 %v1311, %v1455
        %v1457 = vpop.f32.mrb[0].mxu0
        %v1458 = vpop.f32.mrb[0].mxu0
        %v1459 = vadd.f32 %v1314, %v1458
        %v1460 = vpop.f32.mrb[0].mxu0
        %1461 = vmatprep.mubr.bf16.mxu0 0
        %1462 = vmatmul.mubr.bf16.gmra.mrb[0].mxu0 %v1376
        %v1463 = vpop.f32.mrb[0].mxu0
        %v1464 = vadd.f32 %v1319, %v1463
        %v1465 = vpop.f32.mrb[0].mxu0
        %v1466 = vpop.f32.mrb[0].mxu0
        %v1467 = vadd.f32 %v1322, %v1466
        %v1468 = vpop.f32.mrb[0].mxu0
        %1469 = vmatprep.mubr.bf16.mxu0 0
        %1470 = vmatmul.mubr.bf16.gmra.mrb[0].mxu0 %v1379
        %v1471 = vpop.f32.mrb[0].mxu0
        %v1472 = vadd.f32 %v1327, %v1471
        %v1473 = vpop.f32.mrb[0].mxu0
        %v1474 = vpop.f32.mrb[0].mxu0
        %v1475 = vadd.f32 %v1330, %v1474
        %v1476 = vpop.f32.mrb[0].mxu0
        %1477 = vdwg.mxu0
        %s1478 = scalar_lea.vmem %s5, 128
        %v1479 = vld [vmem:[%s1478] sm:$0xf]
        %v1480 = vld [vmem:[%s1478 + $0x4] sm:$0xf]
        %v1481 = vld [vmem:[%s1478 + $0x8] sm:$0xf]
        %v1482 = vld [vmem:[%s1478 + $0xc] sm:$0xf]
        %v1483 = vld [vmem:[%s1478 + $0x10] sm:$0xf]
        %v1484 = vld [vmem:[%s1478 + $0x14] sm:$0xf]
        %v1485 = vld [vmem:[%s1478 + $0x18] sm:$0xf]
        %v1486 = vld [vmem:[%s1478 + $0x1c] sm:$0xf]
        %v1487 = vld [vmem:[%s1478 + $0x20] sm:$0xf]
        %v1488 = vld [vmem:[%s1478 + $0x24] sm:$0xf]
        %v1489 = vld [vmem:[%s1478 + $0x28] sm:$0xf]
        %v1490 = vld [vmem:[%s1478 + $0x2c] sm:$0xf]
        %v1491 = vld [vmem:[%s1478 + $0x30] sm:$0xf]
        %v1492 = vld [vmem:[%s1478 + $0x34] sm:$0xf]
        %v1493 = vld [vmem:[%s1478 + $0x38] sm:$0xf]
        %v1494 = vld [vmem:[%s1478 + $0x3c] sm:$0xf]
        %v1511 = vunpack.c.l.b16 %v1479
        %v1512 = vunpack.c.l.b16 %v1480
        %v1513 = vunpack.c.l.b16 %v1481
        %v1514 = vunpack.c.l.b16 %v1482
        %v1515 = vunpack.c.l.b16 %v1483
        %v1516 = vunpack.c.l.b16 %v1484
        %v1517 = vunpack.c.l.b16 %v1485
        %v1518 = vunpack.c.l.b16 %v1486
        %v1519 = vunpack.c.l.b16 %v1487
        %v1520 = vunpack.c.l.b16 %v1488
        %v1521 = vunpack.c.l.b16 %v1489
        %v1522 = vunpack.c.l.b16 %v1490
        %v1523 = vunpack.c.l.b16 %v1491
        %v1524 = vunpack.c.l.b16 %v1492
        %v1525 = vunpack.c.l.b16 %v1493
        %v1526 = vunpack.c.l.b16 %v1494
        %v1527 = vpack.c.b16 %v1512, %v1511
        %v1528 = vpack.c.b16 %v1514, %v1513
        %v1529 = vpack.c.b16 %v1516, %v1515
        %v1530 = vpack.c.b16 %v1518, %v1517
        %v1531 = vpack.c.b16 %v1520, %v1519
        %v1532 = vpack.c.b16 %v1522, %v1521
        %v1533 = vpack.c.b16 %v1524, %v1523
        %v1534 = vpack.c.b16 %v1526, %v1525
        %1543 = vmatprep.subr.bf16.mxu0 0
        %1544 = vmatpush1.bf16.msra.mxu0 %v822
        %1545 = vmatprep.subr.bf16.mxu0 0
        %1546 = vmatpush1.bf16.msra.mxu0 %v823
        %1547 = vmatprep.subr.bf16.mxu0 0
        %1548 = vmatpush1.bf16.msra.mxu0 %v824
        %1549 = vmatprep.subr.bf16.mxu0 0
        %1550 = vmatpush1.bf16.msra.mxu0 %v825
        %1551 = vmatprep.subr.bf16.mxu0 0
        %1552 = vmatpush1.bf16.msra.mxu0 %v826
        %1553 = vmatprep.subr.bf16.mxu0 0
        %1554 = vmatpush1.bf16.msra.mxu0 %v827
        %1555 = vmatprep.subr.bf16.mxu0 0
        %1556 = vmatpush1.bf16.msra.mxu0 %v828
        %1557 = vmatprep.subr.bf16.mxu0 0
        %1558 = vmatpush1.bf16.msra.mxu0 %v829
        %1559 = vmatprep.subr.bf16.mxu0 0
        %1560 = vmatpush1.bf16.msra.mxu0 0
        %1561 = vmatprep.subr.bf16.mxu0 0
        %1562 = vmatpush1.bf16.msra.mxu0 0
        %1563 = vmatprep.subr.bf16.mxu0 0
        %1564 = vmatpush1.bf16.msra.mxu0 0
        %1565 = vmatprep.subr.bf16.mxu0 0
        %1566 = vmatpush1.bf16.msra.mxu0 0
        %1567 = vmatprep.subr.bf16.mxu0 0
        %1568 = vmatpush1.bf16.msra.mxu0 0
        %1569 = vmatprep.subr.bf16.mxu0 0
        %1570 = vmatpush1.bf16.msra.mxu0 0
        %1571 = vmatprep.subr.bf16.mxu0 0
        %1572 = vmatpush1.bf16.msra.mxu0 0
        %1573 = vmatprep.subr.bf16.mxu0 0
        %1574 = vmatpush1.bf16.msra.mxu0 0
        %1575 = vmatprep.mubr.bf16.mxu0 0
        %1576 = vmatmul.mubr.bf16.gmra.mrb[0].mxu0 %v1527
        %v1577 = vpop.f32.mrb[0].mxu0
        %v1578 = vadd.f32 0.0, %v1577
        %v1579 = vpop.f32.mrb[0].mxu0
        %v1580 = vpop.f32.mrb[0].mxu0
        %v1581 = vadd.f32 0.0, %v1580
        %v1582 = vpop.f32.mrb[0].mxu0
        %1583 = vmatprep.mubr.bf16.mxu0 0
        %1584 = vmatmul.mubr.bf16.gmra.mrb[0].mxu0 %v1528
        %v1585 = vpop.f32.mrb[0].mxu0
        %v1586 = vadd.f32 0.0, %v1585
        %v1587 = vpop.f32.mrb[0].mxu0
        %v1588 = vpop.f32.mrb[0].mxu0
        %v1589 = vadd.f32 0.0, %v1588
        %v1590 = vpop.f32.mrb[0].mxu0
        %1591 = vmatprep.mubr.bf16.mxu0 0
        %1592 = vmatmul.mubr.bf16.gmra.mrb[0].mxu0 %v1529
        %v1593 = vpop.f32.mrb[0].mxu0
        %v1594 = vadd.f32 0.0, %v1593
        %v1595 = vpop.f32.mrb[0].mxu0
        %v1596 = vpop.f32.mrb[0].mxu0
        %v1597 = vadd.f32 0.0, %v1596
        %v1598 = vpop.f32.mrb[0].mxu0
        %1599 = vmatprep.mubr.bf16.mxu0 0
        %1600 = vmatmul.mubr.bf16.gmra.mrb[0].mxu0 %v1530
        %v1601 = vpop.f32.mrb[0].mxu0
        %v1602 = vadd.f32 0.0, %v1601
        %v1603 = vpop.f32.mrb[0].mxu0
        %v1604 = vpop.f32.mrb[0].mxu0
        %v1605 = vadd.f32 0.0, %v1604
        %v1606 = vpop.f32.mrb[0].mxu0
        %1607 = vmatprep.mubr.bf16.mxu0 0
        %1608 = vmatmul.mubr.bf16.gmra.mrb[0].mxu0 %v1531
        %v1609 = vpop.f32.mrb[0].mxu0
        %v1610 = vadd.f32 0.0, %v1609
        %v1611 = vpop.f32.mrb[0].mxu0
        %v1612 = vpop.f32.mrb[0].mxu0
        %v1613 = vadd.f32 0.0, %v1612
        %v1614 = vpop.f32.mrb[0].mxu0
        %1615 = vmatprep.mubr.bf16.mxu0 0
        %1616 = vmatmul.mubr.bf16.gmra.mrb[0].mxu0 %v1532
        %v1617 = vpop.f32.mrb[0].mxu0
        %v1618 = vadd.f32 0.0, %v1617
        %v1619 = vpop.f32.mrb[0].mxu0
        %v1620 = vpop.f32.mrb[0].mxu0
        %v1621 = vadd.f32 0.0, %v1620
        %v1622 = vpop.f32.mrb[0].mxu0
        %1623 = vmatprep.mubr.bf16.mxu0 0
        %1624 = vmatmul.mubr.bf16.gmra.mrb[0].mxu0 %v1533
        %v1625 = vpop.f32.mrb[0].mxu0
        %v1626 = vadd.f32 0.0, %v1625
        %v1627 = vpop.f32.mrb[0].mxu0
        %v1628 = vpop.f32.mrb[0].mxu0
        %v1629 = vadd.f32 0.0, %v1628
        %v1630 = vpop.f32.mrb[0].mxu0
        %1631 = vmatprep.mubr.bf16.mxu0 0
        %1632 = vmatmul.mubr.bf16.gmra.mrb[0].mxu0 %v1534
        %v1633 = vpop.f32.mrb[0].mxu0
        %v1634 = vadd.f32 0.0, %v1633
        %v1635 = vpop.f32.mrb[0].mxu0
        %v1636 = vpop.f32.mrb[0].mxu0
        %v1637 = vadd.f32 0.0, %v1636
        %v1638 = vpop.f32.mrb[0].mxu0
        %1639 = vdwg.mxu0
        %v1640 = vpack.c.bf16 %v1581, %v1578
        %v1641 = vpack.c.bf16 %v1589, %v1586
        %v1642 = vpack.c.bf16 %v1597, %v1594
        %v1643 = vpack.c.bf16 %v1605, %v1602
        %v1644 = vpack.c.bf16 %v1613, %v1610
        %v1645 = vpack.c.bf16 %v1621, %v1618
        %v1646 = vpack.c.bf16 %v1629, %v1626
        %v1647 = vpack.c.bf16 %v1637, %v1634
        %s1648 = scalar_lea.vmem %s365, 64
        %v1649 = vld [vmem:[%s1648] sm:$0xf]
        %v1650 = vld [vmem:[%s1648 + $0x4] sm:$0xf]
        %v1651 = vld [vmem:[%s1648 + $0x8] sm:$0xf]
        %v1652 = vld [vmem:[%s1648 + $0xc] sm:$0xf]
        %v1653 = vld [vmem:[%s1648 + $0x10] sm:$0xf]
        %v1654 = vld [vmem:[%s1648 + $0x14] sm:$0xf]
        %v1655 = vld [vmem:[%s1648 + $0x18] sm:$0xf]
        %v1656 = vld [vmem:[%s1648 + $0x1c] sm:$0xf]
        %v1665 = vunpack.c.l.b16 %v1649
        %v1666 = vunpack.c.l.b16 %v1650
        %v1667 = vunpack.c.l.b16 %v1651
        %v1668 = vunpack.c.l.b16 %v1652
        %v1669 = vunpack.c.l.b16 %v1653
        %v1670 = vunpack.c.l.b16 %v1654
        %v1671 = vunpack.c.l.b16 %v1655
        %v1672 = vunpack.c.l.b16 %v1656
        %v1673 = vpack.c.b16 %v1666, %v1665
        %v1674 = vpack.c.b16 %v1668, %v1667
        %v1675 = vpack.c.b16 %v1670, %v1669
        %v1676 = vpack.c.b16 %v1672, %v1671
        %v1682 = vsel %vm1211, %v1640, 0
        %v1685 = vsel %vm1211, %v1641, 0
        %v1688 = vsel %vm1211, %v1642, 0
        %v1691 = vsel %vm1211, %v1643, 0
        %v1694 = vsel %vm1211, %v1644, 0
        %v1697 = vsel %vm1211, %v1645, 0
        %v1700 = vsel %vm1211, %v1646, 0
        %v1703 = vsel %vm1211, %v1647, 0
        %1705 = vmatprep.subr.bf16.mxu0 0
        %1706 = vmatpush1.bf16.msra.mxu0 %v1673
        %1707 = vmatprep.subr.bf16.mxu0 0
        %1708 = vmatpush1.bf16.msra.mxu0 %v1674
        %1709 = vmatprep.subr.bf16.mxu0 0
        %1710 = vmatpush1.bf16.msra.mxu0 %v1675
        %1711 = vmatprep.subr.bf16.mxu0 0
        %1712 = vmatpush1.bf16.msra.mxu0 %v1676
        %1713 = vmatprep.subr.bf16.mxu0 0
        %1714 = vmatpush1.bf16.msra.mxu0 0
        %1715 = vmatprep.subr.bf16.mxu0 0
        %1716 = vmatpush1.bf16.msra.mxu0 0
        %1717 = vmatprep.subr.bf16.mxu0 0
        %1718 = vmatpush1.bf16.msra.mxu0 0
        %1719 = vmatprep.subr.bf16.mxu0 0
        %1720 = vmatpush1.bf16.msra.mxu0 0
        %1721 = vmatprep.subr.bf16.mxu0 0
        %1722 = vmatpush1.bf16.msra.mxu0 0
        %1723 = vmatprep.subr.bf16.mxu0 0
        %1724 = vmatpush1.bf16.msra.mxu0 0
        %1725 = vmatprep.subr.bf16.mxu0 0
        %1726 = vmatpush1.bf16.msra.mxu0 0
        %1727 = vmatprep.subr.bf16.mxu0 0
        %1728 = vmatpush1.bf16.msra.mxu0 0
        %1729 = vmatprep.subr.bf16.mxu0 0
        %1730 = vmatpush1.bf16.msra.mxu0 0
        %1731 = vmatprep.subr.bf16.mxu0 0
        %1732 = vmatpush1.bf16.msra.mxu0 0
        %1733 = vmatprep.subr.bf16.mxu0 0
        %1734 = vmatpush1.bf16.msra.mxu0 0
        %1735 = vmatprep.subr.bf16.mxu0 0
        %1736 = vmatpush1.bf16.msra.mxu0 0
        %1737 = vmatprep.mubr.bf16.mxu0 0
        %1738 = vmatmul.mubr.bf16.gmra.mrb[0].mxu0 %v1682
        %v1739 = vpop.f32.mrb[0].mxu0
        %v1740 = vadd.f32 0.0, %v1739
        %v1741 = vpop.f32.mrb[0].mxu0
        %v1742 = vpop.f32.mrb[0].mxu0
        %v1743 = vadd.f32 0.0, %v1742
        %v1744 = vpop.f32.mrb[0].mxu0
        %1745 = vmatprep.mubr.bf16.mxu0 0
        %1746 = vmatmul.mubr.bf16.gmra.mrb[0].mxu0 %v1685
        %v1747 = vpop.f32.mrb[0].mxu0
        %v1748 = vadd.f32 0.0, %v1747
        %v1749 = vpop.f32.mrb[0].mxu0
        %v1750 = vpop.f32.mrb[0].mxu0
        %v1751 = vadd.f32 0.0, %v1750
        %v1752 = vpop.f32.mrb[0].mxu0
        %1753 = vmatprep.mubr.bf16.mxu0 0
        %1754 = vmatmul.mubr.bf16.gmra.mrb[0].mxu0 %v1688
        %v1755 = vpop.f32.mrb[0].mxu0
        %v1756 = vadd.f32 0.0, %v1755
        %v1757 = vpop.f32.mrb[0].mxu0
        %v1758 = vpop.f32.mrb[0].mxu0
        %v1759 = vadd.f32 0.0, %v1758
        %v1760 = vpop.f32.mrb[0].mxu0
        %1761 = vmatprep.mubr.bf16.mxu0 0
        %1762 = vmatmul.mubr.bf16.gmra.mrb[0].mxu0 %v1691
        %v1763 = vpop.f32.mrb[0].mxu0
        %v1764 = vadd.f32 0.0, %v1763
        %v1765 = vpop.f32.mrb[0].mxu0
        %v1766 = vpop.f32.mrb[0].mxu0
        %v1767 = vadd.f32 0.0, %v1766
        %v1768 = vpop.f32.mrb[0].mxu0
        %1769 = vmatprep.mubr.bf16.mxu0 0
        %1770 = vmatmul.mubr.bf16.gmra.mrb[0].mxu0 %v1694
        %v1771 = vpop.f32.mrb[0].mxu0
        %v1772 = vadd.f32 0.0, %v1771
        %v1773 = vpop.f32.mrb[0].mxu0
        %v1774 = vpop.f32.mrb[0].mxu0
        %v1775 = vadd.f32 0.0, %v1774
        %v1776 = vpop.f32.mrb[0].mxu0
        %1777 = vmatprep.mubr.bf16.mxu0 0
        %1778 = vmatmul.mubr.bf16.gmra.mrb[0].mxu0 %v1697
        %v1779 = vpop.f32.mrb[0].mxu0
        %v1780 = vadd.f32 0.0, %v1779
        %v1781 = vpop.f32.mrb[0].mxu0
        %v1782 = vpop.f32.mrb[0].mxu0
        %v1783 = vadd.f32 0.0, %v1782
        %v1784 = vpop.f32.mrb[0].mxu0
        %1785 = vmatprep.mubr.bf16.mxu0 0
        %1786 = vmatmul.mubr.bf16.gmra.mrb[0].mxu0 %v1700
        %v1787 = vpop.f32.mrb[0].mxu0
        %v1788 = vadd.f32 0.0, %v1787
        %v1789 = vpop.f32.mrb[0].mxu0
        %v1790 = vpop.f32.mrb[0].mxu0
        %v1791 = vadd.f32 0.0, %v1790
        %v1792 = vpop.f32.mrb[0].mxu0
        %1793 = vmatprep.mubr.bf16.mxu0 0
        %1794 = vmatmul.mubr.bf16.gmra.mrb[0].mxu0 %v1703
        %v1795 = vpop.f32.mrb[0].mxu0
        %v1796 = vadd.f32 0.0, %v1795
        %v1797 = vpop.f32.mrb[0].mxu0
        %v1798 = vpop.f32.mrb[0].mxu0
        %v1799 = vadd.f32 0.0, %v1798
        %v1800 = vpop.f32.mrb[0].mxu0
        %1801 = vdwg.mxu0
        %v1802 = vadd.f32 %v1416, %v1740
        %v1803 = vadd.f32 %v1419, %v1743
        %v1804 = vadd.f32 %v1424, %v1748
        %v1805 = vadd.f32 %v1427, %v1751
        %v1806 = vadd.f32 %v1432, %v1756
        %v1807 = vadd.f32 %v1435, %v1759
        %v1808 = vadd.f32 %v1440, %v1764
        %v1809 = vadd.f32 %v1443, %v1767
        %v1810 = vadd.f32 %v1448, %v1772
        %v1811 = vadd.f32 %v1451, %v1775
        %v1812 = vadd.f32 %v1456, %v1780
        %v1813 = vadd.f32 %v1459, %v1783
        %v1814 = vadd.f32 %v1464, %v1788
        %v1815 = vadd.f32 %v1467, %v1791
        %v1816 = vadd.f32 %v1472, %v1796
        %v1817 = vadd.f32 %v1475, %v1799
        %s1818 = scalar_lea.vmem %s5, 192
        %v1819 = vld [vmem:[%s1818] sm:$0xf]
        %v1820 = vld [vmem:[%s1818 + $0x4] sm:$0xf]
        %v1821 = vld [vmem:[%s1818 + $0x8] sm:$0xf]
        %v1822 = vld [vmem:[%s1818 + $0xc] sm:$0xf]
        %v1823 = vld [vmem:[%s1818 + $0x10] sm:$0xf]
        %v1824 = vld [vmem:[%s1818 + $0x14] sm:$0xf]
        %v1825 = vld [vmem:[%s1818 + $0x18] sm:$0xf]
        %v1826 = vld [vmem:[%s1818 + $0x1c] sm:$0xf]
        %v1827 = vld [vmem:[%s1818 + $0x20] sm:$0xf]
        %v1828 = vld [vmem:[%s1818 + $0x24] sm:$0xf]
        %v1829 = vld [vmem:[%s1818 + $0x28] sm:$0xf]
        %v1830 = vld [vmem:[%s1818 + $0x2c] sm:$0xf]
        %v1831 = vld [vmem:[%s1818 + $0x30] sm:$0xf]
        %v1832 = vld [vmem:[%s1818 + $0x34] sm:$0xf]
        %v1833 = vld [vmem:[%s1818 + $0x38] sm:$0xf]
        %v1834 = vld [vmem:[%s1818 + $0x3c] sm:$0xf]
        %v1851 = vunpack.c.l.b16 %v1819
        %v1852 = vunpack.c.l.b16 %v1820
        %v1853 = vunpack.c.l.b16 %v1821
        %v1854 = vunpack.c.l.b16 %v1822
        %v1855 = vunpack.c.l.b16 %v1823
        %v1856 = vunpack.c.l.b16 %v1824
        %v1857 = vunpack.c.l.b16 %v1825
        %v1858 = vunpack.c.l.b16 %v1826
        %v1859 = vunpack.c.l.b16 %v1827
        %v1860 = vunpack.c.l.b16 %v1828
        %v1861 = vunpack.c.l.b16 %v1829
        %v1862 = vunpack.c.l.b16 %v1830
        %v1863 = vunpack.c.l.b16 %v1831
        %v1864 = vunpack.c.l.b16 %v1832
        %v1865 = vunpack.c.l.b16 %v1833
        %v1866 = vunpack.c.l.b16 %v1834
        %v1867 = vpack.c.b16 %v1852, %v1851
        %v1868 = vpack.c.b16 %v1854, %v1853
        %v1869 = vpack.c.b16 %v1856, %v1855
        %v1870 = vpack.c.b16 %v1858, %v1857
        %v1871 = vpack.c.b16 %v1860, %v1859
        %v1872 = vpack.c.b16 %v1862, %v1861
        %v1873 = vpack.c.b16 %v1864, %v1863
        %v1874 = vpack.c.b16 %v1866, %v1865
        %1883 = vmatprep.subr.bf16.mxu0 0
        %1884 = vmatpush1.bf16.msra.mxu0 %v822
        %1885 = vmatprep.subr.bf16.mxu0 0
        %1886 = vmatpush1.bf16.msra.mxu0 %v823
        %1887 = vmatprep.subr.bf16.mxu0 0
        %1888 = vmatpush1.bf16.msra.mxu0 %v824
        %1889 = vmatprep.subr.bf16.mxu0 0
        %1890 = vmatpush1.bf16.msra.mxu0 %v825
        %1891 = vmatprep.subr.bf16.mxu0 0
        %1892 = vmatpush1.bf16.msra.mxu0 %v826
        %1893 = vmatprep.subr.bf16.mxu0 0
        %1894 = vmatpush1.bf16.msra.mxu0 %v827
        %1895 = vmatprep.subr.bf16.mxu0 0
        %1896 = vmatpush1.bf16.msra.mxu0 %v828
        %1897 = vmatprep.subr.bf16.mxu0 0
        %1898 = vmatpush1.bf16.msra.mxu0 %v829
        %1899 = vmatprep.subr.bf16.mxu0 0
        %1900 = vmatpush1.bf16.msra.mxu0 0
        %1901 = vmatprep.subr.bf16.mxu0 0
        %1902 = vmatpush1.bf16.msra.mxu0 0
        %1903 = vmatprep.subr.bf16.mxu0 0
        %1904 = vmatpush1.bf16.msra.mxu0 0
        %1905 = vmatprep.subr.bf16.mxu0 0
        %1906 = vmatpush1.bf16.msra.mxu0 0
        %1907 = vmatprep.subr.bf16.mxu0 0
        %1908 = vmatpush1.bf16.msra.mxu0 0
        %1909 = vmatprep.subr.bf16.mxu0 0
        %1910 = vmatpush1.bf16.msra.mxu0 0
        %1911 = vmatprep.subr.bf16.mxu0 0
        %1912 = vmatpush1.bf16.msra.mxu0 0
        %1913 = vmatprep.subr.bf16.mxu0 0
        %1914 = vmatpush1.bf16.msra.mxu0 0
        %1915 = vmatprep.mubr.bf16.mxu0 0
        %1916 = vmatmul.mubr.bf16.gmra.mrb[0].mxu0 %v1867
        %v1917 = vpop.f32.mrb[0].mxu0
        %v1918 = vadd.f32 0.0, %v1917
        %v1919 = vpop.f32.mrb[0].mxu0
        %v1920 = vpop.f32.mrb[0].mxu0
        %v1921 = vadd.f32 0.0, %v1920
        %v1922 = vpop.f32.mrb[0].mxu0
        %1923 = vmatprep.mubr.bf16.mxu0 0
        %1924 = vmatmul.mubr.bf16.gmra.mrb[0].mxu0 %v1868
        %v1925 = vpop.f32.mrb[0].mxu0
        %v1926 = vadd.f32 0.0, %v1925
        %v1927 = vpop.f32.mrb[0].mxu0
        %v1928 = vpop.f32.mrb[0].mxu0
        %v1929 = vadd.f32 0.0, %v1928
        %v1930 = vpop.f32.mrb[0].mxu0
        %1931 = vmatprep.mubr.bf16.mxu0 0
        %1932 = vmatmul.mubr.bf16.gmra.mrb[0].mxu0 %v1869
        %v1933 = vpop.f32.mrb[0].mxu0
        %v1934 = vadd.f32 0.0, %v1933
        %v1935 = vpop.f32.mrb[0].mxu0
        %v1936 = vpop.f32.mrb[0].mxu0
        %v1937 = vadd.f32 0.0, %v1936
        %v1938 = vpop.f32.mrb[0].mxu0
        %1939 = vmatprep.mubr.bf16.mxu0 0
        %1940 = vmatmul.mubr.bf16.gmra.mrb[0].mxu0 %v1870
        %v1941 = vpop.f32.mrb[0].mxu0
        %v1942 = vadd.f32 0.0, %v1941
        %v1943 = vpop.f32.mrb[0].mxu0
        %v1944 = vpop.f32.mrb[0].mxu0
        %v1945 = vadd.f32 0.0, %v1944
        %v1946 = vpop.f32.mrb[0].mxu0
        %1947 = vmatprep.mubr.bf16.mxu0 0
        %1948 = vmatmul.mubr.bf16.gmra.mrb[0].mxu0 %v1871
        %v1949 = vpop.f32.mrb[0].mxu0
        %v1950 = vadd.f32 0.0, %v1949
        %v1951 = vpop.f32.mrb[0].mxu0
        %v1952 = vpop.f32.mrb[0].mxu0
        %v1953 = vadd.f32 0.0, %v1952
        %v1954 = vpop.f32.mrb[0].mxu0
        %1955 = vmatprep.mubr.bf16.mxu0 0
        %1956 = vmatmul.mubr.bf16.gmra.mrb[0].mxu0 %v1872
        %v1957 = vpop.f32.mrb[0].mxu0
        %v1958 = vadd.f32 0.0, %v1957
        %v1959 = vpop.f32.mrb[0].mxu0
        %v1960 = vpop.f32.mrb[0].mxu0
        %v1961 = vadd.f32 0.0, %v1960
        %v1962 = vpop.f32.mrb[0].mxu0
        %1963 = vmatprep.mubr.bf16.mxu0 0
        %1964 = vmatmul.mubr.bf16.gmra.mrb[0].mxu0 %v1873
        %v1965 = vpop.f32.mrb[0].mxu0
        %v1966 = vadd.f32 0.0, %v1965
        %v1967 = vpop.f32.mrb[0].mxu0
        %v1968 = vpop.f32.mrb[0].mxu0
        %v1969 = vadd.f32 0.0, %v1968
        %v1970 = vpop.f32.mrb[0].mxu0
        %1971 = vmatprep.mubr.bf16.mxu0 0
        %1972 = vmatmul.mubr.bf16.gmra.mrb[0].mxu0 %v1874
        %v1973 = vpop.f32.mrb[0].mxu0
        %v1974 = vadd.f32 0.0, %v1973
        %v1975 = vpop.f32.mrb[0].mxu0
        %v1976 = vpop.f32.mrb[0].mxu0
        %v1977 = vadd.f32 0.0, %v1976
        %v1978 = vpop.f32.mrb[0].mxu0
        %1979 = vdwg.mxu0
        %v1980 = vpack.c.bf16 %v1921, %v1918
        %v1981 = vpack.c.bf16 %v1929, %v1926
        %v1982 = vpack.c.bf16 %v1937, %v1934
        %v1983 = vpack.c.bf16 %v1945, %v1942
        %v1984 = vpack.c.bf16 %v1953, %v1950
        %v1985 = vpack.c.bf16 %v1961, %v1958
        %v1986 = vpack.c.bf16 %v1969, %v1966
        %v1987 = vpack.c.bf16 %v1977, %v1974
        %s1988 = scalar_lea.vmem %s365, 96
        %v1989 = vld [vmem:[%s1988] sm:$0xf]
        %v1990 = vld [vmem:[%s1988 + $0x4] sm:$0xf]
        %v1991 = vld [vmem:[%s1988 + $0x8] sm:$0xf]
        %v1992 = vld [vmem:[%s1988 + $0xc] sm:$0xf]
        %v1993 = vld [vmem:[%s1988 + $0x10] sm:$0xf]
        %v1994 = vld [vmem:[%s1988 + $0x14] sm:$0xf]
        %v1995 = vld [vmem:[%s1988 + $0x18] sm:$0xf]
        %v1996 = vld [vmem:[%s1988 + $0x1c] sm:$0xf]
        %v2005 = vunpack.c.l.b16 %v1989
        %v2006 = vunpack.c.l.b16 %v1990
        %v2007 = vunpack.c.l.b16 %v1991
        %v2008 = vunpack.c.l.b16 %v1992
        %v2009 = vunpack.c.l.b16 %v1993
        %v2010 = vunpack.c.l.b16 %v1994
        %v2011 = vunpack.c.l.b16 %v1995
        %v2012 = vunpack.c.l.b16 %v1996
        %v2013 = vpack.c.b16 %v2006, %v2005
        %v2014 = vpack.c.b16 %v2008, %v2007
        %v2015 = vpack.c.b16 %v2010, %v2009
        %v2016 = vpack.c.b16 %v2012, %v2011
        %v2022 = vsel %vm1211, %v1980, 0
        %v2025 = vsel %vm1211, %v1981, 0
        %v2028 = vsel %vm1211, %v1982, 0
        %v2031 = vsel %vm1211, %v1983, 0
        %v2034 = vsel %vm1211, %v1984, 0
        %v2037 = vsel %vm1211, %v1985, 0
        %v2040 = vsel %vm1211, %v1986, 0
        %v2043 = vsel %vm1211, %v1987, 0
        %2045 = vmatprep.subr.bf16.mxu0 0
        %2046 = vmatpush1.bf16.msra.mxu0 %v2013
        %2047 = vmatprep.subr.bf16.mxu0 0
        %2048 = vmatpush1.bf16.msra.mxu0 %v2014
        %2049 = vmatprep.subr.bf16.mxu0 0
        %2050 = vmatpush1.bf16.msra.mxu0 %v2015
        %2051 = vmatprep.subr.bf16.mxu0 0
        %2052 = vmatpush1.bf16.msra.mxu0 %v2016
        %2053 = vmatprep.subr.bf16.mxu0 0
        %2054 = vmatpush1.bf16.msra.mxu0 0
        %2055 = vmatprep.subr.bf16.mxu0 0
        %2056 = vmatpush1.bf16.msra.mxu0 0
        %2057 = vmatprep.subr.bf16.mxu0 0
        %2058 = vmatpush1.bf16.msra.mxu0 0
        %2059 = vmatprep.subr.bf16.mxu0 0
        %2060 = vmatpush1.bf16.msra.mxu0 0
        %2061 = vmatprep.subr.bf16.mxu0 0
        %2062 = vmatpush1.bf16.msra.mxu0 0
        %2063 = vmatprep.subr.bf16.mxu0 0
        %2064 = vmatpush1.bf16.msra.mxu0 0
        %2065 = vmatprep.subr.bf16.mxu0 0
        %2066 = vmatpush1.bf16.msra.mxu0 0
        %2067 = vmatprep.subr.bf16.mxu0 0
        %2068 = vmatpush1.bf16.msra.mxu0 0
        %2069 = vmatprep.subr.bf16.mxu0 0
        %2070 = vmatpush1.bf16.msra.mxu0 0
        %2071 = vmatprep.subr.bf16.mxu0 0
        %2072 = vmatpush1.bf16.msra.mxu0 0
        %2073 = vmatprep.subr.bf16.mxu0 0
        %2074 = vmatpush1.bf16.msra.mxu0 0
        %2075 = vmatprep.subr.bf16.mxu0 0
        %2076 = vmatpush1.bf16.msra.mxu0 0
        %2077 = vmatprep.mubr.bf16.mxu0 0
        %2078 = vmatmul.mubr.bf16.gmra.mrb[0].mxu0 %v2022
        %v2079 = vpop.f32.mrb[0].mxu0
        %v2080 = vadd.f32 0.0, %v2079
        %v2081 = vpop.f32.mrb[0].mxu0
        %v2082 = vpop.f32.mrb[0].mxu0
        %v2083 = vadd.f32 0.0, %v2082
        %v2084 = vpop.f32.mrb[0].mxu0
        %2085 = vmatprep.mubr.bf16.mxu0 0
        %2086 = vmatmul.mubr.bf16.gmra.mrb[0].mxu0 %v2025
        %v2087 = vpop.f32.mrb[0].mxu0
        %v2088 = vadd.f32 0.0, %v2087
        %v2089 = vpop.f32.mrb[0].mxu0
        %v2090 = vpop.f32.mrb[0].mxu0
        %v2091 = vadd.f32 0.0, %v2090
        %v2092 = vpop.f32.mrb[0].mxu0
        %2093 = vmatprep.mubr.bf16.mxu0 0
        %2094 = vmatmul.mubr.bf16.gmra.mrb[0].mxu0 %v2028
        %v2095 = vpop.f32.mrb[0].mxu0
        %v2096 = vadd.f32 0.0, %v2095
        %v2097 = vpop.f32.mrb[0].mxu0
        %v2098 = vpop.f32.mrb[0].mxu0
        %v2099 = vadd.f32 0.0, %v2098
        %v2100 = vpop.f32.mrb[0].mxu0
        %2101 = vmatprep.mubr.bf16.mxu0 0
        %2102 = vmatmul.mubr.bf16.gmra.mrb[0].mxu0 %v2031
        %v2103 = vpop.f32.mrb[0].mxu0
        %v2104 = vadd.f32 0.0, %v2103
        %v2105 = vpop.f32.mrb[0].mxu0
        %v2106 = vpop.f32.mrb[0].mxu0
        %v2107 = vadd.f32 0.0, %v2106
        %v2108 = vpop.f32.mrb[0].mxu0
        %2109 = vmatprep.mubr.bf16.mxu0 0
        %2110 = vmatmul.mubr.bf16.gmra.mrb[0].mxu0 %v2034
        %v2111 = vpop.f32.mrb[0].mxu0
        %v2112 = vadd.f32 0.0, %v2111
        %v2113 = vpop.f32.mrb[0].mxu0
        %v2114 = vpop.f32.mrb[0].mxu0
        %v2115 = vadd.f32 0.0, %v2114
        %v2116 = vpop.f32.mrb[0].mxu0
        %2117 = vmatprep.mubr.bf16.mxu0 0
        %2118 = vmatmul.mubr.bf16.gmra.mrb[0].mxu0 %v2037
        %v2119 = vpop.f32.mrb[0].mxu0
        %v2120 = vadd.f32 0.0, %v2119
        %v2121 = vpop.f32.mrb[0].mxu0
        %v2122 = vpop.f32.mrb[0].mxu0
        %v2123 = vadd.f32 0.0, %v2122
        %v2124 = vpop.f32.mrb[0].mxu0
        %2125 = vmatprep.mubr.bf16.mxu0 0
        %2126 = vmatmul.mubr.bf16.gmra.mrb[0].mxu0 %v2040
        %v2127 = vpop.f32.mrb[0].mxu0
        %v2128 = vadd.f32 0.0, %v2127
        %v2129 = vpop.f32.mrb[0].mxu0
        %v2130 = vpop.f32.mrb[0].mxu0
        %v2131 = vadd.f32 0.0, %v2130
        %v2132 = vpop.f32.mrb[0].mxu0
        %2133 = vmatprep.mubr.bf16.mxu0 0
        %2134 = vmatmul.mubr.bf16.gmra.mrb[0].mxu0 %v2043
        %v2135 = vpop.f32.mrb[0].mxu0
        %v2136 = vadd.f32 0.0, %v2135
        %v2137 = vpop.f32.mrb[0].mxu0
        %v2138 = vpop.f32.mrb[0].mxu0
        %v2139 = vadd.f32 0.0, %v2138
        %v2140 = vpop.f32.mrb[0].mxu0
        %2141 = vdwg.mxu0
        %v2142 = vadd.f32 %v1802, %v2080
        %v2143 = vadd.f32 %v1803, %v2083
        %v2144 = vadd.f32 %v1804, %v2088
        %v2145 = vadd.f32 %v1805, %v2091
        %v2146 = vadd.f32 %v1806, %v2096
        %v2147 = vadd.f32 %v1807, %v2099
        %v2148 = vadd.f32 %v1808, %v2104
        %v2149 = vadd.f32 %v1809, %v2107
        %v2150 = vadd.f32 %v1810, %v2112
        %v2151 = vadd.f32 %v1811, %v2115
        %v2152 = vadd.f32 %v1812, %v2120
        %v2153 = vadd.f32 %v1813, %v2123
        %v2154 = vadd.f32 %v1814, %v2128
        %v2155 = vadd.f32 %v1815, %v2131
        %v2156 = vadd.f32 %v1816, %v2136
        %v2157 = vadd.f32 %v1817, %v2139
        %s2158 = scalar_lea.vmem %s365, 128
        %v2159 = vld [vmem:[%s2158] sm:$0xf]
        %v2160 = vld [vmem:[%s2158 + $0x4] sm:$0xf]
        %v2161 = vld [vmem:[%s2158 + $0x8] sm:$0xf]
        %v2162 = vld [vmem:[%s2158 + $0xc] sm:$0xf]
        %v2163 = vld [vmem:[%s2158 + $0x10] sm:$0xf]
        %v2164 = vld [vmem:[%s2158 + $0x14] sm:$0xf]
        %v2165 = vld [vmem:[%s2158 + $0x18] sm:$0xf]
        %v2166 = vld [vmem:[%s2158 + $0x1c] sm:$0xf]
        %v2175 = vunpack.c.l.b16 %v2159
        %v2176 = vunpack.c.l.b16 %v2160
        %v2177 = vunpack.c.l.b16 %v2161
        %v2178 = vunpack.c.l.b16 %v2162
        %v2179 = vunpack.c.l.b16 %v2163
        %v2180 = vunpack.c.l.b16 %v2164
        %v2181 = vunpack.c.l.b16 %v2165
        %v2182 = vunpack.c.l.b16 %v2166
        %v2183 = vpack.c.b16 %v2176, %v2175
        %v2184 = vpack.c.b16 %v2178, %v2177
        %v2185 = vpack.c.b16 %v2180, %v2179
        %v2186 = vpack.c.b16 %v2182, %v2181
        %v2192 = vsel %vm1211, %v822, 0
        %v2195 = vsel %vm1211, %v823, 0
        %v2198 = vsel %vm1211, %v824, 0
        %v2201 = vsel %vm1211, %v825, 0
        %v2204 = vsel %vm1211, %v826, 0
        %v2207 = vsel %vm1211, %v827, 0
        %v2210 = vsel %vm1211, %v828, 0
        %v2213 = vsel %vm1211, %v829, 0
        %2215 = vmatprep.subr.bf16.mxu0 0
        %2216 = vmatpush1.bf16.msra.mxu0 %v2183
        %2217 = vmatprep.subr.bf16.mxu0 0
        %2218 = vmatpush1.bf16.msra.mxu0 %v2184
        %2219 = vmatprep.subr.bf16.mxu0 0
        %2220 = vmatpush1.bf16.msra.mxu0 %v2185
        %2221 = vmatprep.subr.bf16.mxu0 0
        %2222 = vmatpush1.bf16.msra.mxu0 %v2186
        %2223 = vmatprep.subr.bf16.mxu0 0
        %2224 = vmatpush1.bf16.msra.mxu0 0
        %2225 = vmatprep.subr.bf16.mxu0 0
        %2226 = vmatpush1.bf16.msra.mxu0 0
        %2227 = vmatprep.subr.bf16.mxu0 0
        %2228 = vmatpush1.bf16.msra.mxu0 0
        %2229 = vmatprep.subr.bf16.mxu0 0
        %2230 = vmatpush1.bf16.msra.mxu0 0
        %2231 = vmatprep.subr.bf16.mxu0 0
        %2232 = vmatpush1.bf16.msra.mxu0 0
        %2233 = vmatprep.subr.bf16.mxu0 0
        %2234 = vmatpush1.bf16.msra.mxu0 0
        %2235 = vmatprep.subr.bf16.mxu0 0
        %2236 = vmatpush1.bf16.msra.mxu0 0
        %2237 = vmatprep.subr.bf16.mxu0 0
        %2238 = vmatpush1.bf16.msra.mxu0 0
        %2239 = vmatprep.subr.bf16.mxu0 0
        %2240 = vmatpush1.bf16.msra.mxu0 0
        %2241 = vmatprep.subr.bf16.mxu0 0
        %2242 = vmatpush1.bf16.msra.mxu0 0
        %2243 = vmatprep.subr.bf16.mxu0 0
        %2244 = vmatpush1.bf16.msra.mxu0 0
        %2245 = vmatprep.subr.bf16.mxu0 0
        %2246 = vmatpush1.bf16.msra.mxu0 0
        %2247 = vmatprep.mubr.bf16.mxu0 0
        %2248 = vmatmul.mubr.bf16.gmra.mrb[0].mxu0 %v2192
        %v2249 = vpop.f32.mrb[0].mxu0
        %v2250 = vadd.f32 0.0, %v2249
        %v2251 = vpop.f32.mrb[0].mxu0
        %v2252 = vpop.f32.mrb[0].mxu0
        %v2253 = vadd.f32 0.0, %v2252
        %v2254 = vpop.f32.mrb[0].mxu0
        %2255 = vmatprep.mubr.bf16.mxu0 0
        %2256 = vmatmul.mubr.bf16.gmra.mrb[0].mxu0 %v2195
        %v2257 = vpop.f32.mrb[0].mxu0
        %v2258 = vadd.f32 0.0, %v2257
        %v2259 = vpop.f32.mrb[0].mxu0
        %v2260 = vpop.f32.mrb[0].mxu0
        %v2261 = vadd.f32 0.0, %v2260
        %v2262 = vpop.f32.mrb[0].mxu0
        %2263 = vmatprep.mubr.bf16.mxu0 0
        %2264 = vmatmul.mubr.bf16.gmra.mrb[0].mxu0 %v2198
        %v2265 = vpop.f32.mrb[0].mxu0
        %v2266 = vadd.f32 0.0, %v2265
        %v2267 = vpop.f32.mrb[0].mxu0
        %v2268 = vpop.f32.mrb[0].mxu0
        %v2269 = vadd.f32 0.0, %v2268
        %v2270 = vpop.f32.mrb[0].mxu0
        %2271 = vmatprep.mubr.bf16.mxu0 0
        %2272 = vmatmul.mubr.bf16.gmra.mrb[0].mxu0 %v2201
        %v2273 = vpop.f32.mrb[0].mxu0
        %v2274 = vadd.f32 0.0, %v2273
        %v2275 = vpop.f32.mrb[0].mxu0
        %v2276 = vpop.f32.mrb[0].mxu0
        %v2277 = vadd.f32 0.0, %v2276
        %v2278 = vpop.f32.mrb[0].mxu0
        %2279 = vmatprep.mubr.bf16.mxu0 0
        %2280 = vmatmul.mubr.bf16.gmra.mrb[0].mxu0 %v2204
        %v2281 = vpop.f32.mrb[0].mxu0
        %v2282 = vadd.f32 0.0, %v2281
        %v2283 = vpop.f32.mrb[0].mxu0
        %v2284 = vpop.f32.mrb[0].mxu0
        %v2285 = vadd.f32 0.0, %v2284
        %v2286 = vpop.f32.mrb[0].mxu0
        %2287 = vmatprep.mubr.bf16.mxu0 0
        %2288 = vmatmul.mubr.bf16.gmra.mrb[0].mxu0 %v2207
        %v2289 = vpop.f32.mrb[0].mxu0
        %v2290 = vadd.f32 0.0, %v2289
        %v2291 = vpop.f32.mrb[0].mxu0
        %v2292 = vpop.f32.mrb[0].mxu0
        %v2293 = vadd.f32 0.0, %v2292
        %v2294 = vpop.f32.mrb[0].mxu0
        %2295 = vmatprep.mubr.bf16.mxu0 0
        %2296 = vmatmul.mubr.bf16.gmra.mrb[0].mxu0 %v2210
        %v2297 = vpop.f32.mrb[0].mxu0
        %v2298 = vadd.f32 0.0, %v2297
        %v2299 = vpop.f32.mrb[0].mxu0
        %v2300 = vpop.f32.mrb[0].mxu0
        %v2301 = vadd.f32 0.0, %v2300
        %v2302 = vpop.f32.mrb[0].mxu0
        %2303 = vmatprep.mubr.bf16.mxu0 0
        %2304 = vmatmul.mubr.bf16.gmra.mrb[0].mxu0 %v2213
        %v2305 = vpop.f32.mrb[0].mxu0
        %v2306 = vadd.f32 0.0, %v2305
        %v2307 = vpop.f32.mrb[0].mxu0
        %v2308 = vpop.f32.mrb[0].mxu0
        %v2309 = vadd.f32 0.0, %v2308
        %v2310 = vpop.f32.mrb[0].mxu0
        %2311 = vdwg.mxu0
        %v2312 = vadd.f32 %v2142, %v2250
        %v2313 = vadd.f32 %v2143, %v2253
        %v2314 = vadd.f32 %v2144, %v2258
        %v2315 = vadd.f32 %v2145, %v2261
        %v2316 = vadd.f32 %v2146, %v2266
        %v2317 = vadd.f32 %v2147, %v2269
        %v2318 = vadd.f32 %v2148, %v2274
        %v2319 = vadd.f32 %v2149, %v2277
        %v2320 = vadd.f32 %v2150, %v2282
        %v2321 = vadd.f32 %v2151, %v2285
        %v2322 = vadd.f32 %v2152, %v2290
        %v2323 = vadd.f32 %v2153, %v2293
        %v2324 = vadd.f32 %v2154, %v2298
        %v2325 = vadd.f32 %v2155, %v2301
        %v2326 = vadd.f32 %v2156, %v2306
        %v2327 = vadd.f32 %v2157, %v2309
        %s2328 = scalar_lea.vmem %s5, 320
        %v2329 = vld [vmem:[%s2328] sm:$0xf]
        %v2330 = vld [vmem:[%s2328 + $0x4] sm:$0xf]
        %v2331 = vld [vmem:[%s2328 + $0x8] sm:$0xf]
        %v2332 = vld [vmem:[%s2328 + $0xc] sm:$0xf]
        %v2333 = vld [vmem:[%s2328 + $0x10] sm:$0xf]
        %v2334 = vld [vmem:[%s2328 + $0x14] sm:$0xf]
        %v2335 = vld [vmem:[%s2328 + $0x18] sm:$0xf]
        %v2336 = vld [vmem:[%s2328 + $0x1c] sm:$0xf]
        %v2337 = vld [vmem:[%s2328 + $0x20] sm:$0xf]
        %v2338 = vld [vmem:[%s2328 + $0x24] sm:$0xf]
        %v2339 = vld [vmem:[%s2328 + $0x28] sm:$0xf]
        %v2340 = vld [vmem:[%s2328 + $0x2c] sm:$0xf]
        %v2341 = vld [vmem:[%s2328 + $0x30] sm:$0xf]
        %v2342 = vld [vmem:[%s2328 + $0x34] sm:$0xf]
        %v2343 = vld [vmem:[%s2328 + $0x38] sm:$0xf]
        %v2344 = vld [vmem:[%s2328 + $0x3c] sm:$0xf]
        %v2361 = vunpack.c.l.b16 %v2329
        %v2362 = vunpack.c.l.b16 %v2330
        %v2363 = vunpack.c.l.b16 %v2331
        %v2364 = vunpack.c.l.b16 %v2332
        %v2365 = vunpack.c.l.b16 %v2333
        %v2366 = vunpack.c.l.b16 %v2334
        %v2367 = vunpack.c.l.b16 %v2335
        %v2368 = vunpack.c.l.b16 %v2336
        %v2369 = vunpack.c.l.b16 %v2337
        %v2370 = vunpack.c.l.b16 %v2338
        %v2371 = vunpack.c.l.b16 %v2339
        %v2372 = vunpack.c.l.b16 %v2340
        %v2373 = vunpack.c.l.b16 %v2341
        %v2374 = vunpack.c.l.b16 %v2342
        %v2375 = vunpack.c.l.b16 %v2343
        %v2376 = vunpack.c.l.b16 %v2344
        %v2377 = vpack.c.b16 %v2362, %v2361
        %v2378 = vpack.c.b16 %v2364, %v2363
        %v2379 = vpack.c.b16 %v2366, %v2365
        %v2380 = vpack.c.b16 %v2368, %v2367
        %v2381 = vpack.c.b16 %v2370, %v2369
        %v2382 = vpack.c.b16 %v2372, %v2371
        %v2383 = vpack.c.b16 %v2374, %v2373
        %v2384 = vpack.c.b16 %v2376, %v2375
        %2393 = vmatprep.subr.bf16.mxu0 0
        %2394 = vmatpush1.bf16.msra.mxu0 %v822
        %2395 = vmatprep.subr.bf16.mxu0 0
        %2396 = vmatpush1.bf16.msra.mxu0 %v823
        %2397 = vmatprep.subr.bf16.mxu0 0
        %2398 = vmatpush1.bf16.msra.mxu0 %v824
        %2399 = vmatprep.subr.bf16.mxu0 0
        %2400 = vmatpush1.bf16.msra.mxu0 %v825
        %2401 = vmatprep.subr.bf16.mxu0 0
        %2402 = vmatpush1.bf16.msra.mxu0 %v826
        %2403 = vmatprep.subr.bf16.mxu0 0
        %2404 = vmatpush1.bf16.msra.mxu0 %v827
        %2405 = vmatprep.subr.bf16.mxu0 0
        %2406 = vmatpush1.bf16.msra.mxu0 %v828
        %2407 = vmatprep.subr.bf16.mxu0 0
        %2408 = vmatpush1.bf16.msra.mxu0 %v829
        %2409 = vmatprep.subr.bf16.mxu0 0
        %2410 = vmatpush1.bf16.msra.mxu0 0
        %2411 = vmatprep.subr.bf16.mxu0 0
        %2412 = vmatpush1.bf16.msra.mxu0 0
        %2413 = vmatprep.subr.bf16.mxu0 0
        %2414 = vmatpush1.bf16.msra.mxu0 0
        %2415 = vmatprep.subr.bf16.mxu0 0
        %2416 = vmatpush1.bf16.msra.mxu0 0
        %2417 = vmatprep.subr.bf16.mxu0 0
        %2418 = vmatpush1.bf16.msra.mxu0 0
        %2419 = vmatprep.subr.bf16.mxu0 0
        %2420 = vmatpush1.bf16.msra.mxu0 0
        %2421 = vmatprep.subr.bf16.mxu0 0
        %2422 = vmatpush1.bf16.msra.mxu0 0
        %2423 = vmatprep.subr.bf16.mxu0 0
        %2424 = vmatpush1.bf16.msra.mxu0 0
        %2425 = vmatprep.mubr.bf16.mxu0 0
        %2426 = vmatmul.mubr.bf16.gmra.mrb[0].mxu0 %v2377
        %v2427 = vpop.f32.mrb[0].mxu0
        %v2428 = vadd.f32 0.0, %v2427
        %v2429 = vpop.f32.mrb[0].mxu0
        %v2430 = vpop.f32.mrb[0].mxu0
        %v2431 = vadd.f32 0.0, %v2430
        %v2432 = vpop.f32.mrb[0].mxu0
        %2433 = vmatprep.mubr.bf16.mxu0 0
        %2434 = vmatmul.mubr.bf16.gmra.mrb[0].mxu0 %v2378
        %v2435 = vpop.f32.mrb[0].mxu0
        %v2436 = vadd.f32 0.0, %v2435
        %v2437 = vpop.f32.mrb[0].mxu0
        %v2438 = vpop.f32.mrb[0].mxu0
        %v2439 = vadd.f32 0.0, %v2438
        %v2440 = vpop.f32.mrb[0].mxu0
        %2441 = vmatprep.mubr.bf16.mxu0 0
        %2442 = vmatmul.mubr.bf16.gmra.mrb[0].mxu0 %v2379
        %v2443 = vpop.f32.mrb[0].mxu0
        %v2444 = vadd.f32 0.0, %v2443
        %v2445 = vpop.f32.mrb[0].mxu0
        %v2446 = vpop.f32.mrb[0].mxu0
        %v2447 = vadd.f32 0.0, %v2446
        %v2448 = vpop.f32.mrb[0].mxu0
        %2449 = vmatprep.mubr.bf16.mxu0 0
        %2450 = vmatmul.mubr.bf16.gmra.mrb[0].mxu0 %v2380
        %v2451 = vpop.f32.mrb[0].mxu0
        %v2452 = vadd.f32 0.0, %v2451
        %v2453 = vpop.f32.mrb[0].mxu0
        %v2454 = vpop.f32.mrb[0].mxu0
        %v2455 = vadd.f32 0.0, %v2454
        %v2456 = vpop.f32.mrb[0].mxu0
        %2457 = vmatprep.mubr.bf16.mxu0 0
        %2458 = vmatmul.mubr.bf16.gmra.mrb[0].mxu0 %v2381
        %v2459 = vpop.f32.mrb[0].mxu0
        %v2460 = vadd.f32 0.0, %v2459
        %v2461 = vpop.f32.mrb[0].mxu0
        %v2462 = vpop.f32.mrb[0].mxu0
        %v2463 = vadd.f32 0.0, %v2462
        %v2464 = vpop.f32.mrb[0].mxu0
        %2465 = vmatprep.mubr.bf16.mxu0 0
        %2466 = vmatmul.mubr.bf16.gmra.mrb[0].mxu0 %v2382
        %v2467 = vpop.f32.mrb[0].mxu0
        %v2468 = vadd.f32 0.0, %v2467
        %v2469 = vpop.f32.mrb[0].mxu0
        %v2470 = vpop.f32.mrb[0].mxu0
        %v2471 = vadd.f32 0.0, %v2470
        %v2472 = vpop.f32.mrb[0].mxu0
        %2473 = vmatprep.mubr.bf16.mxu0 0
        %2474 = vmatmul.mubr.bf16.gmra.mrb[0].mxu0 %v2383
        %v2475 = vpop.f32.mrb[0].mxu0
        %v2476 = vadd.f32 0.0, %v2475
        %v2477 = vpop.f32.mrb[0].mxu0
        %v2478 = vpop.f32.mrb[0].mxu0
        %v2479 = vadd.f32 0.0, %v2478
        %v2480 = vpop.f32.mrb[0].mxu0
        %2481 = vmatprep.mubr.bf16.mxu0 0
        %2482 = vmatmul.mubr.bf16.gmra.mrb[0].mxu0 %v2384
        %v2483 = vpop.f32.mrb[0].mxu0
        %v2484 = vadd.f32 0.0, %v2483
        %v2485 = vpop.f32.mrb[0].mxu0
        %v2486 = vpop.f32.mrb[0].mxu0
        %v2487 = vadd.f32 0.0, %v2486
        %v2488 = vpop.f32.mrb[0].mxu0
        %2489 = vdwg.mxu0
        %v2490 = vpack.c.bf16 %v2431, %v2428
        %v2491 = vpack.c.bf16 %v2439, %v2436
        %v2492 = vpack.c.bf16 %v2447, %v2444
        %v2493 = vpack.c.bf16 %v2455, %v2452
        %v2494 = vpack.c.bf16 %v2463, %v2460
        %v2495 = vpack.c.bf16 %v2471, %v2468
        %v2496 = vpack.c.bf16 %v2479, %v2476
        %v2497 = vpack.c.bf16 %v2487, %v2484
        %s2498 = scalar_lea.vmem %s365, 160
        %v2499 = vld [vmem:[%s2498] sm:$0xf]
        %v2500 = vld [vmem:[%s2498 + $0x4] sm:$0xf]
        %v2501 = vld [vmem:[%s2498 + $0x8] sm:$0xf]
        %v2502 = vld [vmem:[%s2498 + $0xc] sm:$0xf]
        %v2503 = vld [vmem:[%s2498 + $0x10] sm:$0xf]
        %v2504 = vld [vmem:[%s2498 + $0x14] sm:$0xf]
        %v2505 = vld [vmem:[%s2498 + $0x18] sm:$0xf]
        %v2506 = vld [vmem:[%s2498 + $0x1c] sm:$0xf]
        %v2515 = vunpack.c.l.b16 %v2499
        %v2516 = vunpack.c.l.b16 %v2500
        %v2517 = vunpack.c.l.b16 %v2501
        %v2518 = vunpack.c.l.b16 %v2502
        %v2519 = vunpack.c.l.b16 %v2503
        %v2520 = vunpack.c.l.b16 %v2504
        %v2521 = vunpack.c.l.b16 %v2505
        %v2522 = vunpack.c.l.b16 %v2506
        %v2523 = vpack.c.b16 %v2516, %v2515
        %v2524 = vpack.c.b16 %v2518, %v2517
        %v2525 = vpack.c.b16 %v2520, %v2519
        %v2526 = vpack.c.b16 %v2522, %v2521
        %v2532 = vsel %vm1211, %v2490, 0
        %v2535 = vsel %vm1211, %v2491, 0
        %v2538 = vsel %vm1211, %v2492, 0
        %v2541 = vsel %vm1211, %v2493, 0
        %v2544 = vsel %vm1211, %v2494, 0
        %v2547 = vsel %vm1211, %v2495, 0
        %v2550 = vsel %vm1211, %v2496, 0
        %v2553 = vsel %vm1211, %v2497, 0
        %2555 = vmatprep.subr.bf16.mxu0 0
        %2556 = vmatpush1.bf16.msra.mxu0 %v2523
        %2557 = vmatprep.subr.bf16.mxu0 0
        %2558 = vmatpush1.bf16.msra.mxu0 %v2524
        %2559 = vmatprep.subr.bf16.mxu0 0
        %2560 = vmatpush1.bf16.msra.mxu0 %v2525
        %2561 = vmatprep.subr.bf16.mxu0 0
        %2562 = vmatpush1.bf16.msra.mxu0 %v2526
        %2563 = vmatprep.subr.bf16.mxu0 0
        %2564 = vmatpush1.bf16.msra.mxu0 0
        %2565 = vmatprep.subr.bf16.mxu0 0
        %2566 = vmatpush1.bf16.msra.mxu0 0
        %2567 = vmatprep.subr.bf16.mxu0 0
        %2568 = vmatpush1.bf16.msra.mxu0 0
        %2569 = vmatprep.subr.bf16.mxu0 0
        %2570 = vmatpush1.bf16.msra.mxu0 0
        %2571 = vmatprep.subr.bf16.mxu0 0
        %2572 = vmatpush1.bf16.msra.mxu0 0
        %2573 = vmatprep.subr.bf16.mxu0 0
        %2574 = vmatpush1.bf16.msra.mxu0 0
        %2575 = vmatprep.subr.bf16.mxu0 0
        %2576 = vmatpush1.bf16.msra.mxu0 0
        %2577 = vmatprep.subr.bf16.mxu0 0
        %2578 = vmatpush1.bf16.msra.mxu0 0
        %2579 = vmatprep.subr.bf16.mxu0 0
        %2580 = vmatpush1.bf16.msra.mxu0 0
        %2581 = vmatprep.subr.bf16.mxu0 0
        %2582 = vmatpush1.bf16.msra.mxu0 0
        %2583 = vmatprep.subr.bf16.mxu0 0
        %2584 = vmatpush1.bf16.msra.mxu0 0
        %2585 = vmatprep.subr.bf16.mxu0 0
        %2586 = vmatpush1.bf16.msra.mxu0 0
        %2587 = vmatprep.mubr.bf16.mxu0 0
        %2588 = vmatmul.mubr.bf16.gmra.mrb[0].mxu0 %v2532
        %v2589 = vpop.f32.mrb[0].mxu0
        %v2590 = vadd.f32 0.0, %v2589
        %v2591 = vpop.f32.mrb[0].mxu0
        %v2592 = vpop.f32.mrb[0].mxu0
        %v2593 = vadd.f32 0.0, %v2592
        %v2594 = vpop.f32.mrb[0].mxu0
        %2595 = vmatprep.mubr.bf16.mxu0 0
        %2596 = vmatmul.mubr.bf16.gmra.mrb[0].mxu0 %v2535
        %v2597 = vpop.f32.mrb[0].mxu0
        %v2598 = vadd.f32 0.0, %v2597
        %v2599 = vpop.f32.mrb[0].mxu0
        %v2600 = vpop.f32.mrb[0].mxu0
        %v2601 = vadd.f32 0.0, %v2600
        %v2602 = vpop.f32.mrb[0].mxu0
        %2603 = vmatprep.mubr.bf16.mxu0 0
        %2604 = vmatmul.mubr.bf16.gmra.mrb[0].mxu0 %v2538
        %v2605 = vpop.f32.mrb[0].mxu0
        %v2606 = vadd.f32 0.0, %v2605
        %v2607 = vpop.f32.mrb[0].mxu0
        %v2608 = vpop.f32.mrb[0].mxu0
        %v2609 = vadd.f32 0.0, %v2608
        %v2610 = vpop.f32.mrb[0].mxu0
        %2611 = vmatprep.mubr.bf16.mxu0 0
        %2612 = vmatmul.mubr.bf16.gmra.mrb[0].mxu0 %v2541
        %v2613 = vpop.f32.mrb[0].mxu0
        %v2614 = vadd.f32 0.0, %v2613
        %v2615 = vpop.f32.mrb[0].mxu0
        %v2616 = vpop.f32.mrb[0].mxu0
        %v2617 = vadd.f32 0.0, %v2616
        %v2618 = vpop.f32.mrb[0].mxu0
        %2619 = vmatprep.mubr.bf16.mxu0 0
        %2620 = vmatmul.mubr.bf16.gmra.mrb[0].mxu0 %v2544
        %v2621 = vpop.f32.mrb[0].mxu0
        %v2622 = vadd.f32 0.0, %v2621
        %v2623 = vpop.f32.mrb[0].mxu0
        %v2624 = vpop.f32.mrb[0].mxu0
        %v2625 = vadd.f32 0.0, %v2624
        %v2626 = vpop.f32.mrb[0].mxu0
        %2627 = vmatprep.mubr.bf16.mxu0 0
        %2628 = vmatmul.mubr.bf16.gmra.mrb[0].mxu0 %v2547
        %v2629 = vpop.f32.mrb[0].mxu0
        %v2630 = vadd.f32 0.0, %v2629
        %v2631 = vpop.f32.mrb[0].mxu0
        %v2632 = vpop.f32.mrb[0].mxu0
        %v2633 = vadd.f32 0.0, %v2632
        %v2634 = vpop.f32.mrb[0].mxu0
        %2635 = vmatprep.mubr.bf16.mxu0 0
        %2636 = vmatmul.mubr.bf16.gmra.mrb[0].mxu0 %v2550
        %v2637 = vpop.f32.mrb[0].mxu0
        %v2638 = vadd.f32 0.0, %v2637
        %v2639 = vpop.f32.mrb[0].mxu0
        %v2640 = vpop.f32.mrb[0].mxu0
        %v2641 = vadd.f32 0.0, %v2640
        %v2642 = vpop.f32.mrb[0].mxu0
        %2643 = vmatprep.mubr.bf16.mxu0 0
        %2644 = vmatmul.mubr.bf16.gmra.mrb[0].mxu0 %v2553
        %v2645 = vpop.f32.mrb[0].mxu0
        %v2646 = vadd.f32 0.0, %v2645
        %v2647 = vpop.f32.mrb[0].mxu0
        %v2648 = vpop.f32.mrb[0].mxu0
        %v2649 = vadd.f32 0.0, %v2648
        %v2650 = vpop.f32.mrb[0].mxu0
        %2651 = vdwg.mxu0
        %v2652 = vadd.f32 %v2312, %v2590
        %v2653 = vadd.f32 %v2313, %v2593
        %v2654 = vadd.f32 %v2314, %v2598
        %v2655 = vadd.f32 %v2315, %v2601
        %v2656 = vadd.f32 %v2316, %v2606
        %v2657 = vadd.f32 %v2317, %v2609
        %v2658 = vadd.f32 %v2318, %v2614
        %v2659 = vadd.f32 %v2319, %v2617
        %v2660 = vadd.f32 %v2320, %v2622
        %v2661 = vadd.f32 %v2321, %v2625
        %v2662 = vadd.f32 %v2322, %v2630
        %v2663 = vadd.f32 %v2323, %v2633
        %v2664 = vadd.f32 %v2324, %v2638
        %v2665 = vadd.f32 %v2325, %v2641
        %v2666 = vadd.f32 %v2326, %v2646
        %v2667 = vadd.f32 %v2327, %v2649
        %s2668 = scalar_lea.vmem %s5, 384
        %v2669 = vld [vmem:[%s2668] sm:$0xf]
        %v2670 = vld [vmem:[%s2668 + $0x4] sm:$0xf]
        %v2671 = vld [vmem:[%s2668 + $0x8] sm:$0xf]
        %v2672 = vld [vmem:[%s2668 + $0xc] sm:$0xf]
        %v2673 = vld [vmem:[%s2668 + $0x10] sm:$0xf]
        %v2674 = vld [vmem:[%s2668 + $0x14] sm:$0xf]
        %v2675 = vld [vmem:[%s2668 + $0x18] sm:$0xf]
        %v2676 = vld [vmem:[%s2668 + $0x1c] sm:$0xf]
        %v2677 = vld [vmem:[%s2668 + $0x20] sm:$0xf]
        %v2678 = vld [vmem:[%s2668 + $0x24] sm:$0xf]
        %v2679 = vld [vmem:[%s2668 + $0x28] sm:$0xf]
        %v2680 = vld [vmem:[%s2668 + $0x2c] sm:$0xf]
        %v2681 = vld [vmem:[%s2668 + $0x30] sm:$0xf]
        %v2682 = vld [vmem:[%s2668 + $0x34] sm:$0xf]
        %v2683 = vld [vmem:[%s2668 + $0x38] sm:$0xf]
        %v2684 = vld [vmem:[%s2668 + $0x3c] sm:$0xf]
        %v2701 = vunpack.c.l.b16 %v2669
        %v2702 = vunpack.c.l.b16 %v2670
        %v2703 = vunpack.c.l.b16 %v2671
        %v2704 = vunpack.c.l.b16 %v2672
        %v2705 = vunpack.c.l.b16 %v2673
        %v2706 = vunpack.c.l.b16 %v2674
        %v2707 = vunpack.c.l.b16 %v2675
        %v2708 = vunpack.c.l.b16 %v2676
        %v2709 = vunpack.c.l.b16 %v2677
        %v2710 = vunpack.c.l.b16 %v2678
        %v2711 = vunpack.c.l.b16 %v2679
        %v2712 = vunpack.c.l.b16 %v2680
        %v2713 = vunpack.c.l.b16 %v2681
        %v2714 = vunpack.c.l.b16 %v2682
        %v2715 = vunpack.c.l.b16 %v2683
        %v2716 = vunpack.c.l.b16 %v2684
        %v2717 = vpack.c.b16 %v2702, %v2701
        %v2718 = vpack.c.b16 %v2704, %v2703
        %v2719 = vpack.c.b16 %v2706, %v2705
        %v2720 = vpack.c.b16 %v2708, %v2707
        %v2721 = vpack.c.b16 %v2710, %v2709
        %v2722 = vpack.c.b16 %v2712, %v2711
        %v2723 = vpack.c.b16 %v2714, %v2713
        %v2724 = vpack.c.b16 %v2716, %v2715
        %2733 = vmatprep.subr.bf16.mxu0 0
        %2734 = vmatpush1.bf16.msra.mxu0 %v822
        %2735 = vmatprep.subr.bf16.mxu0 0
        %2736 = vmatpush1.bf16.msra.mxu0 %v823
        %2737 = vmatprep.subr.bf16.mxu0 0
        %2738 = vmatpush1.bf16.msra.mxu0 %v824
        %2739 = vmatprep.subr.bf16.mxu0 0
        %2740 = vmatpush1.bf16.msra.mxu0 %v825
        %2741 = vmatprep.subr.bf16.mxu0 0
        %2742 = vmatpush1.bf16.msra.mxu0 %v826
        %2743 = vmatprep.subr.bf16.mxu0 0
        %2744 = vmatpush1.bf16.msra.mxu0 %v827
        %2745 = vmatprep.subr.bf16.mxu0 0
        %2746 = vmatpush1.bf16.msra.mxu0 %v828
        %2747 = vmatprep.subr.bf16.mxu0 0
        %2748 = vmatpush1.bf16.msra.mxu0 %v829
        %2749 = vmatprep.subr.bf16.mxu0 0
        %2750 = vmatpush1.bf16.msra.mxu0 0
        %2751 = vmatprep.subr.bf16.mxu0 0
        %2752 = vmatpush1.bf16.msra.mxu0 0
        %2753 = vmatprep.subr.bf16.mxu0 0
        %2754 = vmatpush1.bf16.msra.mxu0 0
        %2755 = vmatprep.subr.bf16.mxu0 0
        %2756 = vmatpush1.bf16.msra.mxu0 0
        %2757 = vmatprep.subr.bf16.mxu0 0
        %2758 = vmatpush1.bf16.msra.mxu0 0
        %2759 = vmatprep.subr.bf16.mxu0 0
        %2760 = vmatpush1.bf16.msra.mxu0 0
        %2761 = vmatprep.subr.bf16.mxu0 0
        %2762 = vmatpush1.bf16.msra.mxu0 0
        %2763 = vmatprep.subr.bf16.mxu0 0
        %2764 = vmatpush1.bf16.msra.mxu0 0
        %2765 = vmatprep.mubr.bf16.mxu0 0
        %2766 = vmatmul.mubr.bf16.gmra.mrb[0].mxu0 %v2717
        %v2767 = vpop.f32.mrb[0].mxu0
        %v2768 = vadd.f32 0.0, %v2767
        %v2769 = vpop.f32.mrb[0].mxu0
        %v2770 = vpop.f32.mrb[0].mxu0
        %v2771 = vadd.f32 0.0, %v2770
        %v2772 = vpop.f32.mrb[0].mxu0
        %2773 = vmatprep.mubr.bf16.mxu0 0
        %2774 = vmatmul.mubr.bf16.gmra.mrb[0].mxu0 %v2718
        %v2775 = vpop.f32.mrb[0].mxu0
        %v2776 = vadd.f32 0.0, %v2775
        %v2777 = vpop.f32.mrb[0].mxu0
        %v2778 = vpop.f32.mrb[0].mxu0
        %v2779 = vadd.f32 0.0, %v2778
        %v2780 = vpop.f32.mrb[0].mxu0
        %2781 = vmatprep.mubr.bf16.mxu0 0
        %2782 = vmatmul.mubr.bf16.gmra.mrb[0].mxu0 %v2719
        %v2783 = vpop.f32.mrb[0].mxu0
        %v2784 = vadd.f32 0.0, %v2783
        %v2785 = vpop.f32.mrb[0].mxu0
        %v2786 = vpop.f32.mrb[0].mxu0
        %v2787 = vadd.f32 0.0, %v2786
        %v2788 = vpop.f32.mrb[0].mxu0
        %2789 = vmatprep.mubr.bf16.mxu0 0
        %2790 = vmatmul.mubr.bf16.gmra.mrb[0].mxu0 %v2720
        %v2791 = vpop.f32.mrb[0].mxu0
        %v2792 = vadd.f32 0.0, %v2791
        %v2793 = vpop.f32.mrb[0].mxu0
        %v2794 = vpop.f32.mrb[0].mxu0
        %v2795 = vadd.f32 0.0, %v2794
        %v2796 = vpop.f32.mrb[0].mxu0
        %2797 = vmatprep.mubr.bf16.mxu0 0
        %2798 = vmatmul.mubr.bf16.gmra.mrb[0].mxu0 %v2721
        %v2799 = vpop.f32.mrb[0].mxu0
        %v2800 = vadd.f32 0.0, %v2799
        %v2801 = vpop.f32.mrb[0].mxu0
        %v2802 = vpop.f32.mrb[0].mxu0
        %v2803 = vadd.f32 0.0, %v2802
        %v2804 = vpop.f32.mrb[0].mxu0
        %2805 = vmatprep.mubr.bf16.mxu0 0
        %2806 = vmatmul.mubr.bf16.gmra.mrb[0].mxu0 %v2722
        %v2807 = vpop.f32.mrb[0].mxu0
        %v2808 = vadd.f32 0.0, %v2807
        %v2809 = vpop.f32.mrb[0].mxu0
        %v2810 = vpop.f32.mrb[0].mxu0
        %v2811 = vadd.f32 0.0, %v2810
        %v2812 = vpop.f32.mrb[0].mxu0
        %2813 = vmatprep.mubr.bf16.mxu0 0
        %2814 = vmatmul.mubr.bf16.gmra.mrb[0].mxu0 %v2723
        %v2815 = vpop.f32.mrb[0].mxu0
        %v2816 = vadd.f32 0.0, %v2815
        %v2817 = vpop.f32.mrb[0].mxu0
        %v2818 = vpop.f32.mrb[0].mxu0
        %v2819 = vadd.f32 0.0, %v2818
        %v2820 = vpop.f32.mrb[0].mxu0
        %2821 = vmatprep.mubr.bf16.mxu0 0
        %2822 = vmatmul.mubr.bf16.gmra.mrb[0].mxu0 %v2724
        %v2823 = vpop.f32.mrb[0].mxu0
        %v2824 = vadd.f32 0.0, %v2823
        %v2825 = vpop.f32.mrb[0].mxu0
        %v2826 = vpop.f32.mrb[0].mxu0
        %v2827 = vadd.f32 0.0, %v2826
        %v2828 = vpop.f32.mrb[0].mxu0
        %2829 = vdwg.mxu0
        %v2830 = vpack.c.bf16 %v2771, %v2768
        %v2831 = vpack.c.bf16 %v2779, %v2776
        %v2832 = vpack.c.bf16 %v2787, %v2784
        %v2833 = vpack.c.bf16 %v2795, %v2792
        %v2834 = vpack.c.bf16 %v2803, %v2800
        %v2835 = vpack.c.bf16 %v2811, %v2808
        %v2836 = vpack.c.bf16 %v2819, %v2816
        %v2837 = vpack.c.bf16 %v2827, %v2824
        %s2838 = scalar_lea.vmem %s365, 192
        %v2839 = vld [vmem:[%s2838] sm:$0xf]
        %v2840 = vld [vmem:[%s2838 + $0x4] sm:$0xf]
        %v2841 = vld [vmem:[%s2838 + $0x8] sm:$0xf]
        %v2842 = vld [vmem:[%s2838 + $0xc] sm:$0xf]
        %v2843 = vld [vmem:[%s2838 + $0x10] sm:$0xf]
        %v2844 = vld [vmem:[%s2838 + $0x14] sm:$0xf]
        %v2845 = vld [vmem:[%s2838 + $0x18] sm:$0xf]
        %v2846 = vld [vmem:[%s2838 + $0x1c] sm:$0xf]
        %v2855 = vunpack.c.l.b16 %v2839
        %v2856 = vunpack.c.l.b16 %v2840
        %v2857 = vunpack.c.l.b16 %v2841
        %v2858 = vunpack.c.l.b16 %v2842
        %v2859 = vunpack.c.l.b16 %v2843
        %v2860 = vunpack.c.l.b16 %v2844
        %v2861 = vunpack.c.l.b16 %v2845
        %v2862 = vunpack.c.l.b16 %v2846
        %v2863 = vpack.c.b16 %v2856, %v2855
        %v2864 = vpack.c.b16 %v2858, %v2857
        %v2865 = vpack.c.b16 %v2860, %v2859
        %v2866 = vpack.c.b16 %v2862, %v2861
        %v2872 = vsel %vm1211, %v2830, 0
        %v2875 = vsel %vm1211, %v2831, 0
        %v2878 = vsel %vm1211, %v2832, 0
        %v2881 = vsel %vm1211, %v2833, 0
        %v2884 = vsel %vm1211, %v2834, 0
        %v2887 = vsel %vm1211, %v2835, 0
        %v2890 = vsel %vm1211, %v2836, 0
        %v2893 = vsel %vm1211, %v2837, 0
        %2895 = vmatprep.subr.bf16.mxu0 0
        %2896 = vmatpush1.bf16.msra.mxu0 %v2863
        %2897 = vmatprep.subr.bf16.mxu0 0
        %2898 = vmatpush1.bf16.msra.mxu0 %v2864
        %2899 = vmatprep.subr.bf16.mxu0 0
        %2900 = vmatpush1.bf16.msra.mxu0 %v2865
        %2901 = vmatprep.subr.bf16.mxu0 0
        %2902 = vmatpush1.bf16.msra.mxu0 %v2866
        %2903 = vmatprep.subr.bf16.mxu0 0
        %2904 = vmatpush1.bf16.msra.mxu0 0
        %2905 = vmatprep.subr.bf16.mxu0 0
        %2906 = vmatpush1.bf16.msra.mxu0 0
        %2907 = vmatprep.subr.bf16.mxu0 0
        %2908 = vmatpush1.bf16.msra.mxu0 0
        %2909 = vmatprep.subr.bf16.mxu0 0
        %2910 = vmatpush1.bf16.msra.mxu0 0
        %2911 = vmatprep.subr.bf16.mxu0 0
        %2912 = vmatpush1.bf16.msra.mxu0 0
        %2913 = vmatprep.subr.bf16.mxu0 0
        %2914 = vmatpush1.bf16.msra.mxu0 0
        %2915 = vmatprep.subr.bf16.mxu0 0
        %2916 = vmatpush1.bf16.msra.mxu0 0
        %2917 = vmatprep.subr.bf16.mxu0 0
        %2918 = vmatpush1.bf16.msra.mxu0 0
        %2919 = vmatprep.subr.bf16.mxu0 0
        %2920 = vmatpush1.bf16.msra.mxu0 0
        %2921 = vmatprep.subr.bf16.mxu0 0
        %2922 = vmatpush1.bf16.msra.mxu0 0
        %2923 = vmatprep.subr.bf16.mxu0 0
        %2924 = vmatpush1.bf16.msra.mxu0 0
        %2925 = vmatprep.subr.bf16.mxu0 0
        %2926 = vmatpush1.bf16.msra.mxu0 0
        %2927 = vmatprep.mubr.bf16.mxu0 0
        %2928 = vmatmul.mubr.bf16.gmra.mrb[0].mxu0 %v2872
        %v2929 = vpop.f32.mrb[0].mxu0
        %v2930 = vadd.f32 0.0, %v2929
        %v2931 = vpop.f32.mrb[0].mxu0
        %v2932 = vpop.f32.mrb[0].mxu0
        %v2933 = vadd.f32 0.0, %v2932
        %v2934 = vpop.f32.mrb[0].mxu0
        %2935 = vmatprep.mubr.bf16.mxu0 0
        %2936 = vmatmul.mubr.bf16.gmra.mrb[0].mxu0 %v2875
        %v2937 = vpop.f32.mrb[0].mxu0
        %v2938 = vadd.f32 0.0, %v2937
        %v2939 = vpop.f32.mrb[0].mxu0
        %v2940 = vpop.f32.mrb[0].mxu0
        %v2941 = vadd.f32 0.0, %v2940
        %v2942 = vpop.f32.mrb[0].mxu0
        %2943 = vmatprep.mubr.bf16.mxu0 0
        %2944 = vmatmul.mubr.bf16.gmra.mrb[0].mxu0 %v2878
        %v2945 = vpop.f32.mrb[0].mxu0
        %v2946 = vadd.f32 0.0, %v2945
        %v2947 = vpop.f32.mrb[0].mxu0
        %v2948 = vpop.f32.mrb[0].mxu0
        %v2949 = vadd.f32 0.0, %v2948
        %v2950 = vpop.f32.mrb[0].mxu0
        %2951 = vmatprep.mubr.bf16.mxu0 0
        %2952 = vmatmul.mubr.bf16.gmra.mrb[0].mxu0 %v2881
        %v2953 = vpop.f32.mrb[0].mxu0
        %v2954 = vadd.f32 0.0, %v2953
        %v2955 = vpop.f32.mrb[0].mxu0
        %v2956 = vpop.f32.mrb[0].mxu0
        %v2957 = vadd.f32 0.0, %v2956
        %v2958 = vpop.f32.mrb[0].mxu0
        %2959 = vmatprep.mubr.bf16.mxu0 0
        %2960 = vmatmul.mubr.bf16.gmra.mrb[0].mxu0 %v2884
        %v2961 = vpop.f32.mrb[0].mxu0
        %v2962 = vadd.f32 0.0, %v2961
        %v2963 = vpop.f32.mrb[0].mxu0
        %v2964 = vpop.f32.mrb[0].mxu0
        %v2965 = vadd.f32 0.0, %v2964
        %v2966 = vpop.f32.mrb[0].mxu0
        %2967 = vmatprep.mubr.bf16.mxu0 0
        %2968 = vmatmul.mubr.bf16.gmra.mrb[0].mxu0 %v2887
        %v2969 = vpop.f32.mrb[0].mxu0
        %v2970 = vadd.f32 0.0, %v2969
        %v2971 = vpop.f32.mrb[0].mxu0
        %v2972 = vpop.f32.mrb[0].mxu0
        %v2973 = vadd.f32 0.0, %v2972
        %v2974 = vpop.f32.mrb[0].mxu0
        %2975 = vmatprep.mubr.bf16.mxu0 0
        %2976 = vmatmul.mubr.bf16.gmra.mrb[0].mxu0 %v2890
        %v2977 = vpop.f32.mrb[0].mxu0
        %v2978 = vadd.f32 0.0, %v2977
        %v2979 = vpop.f32.mrb[0].mxu0
        %v2980 = vpop.f32.mrb[0].mxu0
        %v2981 = vadd.f32 0.0, %v2980
        %v2982 = vpop.f32.mrb[0].mxu0
        %2983 = vmatprep.mubr.bf16.mxu0 0
        %2984 = vmatmul.mubr.bf16.gmra.mrb[0].mxu0 %v2893
        %v2985 = vpop.f32.mrb[0].mxu0
        %v2986 = vadd.f32 0.0, %v2985
        %v2987 = vpop.f32.mrb[0].mxu0
        %v2988 = vpop.f32.mrb[0].mxu0
        %v2989 = vadd.f32 0.0, %v2988
        %v2990 = vpop.f32.mrb[0].mxu0
        %2991 = vdwg.mxu0
        %v2992 = vadd.f32 %v2652, %v2930
        %v2993 = vadd.f32 %v2653, %v2933
        %v2994 = vadd.f32 %v2654, %v2938
        %v2995 = vadd.f32 %v2655, %v2941
        %v2996 = vadd.f32 %v2656, %v2946
        %v2997 = vadd.f32 %v2657, %v2949
        %v2998 = vadd.f32 %v2658, %v2954
        %v2999 = vadd.f32 %v2659, %v2957
        %v3000 = vadd.f32 %v2660, %v2962
        %v3001 = vadd.f32 %v2661, %v2965
        %v3002 = vadd.f32 %v2662, %v2970
        %v3003 = vadd.f32 %v2663, %v2973
        %v3004 = vadd.f32 %v2664, %v2978
        %v3005 = vadd.f32 %v2665, %v2981
        %v3006 = vadd.f32 %v2666, %v2986
        %v3007 = vadd.f32 %v2667, %v2989
        %s3008 = scalar_lea.vmem %s5, 448
        %v3009 = vld [vmem:[%s3008] sm:$0xf]
        %v3010 = vld [vmem:[%s3008 + $0x4] sm:$0xf]
        %v3011 = vld [vmem:[%s3008 + $0x8] sm:$0xf]
        %v3012 = vld [vmem:[%s3008 + $0xc] sm:$0xf]
        %v3013 = vld [vmem:[%s3008 + $0x10] sm:$0xf]
        %v3014 = vld [vmem:[%s3008 + $0x14] sm:$0xf]
        %v3015 = vld [vmem:[%s3008 + $0x18] sm:$0xf]
        %v3016 = vld [vmem:[%s3008 + $0x1c] sm:$0xf]
        %v3017 = vld [vmem:[%s3008 + $0x20] sm:$0xf]
        %v3018 = vld [vmem:[%s3008 + $0x24] sm:$0xf]
        %v3019 = vld [vmem:[%s3008 + $0x28] sm:$0xf]
        %v3020 = vld [vmem:[%s3008 + $0x2c] sm:$0xf]
        %v3021 = vld [vmem:[%s3008 + $0x30] sm:$0xf]
        %v3022 = vld [vmem:[%s3008 + $0x34] sm:$0xf]
        %v3023 = vld [vmem:[%s3008 + $0x38] sm:$0xf]
        %v3024 = vld [vmem:[%s3008 + $0x3c] sm:$0xf]
        %v3041 = vunpack.c.l.b16 %v3009
        %v3042 = vunpack.c.l.b16 %v3010
        %v3043 = vunpack.c.l.b16 %v3011
        %v3044 = vunpack.c.l.b16 %v3012
        %v3045 = vunpack.c.l.b16 %v3013
        %v3046 = vunpack.c.l.b16 %v3014
        %v3047 = vunpack.c.l.b16 %v3015
        %v3048 = vunpack.c.l.b16 %v3016
        %v3049 = vunpack.c.l.b16 %v3017
        %v3050 = vunpack.c.l.b16 %v3018
        %v3051 = vunpack.c.l.b16 %v3019
        %v3052 = vunpack.c.l.b16 %v3020
        %v3053 = vunpack.c.l.b16 %v3021
        %v3054 = vunpack.c.l.b16 %v3022
        %v3055 = vunpack.c.l.b16 %v3023
        %v3056 = vunpack.c.l.b16 %v3024
        %v3057 = vpack.c.b16 %v3042, %v3041
        %v3058 = vpack.c.b16 %v3044, %v3043
        %v3059 = vpack.c.b16 %v3046, %v3045
        %v3060 = vpack.c.b16 %v3048, %v3047
        %v3061 = vpack.c.b16 %v3050, %v3049
        %v3062 = vpack.c.b16 %v3052, %v3051
        %v3063 = vpack.c.b16 %v3054, %v3053
        %v3064 = vpack.c.b16 %v3056, %v3055
        %3073 = vmatprep.subr.bf16.mxu0 0
        %3074 = vmatpush1.bf16.msra.mxu0 %v822
        %3075 = vmatprep.subr.bf16.mxu0 0
        %3076 = vmatpush1.bf16.msra.mxu0 %v823
        %3077 = vmatprep.subr.bf16.mxu0 0
        %3078 = vmatpush1.bf16.msra.mxu0 %v824
        %3079 = vmatprep.subr.bf16.mxu0 0
        %3080 = vmatpush1.bf16.msra.mxu0 %v825
        %3081 = vmatprep.subr.bf16.mxu0 0
        %3082 = vmatpush1.bf16.msra.mxu0 %v826
        %3083 = vmatprep.subr.bf16.mxu0 0
        %3084 = vmatpush1.bf16.msra.mxu0 %v827
        %3085 = vmatprep.subr.bf16.mxu0 0
        %3086 = vmatpush1.bf16.msra.mxu0 %v828
        %3087 = vmatprep.subr.bf16.mxu0 0
        %3088 = vmatpush1.bf16.msra.mxu0 %v829
        %3089 = vmatprep.subr.bf16.mxu0 0
        %3090 = vmatpush1.bf16.msra.mxu0 0
        %3091 = vmatprep.subr.bf16.mxu0 0
        %3092 = vmatpush1.bf16.msra.mxu0 0
        %3093 = vmatprep.subr.bf16.mxu0 0
        %3094 = vmatpush1.bf16.msra.mxu0 0
        %3095 = vmatprep.subr.bf16.mxu0 0
        %3096 = vmatpush1.bf16.msra.mxu0 0
        %3097 = vmatprep.subr.bf16.mxu0 0
        %3098 = vmatpush1.bf16.msra.mxu0 0
        %3099 = vmatprep.subr.bf16.mxu0 0
        %3100 = vmatpush1.bf16.msra.mxu0 0
        %3101 = vmatprep.subr.bf16.mxu0 0
        %3102 = vmatpush1.bf16.msra.mxu0 0
        %3103 = vmatprep.subr.bf16.mxu0 0
        %3104 = vmatpush1.bf16.msra.mxu0 0
        %3105 = vmatprep.mubr.bf16.mxu0 0
        %3106 = vmatmul.mubr.bf16.gmra.mrb[0].mxu0 %v3057
        %v3107 = vpop.f32.mrb[0].mxu0
        %v3108 = vadd.f32 0.0, %v3107
        %v3109 = vpop.f32.mrb[0].mxu0
        %v3110 = vpop.f32.mrb[0].mxu0
        %v3111 = vadd.f32 0.0, %v3110
        %v3112 = vpop.f32.mrb[0].mxu0
        %3113 = vmatprep.mubr.bf16.mxu0 0
        %3114 = vmatmul.mubr.bf16.gmra.mrb[0].mxu0 %v3058
        %v3115 = vpop.f32.mrb[0].mxu0
        %v3116 = vadd.f32 0.0, %v3115
        %v3117 = vpop.f32.mrb[0].mxu0
        %v3118 = vpop.f32.mrb[0].mxu0
        %v3119 = vadd.f32 0.0, %v3118
        %v3120 = vpop.f32.mrb[0].mxu0
        %3121 = vmatprep.mubr.bf16.mxu0 0
        %3122 = vmatmul.mubr.bf16.gmra.mrb[0].mxu0 %v3059
        %v3123 = vpop.f32.mrb[0].mxu0
        %v3124 = vadd.f32 0.0, %v3123
        %v3125 = vpop.f32.mrb[0].mxu0
        %v3126 = vpop.f32.mrb[0].mxu0
        %v3127 = vadd.f32 0.0, %v3126
        %v3128 = vpop.f32.mrb[0].mxu0
        %3129 = vmatprep.mubr.bf16.mxu0 0
        %3130 = vmatmul.mubr.bf16.gmra.mrb[0].mxu0 %v3060
        %v3131 = vpop.f32.mrb[0].mxu0
        %v3132 = vadd.f32 0.0, %v3131
        %v3133 = vpop.f32.mrb[0].mxu0
        %v3134 = vpop.f32.mrb[0].mxu0
        %v3135 = vadd.f32 0.0, %v3134
        %v3136 = vpop.f32.mrb[0].mxu0
        %3137 = vmatprep.mubr.bf16.mxu0 0
        %3138 = vmatmul.mubr.bf16.gmra.mrb[0].mxu0 %v3061
        %v3139 = vpop.f32.mrb[0].mxu0
        %v3140 = vadd.f32 0.0, %v3139
        %v3141 = vpop.f32.mrb[0].mxu0
        %v3142 = vpop.f32.mrb[0].mxu0
        %v3143 = vadd.f32 0.0, %v3142
        %v3144 = vpop.f32.mrb[0].mxu0
        %3145 = vmatprep.mubr.bf16.mxu0 0
        %3146 = vmatmul.mubr.bf16.gmra.mrb[0].mxu0 %v3062
        %v3147 = vpop.f32.mrb[0].mxu0
        %v3148 = vadd.f32 0.0, %v3147
        %v3149 = vpop.f32.mrb[0].mxu0
        %v3150 = vpop.f32.mrb[0].mxu0
        %v3151 = vadd.f32 0.0, %v3150
        %v3152 = vpop.f32.mrb[0].mxu0
        %3153 = vmatprep.mubr.bf16.mxu0 0
        %3154 = vmatmul.mubr.bf16.gmra.mrb[0].mxu0 %v3063
        %v3155 = vpop.f32.mrb[0].mxu0
        %v3156 = vadd.f32 0.0, %v3155
        %v3157 = vpop.f32.mrb[0].mxu0
        %v3158 = vpop.f32.mrb[0].mxu0
        %v3159 = vadd.f32 0.0, %v3158
        %v3160 = vpop.f32.mrb[0].mxu0
        %3161 = vmatprep.mubr.bf16.mxu0 0
        %3162 = vmatmul.mubr.bf16.gmra.mrb[0].mxu0 %v3064
        %v3163 = vpop.f32.mrb[0].mxu0
        %v3164 = vadd.f32 0.0, %v3163
        %v3165 = vpop.f32.mrb[0].mxu0
        %v3166 = vpop.f32.mrb[0].mxu0
        %v3167 = vadd.f32 0.0, %v3166
        %v3168 = vpop.f32.mrb[0].mxu0
        %3169 = vdwg.mxu0
        %v3170 = vpack.c.bf16 %v3111, %v3108
        %v3171 = vpack.c.bf16 %v3119, %v3116
        %v3172 = vpack.c.bf16 %v3127, %v3124
        %v3173 = vpack.c.bf16 %v3135, %v3132
        %v3174 = vpack.c.bf16 %v3143, %v3140
        %v3175 = vpack.c.bf16 %v3151, %v3148
        %v3176 = vpack.c.bf16 %v3159, %v3156
        %v3177 = vpack.c.bf16 %v3167, %v3164
        %s3178 = scalar_lea.vmem %s365, 224
        %v3179 = vld [vmem:[%s3178] sm:$0xf]
        %v3180 = vld [vmem:[%s3178 + $0x4] sm:$0xf]
        %v3181 = vld [vmem:[%s3178 + $0x8] sm:$0xf]
        %v3182 = vld [vmem:[%s3178 + $0xc] sm:$0xf]
        %v3183 = vld [vmem:[%s3178 + $0x10] sm:$0xf]
        %v3184 = vld [vmem:[%s3178 + $0x14] sm:$0xf]
        %v3185 = vld [vmem:[%s3178 + $0x18] sm:$0xf]
        %v3186 = vld [vmem:[%s3178 + $0x1c] sm:$0xf]
        %v3195 = vunpack.c.l.b16 %v3179
        %v3196 = vunpack.c.l.b16 %v3180
        %v3197 = vunpack.c.l.b16 %v3181
        %v3198 = vunpack.c.l.b16 %v3182
        %v3199 = vunpack.c.l.b16 %v3183
        %v3200 = vunpack.c.l.b16 %v3184
        %v3201 = vunpack.c.l.b16 %v3185
        %v3202 = vunpack.c.l.b16 %v3186
        %v3203 = vpack.c.b16 %v3196, %v3195
        %v3204 = vpack.c.b16 %v3198, %v3197
        %v3205 = vpack.c.b16 %v3200, %v3199
        %v3206 = vpack.c.b16 %v3202, %v3201
        %v3212 = vsel %vm1211, %v3170, 0
        %v3215 = vsel %vm1211, %v3171, 0
        %v3218 = vsel %vm1211, %v3172, 0
        %v3221 = vsel %vm1211, %v3173, 0
        %v3224 = vsel %vm1211, %v3174, 0
        %v3227 = vsel %vm1211, %v3175, 0
        %v3230 = vsel %vm1211, %v3176, 0
        %v3233 = vsel %vm1211, %v3177, 0
        %3235 = vmatprep.subr.bf16.mxu0 0
        %3236 = vmatpush1.bf16.msra.mxu0 %v3203
        %3237 = vmatprep.subr.bf16.mxu0 0
        %3238 = vmatpush1.bf16.msra.mxu0 %v3204
        %3239 = vmatprep.subr.bf16.mxu0 0
        %3240 = vmatpush1.bf16.msra.mxu0 %v3205
        %3241 = vmatprep.subr.bf16.mxu0 0
        %3242 = vmatpush1.bf16.msra.mxu0 %v3206
        %3243 = vmatprep.subr.bf16.mxu0 0
        %3244 = vmatpush1.bf16.msra.mxu0 0
        %3245 = vmatprep.subr.bf16.mxu0 0
        %3246 = vmatpush1.bf16.msra.mxu0 0
        %3247 = vmatprep.subr.bf16.mxu0 0
        %3248 = vmatpush1.bf16.msra.mxu0 0
        %3249 = vmatprep.subr.bf16.mxu0 0
        %3250 = vmatpush1.bf16.msra.mxu0 0
        %3251 = vmatprep.subr.bf16.mxu0 0
        %3252 = vmatpush1.bf16.msra.mxu0 0
        %3253 = vmatprep.subr.bf16.mxu0 0
        %3254 = vmatpush1.bf16.msra.mxu0 0
        %3255 = vmatprep.subr.bf16.mxu0 0
        %3256 = vmatpush1.bf16.msra.mxu0 0
        %3257 = vmatprep.subr.bf16.mxu0 0
        %3258 = vmatpush1.bf16.msra.mxu0 0
        %3259 = vmatprep.subr.bf16.mxu0 0
        %3260 = vmatpush1.bf16.msra.mxu0 0
        %3261 = vmatprep.subr.bf16.mxu0 0
        %3262 = vmatpush1.bf16.msra.mxu0 0
        %3263 = vmatprep.subr.bf16.mxu0 0
        %3264 = vmatpush1.bf16.msra.mxu0 0
        %3265 = vmatprep.subr.bf16.mxu0 0
        %3266 = vmatpush1.bf16.msra.mxu0 0
        %3267 = vmatprep.mubr.bf16.mxu0 0
        %3268 = vmatmul.mubr.bf16.gmra.mrb[0].mxu0 %v3212
        %v3269 = vpop.f32.mrb[0].mxu0
        %v3270 = vadd.f32 0.0, %v3269
        %v3271 = vpop.f32.mrb[0].mxu0
        %v3272 = vpop.f32.mrb[0].mxu0
        %v3273 = vadd.f32 0.0, %v3272
        %v3274 = vpop.f32.mrb[0].mxu0
        %3275 = vmatprep.mubr.bf16.mxu0 0
        %3276 = vmatmul.mubr.bf16.gmra.mrb[0].mxu0 %v3215
        %v3277 = vpop.f32.mrb[0].mxu0
        %v3278 = vadd.f32 0.0, %v3277
        %v3279 = vpop.f32.mrb[0].mxu0
        %v3280 = vpop.f32.mrb[0].mxu0
        %v3281 = vadd.f32 0.0, %v3280
        %v3282 = vpop.f32.mrb[0].mxu0
        %3283 = vmatprep.mubr.bf16.mxu0 0
        %3284 = vmatmul.mubr.bf16.gmra.mrb[0].mxu0 %v3218
        %v3285 = vpop.f32.mrb[0].mxu0
        %v3286 = vadd.f32 0.0, %v3285
        %v3287 = vpop.f32.mrb[0].mxu0
        %v3288 = vpop.f32.mrb[0].mxu0
        %v3289 = vadd.f32 0.0, %v3288
        %v3290 = vpop.f32.mrb[0].mxu0
        %3291 = vmatprep.mubr.bf16.mxu0 0
        %3292 = vmatmul.mubr.bf16.gmra.mrb[0].mxu0 %v3221
        %v3293 = vpop.f32.mrb[0].mxu0
        %v3294 = vadd.f32 0.0, %v3293
        %v3295 = vpop.f32.mrb[0].mxu0
        %v3296 = vpop.f32.mrb[0].mxu0
        %v3297 = vadd.f32 0.0, %v3296
        %v3298 = vpop.f32.mrb[0].mxu0
        %3299 = vmatprep.mubr.bf16.mxu0 0
        %3300 = vmatmul.mubr.bf16.gmra.mrb[0].mxu0 %v3224
        %v3301 = vpop.f32.mrb[0].mxu0
        %v3302 = vadd.f32 0.0, %v3301
        %v3303 = vpop.f32.mrb[0].mxu0
        %v3304 = vpop.f32.mrb[0].mxu0
        %v3305 = vadd.f32 0.0, %v3304
        %v3306 = vpop.f32.mrb[0].mxu0
        %3307 = vmatprep.mubr.bf16.mxu0 0
        %3308 = vmatmul.mubr.bf16.gmra.mrb[0].mxu0 %v3227
        %v3309 = vpop.f32.mrb[0].mxu0
        %v3310 = vadd.f32 0.0, %v3309
        %v3311 = vpop.f32.mrb[0].mxu0
        %v3312 = vpop.f32.mrb[0].mxu0
        %v3313 = vadd.f32 0.0, %v3312
        %v3314 = vpop.f32.mrb[0].mxu0
        %3315 = vmatprep.mubr.bf16.mxu0 0
        %3316 = vmatmul.mubr.bf16.gmra.mrb[0].mxu0 %v3230
        %v3317 = vpop.f32.mrb[0].mxu0
        %v3318 = vadd.f32 0.0, %v3317
        %v3319 = vpop.f32.mrb[0].mxu0
        %v3320 = vpop.f32.mrb[0].mxu0
        %v3321 = vadd.f32 0.0, %v3320
        %v3322 = vpop.f32.mrb[0].mxu0
        %3323 = vmatprep.mubr.bf16.mxu0 0
        %3324 = vmatmul.mubr.bf16.gmra.mrb[0].mxu0 %v3233
        %v3325 = vpop.f32.mrb[0].mxu0
        %v3326 = vadd.f32 0.0, %v3325
        %v3327 = vpop.f32.mrb[0].mxu0
        %v3328 = vpop.f32.mrb[0].mxu0
        %v3329 = vadd.f32 0.0, %v3328
        %v3330 = vpop.f32.mrb[0].mxu0
        %3331 = vdwg.mxu0
        %v3332 = vadd.f32 %v2992, %v3270
        %v3333 = vadd.f32 %v2993, %v3273
        %v3334 = vadd.f32 %v2994, %v3278
        %v3335 = vadd.f32 %v2995, %v3281
        %v3336 = vadd.f32 %v2996, %v3286
        %v3337 = vadd.f32 %v2997, %v3289
        %v3338 = vadd.f32 %v2998, %v3294
        %v3339 = vadd.f32 %v2999, %v3297
        %v3340 = vadd.f32 %v3000, %v3302
        %v3341 = vadd.f32 %v3001, %v3305
        %v3342 = vadd.f32 %v3002, %v3310
        %v3343 = vadd.f32 %v3003, %v3313
        %v3344 = vadd.f32 %v3004, %v3318
        %v3345 = vadd.f32 %v3005, %v3321
        %v3346 = vadd.f32 %v3006, %v3326
        %v3347 = vadd.f32 %v3007, %v3329
        %s3348 = scalar_lea.vmem %s5, 512
        %v3349 = vld [vmem:[%s3348] sm:$0xf]
        %v3350 = vld [vmem:[%s3348 + $0x4] sm:$0xf]
        %v3351 = vld [vmem:[%s3348 + $0x8] sm:$0xf]
        %v3352 = vld [vmem:[%s3348 + $0xc] sm:$0xf]
        %v3353 = vld [vmem:[%s3348 + $0x10] sm:$0xf]
        %v3354 = vld [vmem:[%s3348 + $0x14] sm:$0xf]
        %v3355 = vld [vmem:[%s3348 + $0x18] sm:$0xf]
        %v3356 = vld [vmem:[%s3348 + $0x1c] sm:$0xf]
        %v3357 = vld [vmem:[%s3348 + $0x20] sm:$0xf]
        %v3358 = vld [vmem:[%s3348 + $0x24] sm:$0xf]
        %v3359 = vld [vmem:[%s3348 + $0x28] sm:$0xf]
        %v3360 = vld [vmem:[%s3348 + $0x2c] sm:$0xf]
        %v3361 = vld [vmem:[%s3348 + $0x30] sm:$0xf]
        %v3362 = vld [vmem:[%s3348 + $0x34] sm:$0xf]
        %v3363 = vld [vmem:[%s3348 + $0x38] sm:$0xf]
        %v3364 = vld [vmem:[%s3348 + $0x3c] sm:$0xf]
        %v3381 = vunpack.c.l.b16 %v3349
        %v3382 = vunpack.c.l.b16 %v3350
        %v3383 = vunpack.c.l.b16 %v3351
        %v3384 = vunpack.c.l.b16 %v3352
        %v3385 = vunpack.c.l.b16 %v3353
        %v3386 = vunpack.c.l.b16 %v3354
        %v3387 = vunpack.c.l.b16 %v3355
        %v3388 = vunpack.c.l.b16 %v3356
        %v3389 = vunpack.c.l.b16 %v3357
        %v3390 = vunpack.c.l.b16 %v3358
        %v3391 = vunpack.c.l.b16 %v3359
        %v3392 = vunpack.c.l.b16 %v3360
        %v3393 = vunpack.c.l.b16 %v3361
        %v3394 = vunpack.c.l.b16 %v3362
        %v3395 = vunpack.c.l.b16 %v3363
        %v3396 = vunpack.c.l.b16 %v3364
        %v3397 = vpack.c.b16 %v3382, %v3381
        %v3398 = vpack.c.b16 %v3384, %v3383
        %v3399 = vpack.c.b16 %v3386, %v3385
        %v3400 = vpack.c.b16 %v3388, %v3387
        %v3401 = vpack.c.b16 %v3390, %v3389
        %v3402 = vpack.c.b16 %v3392, %v3391
        %v3403 = vpack.c.b16 %v3394, %v3393
        %v3404 = vpack.c.b16 %v3396, %v3395
        %3413 = vmatprep.subr.bf16.mxu0 0
        %3414 = vmatpush1.bf16.msra.mxu0 %v822
        %3415 = vmatprep.subr.bf16.mxu0 0
        %3416 = vmatpush1.bf16.msra.mxu0 %v823
        %3417 = vmatprep.subr.bf16.mxu0 0
        %3418 = vmatpush1.bf16.msra.mxu0 %v824
        %3419 = vmatprep.subr.bf16.mxu0 0
        %3420 = vmatpush1.bf16.msra.mxu0 %v825
        %3421 = vmatprep.subr.bf16.mxu0 0
        %3422 = vmatpush1.bf16.msra.mxu0 %v826
        %3423 = vmatprep.subr.bf16.mxu0 0
        %3424 = vmatpush1.bf16.msra.mxu0 %v827
        %3425 = vmatprep.subr.bf16.mxu0 0
        %3426 = vmatpush1.bf16.msra.mxu0 %v828
        %3427 = vmatprep.subr.bf16.mxu0 0
        %3428 = vmatpush1.bf16.msra.mxu0 %v829
        %3429 = vmatprep.subr.bf16.mxu0 0
        %3430 = vmatpush1.bf16.msra.mxu0 0
        %3431 = vmatprep.subr.bf16.mxu0 0
        %3432 = vmatpush1.bf16.msra.mxu0 0
        %3433 = vmatprep.subr.bf16.mxu0 0
        %3434 = vmatpush1.bf16.msra.mxu0 0
        %3435 = vmatprep.subr.bf16.mxu0 0
        %3436 = vmatpush1.bf16.msra.mxu0 0
        %3437 = vmatprep.subr.bf16.mxu0 0
        %3438 = vmatpush1.bf16.msra.mxu0 0
        %3439 = vmatprep.subr.bf16.mxu0 0
        %3440 = vmatpush1.bf16.msra.mxu0 0
        %3441 = vmatprep.subr.bf16.mxu0 0
        %3442 = vmatpush1.bf16.msra.mxu0 0
        %3443 = vmatprep.subr.bf16.mxu0 0
        %3444 = vmatpush1.bf16.msra.mxu0 0
        %3445 = vmatprep.mubr.bf16.mxu0 0
        %3446 = vmatmul.mubr.bf16.gmra.mrb[0].mxu0 %v3397
        %v3447 = vpop.f32.mrb[0].mxu0
        %v3448 = vadd.f32 0.0, %v3447
        %v3449 = vpop.f32.mrb[0].mxu0
        %v3450 = vpop.f32.mrb[0].mxu0
        %v3451 = vadd.f32 0.0, %v3450
        %v3452 = vpop.f32.mrb[0].mxu0
        %3453 = vmatprep.mubr.bf16.mxu0 0
        %3454 = vmatmul.mubr.bf16.gmra.mrb[0].mxu0 %v3398
        %v3455 = vpop.f32.mrb[0].mxu0
        %v3456 = vadd.f32 0.0, %v3455
        %v3457 = vpop.f32.mrb[0].mxu0
        %v3458 = vpop.f32.mrb[0].mxu0
        %v3459 = vadd.f32 0.0, %v3458
        %v3460 = vpop.f32.mrb[0].mxu0
        %3461 = vmatprep.mubr.bf16.mxu0 0
        %3462 = vmatmul.mubr.bf16.gmra.mrb[0].mxu0 %v3399
        %v3463 = vpop.f32.mrb[0].mxu0
        %v3464 = vadd.f32 0.0, %v3463
        %v3465 = vpop.f32.mrb[0].mxu0
        %v3466 = vpop.f32.mrb[0].mxu0
        %v3467 = vadd.f32 0.0, %v3466
        %v3468 = vpop.f32.mrb[0].mxu0
        %3469 = vmatprep.mubr.bf16.mxu0 0
        %3470 = vmatmul.mubr.bf16.gmra.mrb[0].mxu0 %v3400
        %v3471 = vpop.f32.mrb[0].mxu0
        %v3472 = vadd.f32 0.0, %v3471
        %v3473 = vpop.f32.mrb[0].mxu0
        %v3474 = vpop.f32.mrb[0].mxu0
        %v3475 = vadd.f32 0.0, %v3474
        %v3476 = vpop.f32.mrb[0].mxu0
        %3477 = vmatprep.mubr.bf16.mxu0 0
        %3478 = vmatmul.mubr.bf16.gmra.mrb[0].mxu0 %v3401
        %v3479 = vpop.f32.mrb[0].mxu0
        %v3480 = vadd.f32 0.0, %v3479
        %v3481 = vpop.f32.mrb[0].mxu0
        %v3482 = vpop.f32.mrb[0].mxu0
        %v3483 = vadd.f32 0.0, %v3482
        %v3484 = vpop.f32.mrb[0].mxu0
        %3485 = vmatprep.mubr.bf16.mxu0 0
        %3486 = vmatmul.mubr.bf16.gmra.mrb[0].mxu0 %v3402
        %v3487 = vpop.f32.mrb[0].mxu0
        %v3488 = vadd.f32 0.0, %v3487
        %v3489 = vpop.f32.mrb[0].mxu0
        %v3490 = vpop.f32.mrb[0].mxu0
        %v3491 = vadd.f32 0.0, %v3490
        %v3492 = vpop.f32.mrb[0].mxu0
        %3493 = vmatprep.mubr.bf16.mxu0 0
        %3494 = vmatmul.mubr.bf16.gmra.mrb[0].mxu0 %v3403
        %v3495 = vpop.f32.mrb[0].mxu0
        %v3496 = vadd.f32 0.0, %v3495
        %v3497 = vpop.f32.mrb[0].mxu0
        %v3498 = vpop.f32.mrb[0].mxu0
        %v3499 = vadd.f32 0.0, %v3498
        %v3500 = vpop.f32.mrb[0].mxu0
        %3501 = vmatprep.mubr.bf16.mxu0 0
        %3502 = vmatmul.mubr.bf16.gmra.mrb[0].mxu0 %v3404
        %v3503 = vpop.f32.mrb[0].mxu0
        %v3504 = vadd.f32 0.0, %v3503
        %v3505 = vpop.f32.mrb[0].mxu0
        %v3506 = vpop.f32.mrb[0].mxu0
        %v3507 = vadd.f32 0.0, %v3506
        %v3508 = vpop.f32.mrb[0].mxu0
        %3509 = vdwg.mxu0
        %v3510 = vpack.c.bf16 %v3451, %v3448
        %v3511 = vpack.c.bf16 %v3459, %v3456
        %v3512 = vpack.c.bf16 %v3467, %v3464
        %v3513 = vpack.c.bf16 %v3475, %v3472
        %v3514 = vpack.c.bf16 %v3483, %v3480
        %v3515 = vpack.c.bf16 %v3491, %v3488
        %v3516 = vpack.c.bf16 %v3499, %v3496
        %v3517 = vpack.c.bf16 %v3507, %v3504
        %s3518 = scalar_lea.vmem %s365, 256
        %v3519 = vld [vmem:[%s3518] sm:$0xf]
        %v3520 = vld [vmem:[%s3518 + $0x4] sm:$0xf]
        %v3521 = vld [vmem:[%s3518 + $0x8] sm:$0xf]
        %v3522 = vld [vmem:[%s3518 + $0xc] sm:$0xf]
        %v3523 = vld [vmem:[%s3518 + $0x10] sm:$0xf]
        %v3524 = vld [vmem:[%s3518 + $0x14] sm:$0xf]
        %v3525 = vld [vmem:[%s3518 + $0x18] sm:$0xf]
        %v3526 = vld [vmem:[%s3518 + $0x1c] sm:$0xf]
        %v3535 = vunpack.c.l.b16 %v3519
        %v3536 = vunpack.c.l.b16 %v3520
        %v3537 = vunpack.c.l.b16 %v3521
        %v3538 = vunpack.c.l.b16 %v3522
        %v3539 = vunpack.c.l.b16 %v3523
        %v3540 = vunpack.c.l.b16 %v3524
        %v3541 = vunpack.c.l.b16 %v3525
        %v3542 = vunpack.c.l.b16 %v3526
        %v3543 = vpack.c.b16 %v3536, %v3535
        %v3544 = vpack.c.b16 %v3538, %v3537
        %v3545 = vpack.c.b16 %v3540, %v3539
        %v3546 = vpack.c.b16 %v3542, %v3541
        %v3552 = vsel %vm1211, %v3510, 0
        %v3555 = vsel %vm1211, %v3511, 0
        %v3558 = vsel %vm1211, %v3512, 0
        %v3561 = vsel %vm1211, %v3513, 0
        %v3564 = vsel %vm1211, %v3514, 0
        %v3567 = vsel %vm1211, %v3515, 0
        %v3570 = vsel %vm1211, %v3516, 0
        %v3573 = vsel %vm1211, %v3517, 0
        %3575 = vmatprep.subr.bf16.mxu0 0
        %3576 = vmatpush1.bf16.msra.mxu0 %v3543
        %3577 = vmatprep.subr.bf16.mxu0 0
        %3578 = vmatpush1.bf16.msra.mxu0 %v3544
        %3579 = vmatprep.subr.bf16.mxu0 0
        %3580 = vmatpush1.bf16.msra.mxu0 %v3545
        %3581 = vmatprep.subr.bf16.mxu0 0
        %3582 = vmatpush1.bf16.msra.mxu0 %v3546
        %3583 = vmatprep.subr.bf16.mxu0 0
        %3584 = vmatpush1.bf16.msra.mxu0 0
        %3585 = vmatprep.subr.bf16.mxu0 0
        %3586 = vmatpush1.bf16.msra.mxu0 0
        %3587 = vmatprep.subr.bf16.mxu0 0
        %3588 = vmatpush1.bf16.msra.mxu0 0
        %3589 = vmatprep.subr.bf16.mxu0 0
        %3590 = vmatpush1.bf16.msra.mxu0 0
        %3591 = vmatprep.subr.bf16.mxu0 0
        %3592 = vmatpush1.bf16.msra.mxu0 0
        %3593 = vmatprep.subr.bf16.mxu0 0
        %3594 = vmatpush1.bf16.msra.mxu0 0
        %3595 = vmatprep.subr.bf16.mxu0 0
        %3596 = vmatpush1.bf16.msra.mxu0 0
        %3597 = vmatprep.subr.bf16.mxu0 0
        %3598 = vmatpush1.bf16.msra.mxu0 0
        %3599 = vmatprep.subr.bf16.mxu0 0
        %3600 = vmatpush1.bf16.msra.mxu0 0
        %3601 = vmatprep.subr.bf16.mxu0 0
        %3602 = vmatpush1.bf16.msra.mxu0 0
        %3603 = vmatprep.subr.bf16.mxu0 0
        %3604 = vmatpush1.bf16.msra.mxu0 0
        %3605 = vmatprep.subr.bf16.mxu0 0
        %3606 = vmatpush1.bf16.msra.mxu0 0
        %3607 = vmatprep.mubr.bf16.mxu0 0
        %3608 = vmatmul.mubr.bf16.gmra.mrb[0].mxu0 %v3552
        %v3609 = vpop.f32.mrb[0].mxu0
        %v3610 = vadd.f32 0.0, %v3609
        %v3611 = vpop.f32.mrb[0].mxu0
        %v3612 = vpop.f32.mrb[0].mxu0
        %v3613 = vadd.f32 0.0, %v3612
        %v3614 = vpop.f32.mrb[0].mxu0
        %3615 = vmatprep.mubr.bf16.mxu0 0
        %3616 = vmatmul.mubr.bf16.gmra.mrb[0].mxu0 %v3555
        %v3617 = vpop.f32.mrb[0].mxu0
        %v3618 = vadd.f32 0.0, %v3617
        %v3619 = vpop.f32.mrb[0].mxu0
        %v3620 = vpop.f32.mrb[0].mxu0
        %v3621 = vadd.f32 0.0, %v3620
        %v3622 = vpop.f32.mrb[0].mxu0
        %3623 = vmatprep.mubr.bf16.mxu0 0
        %3624 = vmatmul.mubr.bf16.gmra.mrb[0].mxu0 %v3558
        %v3625 = vpop.f32.mrb[0].mxu0
        %v3626 = vadd.f32 0.0, %v3625
        %v3627 = vpop.f32.mrb[0].mxu0
        %v3628 = vpop.f32.mrb[0].mxu0
        %v3629 = vadd.f32 0.0, %v3628
        %v3630 = vpop.f32.mrb[0].mxu0
        %3631 = vmatprep.mubr.bf16.mxu0 0
        %3632 = vmatmul.mubr.bf16.gmra.mrb[0].mxu0 %v3561
        %v3633 = vpop.f32.mrb[0].mxu0
        %v3634 = vadd.f32 0.0, %v3633
        %v3635 = vpop.f32.mrb[0].mxu0
        %v3636 = vpop.f32.mrb[0].mxu0
        %v3637 = vadd.f32 0.0, %v3636
        %v3638 = vpop.f32.mrb[0].mxu0
        %3639 = vmatprep.mubr.bf16.mxu0 0
        %3640 = vmatmul.mubr.bf16.gmra.mrb[0].mxu0 %v3564
        %v3641 = vpop.f32.mrb[0].mxu0
        %v3642 = vadd.f32 0.0, %v3641
        %v3643 = vpop.f32.mrb[0].mxu0
        %v3644 = vpop.f32.mrb[0].mxu0
        %v3645 = vadd.f32 0.0, %v3644
        %v3646 = vpop.f32.mrb[0].mxu0
        %3647 = vmatprep.mubr.bf16.mxu0 0
        %3648 = vmatmul.mubr.bf16.gmra.mrb[0].mxu0 %v3567
        %v3649 = vpop.f32.mrb[0].mxu0
        %v3650 = vadd.f32 0.0, %v3649
        %v3651 = vpop.f32.mrb[0].mxu0
        %v3652 = vpop.f32.mrb[0].mxu0
        %v3653 = vadd.f32 0.0, %v3652
        %v3654 = vpop.f32.mrb[0].mxu0
        %3655 = vmatprep.mubr.bf16.mxu0 0
        %3656 = vmatmul.mubr.bf16.gmra.mrb[0].mxu0 %v3570
        %v3657 = vpop.f32.mrb[0].mxu0
        %v3658 = vadd.f32 0.0, %v3657
        %v3659 = vpop.f32.mrb[0].mxu0
        %v3660 = vpop.f32.mrb[0].mxu0
        %v3661 = vadd.f32 0.0, %v3660
        %v3662 = vpop.f32.mrb[0].mxu0
        %3663 = vmatprep.mubr.bf16.mxu0 0
        %3664 = vmatmul.mubr.bf16.gmra.mrb[0].mxu0 %v3573
        %v3665 = vpop.f32.mrb[0].mxu0
        %v3666 = vadd.f32 0.0, %v3665
        %v3667 = vpop.f32.mrb[0].mxu0
        %v3668 = vpop.f32.mrb[0].mxu0
        %v3669 = vadd.f32 0.0, %v3668
        %v3670 = vpop.f32.mrb[0].mxu0
        %3671 = vdwg.mxu0
        %v3672 = vadd.f32 %v3332, %v3610
        %v3673 = vadd.f32 %v3333, %v3613
        %v3674 = vadd.f32 %v3334, %v3618
        %v3675 = vadd.f32 %v3335, %v3621
        %v3676 = vadd.f32 %v3336, %v3626
        %v3677 = vadd.f32 %v3337, %v3629
        %v3678 = vadd.f32 %v3338, %v3634
        %v3679 = vadd.f32 %v3339, %v3637
        %v3680 = vadd.f32 %v3340, %v3642
        %v3681 = vadd.f32 %v3341, %v3645
        %v3682 = vadd.f32 %v3342, %v3650
        %v3683 = vadd.f32 %v3343, %v3653
        %v3684 = vadd.f32 %v3344, %v3658
        %v3685 = vadd.f32 %v3345, %v3661
        %v3686 = vadd.f32 %v3346, %v3666
        %v3687 = vadd.f32 %v3347, %v3669
        %v3688 = vsel %vm1211, %v3672, 0.0
        %v3689 = vsel %vm1211, %v3673, 0.0
        %v3690 = vadd.f32 %v3688, %v3689
        %v3691 = vsel %vm1211, %v3674, 0.0
        %v3692 = vadd.f32 %v3690, %v3691
        %v3693 = vsel %vm1211, %v3675, 0.0
        %v3694 = vadd.f32 %v3692, %v3693
        %v3695 = vsel %vm1211, %v3676, 0.0
        %v3696 = vadd.f32 %v3694, %v3695
        %v3697 = vsel %vm1211, %v3677, 0.0
        %v3698 = vadd.f32 %v3696, %v3697
        %v3699 = vsel %vm1211, %v3678, 0.0
        %v3700 = vadd.f32 %v3698, %v3699
        %v3701 = vsel %vm1211, %v3679, 0.0
        %v3702 = vadd.f32 %v3700, %v3701
        %v3703 = vsel %vm1211, %v3680, 0.0
        %v3704 = vadd.f32 %v3702, %v3703
        %v3705 = vsel %vm1211, %v3681, 0.0
        %v3706 = vadd.f32 %v3704, %v3705
        %v3707 = vsel %vm1211, %v3682, 0.0
        %v3708 = vadd.f32 %v3706, %v3707
        %v3709 = vsel %vm1211, %v3683, 0.0
        %v3710 = vadd.f32 %v3708, %v3709
        %v3711 = vsel %vm1211, %v3684, 0.0
        %v3712 = vadd.f32 %v3710, %v3711
        %v3713 = vsel %vm1211, %v3685, 0.0
        %v3714 = vadd.f32 %v3712, %v3713
        %v3715 = vsel %vm1211, %v3686, 0.0
        %v3716 = vadd.f32 %v3714, %v3715
        %v3717 = vsel %vm1211, %v3687, 0.0
        %v3718 = vadd.f32 %v3716, %v3717
        %v3719 = vrot.slane %v3718, 4
        %v3720 = vadd.f32 %v3718, %v3719
        %v3721 = vrot.slane %v3720, 2
        %v3722 = vadd.f32 %v3720, %v3721
        %v3723 = vrot.slane %v3722, 1
        %v3724 = vadd.f32 %v3722, %v3723
        %v3725 = vrcp.pop 128.0
        %v3726 = vmul.f32 %v3724, %v3725
        %v3727 = vsub.f32 %v3672, %v3726
        %v3728 = vsub.f32 %v3673, %v3726
        %v3729 = vsub.f32 %v3674, %v3726
        %v3730 = vsub.f32 %v3675, %v3726
        %v3731 = vsub.f32 %v3676, %v3726
        %v3732 = vsub.f32 %v3677, %v3726
        %v3733 = vsub.f32 %v3678, %v3726
        %v3734 = vsub.f32 %v3679, %v3726
        %v3735 = vsub.f32 %v3680, %v3726
        %v3736 = vsub.f32 %v3681, %v3726
        %v3737 = vsub.f32 %v3682, %v3726
        %v3738 = vsub.f32 %v3683, %v3726
        %v3739 = vsub.f32 %v3684, %v3726
        %v3740 = vsub.f32 %v3685, %v3726
        %v3741 = vsub.f32 %v3686, %v3726
        %v3742 = vsub.f32 %v3687, %v3726
        %v3743 = vmul.f32 %v3727, %v3727
        %v3744 = vmul.f32 %v3728, %v3728
        %v3745 = vmul.f32 %v3729, %v3729
        %v3746 = vmul.f32 %v3730, %v3730
        %v3747 = vmul.f32 %v3731, %v3731
        %v3748 = vmul.f32 %v3732, %v3732
        %v3749 = vmul.f32 %v3733, %v3733
        %v3750 = vmul.f32 %v3734, %v3734
        %v3751 = vmul.f32 %v3735, %v3735
        %v3752 = vmul.f32 %v3736, %v3736
        %v3753 = vmul.f32 %v3737, %v3737
        %v3754 = vmul.f32 %v3738, %v3738
        %v3755 = vmul.f32 %v3739, %v3739
        %v3756 = vmul.f32 %v3740, %v3740
        %v3757 = vmul.f32 %v3741, %v3741
        %v3758 = vmul.f32 %v3742, %v3742
        %v3759 = vsel %vm1211, %v3743, 0.0
        %v3760 = vsel %vm1211, %v3744, 0.0
        %v3761 = vadd.f32 %v3759, %v3760
        %v3762 = vsel %vm1211, %v3745, 0.0
        %v3763 = vadd.f32 %v3761, %v3762
        %v3764 = vsel %vm1211, %v3746, 0.0
        %v3765 = vadd.f32 %v3763, %v3764
        %v3766 = vsel %vm1211, %v3747, 0.0
        %v3767 = vadd.f32 %v3765, %v3766
        %v3768 = vsel %vm1211, %v3748, 0.0
        %v3769 = vadd.f32 %v3767, %v3768
        %v3770 = vsel %vm1211, %v3749, 0.0
        %v3771 = vadd.f32 %v3769, %v3770
        %v3772 = vsel %vm1211, %v3750, 0.0
        %v3773 = vadd.f32 %v3771, %v3772
        %v3774 = vsel %vm1211, %v3751, 0.0
        %v3775 = vadd.f32 %v3773, %v3774
        %v3776 = vsel %vm1211, %v3752, 0.0
        %v3777 = vadd.f32 %v3775, %v3776
        %v3778 = vsel %vm1211, %v3753, 0.0
        %v3779 = vadd.f32 %v3777, %v3778
        %v3780 = vsel %vm1211, %v3754, 0.0
        %v3781 = vadd.f32 %v3779, %v3780
        %v3782 = vsel %vm1211, %v3755, 0.0
        %v3783 = vadd.f32 %v3781, %v3782
        %v3784 = vsel %vm1211, %v3756, 0.0
        %v3785 = vadd.f32 %v3783, %v3784
        %v3786 = vsel %vm1211, %v3757, 0.0
        %v3787 = vadd.f32 %v3785, %v3786
        %v3788 = vsel %vm1211, %v3758, 0.0
        %v3789 = vadd.f32 %v3787, %v3788
        %v3790 = vrot.slane %v3789, 4
        %v3791 = vadd.f32 %v3789, %v3790
        %v3792 = vrot.slane %v3791, 2
        %v3793 = vadd.f32 %v3791, %v3792
        %v3794 = vrot.slane %v3793, 1
        %v3795 = vadd.f32 %v3793, %v3794
        %v3796 = vmul.f32 %v3795, %v3725
        %v3797 = vadd.f32 %v3796, 1e-05
        %v3798 = vrsqrt.pop %v3797
        %v3799 = vmul.f32 %v3727, %v3798
        %v3800 = vmul.f32 %v3728, %v3798
        %v3801 = vmul.f32 %v3729, %v3798
        %v3802 = vmul.f32 %v3730, %v3798
        %v3803 = vmul.f32 %v3731, %v3798
        %v3804 = vmul.f32 %v3732, %v3798
        %v3805 = vmul.f32 %v3733, %v3798
        %v3806 = vmul.f32 %v3734, %v3798
        %v3807 = vmul.f32 %v3735, %v3798
        %v3808 = vmul.f32 %v3736, %v3798
        %v3809 = vmul.f32 %v3737, %v3798
        %v3810 = vmul.f32 %v3738, %v3798
        %v3811 = vmul.f32 %v3739, %v3798
        %v3812 = vmul.f32 %v3740, %v3798
        %v3813 = vmul.f32 %v3741, %v3798
        %v3814 = vmul.f32 %v3742, %v3798
        %v3815 = vlaneseq
        %v3816 = vshrl.u32 %v3815, 7
        %v3817 = vsub.s32 0, %v3816
        %v3818 = vrot.slane %v830, %v3817
        %v3819 = vmul.f32 %v3799, %v3818
        %v3820 = vmul.f32 %v3800, %v3818
        %v3821 = vmul.f32 %v3801, %v3818
        %v3822 = vmul.f32 %v3802, %v3818
        %v3823 = vmul.f32 %v3803, %v3818
        %v3824 = vmul.f32 %v3804, %v3818
        %v3825 = vmul.f32 %v3805, %v3818
        %v3826 = vmul.f32 %v3806, %v3818
        %v3827 = vmul.f32 %v3807, %v3818
        %v3828 = vmul.f32 %v3808, %v3818
        %v3829 = vmul.f32 %v3809, %v3818
        %v3830 = vmul.f32 %v3810, %v3818
        %v3831 = vmul.f32 %v3811, %v3818
        %v3832 = vmul.f32 %v3812, %v3818
        %v3833 = vmul.f32 %v3813, %v3818
        %v3834 = vmul.f32 %v3814, %v3818
        %v3835 = vlaneseq
        %v3836 = vshrl.u32 %v3835, 7
        %v3837 = vsub.s32 1, %v3836
        %v3838 = vrot.slane %v830, %v3837
        %v3839 = vadd.f32 %v3819, %v3838
        %v3840 = vadd.f32 %v3820, %v3838
        %v3841 = vadd.f32 %v3821, %v3838
        %v3842 = vadd.f32 %v3822, %v3838
        %v3843 = vadd.f32 %v3823, %v3838
        %v3844 = vadd.f32 %v3824, %v3838
        %v3845 = vadd.f32 %v3825, %v3838
        %v3846 = vadd.f32 %v3826, %v3838
        %v3847 = vadd.f32 %v3827, %v3838
        %v3848 = vadd.f32 %v3828, %v3838
        %v3849 = vadd.f32 %v3829, %v3838
        %v3850 = vadd.f32 %v3830, %v3838
        %v3851 = vadd.f32 %v3831, %v3838
        %v3852 = vadd.f32 %v3832, %v3838
        %v3853 = vadd.f32 %v3833, %v3838
        %v3854 = vadd.f32 %v3834, %v3838
        %v3855 = vmax.f32 %v3839, 0.0
        %v3856 = vmax.f32 %v3840, 0.0
        %v3857 = vmax.f32 %v3841, 0.0
        %v3858 = vmax.f32 %v3842, 0.0
        %v3859 = vmax.f32 %v3843, 0.0
        %v3860 = vmax.f32 %v3844, 0.0
        %v3861 = vmax.f32 %v3845, 0.0
        %v3862 = vmax.f32 %v3846, 0.0
        %v3863 = vmax.f32 %v3847, 0.0
        %v3864 = vmax.f32 %v3848, 0.0
        %v3865 = vmax.f32 %v3849, 0.0
        %v3866 = vmax.f32 %v3850, 0.0
        %v3867 = vmax.f32 %v3851, 0.0
        %v3868 = vmax.f32 %v3852, 0.0
        %v3869 = vmax.f32 %v3853, 0.0
        %v3870 = vmax.f32 %v3854, 0.0
        %v3871 = vpack.c.bf16 %v3856, %v3855
        %v3872 = vpack.c.bf16 %v3858, %v3857
        %v3873 = vpack.c.bf16 %v3860, %v3859
        %v3874 = vpack.c.bf16 %v3862, %v3861
        %v3875 = vpack.c.bf16 %v3864, %v3863
        %v3876 = vpack.c.bf16 %v3866, %v3865
        %v3877 = vpack.c.bf16 %v3868, %v3867
        %v3878 = vpack.c.bf16 %v3870, %v3869
        %3879 = vmatprep.subr.bf16.mxu0 0
        %3880 = vmatpush1.bf16.msra.mxu0 %v3871
        %3881 = vmatprep.subr.bf16.mxu0 0
        %3882 = vmatpush1.bf16.msra.mxu0 %v3872
        %3883 = vmatprep.subr.bf16.mxu0 0
        %3884 = vmatpush1.bf16.msra.mxu0 %v3873
        %3885 = vmatprep.subr.bf16.mxu0 0
        %3886 = vmatpush1.bf16.msra.mxu0 %v3874
        %3887 = vmatprep.subr.bf16.mxu0 0
        %3888 = vmatpush1.bf16.msra.mxu0 %v3875
        %3889 = vmatprep.subr.bf16.mxu0 0
        %3890 = vmatpush1.bf16.msra.mxu0 %v3876
        %3891 = vmatprep.subr.bf16.mxu0 0
        %3892 = vmatpush1.bf16.msra.mxu0 %v3877
        %3893 = vmatprep.subr.bf16.mxu0 0
        %3894 = vmatpush1.bf16.msra.mxu0 %v3878
        %3895 = vmatprep.subr.bf16.mxu0 0
        %3896 = vmatpush1.bf16.msra.mxu0 0
        %3897 = vmatprep.subr.bf16.mxu0 0
        %3898 = vmatpush1.bf16.msra.mxu0 0
        %3899 = vmatprep.subr.bf16.mxu0 0
        %3900 = vmatpush1.bf16.msra.mxu0 0
        %3901 = vmatprep.subr.bf16.mxu0 0
        %3902 = vmatpush1.bf16.msra.mxu0 0
        %3903 = vmatprep.subr.bf16.mxu0 0
        %3904 = vmatpush1.bf16.msra.mxu0 0
        %3905 = vmatprep.subr.bf16.mxu0 0
        %3906 = vmatpush1.bf16.msra.mxu0 0
        %3907 = vmatprep.subr.bf16.mxu0 0
        %3908 = vmatpush1.bf16.msra.mxu0 0
        %3909 = vmatprep.subr.bf16.mxu0 0
        %3910 = vmatpush1.bf16.msra.mxu0 0
        %3911 = vmatprep.mubr.bf16.mxu0 0
        %3912 = vmatmul.mubr.bf16.gmra.mrb[0].mxu0 %v879
        %v3913 = vpop.f32.mrb[0].mxu0
        %v3914 = vadd.f32 0.0, %v3913
        %v3915 = vpop.f32.mrb[0].mxu0
        %v3916 = vpop.f32.mrb[0].mxu0
        %v3917 = vadd.f32 0.0, %v3916
        %v3918 = vpop.f32.mrb[0].mxu0
        %3919 = vmatprep.mubr.bf16.mxu0 0
        %3920 = vmatmul.mubr.bf16.gmra.mrb[0].mxu0 %v880
        %v3921 = vpop.f32.mrb[0].mxu0
        %v3922 = vadd.f32 0.0, %v3921
        %v3923 = vpop.f32.mrb[0].mxu0
        %v3924 = vpop.f32.mrb[0].mxu0
        %v3925 = vadd.f32 0.0, %v3924
        %v3926 = vpop.f32.mrb[0].mxu0
        %3927 = vmatprep.mubr.bf16.mxu0 0
        %3928 = vmatmul.mubr.bf16.gmra.mrb[0].mxu0 %v881
        %v3929 = vpop.f32.mrb[0].mxu0
        %v3930 = vadd.f32 0.0, %v3929
        %v3931 = vpop.f32.mrb[0].mxu0
        %v3932 = vpop.f32.mrb[0].mxu0
        %v3933 = vadd.f32 0.0, %v3932
        %v3934 = vpop.f32.mrb[0].mxu0
        %3935 = vmatprep.mubr.bf16.mxu0 0
        %3936 = vmatmul.mubr.bf16.gmra.mrb[0].mxu0 %v882
        %v3937 = vpop.f32.mrb[0].mxu0
        %v3938 = vadd.f32 0.0, %v3937
        %v3939 = vpop.f32.mrb[0].mxu0
        %v3940 = vpop.f32.mrb[0].mxu0
        %v3941 = vadd.f32 0.0, %v3940
        %v3942 = vpop.f32.mrb[0].mxu0
        %3943 = vmatprep.mubr.bf16.mxu0 0
        %3944 = vmatmul.mubr.bf16.gmra.mrb[0].mxu0 %v883
        %v3945 = vpop.f32.mrb[0].mxu0
        %v3946 = vadd.f32 0.0, %v3945
        %v3947 = vpop.f32.mrb[0].mxu0
        %v3948 = vpop.f32.mrb[0].mxu0
        %v3949 = vadd.f32 0.0, %v3948
        %v3950 = vpop.f32.mrb[0].mxu0
        %3951 = vmatprep.mubr.bf16.mxu0 0
        %3952 = vmatmul.mubr.bf16.gmra.mrb[0].mxu0 %v884
        %v3953 = vpop.f32.mrb[0].mxu0
        %v3954 = vadd.f32 0.0, %v3953
        %v3955 = vpop.f32.mrb[0].mxu0
        %v3956 = vpop.f32.mrb[0].mxu0
        %v3957 = vadd.f32 0.0, %v3956
        %v3958 = vpop.f32.mrb[0].mxu0
        %3959 = vmatprep.mubr.bf16.mxu0 0
        %3960 = vmatmul.mubr.bf16.gmra.mrb[0].mxu0 %v885
        %v3961 = vpop.f32.mrb[0].mxu0
        %v3962 = vadd.f32 0.0, %v3961
        %v3963 = vpop.f32.mrb[0].mxu0
        %v3964 = vpop.f32.mrb[0].mxu0
        %v3965 = vadd.f32 0.0, %v3964
        %v3966 = vpop.f32.mrb[0].mxu0
        %3967 = vmatprep.mubr.bf16.mxu0 0
        %3968 = vmatmul.mubr.bf16.gmra.mrb[0].mxu0 %v886
        %v3969 = vpop.f32.mrb[0].mxu0
        %v3970 = vadd.f32 0.0, %v3969
        %v3971 = vpop.f32.mrb[0].mxu0
        %v3972 = vpop.f32.mrb[0].mxu0
        %v3973 = vadd.f32 0.0, %v3972
        %v3974 = vpop.f32.mrb[0].mxu0
        %3975 = vdwg.mxu0
        %v3976 = vpack.c.bf16 %v3917, %v3914
        %v3977 = vpack.c.bf16 %v3925, %v3922
        %v3978 = vpack.c.bf16 %v3933, %v3930
        %v3979 = vpack.c.bf16 %v3941, %v3938
        %v3980 = vpack.c.bf16 %v3949, %v3946
        %v3981 = vpack.c.bf16 %v3957, %v3954
        %v3982 = vpack.c.bf16 %v3965, %v3962
        %v3983 = vpack.c.bf16 %v3973, %v3970
        %v3984 = vld [vmem:[%s319] sm:$0xf]
        %v3985 = vld [vmem:[%s319 + $0x4] sm:$0xf]
        %v3986 = vld [vmem:[%s319 + $0x8] sm:$0xf]
        %v3987 = vld [vmem:[%s319 + $0xc] sm:$0xf]
        %v3988 = vld [vmem:[%s319 + $0x10] sm:$0xf]
        %v3989 = vld [vmem:[%s319 + $0x14] sm:$0xf]
        %v3990 = vld [vmem:[%s319 + $0x18] sm:$0xf]
        %v3991 = vld [vmem:[%s319 + $0x1c] sm:$0xf]
        %3992 = vmatprep.subr.bf16.mxu0 0
        %3993 = vmatpush1.bf16.msra.mxu0 %v3871
        %3994 = vmatprep.subr.bf16.mxu0 0
        %3995 = vmatpush1.bf16.msra.mxu0 %v3872
        %3996 = vmatprep.subr.bf16.mxu0 0
        %3997 = vmatpush1.bf16.msra.mxu0 %v3873
        %3998 = vmatprep.subr.bf16.mxu0 0
        %3999 = vmatpush1.bf16.msra.mxu0 %v3874
        %4000 = vmatprep.subr.bf16.mxu0 0
        %4001 = vmatpush1.bf16.msra.mxu0 %v3875
        %4002 = vmatprep.subr.bf16.mxu0 0
        %4003 = vmatpush1.bf16.msra.mxu0 %v3876
        %4004 = vmatprep.subr.bf16.mxu0 0
        %4005 = vmatpush1.bf16.msra.mxu0 %v3877
        %4006 = vmatprep.subr.bf16.mxu0 0
        %4007 = vmatpush1.bf16.msra.mxu0 %v3878
        %4008 = vmatprep.subr.bf16.mxu0 0
        %4009 = vmatpush1.bf16.msra.mxu0 0
        %4010 = vmatprep.subr.bf16.mxu0 0
        %4011 = vmatpush1.bf16.msra.mxu0 0
        %4012 = vmatprep.subr.bf16.mxu0 0
        %4013 = vmatpush1.bf16.msra.mxu0 0
        %4014 = vmatprep.subr.bf16.mxu0 0
        %4015 = vmatpush1.bf16.msra.mxu0 0
        %4016 = vmatprep.subr.bf16.mxu0 0
        %4017 = vmatpush1.bf16.msra.mxu0 0
        %4018 = vmatprep.subr.bf16.mxu0 0
        %4019 = vmatpush1.bf16.msra.mxu0 0
        %4020 = vmatprep.subr.bf16.mxu0 0
        %4021 = vmatpush1.bf16.msra.mxu0 0
        %4022 = vmatprep.subr.bf16.mxu0 0
        %4023 = vmatpush1.bf16.msra.mxu0 0
        %4024 = vmatprep.mubr.bf16.mxu0 0
        %4025 = vmatmul.mubr.bf16.gmra.mrb[0].mxu0 %v1057
        %v4026 = vpop.f32.mrb[0].mxu0
        %v4027 = vadd.f32 0.0, %v4026
        %v4028 = vpop.f32.mrb[0].mxu0
        %v4029 = vpop.f32.mrb[0].mxu0
        %v4030 = vadd.f32 0.0, %v4029
        %v4031 = vpop.f32.mrb[0].mxu0
        %4032 = vmatprep.mubr.bf16.mxu0 0
        %4033 = vmatmul.mubr.bf16.gmra.mrb[0].mxu0 %v1058
        %v4034 = vpop.f32.mrb[0].mxu0
        %v4035 = vadd.f32 0.0, %v4034
        %v4036 = vpop.f32.mrb[0].mxu0
        %v4037 = vpop.f32.mrb[0].mxu0
        %v4038 = vadd.f32 0.0, %v4037
        %v4039 = vpop.f32.mrb[0].mxu0
        %4040 = vmatprep.mubr.bf16.mxu0 0
        %4041 = vmatmul.mubr.bf16.gmra.mrb[0].mxu0 %v1059
        %v4042 = vpop.f32.mrb[0].mxu0
        %v4043 = vadd.f32 0.0, %v4042
        %v4044 = vpop.f32.mrb[0].mxu0
        %v4045 = vpop.f32.mrb[0].mxu0
        %v4046 = vadd.f32 0.0, %v4045
        %v4047 = vpop.f32.mrb[0].mxu0
        %4048 = vmatprep.mubr.bf16.mxu0 0
        %4049 = vmatmul.mubr.bf16.gmra.mrb[0].mxu0 %v1060
        %v4050 = vpop.f32.mrb[0].mxu0
        %v4051 = vadd.f32 0.0, %v4050
        %v4052 = vpop.f32.mrb[0].mxu0
        %v4053 = vpop.f32.mrb[0].mxu0
        %v4054 = vadd.f32 0.0, %v4053
        %v4055 = vpop.f32.mrb[0].mxu0
        %4056 = vmatprep.mubr.bf16.mxu0 0
        %4057 = vmatmul.mubr.bf16.gmra.mrb[0].mxu0 %v1061
        %v4058 = vpop.f32.mrb[0].mxu0
        %v4059 = vadd.f32 0.0, %v4058
        %v4060 = vpop.f32.mrb[0].mxu0
        %v4061 = vpop.f32.mrb[0].mxu0
        %v4062 = vadd.f32 0.0, %v4061
        %v4063 = vpop.f32.mrb[0].mxu0
        %4064 = vmatprep.mubr.bf16.mxu0 0
        %4065 = vmatmul.mubr.bf16.gmra.mrb[0].mxu0 %v1062
        %v4066 = vpop.f32.mrb[0].mxu0
        %v4067 = vadd.f32 0.0, %v4066
        %v4068 = vpop.f32.mrb[0].mxu0
        %v4069 = vpop.f32.mrb[0].mxu0
        %v4070 = vadd.f32 0.0, %v4069
        %v4071 = vpop.f32.mrb[0].mxu0
        %4072 = vmatprep.mubr.bf16.mxu0 0
        %4073 = vmatmul.mubr.bf16.gmra.mrb[0].mxu0 %v1063
        %v4074 = vpop.f32.mrb[0].mxu0
        %v4075 = vadd.f32 0.0, %v4074
        %v4076 = vpop.f32.mrb[0].mxu0
        %v4077 = vpop.f32.mrb[0].mxu0
        %v4078 = vadd.f32 0.0, %v4077
        %v4079 = vpop.f32.mrb[0].mxu0
        %4080 = vmatprep.mubr.bf16.mxu0 0
        %4081 = vmatmul.mubr.bf16.gmra.mrb[0].mxu0 %v1064
        %v4082 = vpop.f32.mrb[0].mxu0
        %v4083 = vadd.f32 0.0, %v4082
        %v4084 = vpop.f32.mrb[0].mxu0
        %v4085 = vpop.f32.mrb[0].mxu0
        %v4086 = vadd.f32 0.0, %v4085
        %v4087 = vpop.f32.mrb[0].mxu0
        %4088 = vdwg.mxu0
        %v4089 = vpack.c.bf16 %v4030, %v4027
        %v4090 = vpack.c.bf16 %v4038, %v4035
        %v4091 = vpack.c.bf16 %v4046, %v4043
        %v4092 = vpack.c.bf16 %v4054, %v4051
        %v4093 = vpack.c.bf16 %v4062, %v4059
        %v4094 = vpack.c.bf16 %v4070, %v4067
        %v4095 = vpack.c.bf16 %v4078, %v4075
        %v4096 = vpack.c.bf16 %v4086, %v4083
        %s4097 = scalar_lea.vmem %s319, 32 [#allocation5]
        %v4098 = vld [vmem:[%s4097] sm:$0xf]
        %v4099 = vld [vmem:[%s4097 + $0x4] sm:$0xf]
        %v4100 = vld [vmem:[%s4097 + $0x8] sm:$0xf]
        %v4101 = vld [vmem:[%s4097 + $0xc] sm:$0xf]
        %v4102 = vld [vmem:[%s4097 + $0x10] sm:$0xf]
        %v4103 = vld [vmem:[%s4097 + $0x14] sm:$0xf]
        %v4104 = vld [vmem:[%s4097 + $0x18] sm:$0xf]
        %v4105 = vld [vmem:[%s4097 + $0x1c] sm:$0xf]
        %v4114 = vunpack.c.l.b16 %v4098
        %v4115 = vunpack.c.l.b16 %v4099
        %v4116 = vunpack.c.l.b16 %v4100
        %v4117 = vunpack.c.l.b16 %v4101
        %v4118 = vunpack.c.l.b16 %v4102
        %v4119 = vunpack.c.l.b16 %v4103
        %v4120 = vunpack.c.l.b16 %v4104
        %v4121 = vunpack.c.l.b16 %v4105
        %v4122 = vpack.c.b16 %v4115, %v4114
        %v4123 = vpack.c.b16 %v4117, %v4116
        %v4124 = vpack.c.b16 %v4119, %v4118
        %v4125 = vpack.c.b16 %v4121, %v4120
        %v4131 = vsel %vm1211, %v4089, 0
        %v4134 = vsel %vm1211, %v4090, 0
        %v4137 = vsel %vm1211, %v4091, 0
        %v4140 = vsel %vm1211, %v4092, 0
        %v4143 = vsel %vm1211, %v4093, 0
        %v4146 = vsel %vm1211, %v4094, 0
        %v4149 = vsel %vm1211, %v4095, 0
        %v4152 = vsel %vm1211, %v4096, 0
        %4154 = vmatprep.subr.bf16.mxu0 0
        %4155 = vmatpush1.bf16.msra.mxu0 %v4122
        %4156 = vmatprep.subr.bf16.mxu0 0
        %4157 = vmatpush1.bf16.msra.mxu0 %v4123
        %4158 = vmatprep.subr.bf16.mxu0 0
        %4159 = vmatpush1.bf16.msra.mxu0 %v4124
        %4160 = vmatprep.subr.bf16.mxu0 0
        %4161 = vmatpush1.bf16.msra.mxu0 %v4125
        %4162 = vmatprep.subr.bf16.mxu0 0
        %4163 = vmatpush1.bf16.msra.mxu0 0
        %4164 = vmatprep.subr.bf16.mxu0 0
        %4165 = vmatpush1.bf16.msra.mxu0 0
        %4166 = vmatprep.subr.bf16.mxu0 0
        %4167 = vmatpush1.bf16.msra.mxu0 0
        %4168 = vmatprep.subr.bf16.mxu0 0
        %4169 = vmatpush1.bf16.msra.mxu0 0
        %4170 = vmatprep.subr.bf16.mxu0 0
        %4171 = vmatpush1.bf16.msra.mxu0 0
        %4172 = vmatprep.subr.bf16.mxu0 0
        %4173 = vmatpush1.bf16.msra.mxu0 0
        %4174 = vmatprep.subr.bf16.mxu0 0
        %4175 = vmatpush1.bf16.msra.mxu0 0
        %4176 = vmatprep.subr.bf16.mxu0 0
        %4177 = vmatpush1.bf16.msra.mxu0 0
        %4178 = vmatprep.subr.bf16.mxu0 0
        %4179 = vmatpush1.bf16.msra.mxu0 0
        %4180 = vmatprep.subr.bf16.mxu0 0
        %4181 = vmatpush1.bf16.msra.mxu0 0
        %4182 = vmatprep.subr.bf16.mxu0 0
        %4183 = vmatpush1.bf16.msra.mxu0 0
        %4184 = vmatprep.subr.bf16.mxu0 0
        %4185 = vmatpush1.bf16.msra.mxu0 0
        %4186 = vmatprep.mubr.bf16.mxu0 0
        %4187 = vmatmul.mubr.bf16.gmra.mrb[0].mxu0 %v4131
        %v4188 = vpop.f32.mrb[0].mxu0
        %v4189 = vadd.f32 0.0, %v4188
        %v4190 = vpop.f32.mrb[0].mxu0
        %v4191 = vpop.f32.mrb[0].mxu0
        %v4192 = vadd.f32 0.0, %v4191
        %v4193 = vpop.f32.mrb[0].mxu0
        %4194 = vmatprep.mubr.bf16.mxu0 0
        %4195 = vmatmul.mubr.bf16.gmra.mrb[0].mxu0 %v4134
        %v4196 = vpop.f32.mrb[0].mxu0
        %v4197 = vadd.f32 0.0, %v4196
        %v4198 = vpop.f32.mrb[0].mxu0
        %v4199 = vpop.f32.mrb[0].mxu0
        %v4200 = vadd.f32 0.0, %v4199
        %v4201 = vpop.f32.mrb[0].mxu0
        %4202 = vmatprep.mubr.bf16.mxu0 0
        %4203 = vmatmul.mubr.bf16.gmra.mrb[0].mxu0 %v4137
        %v4204 = vpop.f32.mrb[0].mxu0
        %v4205 = vadd.f32 0.0, %v4204
        %v4206 = vpop.f32.mrb[0].mxu0
        %v4207 = vpop.f32.mrb[0].mxu0
        %v4208 = vadd.f32 0.0, %v4207
        %v4209 = vpop.f32.mrb[0].mxu0
        %4210 = vmatprep.mubr.bf16.mxu0 0
        %4211 = vmatmul.mubr.bf16.gmra.mrb[0].mxu0 %v4140
        %v4212 = vpop.f32.mrb[0].mxu0
        %v4213 = vadd.f32 0.0, %v4212
        %v4214 = vpop.f32.mrb[0].mxu0
        %v4215 = vpop.f32.mrb[0].mxu0
        %v4216 = vadd.f32 0.0, %v4215
        %v4217 = vpop.f32.mrb[0].mxu0
        %4218 = vmatprep.mubr.bf16.mxu0 0
        %4219 = vmatmul.mubr.bf16.gmra.mrb[0].mxu0 %v4143
        %v4220 = vpop.f32.mrb[0].mxu0
        %v4221 = vadd.f32 0.0, %v4220
        %v4222 = vpop.f32.mrb[0].mxu0
        %v4223 = vpop.f32.mrb[0].mxu0
        %v4224 = vadd.f32 0.0, %v4223
        %v4225 = vpop.f32.mrb[0].mxu0
        %4226 = vmatprep.mubr.bf16.mxu0 0
        %4227 = vmatmul.mubr.bf16.gmra.mrb[0].mxu0 %v4146
        %v4228 = vpop.f32.mrb[0].mxu0
        %v4229 = vadd.f32 0.0, %v4228
        %v4230 = vpop.f32.mrb[0].mxu0
        %v4231 = vpop.f32.mrb[0].mxu0
        %v4232 = vadd.f32 0.0, %v4231
        %v4233 = vpop.f32.mrb[0].mxu0
        %4234 = vmatprep.mubr.bf16.mxu0 0
        %4235 = vmatmul.mubr.bf16.gmra.mrb[0].mxu0 %v4149
        %v4236 = vpop.f32.mrb[0].mxu0
        %v4237 = vadd.f32 0.0, %v4236
        %v4238 = vpop.f32.mrb[0].mxu0
        %v4239 = vpop.f32.mrb[0].mxu0
        %v4240 = vadd.f32 0.0, %v4239
        %v4241 = vpop.f32.mrb[0].mxu0
        %4242 = vmatprep.mubr.bf16.mxu0 0
        %4243 = vmatmul.mubr.bf16.gmra.mrb[0].mxu0 %v4152
        %v4244 = vpop.f32.mrb[0].mxu0
        %v4245 = vadd.f32 0.0, %v4244
        %v4246 = vpop.f32.mrb[0].mxu0
        %v4247 = vpop.f32.mrb[0].mxu0
        %v4248 = vadd.f32 0.0, %v4247
        %v4249 = vpop.f32.mrb[0].mxu0
        %4250 = vdwg.mxu0
        %v4259 = vunpack.c.l.b16 %v3984
        %v4260 = vunpack.c.l.b16 %v3985
        %v4261 = vunpack.c.l.b16 %v3986
        %v4262 = vunpack.c.l.b16 %v3987
        %v4263 = vunpack.c.l.b16 %v3988
        %v4264 = vunpack.c.l.b16 %v3989
        %v4265 = vunpack.c.l.b16 %v3990
        %v4266 = vunpack.c.l.b16 %v3991
        %v4267 = vpack.c.b16 %v4260, %v4259
        %v4268 = vpack.c.b16 %v4262, %v4261
        %v4269 = vpack.c.b16 %v4264, %v4263
        %v4270 = vpack.c.b16 %v4266, %v4265
        %v4276 = vsel %vm1211, %v3976, 0
        %v4279 = vsel %vm1211, %v3977, 0
        %v4282 = vsel %vm1211, %v3978, 0
        %v4285 = vsel %vm1211, %v3979, 0
        %v4288 = vsel %vm1211, %v3980, 0
        %v4291 = vsel %vm1211, %v3981, 0
        %v4294 = vsel %vm1211, %v3982, 0
        %v4297 = vsel %vm1211, %v3983, 0
        %4299 = vmatprep.subr.bf16.mxu0 0
        %4300 = vmatpush1.bf16.msra.mxu0 %v4267
        %4301 = vmatprep.subr.bf16.mxu0 0
        %4302 = vmatpush1.bf16.msra.mxu0 %v4268
        %4303 = vmatprep.subr.bf16.mxu0 0
        %4304 = vmatpush1.bf16.msra.mxu0 %v4269
        %4305 = vmatprep.subr.bf16.mxu0 0
        %4306 = vmatpush1.bf16.msra.mxu0 %v4270
        %4307 = vmatprep.subr.bf16.mxu0 0
        %4308 = vmatpush1.bf16.msra.mxu0 0
        %4309 = vmatprep.subr.bf16.mxu0 0
        %4310 = vmatpush1.bf16.msra.mxu0 0
        %4311 = vmatprep.subr.bf16.mxu0 0
        %4312 = vmatpush1.bf16.msra.mxu0 0
        %4313 = vmatprep.subr.bf16.mxu0 0
        %4314 = vmatpush1.bf16.msra.mxu0 0
        %4315 = vmatprep.subr.bf16.mxu0 0
        %4316 = vmatpush1.bf16.msra.mxu0 0
        %4317 = vmatprep.subr.bf16.mxu0 0
        %4318 = vmatpush1.bf16.msra.mxu0 0
        %4319 = vmatprep.subr.bf16.mxu0 0
        %4320 = vmatpush1.bf16.msra.mxu0 0
        %4321 = vmatprep.subr.bf16.mxu0 0
        %4322 = vmatpush1.bf16.msra.mxu0 0
        %4323 = vmatprep.subr.bf16.mxu0 0
        %4324 = vmatpush1.bf16.msra.mxu0 0
        %4325 = vmatprep.subr.bf16.mxu0 0
        %4326 = vmatpush1.bf16.msra.mxu0 0
        %4327 = vmatprep.subr.bf16.mxu0 0
        %4328 = vmatpush1.bf16.msra.mxu0 0
        %4329 = vmatprep.subr.bf16.mxu0 0
        %4330 = vmatpush1.bf16.msra.mxu0 0
        %4331 = vmatprep.mubr.bf16.mxu0 0
        %4332 = vmatmul.mubr.bf16.gmra.mrb[0].mxu0 %v4276
        %v4333 = vpop.f32.mrb[0].mxu0
        %v4334 = vadd.f32 %v4189, %v4333
        %v4335 = vpop.f32.mrb[0].mxu0
        %v4336 = vpop.f32.mrb[0].mxu0
        %v4337 = vadd.f32 %v4192, %v4336
        %v4338 = vpop.f32.mrb[0].mxu0
        %4339 = vmatprep.mubr.bf16.mxu0 0
        %4340 = vmatmul.mubr.bf16.gmra.mrb[0].mxu0 %v4279
        %v4341 = vpop.f32.mrb[0].mxu0
        %v4342 = vadd.f32 %v4197, %v4341
        %v4343 = vpop.f32.mrb[0].mxu0
        %v4344 = vpop.f32.mrb[0].mxu0
        %v4345 = vadd.f32 %v4200, %v4344
        %v4346 = vpop.f32.mrb[0].mxu0
        %4347 = vmatprep.mubr.bf16.mxu0 0
        %4348 = vmatmul.mubr.bf16.gmra.mrb[0].mxu0 %v4282
        %v4349 = vpop.f32.mrb[0].mxu0
        %v4350 = vadd.f32 %v4205, %v4349
        %v4351 = vpop.f32.mrb[0].mxu0
        %v4352 = vpop.f32.mrb[0].mxu0
        %v4353 = vadd.f32 %v4208, %v4352
        %v4354 = vpop.f32.mrb[0].mxu0
        %4355 = vmatprep.mubr.bf16.mxu0 0
        %4356 = vmatmul.mubr.bf16.gmra.mrb[0].mxu0 %v4285
        %v4357 = vpop.f32.mrb[0].mxu0
        %v4358 = vadd.f32 %v4213, %v4357
        %v4359 = vpop.f32.mrb[0].mxu0
        %v4360 = vpop.f32.mrb[0].mxu0
        %v4361 = vadd.f32 %v4216, %v4360
        %v4362 = vpop.f32.mrb[0].mxu0
        %4363 = vmatprep.mubr.bf16.mxu0 0
        %4364 = vmatmul.mubr.bf16.gmra.mrb[0].mxu0 %v4288
        %v4365 = vpop.f32.mrb[0].mxu0
        %v4366 = vadd.f32 %v4221, %v4365
        %v4367 = vpop.f32.mrb[0].mxu0
        %v4368 = vpop.f32.mrb[0].mxu0
        %v4369 = vadd.f32 %v4224, %v4368
        %v4370 = vpop.f32.mrb[0].mxu0
        %4371 = vmatprep.mubr.bf16.mxu0 0
        %4372 = vmatmul.mubr.bf16.gmra.mrb[0].mxu0 %v4291
        %v4373 = vpop.f32.mrb[0].mxu0
        %v4374 = vadd.f32 %v4229, %v4373
        %v4375 = vpop.f32.mrb[0].mxu0
        %v4376 = vpop.f32.mrb[0].mxu0
        %v4377 = vadd.f32 %v4232, %v4376
        %v4378 = vpop.f32.mrb[0].mxu0
        %4379 = vmatprep.mubr.bf16.mxu0 0
        %4380 = vmatmul.mubr.bf16.gmra.mrb[0].mxu0 %v4294
        %v4381 = vpop.f32.mrb[0].mxu0
        %v4382 = vadd.f32 %v4237, %v4381
        %v4383 = vpop.f32.mrb[0].mxu0
        %v4384 = vpop.f32.mrb[0].mxu0
        %v4385 = vadd.f32 %v4240, %v4384
        %v4386 = vpop.f32.mrb[0].mxu0
        %4387 = vmatprep.mubr.bf16.mxu0 0
        %4388 = vmatmul.mubr.bf16.gmra.mrb[0].mxu0 %v4297
        %v4389 = vpop.f32.mrb[0].mxu0
        %v4390 = vadd.f32 %v4245, %v4389
        %v4391 = vpop.f32.mrb[0].mxu0
        %v4392 = vpop.f32.mrb[0].mxu0
        %v4393 = vadd.f32 %v4248, %v4392
        %v4394 = vpop.f32.mrb[0].mxu0
        %4395 = vdwg.mxu0
        %4396 = vmatprep.subr.bf16.mxu0 0
        %4397 = vmatpush1.bf16.msra.mxu0 %v3871
        %4398 = vmatprep.subr.bf16.mxu0 0
        %4399 = vmatpush1.bf16.msra.mxu0 %v3872
        %4400 = vmatprep.subr.bf16.mxu0 0
        %4401 = vmatpush1.bf16.msra.mxu0 %v3873
        %4402 = vmatprep.subr.bf16.mxu0 0
        %4403 = vmatpush1.bf16.msra.mxu0 %v3874
        %4404 = vmatprep.subr.bf16.mxu0 0
        %4405 = vmatpush1.bf16.msra.mxu0 %v3875
        %4406 = vmatprep.subr.bf16.mxu0 0
        %4407 = vmatpush1.bf16.msra.mxu0 %v3876
        %4408 = vmatprep.subr.bf16.mxu0 0
        %4409 = vmatpush1.bf16.msra.mxu0 %v3877
        %4410 = vmatprep.subr.bf16.mxu0 0
        %4411 = vmatpush1.bf16.msra.mxu0 %v3878
        %4412 = vmatprep.subr.bf16.mxu0 0
        %4413 = vmatpush1.bf16.msra.mxu0 0
        %4414 = vmatprep.subr.bf16.mxu0 0
        %4415 = vmatpush1.bf16.msra.mxu0 0
        %4416 = vmatprep.subr.bf16.mxu0 0
        %4417 = vmatpush1.bf16.msra.mxu0 0
        %4418 = vmatprep.subr.bf16.mxu0 0
        %4419 = vmatpush1.bf16.msra.mxu0 0
        %4420 = vmatprep.subr.bf16.mxu0 0
        %4421 = vmatpush1.bf16.msra.mxu0 0
        %4422 = vmatprep.subr.bf16.mxu0 0
        %4423 = vmatpush1.bf16.msra.mxu0 0
        %4424 = vmatprep.subr.bf16.mxu0 0
        %4425 = vmatpush1.bf16.msra.mxu0 0
        %4426 = vmatprep.subr.bf16.mxu0 0
        %4427 = vmatpush1.bf16.msra.mxu0 0
        %4428 = vmatprep.mubr.bf16.mxu0 0
        %4429 = vmatmul.mubr.bf16.gmra.mrb[0].mxu0 %v1527
        %v4430 = vpop.f32.mrb[0].mxu0
        %v4431 = vadd.f32 0.0, %v4430
        %v4432 = vpop.f32.mrb[0].mxu0
        %v4433 = vpop.f32.mrb[0].mxu0
        %v4434 = vadd.f32 0.0, %v4433
        %v4435 = vpop.f32.mrb[0].mxu0
        %4436 = vmatprep.mubr.bf16.mxu0 0
        %4437 = vmatmul.mubr.bf16.gmra.mrb[0].mxu0 %v1528
        %v4438 = vpop.f32.mrb[0].mxu0
        %v4439 = vadd.f32 0.0, %v4438
        %v4440 = vpop.f32.mrb[0].mxu0
        %v4441 = vpop.f32.mrb[0].mxu0
        %v4442 = vadd.f32 0.0, %v4441
        %v4443 = vpop.f32.mrb[0].mxu0
        %4444 = vmatprep.mubr.bf16.mxu0 0
        %4445 = vmatmul.mubr.bf16.gmra.mrb[0].mxu0 %v1529
        %v4446 = vpop.f32.mrb[0].mxu0
        %v4447 = vadd.f32 0.0, %v4446
        %v4448 = vpop.f32.mrb[0].mxu0
        %v4449 = vpop.f32.mrb[0].mxu0
        %v4450 = vadd.f32 0.0, %v4449
        %v4451 = vpop.f32.mrb[0].mxu0
        %4452 = vmatprep.mubr.bf16.mxu0 0
        %4453 = vmatmul.mubr.bf16.gmra.mrb[0].mxu0 %v1530
        %v4454 = vpop.f32.mrb[0].mxu0
        %v4455 = vadd.f32 0.0, %v4454
        %v4456 = vpop.f32.mrb[0].mxu0
        %v4457 = vpop.f32.mrb[0].mxu0
        %v4458 = vadd.f32 0.0, %v4457
        %v4459 = vpop.f32.mrb[0].mxu0
        %4460 = vmatprep.mubr.bf16.mxu0 0
        %4461 = vmatmul.mubr.bf16.gmra.mrb[0].mxu0 %v1531
        %v4462 = vpop.f32.mrb[0].mxu0
        %v4463 = vadd.f32 0.0, %v4462
        %v4464 = vpop.f32.mrb[0].mxu0
        %v4465 = vpop.f32.mrb[0].mxu0
        %v4466 = vadd.f32 0.0, %v4465
        %v4467 = vpop.f32.mrb[0].mxu0
        %4468 = vmatprep.mubr.bf16.mxu0 0
        %4469 = vmatmul.mubr.bf16.gmra.mrb[0].mxu0 %v1532
        %v4470 = vpop.f32.mrb[0].mxu0
        %v4471 = vadd.f32 0.0, %v4470
        %v4472 = vpop.f32.mrb[0].mxu0
        %v4473 = vpop.f32.mrb[0].mxu0
        %v4474 = vadd.f32 0.0, %v4473
        %v4475 = vpop.f32.mrb[0].mxu0
        %4476 = vmatprep.mubr.bf16.mxu0 0
        %4477 = vmatmul.mubr.bf16.gmra.mrb[0].mxu0 %v1533
        %v4478 = vpop.f32.mrb[0].mxu0
        %v4479 = vadd.f32 0.0, %v4478
        %v4480 = vpop.f32.mrb[0].mxu0
        %v4481 = vpop.f32.mrb[0].mxu0
        %v4482 = vadd.f32 0.0, %v4481
        %v4483 = vpop.f32.mrb[0].mxu0
        %4484 = vmatprep.mubr.bf16.mxu0 0
        %4485 = vmatmul.mubr.bf16.gmra.mrb[0].mxu0 %v1534
        %v4486 = vpop.f32.mrb[0].mxu0
        %v4487 = vadd.f32 0.0, %v4486
        %v4488 = vpop.f32.mrb[0].mxu0
        %v4489 = vpop.f32.mrb[0].mxu0
        %v4490 = vadd.f32 0.0, %v4489
        %v4491 = vpop.f32.mrb[0].mxu0
        %4492 = vdwg.mxu0
        %v4493 = vpack.c.bf16 %v4434, %v4431
        %v4494 = vpack.c.bf16 %v4442, %v4439
        %v4495 = vpack.c.bf16 %v4450, %v4447
        %v4496 = vpack.c.bf16 %v4458, %v4455
        %v4497 = vpack.c.bf16 %v4466, %v4463
        %v4498 = vpack.c.bf16 %v4474, %v4471
        %v4499 = vpack.c.bf16 %v4482, %v4479
        %v4500 = vpack.c.bf16 %v4490, %v4487
        %s4501 = scalar_lea.vmem %s319, 64 [#allocation5]
        %v4502 = vld [vmem:[%s4501] sm:$0xf]
        %v4503 = vld [vmem:[%s4501 + $0x4] sm:$0xf]
        %v4504 = vld [vmem:[%s4501 + $0x8] sm:$0xf]
        %v4505 = vld [vmem:[%s4501 + $0xc] sm:$0xf]
        %v4506 = vld [vmem:[%s4501 + $0x10] sm:$0xf]
        %v4507 = vld [vmem:[%s4501 + $0x14] sm:$0xf]
        %v4508 = vld [vmem:[%s4501 + $0x18] sm:$0xf]
        %v4509 = vld [vmem:[%s4501 + $0x1c] sm:$0xf]
        %v4518 = vunpack.c.l.b16 %v4502
        %v4519 = vunpack.c.l.b16 %v4503
        %v4520 = vunpack.c.l.b16 %v4504
        %v4521 = vunpack.c.l.b16 %v4505
        %v4522 = vunpack.c.l.b16 %v4506
        %v4523 = vunpack.c.l.b16 %v4507
        %v4524 = vunpack.c.l.b16 %v4508
        %v4525 = vunpack.c.l.b16 %v4509
        %v4526 = vpack.c.b16 %v4519, %v4518
        %v4527 = vpack.c.b16 %v4521, %v4520
        %v4528 = vpack.c.b16 %v4523, %v4522
        %v4529 = vpack.c.b16 %v4525, %v4524
        %v4535 = vsel %vm1211, %v4493, 0
        %v4538 = vsel %vm1211, %v4494, 0
        %v4541 = vsel %vm1211, %v4495, 0
        %v4544 = vsel %vm1211, %v4496, 0
        %v4547 = vsel %vm1211, %v4497, 0
        %v4550 = vsel %vm1211, %v4498, 0
        %v4553 = vsel %vm1211, %v4499, 0
        %v4556 = vsel %vm1211, %v4500, 0
        %4558 = vmatprep.subr.bf16.mxu0 0
        %4559 = vmatpush1.bf16.msra.mxu0 %v4526
        %4560 = vmatprep.subr.bf16.mxu0 0
        %4561 = vmatpush1.bf16.msra.mxu0 %v4527
        %4562 = vmatprep.subr.bf16.mxu0 0
        %4563 = vmatpush1.bf16.msra.mxu0 %v4528
        %4564 = vmatprep.subr.bf16.mxu0 0
        %4565 = vmatpush1.bf16.msra.mxu0 %v4529
        %4566 = vmatprep.subr.bf16.mxu0 0
        %4567 = vmatpush1.bf16.msra.mxu0 0
        %4568 = vmatprep.subr.bf16.mxu0 0
        %4569 = vmatpush1.bf16.msra.mxu0 0
        %4570 = vmatprep.subr.bf16.mxu0 0
        %4571 = vmatpush1.bf16.msra.mxu0 0
        %4572 = vmatprep.subr.bf16.mxu0 0
        %4573 = vmatpush1.bf16.msra.mxu0 0
        %4574 = vmatprep.subr.bf16.mxu0 0
        %4575 = vmatpush1.bf16.msra.mxu0 0
        %4576 = vmatprep.subr.bf16.mxu0 0
        %4577 = vmatpush1.bf16.msra.mxu0 0
        %4578 = vmatprep.subr.bf16.mxu0 0
        %4579 = vmatpush1.bf16.msra.mxu0 0
        %4580 = vmatprep.subr.bf16.mxu0 0
        %4581 = vmatpush1.bf16.msra.mxu0 0
        %4582 = vmatprep.subr.bf16.mxu0 0
        %4583 = vmatpush1.bf16.msra.mxu0 0
        %4584 = vmatprep.subr.bf16.mxu0 0
        %4585 = vmatpush1.bf16.msra.mxu0 0
        %4586 = vmatprep.subr.bf16.mxu0 0
        %4587 = vmatpush1.bf16.msra.mxu0 0
        %4588 = vmatprep.subr.bf16.mxu0 0
        %4589 = vmatpush1.bf16.msra.mxu0 0
        %4590 = vmatprep.mubr.bf16.mxu0 0
        %4591 = vmatmul.mubr.bf16.gmra.mrb[0].mxu0 %v4535
        %v4592 = vpop.f32.mrb[0].mxu0
        %v4593 = vadd.f32 0.0, %v4592
        %v4594 = vpop.f32.mrb[0].mxu0
        %v4595 = vpop.f32.mrb[0].mxu0
        %v4596 = vadd.f32 0.0, %v4595
        %v4597 = vpop.f32.mrb[0].mxu0
        %4598 = vmatprep.mubr.bf16.mxu0 0
        %4599 = vmatmul.mubr.bf16.gmra.mrb[0].mxu0 %v4538
        %v4600 = vpop.f32.mrb[0].mxu0
        %v4601 = vadd.f32 0.0, %v4600
        %v4602 = vpop.f32.mrb[0].mxu0
        %v4603 = vpop.f32.mrb[0].mxu0
        %v4604 = vadd.f32 0.0, %v4603
        %v4605 = vpop.f32.mrb[0].mxu0
        %4606 = vmatprep.mubr.bf16.mxu0 0
        %4607 = vmatmul.mubr.bf16.gmra.mrb[0].mxu0 %v4541
        %v4608 = vpop.f32.mrb[0].mxu0
        %v4609 = vadd.f32 0.0, %v4608
        %v4610 = vpop.f32.mrb[0].mxu0
        %v4611 = vpop.f32.mrb[0].mxu0
        %v4612 = vadd.f32 0.0, %v4611
        %v4613 = vpop.f32.mrb[0].mxu0
        %4614 = vmatprep.mubr.bf16.mxu0 0
        %4615 = vmatmul.mubr.bf16.gmra.mrb[0].mxu0 %v4544
        %v4616 = vpop.f32.mrb[0].mxu0
        %v4617 = vadd.f32 0.0, %v4616
        %v4618 = vpop.f32.mrb[0].mxu0
        %v4619 = vpop.f32.mrb[0].mxu0
        %v4620 = vadd.f32 0.0, %v4619
        %v4621 = vpop.f32.mrb[0].mxu0
        %4622 = vmatprep.mubr.bf16.mxu0 0
        %4623 = vmatmul.mubr.bf16.gmra.mrb[0].mxu0 %v4547
        %v4624 = vpop.f32.mrb[0].mxu0
        %v4625 = vadd.f32 0.0, %v4624
        %v4626 = vpop.f32.mrb[0].mxu0
        %v4627 = vpop.f32.mrb[0].mxu0
        %v4628 = vadd.f32 0.0, %v4627
        %v4629 = vpop.f32.mrb[0].mxu0
        %4630 = vmatprep.mubr.bf16.mxu0 0
        %4631 = vmatmul.mubr.bf16.gmra.mrb[0].mxu0 %v4550
        %v4632 = vpop.f32.mrb[0].mxu0
        %v4633 = vadd.f32 0.0, %v4632
        %v4634 = vpop.f32.mrb[0].mxu0
        %v4635 = vpop.f32.mrb[0].mxu0
        %v4636 = vadd.f32 0.0, %v4635
        %v4637 = vpop.f32.mrb[0].mxu0
        %4638 = vmatprep.mubr.bf16.mxu0 0
        %4639 = vmatmul.mubr.bf16.gmra.mrb[0].mxu0 %v4553
        %v4640 = vpop.f32.mrb[0].mxu0
        %v4641 = vadd.f32 0.0, %v4640
        %v4642 = vpop.f32.mrb[0].mxu0
        %v4643 = vpop.f32.mrb[0].mxu0
        %v4644 = vadd.f32 0.0, %v4643
        %v4645 = vpop.f32.mrb[0].mxu0
        %4646 = vmatprep.mubr.bf16.mxu0 0
        %4647 = vmatmul.mubr.bf16.gmra.mrb[0].mxu0 %v4556
        %v4648 = vpop.f32.mrb[0].mxu0
        %v4649 = vadd.f32 0.0, %v4648
        %v4650 = vpop.f32.mrb[0].mxu0
        %v4651 = vpop.f32.mrb[0].mxu0
        %v4652 = vadd.f32 0.0, %v4651
        %v4653 = vpop.f32.mrb[0].mxu0
        %4654 = vdwg.mxu0
        %v4655 = vadd.f32 %v4334, %v4593
        %v4656 = vadd.f32 %v4337, %v4596
        %v4657 = vadd.f32 %v4342, %v4601
        %v4658 = vadd.f32 %v4345, %v4604
        %v4659 = vadd.f32 %v4350, %v4609
        %v4660 = vadd.f32 %v4353, %v4612
        %v4661 = vadd.f32 %v4358, %v4617
        %v4662 = vadd.f32 %v4361, %v4620
        %v4663 = vadd.f32 %v4366, %v4625
        %v4664 = vadd.f32 %v4369, %v4628
        %v4665 = vadd.f32 %v4374, %v4633
        %v4666 = vadd.f32 %v4377, %v4636
        %v4667 = vadd.f32 %v4382, %v4641
        %v4668 = vadd.f32 %v4385, %v4644
        %v4669 = vadd.f32 %v4390, %v4649
        %v4670 = vadd.f32 %v4393, %v4652
        %4671 = vmatprep.subr.bf16.mxu0 0
        %4672 = vmatpush1.bf16.msra.mxu0 %v3871
        %4673 = vmatprep.subr.bf16.mxu0 0
        %4674 = vmatpush1.bf16.msra.mxu0 %v3872
        %4675 = vmatprep.subr.bf16.mxu0 0
        %4676 = vmatpush1.bf16.msra.mxu0 %v3873
        %4677 = vmatprep.subr.bf16.mxu0 0
        %4678 = vmatpush1.bf16.msra.mxu0 %v3874
        %4679 = vmatprep.subr.bf16.mxu0 0
        %4680 = vmatpush1.bf16.msra.mxu0 %v3875
        %4681 = vmatprep.subr.bf16.mxu0 0
        %4682 = vmatpush1.bf16.msra.mxu0 %v3876
        %4683 = vmatprep.subr.bf16.mxu0 0
        %4684 = vmatpush1.bf16.msra.mxu0 %v3877
        %4685 = vmatprep.subr.bf16.mxu0 0
        %4686 = vmatpush1.bf16.msra.mxu0 %v3878
        %4687 = vmatprep.subr.bf16.mxu0 0
        %4688 = vmatpush1.bf16.msra.mxu0 0
        %4689 = vmatprep.subr.bf16.mxu0 0
        %4690 = vmatpush1.bf16.msra.mxu0 0
        %4691 = vmatprep.subr.bf16.mxu0 0
        %4692 = vmatpush1.bf16.msra.mxu0 0
        %4693 = vmatprep.subr.bf16.mxu0 0
        %4694 = vmatpush1.bf16.msra.mxu0 0
        %4695 = vmatprep.subr.bf16.mxu0 0
        %4696 = vmatpush1.bf16.msra.mxu0 0
        %4697 = vmatprep.subr.bf16.mxu0 0
        %4698 = vmatpush1.bf16.msra.mxu0 0
        %4699 = vmatprep.subr.bf16.mxu0 0
        %4700 = vmatpush1.bf16.msra.mxu0 0
        %4701 = vmatprep.subr.bf16.mxu0 0
        %4702 = vmatpush1.bf16.msra.mxu0 0
        %4703 = vmatprep.mubr.bf16.mxu0 0
        %4704 = vmatmul.mubr.bf16.gmra.mrb[0].mxu0 %v1867
        %v4705 = vpop.f32.mrb[0].mxu0
        %v4706 = vadd.f32 0.0, %v4705
        %v4707 = vpop.f32.mrb[0].mxu0
        %v4708 = vpop.f32.mrb[0].mxu0
        %v4709 = vadd.f32 0.0, %v4708
        %v4710 = vpop.f32.mrb[0].mxu0
        %4711 = vmatprep.mubr.bf16.mxu0 0
        %4712 = vmatmul.mubr.bf16.gmra.mrb[0].mxu0 %v1868
        %v4713 = vpop.f32.mrb[0].mxu0
        %v4714 = vadd.f32 0.0, %v4713
        %v4715 = vpop.f32.mrb[0].mxu0
        %v4716 = vpop.f32.mrb[0].mxu0
        %v4717 = vadd.f32 0.0, %v4716
        %v4718 = vpop.f32.mrb[0].mxu0
        %4719 = vmatprep.mubr.bf16.mxu0 0
        %4720 = vmatmul.mubr.bf16.gmra.mrb[0].mxu0 %v1869
        %v4721 = vpop.f32.mrb[0].mxu0
        %v4722 = vadd.f32 0.0, %v4721
        %v4723 = vpop.f32.mrb[0].mxu0
        %v4724 = vpop.f32.mrb[0].mxu0
        %v4725 = vadd.f32 0.0, %v4724
        %v4726 = vpop.f32.mrb[0].mxu0
        %4727 = vmatprep.mubr.bf16.mxu0 0
        %4728 = vmatmul.mubr.bf16.gmra.mrb[0].mxu0 %v1870
        %v4729 = vpop.f32.mrb[0].mxu0
        %v4730 = vadd.f32 0.0, %v4729
        %v4731 = vpop.f32.mrb[0].mxu0
        %v4732 = vpop.f32.mrb[0].mxu0
        %v4733 = vadd.f32 0.0, %v4732
        %v4734 = vpop.f32.mrb[0].mxu0
        %4735 = vmatprep.mubr.bf16.mxu0 0
        %4736 = vmatmul.mubr.bf16.gmra.mrb[0].mxu0 %v1871
        %v4737 = vpop.f32.mrb[0].mxu0
        %v4738 = vadd.f32 0.0, %v4737
        %v4739 = vpop.f32.mrb[0].mxu0
        %v4740 = vpop.f32.mrb[0].mxu0
        %v4741 = vadd.f32 0.0, %v4740
        %v4742 = vpop.f32.mrb[0].mxu0
        %4743 = vmatprep.mubr.bf16.mxu0 0
        %4744 = vmatmul.mubr.bf16.gmra.mrb[0].mxu0 %v1872
        %v4745 = vpop.f32.mrb[0].mxu0
        %v4746 = vadd.f32 0.0, %v4745
        %v4747 = vpop.f32.mrb[0].mxu0
        %v4748 = vpop.f32.mrb[0].mxu0
        %v4749 = vadd.f32 0.0, %v4748
        %v4750 = vpop.f32.mrb[0].mxu0
        %4751 = vmatprep.mubr.bf16.mxu0 0
        %4752 = vmatmul.mubr.bf16.gmra.mrb[0].mxu0 %v1873
        %v4753 = vpop.f32.mrb[0].mxu0
        %v4754 = vadd.f32 0.0, %v4753
        %v4755 = vpop.f32.mrb[0].mxu0
        %v4756 = vpop.f32.mrb[0].mxu0
        %v4757 = vadd.f32 0.0, %v4756
        %v4758 = vpop.f32.mrb[0].mxu0
        %4759 = vmatprep.mubr.bf16.mxu0 0
        %4760 = vmatmul.mubr.bf16.gmra.mrb[0].mxu0 %v1874
        %v4761 = vpop.f32.mrb[0].mxu0
        %v4762 = vadd.f32 0.0, %v4761
        %v4763 = vpop.f32.mrb[0].mxu0
        %v4764 = vpop.f32.mrb[0].mxu0
        %v4765 = vadd.f32 0.0, %v4764
        %v4766 = vpop.f32.mrb[0].mxu0
        %4767 = vdwg.mxu0
        %v4768 = vpack.c.bf16 %v4709, %v4706
        %v4769 = vpack.c.bf16 %v4717, %v4714
        %v4770 = vpack.c.bf16 %v4725, %v4722
        %v4771 = vpack.c.bf16 %v4733, %v4730
        %v4772 = vpack.c.bf16 %v4741, %v4738
        %v4773 = vpack.c.bf16 %v4749, %v4746
        %v4774 = vpack.c.bf16 %v4757, %v4754
        %v4775 = vpack.c.bf16 %v4765, %v4762
        %s4776 = scalar_lea.vmem %s319, 96 [#allocation5]
        %v4777 = vld [vmem:[%s4776] sm:$0xf]
        %v4778 = vld [vmem:[%s4776 + $0x4] sm:$0xf]
        %v4779 = vld [vmem:[%s4776 + $0x8] sm:$0xf]
        %v4780 = vld [vmem:[%s4776 + $0xc] sm:$0xf]
        %v4781 = vld [vmem:[%s4776 + $0x10] sm:$0xf]
        %v4782 = vld [vmem:[%s4776 + $0x14] sm:$0xf]
        %v4783 = vld [vmem:[%s4776 + $0x18] sm:$0xf]
        %v4784 = vld [vmem:[%s4776 + $0x1c] sm:$0xf]
        %v4793 = vunpack.c.l.b16 %v4777
        %v4794 = vunpack.c.l.b16 %v4778
        %v4795 = vunpack.c.l.b16 %v4779
        %v4796 = vunpack.c.l.b16 %v4780
        %v4797 = vunpack.c.l.b16 %v4781
        %v4798 = vunpack.c.l.b16 %v4782
        %v4799 = vunpack.c.l.b16 %v4783
        %v4800 = vunpack.c.l.b16 %v4784
        %v4801 = vpack.c.b16 %v4794, %v4793
        %v4802 = vpack.c.b16 %v4796, %v4795
        %v4803 = vpack.c.b16 %v4798, %v4797
        %v4804 = vpack.c.b16 %v4800, %v4799
        %v4810 = vsel %vm1211, %v4768, 0
        %v4813 = vsel %vm1211, %v4769, 0
        %v4816 = vsel %vm1211, %v4770, 0
        %v4819 = vsel %vm1211, %v4771, 0
        %v4822 = vsel %vm1211, %v4772, 0
        %v4825 = vsel %vm1211, %v4773, 0
        %v4828 = vsel %vm1211, %v4774, 0
        %v4831 = vsel %vm1211, %v4775, 0
        %4833 = vmatprep.subr.bf16.mxu0 0
        %4834 = vmatpush1.bf16.msra.mxu0 %v4801
        %4835 = vmatprep.subr.bf16.mxu0 0
        %4836 = vmatpush1.bf16.msra.mxu0 %v4802
        %4837 = vmatprep.subr.bf16.mxu0 0
        %4838 = vmatpush1.bf16.msra.mxu0 %v4803
        %4839 = vmatprep.subr.bf16.mxu0 0
        %4840 = vmatpush1.bf16.msra.mxu0 %v4804
        %4841 = vmatprep.subr.bf16.mxu0 0
        %4842 = vmatpush1.bf16.msra.mxu0 0
        %4843 = vmatprep.subr.bf16.mxu0 0
        %4844 = vmatpush1.bf16.msra.mxu0 0
        %4845 = vmatprep.subr.bf16.mxu0 0
        %4846 = vmatpush1.bf16.msra.mxu0 0
        %4847 = vmatprep.subr.bf16.mxu0 0
        %4848 = vmatpush1.bf16.msra.mxu0 0
        %4849 = vmatprep.subr.bf16.mxu0 0
        %4850 = vmatpush1.bf16.msra.mxu0 0
        %4851 = vmatprep.subr.bf16.mxu0 0
        %4852 = vmatpush1.bf16.msra.mxu0 0
        %4853 = vmatprep.subr.bf16.mxu0 0
        %4854 = vmatpush1.bf16.msra.mxu0 0
        %4855 = vmatprep.subr.bf16.mxu0 0
        %4856 = vmatpush1.bf16.msra.mxu0 0
        %4857 = vmatprep.subr.bf16.mxu0 0
        %4858 = vmatpush1.bf16.msra.mxu0 0
        %4859 = vmatprep.subr.bf16.mxu0 0
        %4860 = vmatpush1.bf16.msra.mxu0 0
        %4861 = vmatprep.subr.bf16.mxu0 0
        %4862 = vmatpush1.bf16.msra.mxu0 0
        %4863 = vmatprep.subr.bf16.mxu0 0
        %4864 = vmatpush1.bf16.msra.mxu0 0
        %4865 = vmatprep.mubr.bf16.mxu0 0
        %4866 = vmatmul.mubr.bf16.gmra.mrb[0].mxu0 %v4810
        %v4867 = vpop.f32.mrb[0].mxu0
        %v4868 = vadd.f32 0.0, %v4867
        %v4869 = vpop.f32.mrb[0].mxu0
        %v4870 = vpop.f32.mrb[0].mxu0
        %v4871 = vadd.f32 0.0, %v4870
        %v4872 = vpop.f32.mrb[0].mxu0
        %4873 = vmatprep.mubr.bf16.mxu0 0
        %4874 = vmatmul.mubr.bf16.gmra.mrb[0].mxu0 %v4813
        %v4875 = vpop.f32.mrb[0].mxu0
        %v4876 = vadd.f32 0.0, %v4875
        %v4877 = vpop.f32.mrb[0].mxu0
        %v4878 = vpop.f32.mrb[0].mxu0
        %v4879 = vadd.f32 0.0, %v4878
        %v4880 = vpop.f32.mrb[0].mxu0
        %4881 = vmatprep.mubr.bf16.mxu0 0
        %4882 = vmatmul.mubr.bf16.gmra.mrb[0].mxu0 %v4816
        %v4883 = vpop.f32.mrb[0].mxu0
        %v4884 = vadd.f32 0.0, %v4883
        %v4885 = vpop.f32.mrb[0].mxu0
        %v4886 = vpop.f32.mrb[0].mxu0
        %v4887 = vadd.f32 0.0, %v4886
        %v4888 = vpop.f32.mrb[0].mxu0
        %4889 = vmatprep.mubr.bf16.mxu0 0
        %4890 = vmatmul.mubr.bf16.gmra.mrb[0].mxu0 %v4819
        %v4891 = vpop.f32.mrb[0].mxu0
        %v4892 = vadd.f32 0.0, %v4891
        %v4893 = vpop.f32.mrb[0].mxu0
        %v4894 = vpop.f32.mrb[0].mxu0
        %v4895 = vadd.f32 0.0, %v4894
        %v4896 = vpop.f32.mrb[0].mxu0
        %4897 = vmatprep.mubr.bf16.mxu0 0
        %4898 = vmatmul.mubr.bf16.gmra.mrb[0].mxu0 %v4822
        %v4899 = vpop.f32.mrb[0].mxu0
        %v4900 = vadd.f32 0.0, %v4899
        %v4901 = vpop.f32.mrb[0].mxu0
        %v4902 = vpop.f32.mrb[0].mxu0
        %v4903 = vadd.f32 0.0, %v4902
        %v4904 = vpop.f32.mrb[0].mxu0
        %4905 = vmatprep.mubr.bf16.mxu0 0
        %4906 = vmatmul.mubr.bf16.gmra.mrb[0].mxu0 %v4825
        %v4907 = vpop.f32.mrb[0].mxu0
        %v4908 = vadd.f32 0.0, %v4907
        %v4909 = vpop.f32.mrb[0].mxu0
        %v4910 = vpop.f32.mrb[0].mxu0
        %v4911 = vadd.f32 0.0, %v4910
        %v4912 = vpop.f32.mrb[0].mxu0
        %4913 = vmatprep.mubr.bf16.mxu0 0
        %4914 = vmatmul.mubr.bf16.gmra.mrb[0].mxu0 %v4828
        %v4915 = vpop.f32.mrb[0].mxu0
        %v4916 = vadd.f32 0.0, %v4915
        %v4917 = vpop.f32.mrb[0].mxu0
        %v4918 = vpop.f32.mrb[0].mxu0
        %v4919 = vadd.f32 0.0, %v4918
        %v4920 = vpop.f32.mrb[0].mxu0
        %4921 = vmatprep.mubr.bf16.mxu0 0
        %4922 = vmatmul.mubr.bf16.gmra.mrb[0].mxu0 %v4831
        %v4923 = vpop.f32.mrb[0].mxu0
        %v4924 = vadd.f32 0.0, %v4923
        %v4925 = vpop.f32.mrb[0].mxu0
        %v4926 = vpop.f32.mrb[0].mxu0
        %v4927 = vadd.f32 0.0, %v4926
        %v4928 = vpop.f32.mrb[0].mxu0
        %4929 = vdwg.mxu0
        %v4930 = vadd.f32 %v4655, %v4868
        %v4931 = vadd.f32 %v4656, %v4871
        %v4932 = vadd.f32 %v4657, %v4876
        %v4933 = vadd.f32 %v4658, %v4879
        %v4934 = vadd.f32 %v4659, %v4884
        %v4935 = vadd.f32 %v4660, %v4887
        %v4936 = vadd.f32 %v4661, %v4892
        %v4937 = vadd.f32 %v4662, %v4895
        %v4938 = vadd.f32 %v4663, %v4900
        %v4939 = vadd.f32 %v4664, %v4903
        %v4940 = vadd.f32 %v4665, %v4908
        %v4941 = vadd.f32 %v4666, %v4911
        %v4942 = vadd.f32 %v4667, %v4916
        %v4943 = vadd.f32 %v4668, %v4919
        %v4944 = vadd.f32 %v4669, %v4924
        %v4945 = vadd.f32 %v4670, %v4927
        %s4946 = scalar_lea.vmem %s319, 128 [#allocation5]
        %v4947 = vld [vmem:[%s4946] sm:$0xf]
        %v4948 = vld [vmem:[%s4946 + $0x4] sm:$0xf]
        %v4949 = vld [vmem:[%s4946 + $0x8] sm:$0xf]
        %v4950 = vld [vmem:[%s4946 + $0xc] sm:$0xf]
        %v4951 = vld [vmem:[%s4946 + $0x10] sm:$0xf]
        %v4952 = vld [vmem:[%s4946 + $0x14] sm:$0xf]
        %v4953 = vld [vmem:[%s4946 + $0x18] sm:$0xf]
        %v4954 = vld [vmem:[%s4946 + $0x1c] sm:$0xf]
        %v4963 = vunpack.c.l.b16 %v4947
        %v4964 = vunpack.c.l.b16 %v4948
        %v4965 = vunpack.c.l.b16 %v4949
        %v4966 = vunpack.c.l.b16 %v4950
        %v4967 = vunpack.c.l.b16 %v4951
        %v4968 = vunpack.c.l.b16 %v4952
        %v4969 = vunpack.c.l.b16 %v4953
        %v4970 = vunpack.c.l.b16 %v4954
        %v4971 = vpack.c.b16 %v4964, %v4963
        %v4972 = vpack.c.b16 %v4966, %v4965
        %v4973 = vpack.c.b16 %v4968, %v4967
        %v4974 = vpack.c.b16 %v4970, %v4969
        %v4980 = vsel %vm1211, %v3871, 0
        %v4983 = vsel %vm1211, %v3872, 0
        %v4986 = vsel %vm1211, %v3873, 0
        %v4989 = vsel %vm1211, %v3874, 0
        %v4992 = vsel %vm1211, %v3875, 0
        %v4995 = vsel %vm1211, %v3876, 0
        %v4998 = vsel %vm1211, %v3877, 0
        %v5001 = vsel %vm1211, %v3878, 0
        %5003 = vmatprep.subr.bf16.mxu0 0
        %5004 = vmatpush1.bf16.msra.mxu0 %v4971
        %5005 = vmatprep.subr.bf16.mxu0 0
        %5006 = vmatpush1.bf16.msra.mxu0 %v4972
        %5007 = vmatprep.subr.bf16.mxu0 0
        %5008 = vmatpush1.bf16.msra.mxu0 %v4973
        %5009 = vmatprep.subr.bf16.mxu0 0
        %5010 = vmatpush1.bf16.msra.mxu0 %v4974
        %5011 = vmatprep.subr.bf16.mxu0 0
        %5012 = vmatpush1.bf16.msra.mxu0 0
        %5013 = vmatprep.subr.bf16.mxu0 0
        %5014 = vmatpush1.bf16.msra.mxu0 0
        %5015 = vmatprep.subr.bf16.mxu0 0
        %5016 = vmatpush1.bf16.msra.mxu0 0
        %5017 = vmatprep.subr.bf16.mxu0 0
        %5018 = vmatpush1.bf16.msra.mxu0 0
        %5019 = vmatprep.subr.bf16.mxu0 0
        %5020 = vmatpush1.bf16.msra.mxu0 0
        %5021 = vmatprep.subr.bf16.mxu0 0
        %5022 = vmatpush1.bf16.msra.mxu0 0
        %5023 = vmatprep.subr.bf16.mxu0 0
        %5024 = vmatpush1.bf16.msra.mxu0 0
        %5025 = vmatprep.subr.bf16.mxu0 0
        %5026 = vmatpush1.bf16.msra.mxu0 0
        %5027 = vmatprep.subr.bf16.mxu0 0
        %5028 = vmatpush1.bf16.msra.mxu0 0
        %5029 = vmatprep.subr.bf16.mxu0 0
        %5030 = vmatpush1.bf16.msra.mxu0 0
        %5031 = vmatprep.subr.bf16.mxu0 0
        %5032 = vmatpush1.bf16.msra.mxu0 0
        %5033 = vmatprep.subr.bf16.mxu0 0
        %5034 = vmatpush1.bf16.msra.mxu0 0
        %5035 = vmatprep.mubr.bf16.mxu0 0
        %5036 = vmatmul.mubr.bf16.gmra.mrb[0].mxu0 %v4980
        %v5037 = vpop.f32.mrb[0].mxu0
        %v5038 = vadd.f32 0.0, %v5037
        %v5039 = vpop.f32.mrb[0].mxu0
        %v5040 = vpop.f32.mrb[0].mxu0
        %v5041 = vadd.f32 0.0, %v5040
        %v5042 = vpop.f32.mrb[0].mxu0
        %5043 = vmatprep.mubr.bf16.mxu0 0
        %5044 = vmatmul.mubr.bf16.gmra.mrb[0].mxu0 %v4983
        %v5045 = vpop.f32.mrb[0].mxu0
        %v5046 = vadd.f32 0.0, %v5045
        %v5047 = vpop.f32.mrb[0].mxu0
        %v5048 = vpop.f32.mrb[0].mxu0
        %v5049 = vadd.f32 0.0, %v5048
        %v5050 = vpop.f32.mrb[0].mxu0
        %5051 = vmatprep.mubr.bf16.mxu0 0
        %5052 = vmatmul.mubr.bf16.gmra.mrb[0].mxu0 %v4986
        %v5053 = vpop.f32.mrb[0].mxu0
        %v5054 = vadd.f32 0.0, %v5053
        %v5055 = vpop.f32.mrb[0].mxu0
        %v5056 = vpop.f32.mrb[0].mxu0
        %v5057 = vadd.f32 0.0, %v5056
        %v5058 = vpop.f32.mrb[0].mxu0
        %5059 = vmatprep.mubr.bf16.mxu0 0
        %5060 = vmatmul.mubr.bf16.gmra.mrb[0].mxu0 %v4989
        %v5061 = vpop.f32.mrb[0].mxu0
        %v5062 = vadd.f32 0.0, %v5061
        %v5063 = vpop.f32.mrb[0].mxu0
        %v5064 = vpop.f32.mrb[0].mxu0
        %v5065 = vadd.f32 0.0, %v5064
        %v5066 = vpop.f32.mrb[0].mxu0
        %5067 = vmatprep.mubr.bf16.mxu0 0
        %5068 = vmatmul.mubr.bf16.gmra.mrb[0].mxu0 %v4992
        %v5069 = vpop.f32.mrb[0].mxu0
        %v5070 = vadd.f32 0.0, %v5069
        %v5071 = vpop.f32.mrb[0].mxu0
        %v5072 = vpop.f32.mrb[0].mxu0
        %v5073 = vadd.f32 0.0, %v5072
        %v5074 = vpop.f32.mrb[0].mxu0
        %5075 = vmatprep.mubr.bf16.mxu0 0
        %5076 = vmatmul.mubr.bf16.gmra.mrb[0].mxu0 %v4995
        %v5077 = vpop.f32.mrb[0].mxu0
        %v5078 = vadd.f32 0.0, %v5077
        %v5079 = vpop.f32.mrb[0].mxu0
        %v5080 = vpop.f32.mrb[0].mxu0
        %v5081 = vadd.f32 0.0, %v5080
        %v5082 = vpop.f32.mrb[0].mxu0
        %5083 = vmatprep.mubr.bf16.mxu0 0
        %5084 = vmatmul.mubr.bf16.gmra.mrb[0].mxu0 %v4998
        %v5085 = vpop.f32.mrb[0].mxu0
        %v5086 = vadd.f32 0.0, %v5085
        %v5087 = vpop.f32.mrb[0].mxu0
        %v5088 = vpop.f32.mrb[0].mxu0
        %v5089 = vadd.f32 0.0, %v5088
        %v5090 = vpop.f32.mrb[0].mxu0
        %5091 = vmatprep.mubr.bf16.mxu0 0
        %5092 = vmatmul.mubr.bf16.gmra.mrb[0].mxu0 %v5001
        %v5093 = vpop.f32.mrb[0].mxu0
        %v5094 = vadd.f32 0.0, %v5093
        %v5095 = vpop.f32.mrb[0].mxu0
        %v5096 = vpop.f32.mrb[0].mxu0
        %v5097 = vadd.f32 0.0, %v5096
        %v5098 = vpop.f32.mrb[0].mxu0
        %5099 = vdwg.mxu0
        %v5100 = vadd.f32 %v4930, %v5038
        %v5101 = vadd.f32 %v4931, %v5041
        %v5102 = vadd.f32 %v4932, %v5046
        %v5103 = vadd.f32 %v4933, %v5049
        %v5104 = vadd.f32 %v4934, %v5054
        %v5105 = vadd.f32 %v4935, %v5057
        %v5106 = vadd.f32 %v4936, %v5062
        %v5107 = vadd.f32 %v4937, %v5065
        %v5108 = vadd.f32 %v4938, %v5070
        %v5109 = vadd.f32 %v4939, %v5073
        %v5110 = vadd.f32 %v4940, %v5078
        %v5111 = vadd.f32 %v4941, %v5081
        %v5112 = vadd.f32 %v4942, %v5086
        %v5113 = vadd.f32 %v4943, %v5089
        %v5114 = vadd.f32 %v4944, %v5094
        %v5115 = vadd.f32 %v4945, %v5097
        %5116 = vmatprep.subr.bf16.mxu0 0
        %5117 = vmatpush1.bf16.msra.mxu0 %v3871
        %5118 = vmatprep.subr.bf16.mxu0 0
        %5119 = vmatpush1.bf16.msra.mxu0 %v3872
        %5120 = vmatprep.subr.bf16.mxu0 0
        %5121 = vmatpush1.bf16.msra.mxu0 %v3873
        %5122 = vmatprep.subr.bf16.mxu0 0
        %5123 = vmatpush1.bf16.msra.mxu0 %v3874
        %5124 = vmatprep.subr.bf16.mxu0 0
        %5125 = vmatpush1.bf16.msra.mxu0 %v3875
        %5126 = vmatprep.subr.bf16.mxu0 0
        %5127 = vmatpush1.bf16.msra.mxu0 %v3876
        %5128 = vmatprep.subr.bf16.mxu0 0
        %5129 = vmatpush1.bf16.msra.mxu0 %v3877
        %5130 = vmatprep.subr.bf16.mxu0 0
        %5131 = vmatpush1.bf16.msra.mxu0 %v3878
        %5132 = vmatprep.subr.bf16.mxu0 0
        %5133 = vmatpush1.bf16.msra.mxu0 0
        %5134 = vmatprep.subr.bf16.mxu0 0
        %5135 = vmatpush1.bf16.msra.mxu0 0
        %5136 = vmatprep.subr.bf16.mxu0 0
        %5137 = vmatpush1.bf16.msra.mxu0 0
        %5138 = vmatprep.subr.bf16.mxu0 0
        %5139 = vmatpush1.bf16.msra.mxu0 0
        %5140 = vmatprep.subr.bf16.mxu0 0
        %5141 = vmatpush1.bf16.msra.mxu0 0
        %5142 = vmatprep.subr.bf16.mxu0 0
        %5143 = vmatpush1.bf16.msra.mxu0 0
        %5144 = vmatprep.subr.bf16.mxu0 0
        %5145 = vmatpush1.bf16.msra.mxu0 0
        %5146 = vmatprep.subr.bf16.mxu0 0
        %5147 = vmatpush1.bf16.msra.mxu0 0
        %5148 = vmatprep.mubr.bf16.mxu0 0
        %5149 = vmatmul.mubr.bf16.gmra.mrb[0].mxu0 %v2377
        %v5150 = vpop.f32.mrb[0].mxu0
        %v5151 = vadd.f32 0.0, %v5150
        %v5152 = vpop.f32.mrb[0].mxu0
        %v5153 = vpop.f32.mrb[0].mxu0
        %v5154 = vadd.f32 0.0, %v5153
        %v5155 = vpop.f32.mrb[0].mxu0
        %5156 = vmatprep.mubr.bf16.mxu0 0
        %5157 = vmatmul.mubr.bf16.gmra.mrb[0].mxu0 %v2378
        %v5158 = vpop.f32.mrb[0].mxu0
        %v5159 = vadd.f32 0.0, %v5158
        %v5160 = vpop.f32.mrb[0].mxu0
        %v5161 = vpop.f32.mrb[0].mxu0
        %v5162 = vadd.f32 0.0, %v5161
        %v5163 = vpop.f32.mrb[0].mxu0
        %5164 = vmatprep.mubr.bf16.mxu0 0
        %5165 = vmatmul.mubr.bf16.gmra.mrb[0].mxu0 %v2379
        %v5166 = vpop.f32.mrb[0].mxu0
        %v5167 = vadd.f32 0.0, %v5166
        %v5168 = vpop.f32.mrb[0].mxu0
        %v5169 = vpop.f32.mrb[0].mxu0
        %v5170 = vadd.f32 0.0, %v5169
        %v5171 = vpop.f32.mrb[0].mxu0
        %5172 = vmatprep.mubr.bf16.mxu0 0
        %5173 = vmatmul.mubr.bf16.gmra.mrb[0].mxu0 %v2380
        %v5174 = vpop.f32.mrb[0].mxu0
        %v5175 = vadd.f32 0.0, %v5174
        %v5176 = vpop.f32.mrb[0].mxu0
        %v5177 = vpop.f32.mrb[0].mxu0
        %v5178 = vadd.f32 0.0, %v5177
        %v5179 = vpop.f32.mrb[0].mxu0
        %5180 = vmatprep.mubr.bf16.mxu0 0
        %5181 = vmatmul.mubr.bf16.gmra.mrb[0].mxu0 %v2381
        %v5182 = vpop.f32.mrb[0].mxu0
        %v5183 = vadd.f32 0.0, %v5182
        %v5184 = vpop.f32.mrb[0].mxu0
        %v5185 = vpop.f32.mrb[0].mxu0
        %v5186 = vadd.f32 0.0, %v5185
        %v5187 = vpop.f32.mrb[0].mxu0
        %5188 = vmatprep.mubr.bf16.mxu0 0
        %5189 = vmatmul.mubr.bf16.gmra.mrb[0].mxu0 %v2382
        %v5190 = vpop.f32.mrb[0].mxu0
        %v5191 = vadd.f32 0.0, %v5190
        %v5192 = vpop.f32.mrb[0].mxu0
        %v5193 = vpop.f32.mrb[0].mxu0
        %v5194 = vadd.f32 0.0, %v5193
        %v5195 = vpop.f32.mrb[0].mxu0
        %5196 = vmatprep.mubr.bf16.mxu0 0
        %5197 = vmatmul.mubr.bf16.gmra.mrb[0].mxu0 %v2383
        %v5198 = vpop.f32.mrb[0].mxu0
        %v5199 = vadd.f32 0.0, %v5198
        %v5200 = vpop.f32.mrb[0].mxu0
        %v5201 = vpop.f32.mrb[0].mxu0
        %v5202 = vadd.f32 0.0, %v5201
        %v5203 = vpop.f32.mrb[0].mxu0
        %5204 = vmatprep.mubr.bf16.mxu0 0
        %5205 = vmatmul.mubr.bf16.gmra.mrb[0].mxu0 %v2384
        %v5206 = vpop.f32.mrb[0].mxu0
        %v5207 = vadd.f32 0.0, %v5206
        %v5208 = vpop.f32.mrb[0].mxu0
        %v5209 = vpop.f32.mrb[0].mxu0
        %v5210 = vadd.f32 0.0, %v5209
        %v5211 = vpop.f32.mrb[0].mxu0
        %5212 = vdwg.mxu0
        %v5213 = vpack.c.bf16 %v5154, %v5151
        %v5214 = vpack.c.bf16 %v5162, %v5159
        %v5215 = vpack.c.bf16 %v5170, %v5167
        %v5216 = vpack.c.bf16 %v5178, %v5175
        %v5217 = vpack.c.bf16 %v5186, %v5183
        %v5218 = vpack.c.bf16 %v5194, %v5191
        %v5219 = vpack.c.bf16 %v5202, %v5199
        %v5220 = vpack.c.bf16 %v5210, %v5207
        %s5221 = scalar_lea.vmem %s319, 160 [#allocation5]
        %v5222 = vld [vmem:[%s5221] sm:$0xf]
        %v5223 = vld [vmem:[%s5221 + $0x4] sm:$0xf]
        %v5224 = vld [vmem:[%s5221 + $0x8] sm:$0xf]
        %v5225 = vld [vmem:[%s5221 + $0xc] sm:$0xf]
        %v5226 = vld [vmem:[%s5221 + $0x10] sm:$0xf]
        %v5227 = vld [vmem:[%s5221 + $0x14] sm:$0xf]
        %v5228 = vld [vmem:[%s5221 + $0x18] sm:$0xf]
        %v5229 = vld [vmem:[%s5221 + $0x1c] sm:$0xf]
        %v5238 = vunpack.c.l.b16 %v5222
        %v5239 = vunpack.c.l.b16 %v5223
        %v5240 = vunpack.c.l.b16 %v5224
        %v5241 = vunpack.c.l.b16 %v5225
        %v5242 = vunpack.c.l.b16 %v5226
        %v5243 = vunpack.c.l.b16 %v5227
        %v5244 = vunpack.c.l.b16 %v5228
        %v5245 = vunpack.c.l.b16 %v5229
        %v5246 = vpack.c.b16 %v5239, %v5238
        %v5247 = vpack.c.b16 %v5241, %v5240
        %v5248 = vpack.c.b16 %v5243, %v5242
        %v5249 = vpack.c.b16 %v5245, %v5244
        %v5255 = vsel %vm1211, %v5213, 0
        %v5258 = vsel %vm1211, %v5214, 0
        %v5261 = vsel %vm1211, %v5215, 0
        %v5264 = vsel %vm1211, %v5216, 0
        %v5267 = vsel %vm1211, %v5217, 0
        %v5270 = vsel %vm1211, %v5218, 0
        %v5273 = vsel %vm1211, %v5219, 0
        %v5276 = vsel %vm1211, %v5220, 0
        %5278 = vmatprep.subr.bf16.mxu0 0
        %5279 = vmatpush1.bf16.msra.mxu0 %v5246
        %5280 = vmatprep.subr.bf16.mxu0 0
        %5281 = vmatpush1.bf16.msra.mxu0 %v5247
        %5282 = vmatprep.subr.bf16.mxu0 0
        %5283 = vmatpush1.bf16.msra.mxu0 %v5248
        %5284 = vmatprep.subr.bf16.mxu0 0
        %5285 = vmatpush1.bf16.msra.mxu0 %v5249
        %5286 = vmatprep.subr.bf16.mxu0 0
        %5287 = vmatpush1.bf16.msra.mxu0 0
        %5288 = vmatprep.subr.bf16.mxu0 0
        %5289 = vmatpush1.bf16.msra.mxu0 0
        %5290 = vmatprep.subr.bf16.mxu0 0
        %5291 = vmatpush1.bf16.msra.mxu0 0
        %5292 = vmatprep.subr.bf16.mxu0 0
        %5293 = vmatpush1.bf16.msra.mxu0 0
        %5294 = vmatprep.subr.bf16.mxu0 0
        %5295 = vmatpush1.bf16.msra.mxu0 0
        %5296 = vmatprep.subr.bf16.mxu0 0
        %5297 = vmatpush1.bf16.msra.mxu0 0
        %5298 = vmatprep.subr.bf16.mxu0 0
        %5299 = vmatpush1.bf16.msra.mxu0 0
        %5300 = vmatprep.subr.bf16.mxu0 0
        %5301 = vmatpush1.bf16.msra.mxu0 0
        %5302 = vmatprep.subr.bf16.mxu0 0
        %5303 = vmatpush1.bf16.msra.mxu0 0
        %5304 = vmatprep.subr.bf16.mxu0 0
        %5305 = vmatpush1.bf16.msra.mxu0 0
        %5306 = vmatprep.subr.bf16.mxu0 0
        %5307 = vmatpush1.bf16.msra.mxu0 0
        %5308 = vmatprep.subr.bf16.mxu0 0
        %5309 = vmatpush1.bf16.msra.mxu0 0
        %5310 = vmatprep.mubr.bf16.mxu0 0
        %5311 = vmatmul.mubr.bf16.gmra.mrb[0].mxu0 %v5255
        %v5312 = vpop.f32.mrb[0].mxu0
        %v5313 = vadd.f32 0.0, %v5312
        %v5314 = vpop.f32.mrb[0].mxu0
        %v5315 = vpop.f32.mrb[0].mxu0
        %v5316 = vadd.f32 0.0, %v5315
        %v5317 = vpop.f32.mrb[0].mxu0
        %5318 = vmatprep.mubr.bf16.mxu0 0
        %5319 = vmatmul.mubr.bf16.gmra.mrb[0].mxu0 %v5258
        %v5320 = vpop.f32.mrb[0].mxu0
        %v5321 = vadd.f32 0.0, %v5320
        %v5322 = vpop.f32.mrb[0].mxu0
        %v5323 = vpop.f32.mrb[0].mxu0
        %v5324 = vadd.f32 0.0, %v5323
        %v5325 = vpop.f32.mrb[0].mxu0
        %5326 = vmatprep.mubr.bf16.mxu0 0
        %5327 = vmatmul.mubr.bf16.gmra.mrb[0].mxu0 %v5261
        %v5328 = vpop.f32.mrb[0].mxu0
        %v5329 = vadd.f32 0.0, %v5328
        %v5330 = vpop.f32.mrb[0].mxu0
        %v5331 = vpop.f32.mrb[0].mxu0
        %v5332 = vadd.f32 0.0, %v5331
        %v5333 = vpop.f32.mrb[0].mxu0
        %5334 = vmatprep.mubr.bf16.mxu0 0
        %5335 = vmatmul.mubr.bf16.gmra.mrb[0].mxu0 %v5264
        %v5336 = vpop.f32.mrb[0].mxu0
        %v5337 = vadd.f32 0.0, %v5336
        %v5338 = vpop.f32.mrb[0].mxu0
        %v5339 = vpop.f32.mrb[0].mxu0
        %v5340 = vadd.f32 0.0, %v5339
        %v5341 = vpop.f32.mrb[0].mxu0
        %5342 = vmatprep.mubr.bf16.mxu0 0
        %5343 = vmatmul.mubr.bf16.gmra.mrb[0].mxu0 %v5267
        %v5344 = vpop.f32.mrb[0].mxu0
        %v5345 = vadd.f32 0.0, %v5344
        %v5346 = vpop.f32.mrb[0].mxu0
        %v5347 = vpop.f32.mrb[0].mxu0
        %v5348 = vadd.f32 0.0, %v5347
        %v5349 = vpop.f32.mrb[0].mxu0
        %5350 = vmatprep.mubr.bf16.mxu0 0
        %5351 = vmatmul.mubr.bf16.gmra.mrb[0].mxu0 %v5270
        %v5352 = vpop.f32.mrb[0].mxu0
        %v5353 = vadd.f32 0.0, %v5352
        %v5354 = vpop.f32.mrb[0].mxu0
        %v5355 = vpop.f32.mrb[0].mxu0
        %v5356 = vadd.f32 0.0, %v5355
        %v5357 = vpop.f32.mrb[0].mxu0
        %5358 = vmatprep.mubr.bf16.mxu0 0
        %5359 = vmatmul.mubr.bf16.gmra.mrb[0].mxu0 %v5273
        %v5360 = vpop.f32.mrb[0].mxu0
        %v5361 = vadd.f32 0.0, %v5360
        %v5362 = vpop.f32.mrb[0].mxu0
        %v5363 = vpop.f32.mrb[0].mxu0
        %v5364 = vadd.f32 0.0, %v5363
        %v5365 = vpop.f32.mrb[0].mxu0
        %5366 = vmatprep.mubr.bf16.mxu0 0
        %5367 = vmatmul.mubr.bf16.gmra.mrb[0].mxu0 %v5276
        %v5368 = vpop.f32.mrb[0].mxu0
        %v5369 = vadd.f32 0.0, %v5368
        %v5370 = vpop.f32.mrb[0].mxu0
        %v5371 = vpop.f32.mrb[0].mxu0
        %v5372 = vadd.f32 0.0, %v5371
        %v5373 = vpop.f32.mrb[0].mxu0
        %5374 = vdwg.mxu0
        %v5375 = vadd.f32 %v5100, %v5313
        %v5376 = vadd.f32 %v5101, %v5316
        %v5377 = vadd.f32 %v5102, %v5321
        %v5378 = vadd.f32 %v5103, %v5324
        %v5379 = vadd.f32 %v5104, %v5329
        %v5380 = vadd.f32 %v5105, %v5332
        %v5381 = vadd.f32 %v5106, %v5337
        %v5382 = vadd.f32 %v5107, %v5340
        %v5383 = vadd.f32 %v5108, %v5345
        %v5384 = vadd.f32 %v5109, %v5348
        %v5385 = vadd.f32 %v5110, %v5353
        %v5386 = vadd.f32 %v5111, %v5356
        %v5387 = vadd.f32 %v5112, %v5361
        %v5388 = vadd.f32 %v5113, %v5364
        %v5389 = vadd.f32 %v5114, %v5369
        %v5390 = vadd.f32 %v5115, %v5372
        %5391 = vmatprep.subr.bf16.mxu0 0
        %5392 = vmatpush1.bf16.msra.mxu0 %v3871
        %5393 = vmatprep.subr.bf16.mxu0 0
        %5394 = vmatpush1.bf16.msra.mxu0 %v3872
        %5395 = vmatprep.subr.bf16.mxu0 0
        %5396 = vmatpush1.bf16.msra.mxu0 %v3873
        %5397 = vmatprep.subr.bf16.mxu0 0
        %5398 = vmatpush1.bf16.msra.mxu0 %v3874
        %5399 = vmatprep.subr.bf16.mxu0 0
        %5400 = vmatpush1.bf16.msra.mxu0 %v3875
        %5401 = vmatprep.subr.bf16.mxu0 0
        %5402 = vmatpush1.bf16.msra.mxu0 %v3876
        %5403 = vmatprep.subr.bf16.mxu0 0
        %5404 = vmatpush1.bf16.msra.mxu0 %v3877
        %5405 = vmatprep.subr.bf16.mxu0 0
        %5406 = vmatpush1.bf16.msra.mxu0 %v3878
        %5407 = vmatprep.subr.bf16.mxu0 0
        %5408 = vmatpush1.bf16.msra.mxu0 0
        %5409 = vmatprep.subr.bf16.mxu0 0
        %5410 = vmatpush1.bf16.msra.mxu0 0
        %5411 = vmatprep.subr.bf16.mxu0 0
        %5412 = vmatpush1.bf16.msra.mxu0 0
        %5413 = vmatprep.subr.bf16.mxu0 0
        %5414 = vmatpush1.bf16.msra.mxu0 0
        %5415 = vmatprep.subr.bf16.mxu0 0
        %5416 = vmatpush1.bf16.msra.mxu0 0
        %5417 = vmatprep.subr.bf16.mxu0 0
        %5418 = vmatpush1.bf16.msra.mxu0 0
        %5419 = vmatprep.subr.bf16.mxu0 0
        %5420 = vmatpush1.bf16.msra.mxu0 0
        %5421 = vmatprep.subr.bf16.mxu0 0
        %5422 = vmatpush1.bf16.msra.mxu0 0
        %5423 = vmatprep.mubr.bf16.mxu0 0
        %5424 = vmatmul.mubr.bf16.gmra.mrb[0].mxu0 %v2717
        %v5425 = vpop.f32.mrb[0].mxu0
        %v5426 = vadd.f32 0.0, %v5425
        %v5427 = vpop.f32.mrb[0].mxu0
        %v5428 = vpop.f32.mrb[0].mxu0
        %v5429 = vadd.f32 0.0, %v5428
        %v5430 = vpop.f32.mrb[0].mxu0
        %5431 = vmatprep.mubr.bf16.mxu0 0
        %5432 = vmatmul.mubr.bf16.gmra.mrb[0].mxu0 %v2718
        %v5433 = vpop.f32.mrb[0].mxu0
        %v5434 = vadd.f32 0.0, %v5433
        %v5435 = vpop.f32.mrb[0].mxu0
        %v5436 = vpop.f32.mrb[0].mxu0
        %v5437 = vadd.f32 0.0, %v5436
        %v5438 = vpop.f32.mrb[0].mxu0
        %5439 = vmatprep.mubr.bf16.mxu0 0
        %5440 = vmatmul.mubr.bf16.gmra.mrb[0].mxu0 %v2719
        %v5441 = vpop.f32.mrb[0].mxu0
        %v5442 = vadd.f32 0.0, %v5441
        %v5443 = vpop.f32.mrb[0].mxu0
        %v5444 = vpop.f32.mrb[0].mxu0
        %v5445 = vadd.f32 0.0, %v5444
        %v5446 = vpop.f32.mrb[0].mxu0
        %5447 = vmatprep.mubr.bf16.mxu0 0
        %5448 = vmatmul.mubr.bf16.gmra.mrb[0].mxu0 %v2720
        %v5449 = vpop.f32.mrb[0].mxu0
        %v5450 = vadd.f32 0.0, %v5449
        %v5451 = vpop.f32.mrb[0].mxu0
        %v5452 = vpop.f32.mrb[0].mxu0
        %v5453 = vadd.f32 0.0, %v5452
        %v5454 = vpop.f32.mrb[0].mxu0
        %5455 = vmatprep.mubr.bf16.mxu0 0
        %5456 = vmatmul.mubr.bf16.gmra.mrb[0].mxu0 %v2721
        %v5457 = vpop.f32.mrb[0].mxu0
        %v5458 = vadd.f32 0.0, %v5457
        %v5459 = vpop.f32.mrb[0].mxu0
        %v5460 = vpop.f32.mrb[0].mxu0
        %v5461 = vadd.f32 0.0, %v5460
        %v5462 = vpop.f32.mrb[0].mxu0
        %5463 = vmatprep.mubr.bf16.mxu0 0
        %5464 = vmatmul.mubr.bf16.gmra.mrb[0].mxu0 %v2722
        %v5465 = vpop.f32.mrb[0].mxu0
        %v5466 = vadd.f32 0.0, %v5465
        %v5467 = vpop.f32.mrb[0].mxu0
        %v5468 = vpop.f32.mrb[0].mxu0
        %v5469 = vadd.f32 0.0, %v5468
        %v5470 = vpop.f32.mrb[0].mxu0
        %5471 = vmatprep.mubr.bf16.mxu0 0
        %5472 = vmatmul.mubr.bf16.gmra.mrb[0].mxu0 %v2723
        %v5473 = vpop.f32.mrb[0].mxu0
        %v5474 = vadd.f32 0.0, %v5473
        %v5475 = vpop.f32.mrb[0].mxu0
        %v5476 = vpop.f32.mrb[0].mxu0
        %v5477 = vadd.f32 0.0, %v5476
        %v5478 = vpop.f32.mrb[0].mxu0
        %5479 = vmatprep.mubr.bf16.mxu0 0
        %5480 = vmatmul.mubr.bf16.gmra.mrb[0].mxu0 %v2724
        %v5481 = vpop.f32.mrb[0].mxu0
        %v5482 = vadd.f32 0.0, %v5481
        %v5483 = vpop.f32.mrb[0].mxu0
        %v5484 = vpop.f32.mrb[0].mxu0
        %v5485 = vadd.f32 0.0, %v5484
        %v5486 = vpop.f32.mrb[0].mxu0
        %5487 = vdwg.mxu0
        %v5488 = vpack.c.bf16 %v5429, %v5426
        %v5489 = vpack.c.bf16 %v5437, %v5434
        %v5490 = vpack.c.bf16 %v5445, %v5442
        %v5491 = vpack.c.bf16 %v5453, %v5450
        %v5492 = vpack.c.bf16 %v5461, %v5458
        %v5493 = vpack.c.bf16 %v5469, %v5466
        %v5494 = vpack.c.bf16 %v5477, %v5474
        %v5495 = vpack.c.bf16 %v5485, %v5482
        %s5496 = scalar_lea.vmem %s319, 192 [#allocation5]
        %v5497 = vld [vmem:[%s5496] sm:$0xf]
        %v5498 = vld [vmem:[%s5496 + $0x4] sm:$0xf]
        %v5499 = vld [vmem:[%s5496 + $0x8] sm:$0xf]
        %v5500 = vld [vmem:[%s5496 + $0xc] sm:$0xf]
        %v5501 = vld [vmem:[%s5496 + $0x10] sm:$0xf]
        %v5502 = vld [vmem:[%s5496 + $0x14] sm:$0xf]
        %v5503 = vld [vmem:[%s5496 + $0x18] sm:$0xf]
        %v5504 = vld [vmem:[%s5496 + $0x1c] sm:$0xf]
        %v5513 = vunpack.c.l.b16 %v5497
        %v5514 = vunpack.c.l.b16 %v5498
        %v5515 = vunpack.c.l.b16 %v5499
        %v5516 = vunpack.c.l.b16 %v5500
        %v5517 = vunpack.c.l.b16 %v5501
        %v5518 = vunpack.c.l.b16 %v5502
        %v5519 = vunpack.c.l.b16 %v5503
        %v5520 = vunpack.c.l.b16 %v5504
        %v5521 = vpack.c.b16 %v5514, %v5513
        %v5522 = vpack.c.b16 %v5516, %v5515
        %v5523 = vpack.c.b16 %v5518, %v5517
        %v5524 = vpack.c.b16 %v5520, %v5519
        %v5530 = vsel %vm1211, %v5488, 0
        %v5533 = vsel %vm1211, %v5489, 0
        %v5536 = vsel %vm1211, %v5490, 0
        %v5539 = vsel %vm1211, %v5491, 0
        %v5542 = vsel %vm1211, %v5492, 0
        %v5545 = vsel %vm1211, %v5493, 0
        %v5548 = vsel %vm1211, %v5494, 0
        %v5551 = vsel %vm1211, %v5495, 0
        %5553 = vmatprep.subr.bf16.mxu0 0
        %5554 = vmatpush1.bf16.msra.mxu0 %v5521
        %5555 = vmatprep.subr.bf16.mxu0 0
        %5556 = vmatpush1.bf16.msra.mxu0 %v5522
        %5557 = vmatprep.subr.bf16.mxu0 0
        %5558 = vmatpush1.bf16.msra.mxu0 %v5523
        %5559 = vmatprep.subr.bf16.mxu0 0
        %5560 = vmatpush1.bf16.msra.mxu0 %v5524
        %5561 = vmatprep.subr.bf16.mxu0 0
        %5562 = vmatpush1.bf16.msra.mxu0 0
        %5563 = vmatprep.subr.bf16.mxu0 0
        %5564 = vmatpush1.bf16.msra.mxu0 0
        %5565 = vmatprep.subr.bf16.mxu0 0
        %5566 = vmatpush1.bf16.msra.mxu0 0
        %5567 = vmatprep.subr.bf16.mxu0 0
        %5568 = vmatpush1.bf16.msra.mxu0 0
        %5569 = vmatprep.subr.bf16.mxu0 0
        %5570 = vmatpush1.bf16.msra.mxu0 0
        %5571 = vmatprep.subr.bf16.mxu0 0
        %5572 = vmatpush1.bf16.msra.mxu0 0
        %5573 = vmatprep.subr.bf16.mxu0 0
        %5574 = vmatpush1.bf16.msra.mxu0 0
        %5575 = vmatprep.subr.bf16.mxu0 0
        %5576 = vmatpush1.bf16.msra.mxu0 0
        %5577 = vmatprep.subr.bf16.mxu0 0
        %5578 = vmatpush1.bf16.msra.mxu0 0
        %5579 = vmatprep.subr.bf16.mxu0 0
        %5580 = vmatpush1.bf16.msra.mxu0 0
        %5581 = vmatprep.subr.bf16.mxu0 0
        %5582 = vmatpush1.bf16.msra.mxu0 0
        %5583 = vmatprep.subr.bf16.mxu0 0
        %5584 = vmatpush1.bf16.msra.mxu0 0
        %5585 = vmatprep.mubr.bf16.mxu0 0
        %5586 = vmatmul.mubr.bf16.gmra.mrb[0].mxu0 %v5530
        %v5587 = vpop.f32.mrb[0].mxu0
        %v5588 = vadd.f32 0.0, %v5587
        %v5589 = vpop.f32.mrb[0].mxu0
        %v5590 = vpop.f32.mrb[0].mxu0
        %v5591 = vadd.f32 0.0, %v5590
        %v5592 = vpop.f32.mrb[0].mxu0
        %5593 = vmatprep.mubr.bf16.mxu0 0
        %5594 = vmatmul.mubr.bf16.gmra.mrb[0].mxu0 %v5533
        %v5595 = vpop.f32.mrb[0].mxu0
        %v5596 = vadd.f32 0.0, %v5595
        %v5597 = vpop.f32.mrb[0].mxu0
        %v5598 = vpop.f32.mrb[0].mxu0
        %v5599 = vadd.f32 0.0, %v5598
        %v5600 = vpop.f32.mrb[0].mxu0
        %5601 = vmatprep.mubr.bf16.mxu0 0
        %5602 = vmatmul.mubr.bf16.gmra.mrb[0].mxu0 %v5536
        %v5603 = vpop.f32.mrb[0].mxu0
        %v5604 = vadd.f32 0.0, %v5603
        %v5605 = vpop.f32.mrb[0].mxu0
        %v5606 = vpop.f32.mrb[0].mxu0
        %v5607 = vadd.f32 0.0, %v5606
        %v5608 = vpop.f32.mrb[0].mxu0
        %5609 = vmatprep.mubr.bf16.mxu0 0
        %5610 = vmatmul.mubr.bf16.gmra.mrb[0].mxu0 %v5539
        %v5611 = vpop.f32.mrb[0].mxu0
        %v5612 = vadd.f32 0.0, %v5611
        %v5613 = vpop.f32.mrb[0].mxu0
        %v5614 = vpop.f32.mrb[0].mxu0
        %v5615 = vadd.f32 0.0, %v5614
        %v5616 = vpop.f32.mrb[0].mxu0
        %5617 = vmatprep.mubr.bf16.mxu0 0
        %5618 = vmatmul.mubr.bf16.gmra.mrb[0].mxu0 %v5542
        %v5619 = vpop.f32.mrb[0].mxu0
        %v5620 = vadd.f32 0.0, %v5619
        %v5621 = vpop.f32.mrb[0].mxu0
        %v5622 = vpop.f32.mrb[0].mxu0
        %v5623 = vadd.f32 0.0, %v5622
        %v5624 = vpop.f32.mrb[0].mxu0
        %5625 = vmatprep.mubr.bf16.mxu0 0
        %5626 = vmatmul.mubr.bf16.gmra.mrb[0].mxu0 %v5545
        %v5627 = vpop.f32.mrb[0].mxu0
        %v5628 = vadd.f32 0.0, %v5627
        %v5629 = vpop.f32.mrb[0].mxu0
        %v5630 = vpop.f32.mrb[0].mxu0
        %v5631 = vadd.f32 0.0, %v5630
        %v5632 = vpop.f32.mrb[0].mxu0
        %5633 = vmatprep.mubr.bf16.mxu0 0
        %5634 = vmatmul.mubr.bf16.gmra.mrb[0].mxu0 %v5548
        %v5635 = vpop.f32.mrb[0].mxu0
        %v5636 = vadd.f32 0.0, %v5635
        %v5637 = vpop.f32.mrb[0].mxu0
        %v5638 = vpop.f32.mrb[0].mxu0
        %v5639 = vadd.f32 0.0, %v5638
        %v5640 = vpop.f32.mrb[0].mxu0
        %5641 = vmatprep.mubr.bf16.mxu0 0
        %5642 = vmatmul.mubr.bf16.gmra.mrb[0].mxu0 %v5551
        %v5643 = vpop.f32.mrb[0].mxu0
        %v5644 = vadd.f32 0.0, %v5643
        %v5645 = vpop.f32.mrb[0].mxu0
        %v5646 = vpop.f32.mrb[0].mxu0
        %v5647 = vadd.f32 0.0, %v5646
        %v5648 = vpop.f32.mrb[0].mxu0
        %5649 = vdwg.mxu0
        %v5650 = vadd.f32 %v5375, %v5588
        %v5651 = vadd.f32 %v5376, %v5591
        %v5652 = vadd.f32 %v5377, %v5596
        %v5653 = vadd.f32 %v5378, %v5599
        %v5654 = vadd.f32 %v5379, %v5604
        %v5655 = vadd.f32 %v5380, %v5607
        %v5656 = vadd.f32 %v5381, %v5612
        %v5657 = vadd.f32 %v5382, %v5615
        %v5658 = vadd.f32 %v5383, %v5620
        %v5659 = vadd.f32 %v5384, %v5623
        %v5660 = vadd.f32 %v5385, %v5628
        %v5661 = vadd.f32 %v5386, %v5631
        %v5662 = vadd.f32 %v5387, %v5636
        %v5663 = vadd.f32 %v5388, %v5639
        %v5664 = vadd.f32 %v5389, %v5644
        %v5665 = vadd.f32 %v5390, %v5647
        %5666 = vmatprep.subr.bf16.mxu0 0
        %5667 = vmatpush1.bf16.msra.mxu0 %v3871
        %5668 = vmatprep.subr.bf16.mxu0 0
        %5669 = vmatpush1.bf16.msra.mxu0 %v3872
        %5670 = vmatprep.subr.bf16.mxu0 0
        %5671 = vmatpush1.bf16.msra.mxu0 %v3873
        %5672 = vmatprep.subr.bf16.mxu0 0
        %5673 = vmatpush1.bf16.msra.mxu0 %v3874
        %5674 = vmatprep.subr.bf16.mxu0 0
        %5675 = vmatpush1.bf16.msra.mxu0 %v3875
        %5676 = vmatprep.subr.bf16.mxu0 0
        %5677 = vmatpush1.bf16.msra.mxu0 %v3876
        %5678 = vmatprep.subr.bf16.mxu0 0
        %5679 = vmatpush1.bf16.msra.mxu0 %v3877
        %5680 = vmatprep.subr.bf16.mxu0 0
        %5681 = vmatpush1.bf16.msra.mxu0 %v3878
        %5682 = vmatprep.subr.bf16.mxu0 0
        %5683 = vmatpush1.bf16.msra.mxu0 0
        %5684 = vmatprep.subr.bf16.mxu0 0
        %5685 = vmatpush1.bf16.msra.mxu0 0
        %5686 = vmatprep.subr.bf16.mxu0 0
        %5687 = vmatpush1.bf16.msra.mxu0 0
        %5688 = vmatprep.subr.bf16.mxu0 0
        %5689 = vmatpush1.bf16.msra.mxu0 0
        %5690 = vmatprep.subr.bf16.mxu0 0
        %5691 = vmatpush1.bf16.msra.mxu0 0
        %5692 = vmatprep.subr.bf16.mxu0 0
        %5693 = vmatpush1.bf16.msra.mxu0 0
        %5694 = vmatprep.subr.bf16.mxu0 0
        %5695 = vmatpush1.bf16.msra.mxu0 0
        %5696 = vmatprep.subr.bf16.mxu0 0
        %5697 = vmatpush1.bf16.msra.mxu0 0
        %5698 = vmatprep.mubr.bf16.mxu0 0
        %5699 = vmatmul.mubr.bf16.gmra.mrb[0].mxu0 %v3057
        %v5700 = vpop.f32.mrb[0].mxu0
        %v5701 = vadd.f32 0.0, %v5700
        %v5702 = vpop.f32.mrb[0].mxu0
        %v5703 = vpop.f32.mrb[0].mxu0
        %v5704 = vadd.f32 0.0, %v5703
        %v5705 = vpop.f32.mrb[0].mxu0
        %5706 = vmatprep.mubr.bf16.mxu0 0
        %5707 = vmatmul.mubr.bf16.gmra.mrb[0].mxu0 %v3058
        %v5708 = vpop.f32.mrb[0].mxu0
        %v5709 = vadd.f32 0.0, %v5708
        %v5710 = vpop.f32.mrb[0].mxu0
        %v5711 = vpop.f32.mrb[0].mxu0
        %v5712 = vadd.f32 0.0, %v5711
        %v5713 = vpop.f32.mrb[0].mxu0
        %5714 = vmatprep.mubr.bf16.mxu0 0
        %5715 = vmatmul.mubr.bf16.gmra.mrb[0].mxu0 %v3059
        %v5716 = vpop.f32.mrb[0].mxu0
        %v5717 = vadd.f32 0.0, %v5716
        %v5718 = vpop.f32.mrb[0].mxu0
        %v5719 = vpop.f32.mrb[0].mxu0
        %v5720 = vadd.f32 0.0, %v5719
        %v5721 = vpop.f32.mrb[0].mxu0
        %5722 = vmatprep.mubr.bf16.mxu0 0
        %5723 = vmatmul.mubr.bf16.gmra.mrb[0].mxu0 %v3060
        %v5724 = vpop.f32.mrb[0].mxu0
        %v5725 = vadd.f32 0.0, %v5724
        %v5726 = vpop.f32.mrb[0].mxu0
        %v5727 = vpop.f32.mrb[0].mxu0
        %v5728 = vadd.f32 0.0, %v5727
        %v5729 = vpop.f32.mrb[0].mxu0
        %5730 = vmatprep.mubr.bf16.mxu0 0
        %5731 = vmatmul.mubr.bf16.gmra.mrb[0].mxu0 %v3061
        %v5732 = vpop.f32.mrb[0].mxu0
        %v5733 = vadd.f32 0.0, %v5732
        %v5734 = vpop.f32.mrb[0].mxu0
        %v5735 = vpop.f32.mrb[0].mxu0
        %v5736 = vadd.f32 0.0, %v5735
        %v5737 = vpop.f32.mrb[0].mxu0
        %5738 = vmatprep.mubr.bf16.mxu0 0
        %5739 = vmatmul.mubr.bf16.gmra.mrb[0].mxu0 %v3062
        %v5740 = vpop.f32.mrb[0].mxu0
        %v5741 = vadd.f32 0.0, %v5740
        %v5742 = vpop.f32.mrb[0].mxu0
        %v5743 = vpop.f32.mrb[0].mxu0
        %v5744 = vadd.f32 0.0, %v5743
        %v5745 = vpop.f32.mrb[0].mxu0
        %5746 = vmatprep.mubr.bf16.mxu0 0
        %5747 = vmatmul.mubr.bf16.gmra.mrb[0].mxu0 %v3063
        %v5748 = vpop.f32.mrb[0].mxu0
        %v5749 = vadd.f32 0.0, %v5748
        %v5750 = vpop.f32.mrb[0].mxu0
        %v5751 = vpop.f32.mrb[0].mxu0
        %v5752 = vadd.f32 0.0, %v5751
        %v5753 = vpop.f32.mrb[0].mxu0
        %5754 = vmatprep.mubr.bf16.mxu0 0
        %5755 = vmatmul.mubr.bf16.gmra.mrb[0].mxu0 %v3064
        %v5756 = vpop.f32.mrb[0].mxu0
        %v5757 = vadd.f32 0.0, %v5756
        %v5758 = vpop.f32.mrb[0].mxu0
        %v5759 = vpop.f32.mrb[0].mxu0
        %v5760 = vadd.f32 0.0, %v5759
        %v5761 = vpop.f32.mrb[0].mxu0
        %5762 = vdwg.mxu0
        %v5763 = vpack.c.bf16 %v5704, %v5701
        %v5764 = vpack.c.bf16 %v5712, %v5709
        %v5765 = vpack.c.bf16 %v5720, %v5717
        %v5766 = vpack.c.bf16 %v5728, %v5725
        %v5767 = vpack.c.bf16 %v5736, %v5733
        %v5768 = vpack.c.bf16 %v5744, %v5741
        %v5769 = vpack.c.bf16 %v5752, %v5749
        %v5770 = vpack.c.bf16 %v5760, %v5757
        %s5771 = scalar_lea.vmem %s319, 224 [#allocation5]
        %v5772 = vld [vmem:[%s5771] sm:$0xf]
        %v5773 = vld [vmem:[%s5771 + $0x4] sm:$0xf]
        %v5774 = vld [vmem:[%s5771 + $0x8] sm:$0xf]
        %v5775 = vld [vmem:[%s5771 + $0xc] sm:$0xf]
        %v5776 = vld [vmem:[%s5771 + $0x10] sm:$0xf]
        %v5777 = vld [vmem:[%s5771 + $0x14] sm:$0xf]
        %v5778 = vld [vmem:[%s5771 + $0x18] sm:$0xf]
        %v5779 = vld [vmem:[%s5771 + $0x1c] sm:$0xf]
        %v5788 = vunpack.c.l.b16 %v5772
        %v5789 = vunpack.c.l.b16 %v5773
        %v5790 = vunpack.c.l.b16 %v5774
        %v5791 = vunpack.c.l.b16 %v5775
        %v5792 = vunpack.c.l.b16 %v5776
        %v5793 = vunpack.c.l.b16 %v5777
        %v5794 = vunpack.c.l.b16 %v5778
        %v5795 = vunpack.c.l.b16 %v5779
        %v5796 = vpack.c.b16 %v5789, %v5788
        %v5797 = vpack.c.b16 %v5791, %v5790
        %v5798 = vpack.c.b16 %v5793, %v5792
        %v5799 = vpack.c.b16 %v5795, %v5794
        %v5805 = vsel %vm1211, %v5763, 0
        %v5808 = vsel %vm1211, %v5764, 0
        %v5811 = vsel %vm1211, %v5765, 0
        %v5814 = vsel %vm1211, %v5766, 0
        %v5817 = vsel %vm1211, %v5767, 0
        %v5820 = vsel %vm1211, %v5768, 0
        %v5823 = vsel %vm1211, %v5769, 0
        %v5826 = vsel %vm1211, %v5770, 0
        %5828 = vmatprep.subr.bf16.mxu0 0
        %5829 = vmatpush1.bf16.msra.mxu0 %v5796
        %5830 = vmatprep.subr.bf16.mxu0 0
        %5831 = vmatpush1.bf16.msra.mxu0 %v5797
        %5832 = vmatprep.subr.bf16.mxu0 0
        %5833 = vmatpush1.bf16.msra.mxu0 %v5798
        %5834 = vmatprep.subr.bf16.mxu0 0
        %5835 = vmatpush1.bf16.msra.mxu0 %v5799
        %5836 = vmatprep.subr.bf16.mxu0 0
        %5837 = vmatpush1.bf16.msra.mxu0 0
        %5838 = vmatprep.subr.bf16.mxu0 0
        %5839 = vmatpush1.bf16.msra.mxu0 0
        %5840 = vmatprep.subr.bf16.mxu0 0
        %5841 = vmatpush1.bf16.msra.mxu0 0
        %5842 = vmatprep.subr.bf16.mxu0 0
        %5843 = vmatpush1.bf16.msra.mxu0 0
        %5844 = vmatprep.subr.bf16.mxu0 0
        %5845 = vmatpush1.bf16.msra.mxu0 0
        %5846 = vmatprep.subr.bf16.mxu0 0
        %5847 = vmatpush1.bf16.msra.mxu0 0
        %5848 = vmatprep.subr.bf16.mxu0 0
        %5849 = vmatpush1.bf16.msra.mxu0 0
        %5850 = vmatprep.subr.bf16.mxu0 0
        %5851 = vmatpush1.bf16.msra.mxu0 0
        %5852 = vmatprep.subr.bf16.mxu0 0
        %5853 = vmatpush1.bf16.msra.mxu0 0
        %5854 = vmatprep.subr.bf16.mxu0 0
        %5855 = vmatpush1.bf16.msra.mxu0 0
        %5856 = vmatprep.subr.bf16.mxu0 0
        %5857 = vmatpush1.bf16.msra.mxu0 0
        %5858 = vmatprep.subr.bf16.mxu0 0
        %5859 = vmatpush1.bf16.msra.mxu0 0
        %5860 = vmatprep.mubr.bf16.mxu0 0
        %5861 = vmatmul.mubr.bf16.gmra.mrb[0].mxu0 %v5805
        %v5862 = vpop.f32.mrb[0].mxu0
        %v5863 = vadd.f32 0.0, %v5862
        %v5864 = vpop.f32.mrb[0].mxu0
        %v5865 = vpop.f32.mrb[0].mxu0
        %v5866 = vadd.f32 0.0, %v5865
        %v5867 = vpop.f32.mrb[0].mxu0
        %5868 = vmatprep.mubr.bf16.mxu0 0
        %5869 = vmatmul.mubr.bf16.gmra.mrb[0].mxu0 %v5808
        %v5870 = vpop.f32.mrb[0].mxu0
        %v5871 = vadd.f32 0.0, %v5870
        %v5872 = vpop.f32.mrb[0].mxu0
        %v5873 = vpop.f32.mrb[0].mxu0
        %v5874 = vadd.f32 0.0, %v5873
        %v5875 = vpop.f32.mrb[0].mxu0
        %5876 = vmatprep.mubr.bf16.mxu0 0
        %5877 = vmatmul.mubr.bf16.gmra.mrb[0].mxu0 %v5811
        %v5878 = vpop.f32.mrb[0].mxu0
        %v5879 = vadd.f32 0.0, %v5878
        %v5880 = vpop.f32.mrb[0].mxu0
        %v5881 = vpop.f32.mrb[0].mxu0
        %v5882 = vadd.f32 0.0, %v5881
        %v5883 = vpop.f32.mrb[0].mxu0
        %5884 = vmatprep.mubr.bf16.mxu0 0
        %5885 = vmatmul.mubr.bf16.gmra.mrb[0].mxu0 %v5814
        %v5886 = vpop.f32.mrb[0].mxu0
        %v5887 = vadd.f32 0.0, %v5886
        %v5888 = vpop.f32.mrb[0].mxu0
        %v5889 = vpop.f32.mrb[0].mxu0
        %v5890 = vadd.f32 0.0, %v5889
        %v5891 = vpop.f32.mrb[0].mxu0
        %5892 = vmatprep.mubr.bf16.mxu0 0
        %5893 = vmatmul.mubr.bf16.gmra.mrb[0].mxu0 %v5817
        %v5894 = vpop.f32.mrb[0].mxu0
        %v5895 = vadd.f32 0.0, %v5894
        %v5896 = vpop.f32.mrb[0].mxu0
        %v5897 = vpop.f32.mrb[0].mxu0
        %v5898 = vadd.f32 0.0, %v5897
        %v5899 = vpop.f32.mrb[0].mxu0
        %5900 = vmatprep.mubr.bf16.mxu0 0
        %5901 = vmatmul.mubr.bf16.gmra.mrb[0].mxu0 %v5820
        %v5902 = vpop.f32.mrb[0].mxu0
        %v5903 = vadd.f32 0.0, %v5902
        %v5904 = vpop.f32.mrb[0].mxu0
        %v5905 = vpop.f32.mrb[0].mxu0
        %v5906 = vadd.f32 0.0, %v5905
        %v5907 = vpop.f32.mrb[0].mxu0
        %5908 = vmatprep.mubr.bf16.mxu0 0
        %5909 = vmatmul.mubr.bf16.gmra.mrb[0].mxu0 %v5823
        %v5910 = vpop.f32.mrb[0].mxu0
        %v5911 = vadd.f32 0.0, %v5910
        %v5912 = vpop.f32.mrb[0].mxu0
        %v5913 = vpop.f32.mrb[0].mxu0
        %v5914 = vadd.f32 0.0, %v5913
        %v5915 = vpop.f32.mrb[0].mxu0
        %5916 = vmatprep.mubr.bf16.mxu0 0
        %5917 = vmatmul.mubr.bf16.gmra.mrb[0].mxu0 %v5826
        %v5918 = vpop.f32.mrb[0].mxu0
        %v5919 = vadd.f32 0.0, %v5918
        %v5920 = vpop.f32.mrb[0].mxu0
        %v5921 = vpop.f32.mrb[0].mxu0
        %v5922 = vadd.f32 0.0, %v5921
        %v5923 = vpop.f32.mrb[0].mxu0
        %5924 = vdwg.mxu0
        %v5925 = vadd.f32 %v5650, %v5863
        %v5926 = vadd.f32 %v5651, %v5866
        %v5927 = vadd.f32 %v5652, %v5871
        %v5928 = vadd.f32 %v5653, %v5874
        %v5929 = vadd.f32 %v5654, %v5879
        %v5930 = vadd.f32 %v5655, %v5882
        %v5931 = vadd.f32 %v5656, %v5887
        %v5932 = vadd.f32 %v5657, %v5890
        %v5933 = vadd.f32 %v5658, %v5895
        %v5934 = vadd.f32 %v5659, %v5898
        %v5935 = vadd.f32 %v5660, %v5903
        %v5936 = vadd.f32 %v5661, %v5906
        %v5937 = vadd.f32 %v5662, %v5911
        %v5938 = vadd.f32 %v5663, %v5914
        %v5939 = vadd.f32 %v5664, %v5919
        %v5940 = vadd.f32 %v5665, %v5922
        %5941 = vmatprep.subr.bf16.mxu0 0
        %5942 = vmatpush1.bf16.msra.mxu0 %v3871
        %5943 = vmatprep.subr.bf16.mxu0 0
        %5944 = vmatpush1.bf16.msra.mxu0 %v3872
        %5945 = vmatprep.subr.bf16.mxu0 0
        %5946 = vmatpush1.bf16.msra.mxu0 %v3873
        %5947 = vmatprep.subr.bf16.mxu0 0
        %5948 = vmatpush1.bf16.msra.mxu0 %v3874
        %5949 = vmatprep.subr.bf16.mxu0 0
        %5950 = vmatpush1.bf16.msra.mxu0 %v3875
        %5951 = vmatprep.subr.bf16.mxu0 0
        %5952 = vmatpush1.bf16.msra.mxu0 %v3876
        %5953 = vmatprep.subr.bf16.mxu0 0
        %5954 = vmatpush1.bf16.msra.mxu0 %v3877
        %5955 = vmatprep.subr.bf16.mxu0 0
        %5956 = vmatpush1.bf16.msra.mxu0 %v3878
        %5957 = vmatprep.subr.bf16.mxu0 0
        %5958 = vmatpush1.bf16.msra.mxu0 0
        %5959 = vmatprep.subr.bf16.mxu0 0
        %5960 = vmatpush1.bf16.msra.mxu0 0
        %5961 = vmatprep.subr.bf16.mxu0 0
        %5962 = vmatpush1.bf16.msra.mxu0 0
        %5963 = vmatprep.subr.bf16.mxu0 0
        %5964 = vmatpush1.bf16.msra.mxu0 0
        %5965 = vmatprep.subr.bf16.mxu0 0
        %5966 = vmatpush1.bf16.msra.mxu0 0
        %5967 = vmatprep.subr.bf16.mxu0 0
        %5968 = vmatpush1.bf16.msra.mxu0 0
        %5969 = vmatprep.subr.bf16.mxu0 0
        %5970 = vmatpush1.bf16.msra.mxu0 0
        %5971 = vmatprep.subr.bf16.mxu0 0
        %5972 = vmatpush1.bf16.msra.mxu0 0
        %5973 = vmatprep.mubr.bf16.mxu0 0
        %5974 = vmatmul.mubr.bf16.gmra.mrb[0].mxu0 %v3397
        %v5975 = vpop.f32.mrb[0].mxu0
        %v5976 = vadd.f32 0.0, %v5975
        %v5977 = vpop.f32.mrb[0].mxu0
        %v5978 = vpop.f32.mrb[0].mxu0
        %v5979 = vadd.f32 0.0, %v5978
        %v5980 = vpop.f32.mrb[0].mxu0
        %5981 = vmatprep.mubr.bf16.mxu0 0
        %5982 = vmatmul.mubr.bf16.gmra.mrb[0].mxu0 %v3398
        %v5983 = vpop.f32.mrb[0].mxu0
        %v5984 = vadd.f32 0.0, %v5983
        %v5985 = vpop.f32.mrb[0].mxu0
        %v5986 = vpop.f32.mrb[0].mxu0
        %v5987 = vadd.f32 0.0, %v5986
        %v5988 = vpop.f32.mrb[0].mxu0
        %5989 = vmatprep.mubr.bf16.mxu0 0
        %5990 = vmatmul.mubr.bf16.gmra.mrb[0].mxu0 %v3399
        %v5991 = vpop.f32.mrb[0].mxu0
        %v5992 = vadd.f32 0.0, %v5991
        %v5993 = vpop.f32.mrb[0].mxu0
        %v5994 = vpop.f32.mrb[0].mxu0
        %v5995 = vadd.f32 0.0, %v5994
        %v5996 = vpop.f32.mrb[0].mxu0
        %5997 = vmatprep.mubr.bf16.mxu0 0
        %5998 = vmatmul.mubr.bf16.gmra.mrb[0].mxu0 %v3400
        %v5999 = vpop.f32.mrb[0].mxu0
        %v6000 = vadd.f32 0.0, %v5999
        %v6001 = vpop.f32.mrb[0].mxu0
        %v6002 = vpop.f32.mrb[0].mxu0
        %v6003 = vadd.f32 0.0, %v6002
        %v6004 = vpop.f32.mrb[0].mxu0
        %6005 = vmatprep.mubr.bf16.mxu0 0
        %6006 = vmatmul.mubr.bf16.gmra.mrb[0].mxu0 %v3401
        %v6007 = vpop.f32.mrb[0].mxu0
        %v6008 = vadd.f32 0.0, %v6007
        %v6009 = vpop.f32.mrb[0].mxu0
        %v6010 = vpop.f32.mrb[0].mxu0
        %v6011 = vadd.f32 0.0, %v6010
        %v6012 = vpop.f32.mrb[0].mxu0
        %6013 = vmatprep.mubr.bf16.mxu0 0
        %6014 = vmatmul.mubr.bf16.gmra.mrb[0].mxu0 %v3402
        %v6015 = vpop.f32.mrb[0].mxu0
        %v6016 = vadd.f32 0.0, %v6015
        %v6017 = vpop.f32.mrb[0].mxu0
        %v6018 = vpop.f32.mrb[0].mxu0
        %v6019 = vadd.f32 0.0, %v6018
        %v6020 = vpop.f32.mrb[0].mxu0
        %6021 = vmatprep.mubr.bf16.mxu0 0
        %6022 = vmatmul.mubr.bf16.gmra.mrb[0].mxu0 %v3403
        %v6023 = vpop.f32.mrb[0].mxu0
        %v6024 = vadd.f32 0.0, %v6023
        %v6025 = vpop.f32.mrb[0].mxu0
        %v6026 = vpop.f32.mrb[0].mxu0
        %v6027 = vadd.f32 0.0, %v6026
        %v6028 = vpop.f32.mrb[0].mxu0
        %6029 = vmatprep.mubr.bf16.mxu0 0
        %6030 = vmatmul.mubr.bf16.gmra.mrb[0].mxu0 %v3404
        %v6031 = vpop.f32.mrb[0].mxu0
        %v6032 = vadd.f32 0.0, %v6031
        %v6033 = vpop.f32.mrb[0].mxu0
        %v6034 = vpop.f32.mrb[0].mxu0
        %v6035 = vadd.f32 0.0, %v6034
        %v6036 = vpop.f32.mrb[0].mxu0
        %6037 = vdwg.mxu0
        %v6038 = vpack.c.bf16 %v5979, %v5976
        %v6039 = vpack.c.bf16 %v5987, %v5984
        %v6040 = vpack.c.bf16 %v5995, %v5992
        %v6041 = vpack.c.bf16 %v6003, %v6000
        %v6042 = vpack.c.bf16 %v6011, %v6008
        %v6043 = vpack.c.bf16 %v6019, %v6016
        %v6044 = vpack.c.bf16 %v6027, %v6024
        %v6045 = vpack.c.bf16 %v6035, %v6032
        %s6046 = scalar_lea.vmem %s319, 256 [#allocation5]
        %v6047 = vld [vmem:[%s6046] sm:$0xf]
        %v6048 = vld [vmem:[%s6046 + $0x4] sm:$0xf]
        %v6049 = vld [vmem:[%s6046 + $0x8] sm:$0xf]
        %v6050 = vld [vmem:[%s6046 + $0xc] sm:$0xf]
        %v6051 = vld [vmem:[%s6046 + $0x10] sm:$0xf]
        %v6052 = vld [vmem:[%s6046 + $0x14] sm:$0xf]
        %v6053 = vld [vmem:[%s6046 + $0x18] sm:$0xf]
        %v6054 = vld [vmem:[%s6046 + $0x1c] sm:$0xf]
        %v6063 = vunpack.c.l.b16 %v6047
        %v6064 = vunpack.c.l.b16 %v6048
        %v6065 = vunpack.c.l.b16 %v6049
        %v6066 = vunpack.c.l.b16 %v6050
        %v6067 = vunpack.c.l.b16 %v6051
        %v6068 = vunpack.c.l.b16 %v6052
        %v6069 = vunpack.c.l.b16 %v6053
        %v6070 = vunpack.c.l.b16 %v6054
        %v6071 = vpack.c.b16 %v6064, %v6063
        %v6072 = vpack.c.b16 %v6066, %v6065
        %v6073 = vpack.c.b16 %v6068, %v6067
        %v6074 = vpack.c.b16 %v6070, %v6069
        %v6080 = vsel %vm1211, %v6038, 0
        %v6083 = vsel %vm1211, %v6039, 0
        %v6086 = vsel %vm1211, %v6040, 0
        %v6089 = vsel %vm1211, %v6041, 0
        %v6092 = vsel %vm1211, %v6042, 0
        %v6095 = vsel %vm1211, %v6043, 0
        %v6098 = vsel %vm1211, %v6044, 0
        %v6101 = vsel %vm1211, %v6045, 0
        %6103 = vmatprep.subr.bf16.mxu0 0
        %6104 = vmatpush1.bf16.msra.mxu0 %v6071
        %6105 = vmatprep.subr.bf16.mxu0 0
        %6106 = vmatpush1.bf16.msra.mxu0 %v6072
        %6107 = vmatprep.subr.bf16.mxu0 0
        %6108 = vmatpush1.bf16.msra.mxu0 %v6073
        %6109 = vmatprep.subr.bf16.mxu0 0
        %6110 = vmatpush1.bf16.msra.mxu0 %v6074
        %6111 = vmatprep.subr.bf16.mxu0 0
        %6112 = vmatpush1.bf16.msra.mxu0 0
        %6113 = vmatprep.subr.bf16.mxu0 0
        %6114 = vmatpush1.bf16.msra.mxu0 0
        %6115 = vmatprep.subr.bf16.mxu0 0
        %6116 = vmatpush1.bf16.msra.mxu0 0
        %6117 = vmatprep.subr.bf16.mxu0 0
        %6118 = vmatpush1.bf16.msra.mxu0 0
        %6119 = vmatprep.subr.bf16.mxu0 0
        %6120 = vmatpush1.bf16.msra.mxu0 0
        %6121 = vmatprep.subr.bf16.mxu0 0
        %6122 = vmatpush1.bf16.msra.mxu0 0
        %6123 = vmatprep.subr.bf16.mxu0 0
        %6124 = vmatpush1.bf16.msra.mxu0 0
        %6125 = vmatprep.subr.bf16.mxu0 0
        %6126 = vmatpush1.bf16.msra.mxu0 0
        %6127 = vmatprep.subr.bf16.mxu0 0
        %6128 = vmatpush1.bf16.msra.mxu0 0
        %6129 = vmatprep.subr.bf16.mxu0 0
        %6130 = vmatpush1.bf16.msra.mxu0 0
        %6131 = vmatprep.subr.bf16.mxu0 0
        %6132 = vmatpush1.bf16.msra.mxu0 0
        %6133 = vmatprep.subr.bf16.mxu0 0
        %6134 = vmatpush1.bf16.msra.mxu0 0
        %6135 = vmatprep.mubr.bf16.mxu0 0
        %6136 = vmatmul.mubr.bf16.gmra.mrb[0].mxu0 %v6080
        %v6137 = vpop.f32.mrb[0].mxu0
        %v6138 = vadd.f32 0.0, %v6137
        %v6139 = vpop.f32.mrb[0].mxu0
        %v6140 = vpop.f32.mrb[0].mxu0
        %v6141 = vadd.f32 0.0, %v6140
        %v6142 = vpop.f32.mrb[0].mxu0
        %6143 = vmatprep.mubr.bf16.mxu0 0
        %6144 = vmatmul.mubr.bf16.gmra.mrb[0].mxu0 %v6083
        %v6145 = vpop.f32.mrb[0].mxu0
        %v6146 = vadd.f32 0.0, %v6145
        %v6147 = vpop.f32.mrb[0].mxu0
        %v6148 = vpop.f32.mrb[0].mxu0
        %v6149 = vadd.f32 0.0, %v6148
        %v6150 = vpop.f32.mrb[0].mxu0
        %6151 = vmatprep.mubr.bf16.mxu0 0
        %6152 = vmatmul.mubr.bf16.gmra.mrb[0].mxu0 %v6086
        %v6153 = vpop.f32.mrb[0].mxu0
        %v6154 = vadd.f32 0.0, %v6153
        %v6155 = vpop.f32.mrb[0].mxu0
        %v6156 = vpop.f32.mrb[0].mxu0
        %v6157 = vadd.f32 0.0, %v6156
        %v6158 = vpop.f32.mrb[0].mxu0
        %6159 = vmatprep.mubr.bf16.mxu0 0
        %6160 = vmatmul.mubr.bf16.gmra.mrb[0].mxu0 %v6089
        %v6161 = vpop.f32.mrb[0].mxu0
        %v6162 = vadd.f32 0.0, %v6161
        %v6163 = vpop.f32.mrb[0].mxu0
        %v6164 = vpop.f32.mrb[0].mxu0
        %v6165 = vadd.f32 0.0, %v6164
        %v6166 = vpop.f32.mrb[0].mxu0
        %6167 = vmatprep.mubr.bf16.mxu0 0
        %6168 = vmatmul.mubr.bf16.gmra.mrb[0].mxu0 %v6092
        %v6169 = vpop.f32.mrb[0].mxu0
        %v6170 = vadd.f32 0.0, %v6169
        %v6171 = vpop.f32.mrb[0].mxu0
        %v6172 = vpop.f32.mrb[0].mxu0
        %v6173 = vadd.f32 0.0, %v6172
        %v6174 = vpop.f32.mrb[0].mxu0
        %6175 = vmatprep.mubr.bf16.mxu0 0
        %6176 = vmatmul.mubr.bf16.gmra.mrb[0].mxu0 %v6095
        %v6177 = vpop.f32.mrb[0].mxu0
        %v6178 = vadd.f32 0.0, %v6177
        %v6179 = vpop.f32.mrb[0].mxu0
        %v6180 = vpop.f32.mrb[0].mxu0
        %v6181 = vadd.f32 0.0, %v6180
        %v6182 = vpop.f32.mrb[0].mxu0
        %6183 = vmatprep.mubr.bf16.mxu0 0
        %6184 = vmatmul.mubr.bf16.gmra.mrb[0].mxu0 %v6098
        %v6185 = vpop.f32.mrb[0].mxu0
        %v6186 = vadd.f32 0.0, %v6185
        %v6187 = vpop.f32.mrb[0].mxu0
        %v6188 = vpop.f32.mrb[0].mxu0
        %v6189 = vadd.f32 0.0, %v6188
        %v6190 = vpop.f32.mrb[0].mxu0
        %6191 = vmatprep.mubr.bf16.mxu0 0
        %6192 = vmatmul.mubr.bf16.gmra.mrb[0].mxu0 %v6101
        %v6193 = vpop.f32.mrb[0].mxu0
        %v6194 = vadd.f32 0.0, %v6193
        %v6195 = vpop.f32.mrb[0].mxu0
        %v6196 = vpop.f32.mrb[0].mxu0
        %v6197 = vadd.f32 0.0, %v6196
        %v6198 = vpop.f32.mrb[0].mxu0
        %6199 = vdwg.mxu0
        %v6200 = vadd.f32 %v5925, %v6138
        %v6201 = vadd.f32 %v5926, %v6141
        %v6202 = vadd.f32 %v5927, %v6146
        %v6203 = vadd.f32 %v5928, %v6149
        %v6204 = vadd.f32 %v5929, %v6154
        %v6205 = vadd.f32 %v5930, %v6157
        %v6206 = vadd.f32 %v5931, %v6162
        %v6207 = vadd.f32 %v5932, %v6165
        %v6208 = vadd.f32 %v5933, %v6170
        %v6209 = vadd.f32 %v5934, %v6173
        %v6210 = vadd.f32 %v5935, %v6178
        %v6211 = vadd.f32 %v5936, %v6181
        %v6212 = vadd.f32 %v5937, %v6186
        %v6213 = vadd.f32 %v5938, %v6189
        %v6214 = vadd.f32 %v5939, %v6194
        %v6215 = vadd.f32 %v5940, %v6197
        %v6216 = vsel %vm1211, %v6200, 0.0
        %v6217 = vsel %vm1211, %v6201, 0.0
        %v6218 = vadd.f32 %v6216, %v6217
        %v6219 = vsel %vm1211, %v6202, 0.0
        %v6220 = vadd.f32 %v6218, %v6219
        %v6221 = vsel %vm1211, %v6203, 0.0
        %v6222 = vadd.f32 %v6220, %v6221
        %v6223 = vsel %vm1211, %v6204, 0.0
        %v6224 = vadd.f32 %v6222, %v6223
        %v6225 = vsel %vm1211, %v6205, 0.0
        %v6226 = vadd.f32 %v6224, %v6225
        %v6227 = vsel %vm1211, %v6206, 0.0
        %v6228 = vadd.f32 %v6226, %v6227
        %v6229 = vsel %vm1211, %v6207, 0.0
        %v6230 = vadd.f32 %v6228, %v6229
        %v6231 = vsel %vm1211, %v6208, 0.0
        %v6232 = vadd.f32 %v6230, %v6231
        %v6233 = vsel %vm1211, %v6209, 0.0
        %v6234 = vadd.f32 %v6232, %v6233
        %v6235 = vsel %vm1211, %v6210, 0.0
        %v6236 = vadd.f32 %v6234, %v6235
        %v6237 = vsel %vm1211, %v6211, 0.0
        %v6238 = vadd.f32 %v6236, %v6237
        %v6239 = vsel %vm1211, %v6212, 0.0
        %v6240 = vadd.f32 %v6238, %v6239
        %v6241 = vsel %vm1211, %v6213, 0.0
        %v6242 = vadd.f32 %v6240, %v6241
        %v6243 = vsel %vm1211, %v6214, 0.0
        %v6244 = vadd.f32 %v6242, %v6243
        %v6245 = vsel %vm1211, %v6215, 0.0
        %v6246 = vadd.f32 %v6244, %v6245
        %v6247 = vrot.slane %v6246, 4
        %v6248 = vadd.f32 %v6246, %v6247
        %v6249 = vrot.slane %v6248, 2
        %v6250 = vadd.f32 %v6248, %v6249
        %v6251 = vrot.slane %v6250, 1
        %v6252 = vadd.f32 %v6250, %v6251
        %v6253 = vmul.f32 %v6252, %v3725
        %v6254 = vsub.f32 %v6200, %v6253
        %v6255 = vsub.f32 %v6201, %v6253
        %v6256 = vsub.f32 %v6202, %v6253
        %v6257 = vsub.f32 %v6203, %v6253
        %v6258 = vsub.f32 %v6204, %v6253
        %v6259 = vsub.f32 %v6205, %v6253
        %v6260 = vsub.f32 %v6206, %v6253
        %v6261 = vsub.f32 %v6207, %v6253
        %v6262 = vsub.f32 %v6208, %v6253
        %v6263 = vsub.f32 %v6209, %v6253
        %v6264 = vsub.f32 %v6210, %v6253
        %v6265 = vsub.f32 %v6211, %v6253
        %v6266 = vsub.f32 %v6212, %v6253
        %v6267 = vsub.f32 %v6213, %v6253
        %v6268 = vsub.f32 %v6214, %v6253
        %v6269 = vsub.f32 %v6215, %v6253
        %v6270 = vmul.f32 %v6254, %v6254
        %v6271 = vmul.f32 %v6255, %v6255
        %v6272 = vmul.f32 %v6256, %v6256
        %v6273 = vmul.f32 %v6257, %v6257
        %v6274 = vmul.f32 %v6258, %v6258
        %v6275 = vmul.f32 %v6259, %v6259
        %v6276 = vmul.f32 %v6260, %v6260
        %v6277 = vmul.f32 %v6261, %v6261
        %v6278 = vmul.f32 %v6262, %v6262
        %v6279 = vmul.f32 %v6263, %v6263
        %v6280 = vmul.f32 %v6264, %v6264
        %v6281 = vmul.f32 %v6265, %v6265
        %v6282 = vmul.f32 %v6266, %v6266
        %v6283 = vmul.f32 %v6267, %v6267
        %v6284 = vmul.f32 %v6268, %v6268
        %v6285 = vmul.f32 %v6269, %v6269
        %v6286 = vsel %vm1211, %v6270, 0.0
        %v6287 = vsel %vm1211, %v6271, 0.0
        %v6288 = vadd.f32 %v6286, %v6287
        %v6289 = vsel %vm1211, %v6272, 0.0
        %v6290 = vadd.f32 %v6288, %v6289
        %v6291 = vsel %vm1211, %v6273, 0.0
        %v6292 = vadd.f32 %v6290, %v6291
        %v6293 = vsel %vm1211, %v6274, 0.0
        %v6294 = vadd.f32 %v6292, %v6293
        %v6295 = vsel %vm1211, %v6275, 0.0
        %v6296 = vadd.f32 %v6294, %v6295
        %v6297 = vsel %vm1211, %v6276, 0.0
        %v6298 = vadd.f32 %v6296, %v6297
        %v6299 = vsel %vm1211, %v6277, 0.0
        %v6300 = vadd.f32 %v6298, %v6299
        %v6301 = vsel %vm1211, %v6278, 0.0
        %v6302 = vadd.f32 %v6300, %v6301
        %v6303 = vsel %vm1211, %v6279, 0.0
        %v6304 = vadd.f32 %v6302, %v6303
        %v6305 = vsel %vm1211, %v6280, 0.0
        %v6306 = vadd.f32 %v6304, %v6305
        %v6307 = vsel %vm1211, %v6281, 0.0
        %v6308 = vadd.f32 %v6306, %v6307
        %v6309 = vsel %vm1211, %v6282, 0.0
        %v6310 = vadd.f32 %v6308, %v6309
        %v6311 = vsel %vm1211, %v6283, 0.0
        %v6312 = vadd.f32 %v6310, %v6311
        %v6313 = vsel %vm1211, %v6284, 0.0
        %v6314 = vadd.f32 %v6312, %v6313
        %v6315 = vsel %vm1211, %v6285, 0.0
        %v6316 = vadd.f32 %v6314, %v6315
        %v6317 = vrot.slane %v6316, 4
        %v6318 = vadd.f32 %v6316, %v6317
        %v6319 = vrot.slane %v6318, 2
        %v6320 = vadd.f32 %v6318, %v6319
        %v6321 = vrot.slane %v6320, 1
        %v6322 = vadd.f32 %v6320, %v6321
        %v6323 = vmul.f32 %v6322, %v3725
        %v6324 = vadd.f32 %v6323, 1e-05
        %v6325 = vrsqrt.pop %v6324
        %v6326 = vmul.f32 %v6254, %v6325
        %v6327 = vmul.f32 %v6255, %v6325
        %v6328 = vmul.f32 %v6256, %v6325
        %v6329 = vmul.f32 %v6257, %v6325
        %v6330 = vmul.f32 %v6258, %v6325
        %v6331 = vmul.f32 %v6259, %v6325
        %v6332 = vmul.f32 %v6260, %v6325
        %v6333 = vmul.f32 %v6261, %v6325
        %v6334 = vmul.f32 %v6262, %v6325
        %v6335 = vmul.f32 %v6263, %v6325
        %v6336 = vmul.f32 %v6264, %v6325
        %v6337 = vmul.f32 %v6265, %v6325
        %v6338 = vmul.f32 %v6266, %v6325
        %v6339 = vmul.f32 %v6267, %v6325
        %v6340 = vmul.f32 %v6268, %v6325
        %v6341 = vmul.f32 %v6269, %v6325
        %v6342 = vlaneseq
        %v6343 = vshrl.u32 %v6342, 7
        %v6344 = vsub.s32 2, %v6343
        %v6345 = vrot.slane %v830, %v6344
        %v6346 = vmul.f32 %v6326, %v6345
        %v6347 = vmul.f32 %v6327, %v6345
        %v6348 = vmul.f32 %v6328, %v6345
        %v6349 = vmul.f32 %v6329, %v6345
        %v6350 = vmul.f32 %v6330, %v6345
        %v6351 = vmul.f32 %v6331, %v6345
        %v6352 = vmul.f32 %v6332, %v6345
        %v6353 = vmul.f32 %v6333, %v6345
        %v6354 = vmul.f32 %v6334, %v6345
        %v6355 = vmul.f32 %v6335, %v6345
        %v6356 = vmul.f32 %v6336, %v6345
        %v6357 = vmul.f32 %v6337, %v6345
        %v6358 = vmul.f32 %v6338, %v6345
        %v6359 = vmul.f32 %v6339, %v6345
        %v6360 = vmul.f32 %v6340, %v6345
        %v6361 = vmul.f32 %v6341, %v6345
        %v6362 = vlaneseq
        %v6363 = vshrl.u32 %v6362, 7
        %v6364 = vsub.s32 3, %v6363
        %v6365 = vrot.slane %v830, %v6364
        %v6366 = vadd.f32 %v6346, %v6365
        %v6367 = vadd.f32 %v6347, %v6365
        %v6368 = vadd.f32 %v6348, %v6365
        %v6369 = vadd.f32 %v6349, %v6365
        %v6370 = vadd.f32 %v6350, %v6365
        %v6371 = vadd.f32 %v6351, %v6365
        %v6372 = vadd.f32 %v6352, %v6365
        %v6373 = vadd.f32 %v6353, %v6365
        %v6374 = vadd.f32 %v6354, %v6365
        %v6375 = vadd.f32 %v6355, %v6365
        %v6376 = vadd.f32 %v6356, %v6365
        %v6377 = vadd.f32 %v6357, %v6365
        %v6378 = vadd.f32 %v6358, %v6365
        %v6379 = vadd.f32 %v6359, %v6365
        %v6380 = vadd.f32 %v6360, %v6365
        %v6381 = vadd.f32 %v6361, %v6365
        %v6382 = vld [vmem:[%s370] sm:$0xf]
        %v6383 = vld [vmem:[%s370 + $0x4] sm:$0xf]
        %v6384 = vld [vmem:[%s370 + $0x8] sm:$0xf]
        %v6385 = vld [vmem:[%s370 + $0xc] sm:$0xf]
        %v6386 = vld [vmem:[%s370 + $0x10] sm:$0xf]
        %v6387 = vld [vmem:[%s370 + $0x14] sm:$0xf]
        %v6388 = vld [vmem:[%s370 + $0x18] sm:$0xf]
        %v6389 = vld [vmem:[%s370 + $0x1c] sm:$0xf]
        %v6398 = vunpack.c.l.b16 %v6382
        %v6399 = vunpack.c.l.b16 %v6383
        %v6400 = vunpack.c.l.b16 %v6384
        %v6401 = vunpack.c.l.b16 %v6385
        %v6402 = vunpack.c.l.b16 %v6386
        %v6403 = vunpack.c.l.b16 %v6387
        %v6404 = vunpack.c.l.b16 %v6388
        %v6405 = vunpack.c.l.b16 %v6389
        %v6406 = vpack.c.b16 %v6399, %v6398
        %v6407 = vpack.c.b16 %v6401, %v6400
        %v6408 = vpack.c.b16 %v6403, %v6402
        %v6409 = vpack.c.b16 %v6405, %v6404
        %6414 = vmatprep.subr.bf16.mxu0 0
        %6415 = vmatpush1.bf16.msra.mxu0 %v6406
        %6416 = vmatprep.subr.bf16.mxu0 0
        %6417 = vmatpush1.bf16.msra.mxu0 %v6407
        %6418 = vmatprep.subr.bf16.mxu0 0
        %6419 = vmatpush1.bf16.msra.mxu0 %v6408
        %6420 = vmatprep.subr.bf16.mxu0 0
        %6421 = vmatpush1.bf16.msra.mxu0 %v6409
        %6422 = vmatprep.subr.bf16.mxu0 0
        %6423 = vmatpush1.bf16.msra.mxu0 0
        %6424 = vmatprep.subr.bf16.mxu0 0
        %6425 = vmatpush1.bf16.msra.mxu0 0
        %6426 = vmatprep.subr.bf16.mxu0 0
        %6427 = vmatpush1.bf16.msra.mxu0 0
        %6428 = vmatprep.subr.bf16.mxu0 0
        %6429 = vmatpush1.bf16.msra.mxu0 0
        %6430 = vmatprep.subr.bf16.mxu0 0
        %6431 = vmatpush1.bf16.msra.mxu0 0
        %6432 = vmatprep.subr.bf16.mxu0 0
        %6433 = vmatpush1.bf16.msra.mxu0 0
        %6434 = vmatprep.subr.bf16.mxu0 0
        %6435 = vmatpush1.bf16.msra.mxu0 0
        %6436 = vmatprep.subr.bf16.mxu0 0
        %6437 = vmatpush1.bf16.msra.mxu0 0
        %6438 = vmatprep.subr.bf16.mxu0 0
        %6439 = vmatpush1.bf16.msra.mxu0 0
        %6440 = vmatprep.subr.bf16.mxu0 0
        %6441 = vmatpush1.bf16.msra.mxu0 0
        %6442 = vmatprep.subr.bf16.mxu0 0
        %6443 = vmatpush1.bf16.msra.mxu0 0
        %6444 = vmatprep.subr.bf16.mxu0 0
        %6445 = vmatpush1.bf16.msra.mxu0 0
        %6446 = vmatprep.mubr.bf16.mxu0 0
        %6447 = vmatmul.mubr.bf16.gmra.mrb[0].mxu0 %v2192
        %v6448 = vpop.f32.mrb[0].mxu0
        %v6449 = vadd.f32 0.0, %v6448
        %v6450 = vpop.f32.mrb[0].mxu0
        %v6451 = vpop.f32.mrb[0].mxu0
        %v6452 = vadd.f32 0.0, %v6451
        %v6453 = vpop.f32.mrb[0].mxu0
        %6454 = vmatprep.mubr.bf16.mxu0 0
        %6455 = vmatmul.mubr.bf16.gmra.mrb[0].mxu0 %v2195
        %v6456 = vpop.f32.mrb[0].mxu0
        %v6457 = vadd.f32 0.0, %v6456
        %v6458 = vpop.f32.mrb[0].mxu0
        %v6459 = vpop.f32.mrb[0].mxu0
        %v6460 = vadd.f32 0.0, %v6459
        %v6461 = vpop.f32.mrb[0].mxu0
        %6462 = vmatprep.mubr.bf16.mxu0 0
        %6463 = vmatmul.mubr.bf16.gmra.mrb[0].mxu0 %v2198
        %v6464 = vpop.f32.mrb[0].mxu0
        %v6465 = vadd.f32 0.0, %v6464
        %v6466 = vpop.f32.mrb[0].mxu0
        %v6467 = vpop.f32.mrb[0].mxu0
        %v6468 = vadd.f32 0.0, %v6467
        %v6469 = vpop.f32.mrb[0].mxu0
        %6470 = vmatprep.mubr.bf16.mxu0 0
        %6471 = vmatmul.mubr.bf16.gmra.mrb[0].mxu0 %v2201
        %v6472 = vpop.f32.mrb[0].mxu0
        %v6473 = vadd.f32 0.0, %v6472
        %v6474 = vpop.f32.mrb[0].mxu0
        %v6475 = vpop.f32.mrb[0].mxu0
        %v6476 = vadd.f32 0.0, %v6475
        %v6477 = vpop.f32.mrb[0].mxu0
        %6478 = vmatprep.mubr.bf16.mxu0 0
        %6479 = vmatmul.mubr.bf16.gmra.mrb[0].mxu0 %v2204
        %v6480 = vpop.f32.mrb[0].mxu0
        %v6481 = vadd.f32 0.0, %v6480
        %v6482 = vpop.f32.mrb[0].mxu0
        %v6483 = vpop.f32.mrb[0].mxu0
        %v6484 = vadd.f32 0.0, %v6483
        %v6485 = vpop.f32.mrb[0].mxu0
        %6486 = vmatprep.mubr.bf16.mxu0 0
        %6487 = vmatmul.mubr.bf16.gmra.mrb[0].mxu0 %v2207
        %v6488 = vpop.f32.mrb[0].mxu0
        %v6489 = vadd.f32 0.0, %v6488
        %v6490 = vpop.f32.mrb[0].mxu0
        %v6491 = vpop.f32.mrb[0].mxu0
        %v6492 = vadd.f32 0.0, %v6491
        %v6493 = vpop.f32.mrb[0].mxu0
        %6494 = vmatprep.mubr.bf16.mxu0 0
        %6495 = vmatmul.mubr.bf16.gmra.mrb[0].mxu0 %v2210
        %v6496 = vpop.f32.mrb[0].mxu0
        %v6497 = vadd.f32 0.0, %v6496
        %v6498 = vpop.f32.mrb[0].mxu0
        %v6499 = vpop.f32.mrb[0].mxu0
        %v6500 = vadd.f32 0.0, %v6499
        %v6501 = vpop.f32.mrb[0].mxu0
        %6502 = vmatprep.mubr.bf16.mxu0 0
        %6503 = vmatmul.mubr.bf16.gmra.mrb[0].mxu0 %v2213
        %v6504 = vpop.f32.mrb[0].mxu0
        %v6505 = vadd.f32 0.0, %v6504
        %v6506 = vpop.f32.mrb[0].mxu0
        %v6507 = vpop.f32.mrb[0].mxu0
        %v6508 = vadd.f32 0.0, %v6507
        %v6509 = vpop.f32.mrb[0].mxu0
        %6510 = vdwg.mxu0
        %v6511 = vsel %vm1211, %v6449, 0.0
        %v6512 = vsel %vm1211, %v6452, 0.0
        %v6513 = vadd.f32 %v6511, %v6512
        %v6514 = vsel %vm1211, %v6457, 0.0
        %v6515 = vadd.f32 %v6513, %v6514
        %v6516 = vsel %vm1211, %v6460, 0.0
        %v6517 = vadd.f32 %v6515, %v6516
        %v6518 = vsel %vm1211, %v6465, 0.0
        %v6519 = vadd.f32 %v6517, %v6518
        %v6520 = vsel %vm1211, %v6468, 0.0
        %v6521 = vadd.f32 %v6519, %v6520
        %v6522 = vsel %vm1211, %v6473, 0.0
        %v6523 = vadd.f32 %v6521, %v6522
        %v6524 = vsel %vm1211, %v6476, 0.0
        %v6525 = vadd.f32 %v6523, %v6524
        %v6526 = vsel %vm1211, %v6481, 0.0
        %v6527 = vadd.f32 %v6525, %v6526
        %v6528 = vsel %vm1211, %v6484, 0.0
        %v6529 = vadd.f32 %v6527, %v6528
        %v6530 = vsel %vm1211, %v6489, 0.0
        %v6531 = vadd.f32 %v6529, %v6530
        %v6532 = vsel %vm1211, %v6492, 0.0
        %v6533 = vadd.f32 %v6531, %v6532
        %v6534 = vsel %vm1211, %v6497, 0.0
        %v6535 = vadd.f32 %v6533, %v6534
        %v6536 = vsel %vm1211, %v6500, 0.0
        %v6537 = vadd.f32 %v6535, %v6536
        %v6538 = vsel %vm1211, %v6505, 0.0
        %v6539 = vadd.f32 %v6537, %v6538
        %v6540 = vsel %vm1211, %v6508, 0.0
        %v6541 = vadd.f32 %v6539, %v6540
        %v6542 = vrot.slane %v6541, 4
        %v6543 = vadd.f32 %v6541, %v6542
        %v6544 = vrot.slane %v6543, 2
        %v6545 = vadd.f32 %v6543, %v6544
        %v6546 = vrot.slane %v6545, 1
        %v6547 = vadd.f32 %v6545, %v6546
        %v6548 = vmul.f32 %v6547, %v3725
        %v6549 = vsub.f32 %v6449, %v6548
        %v6550 = vsub.f32 %v6452, %v6548
        %v6551 = vsub.f32 %v6457, %v6548
        %v6552 = vsub.f32 %v6460, %v6548
        %v6553 = vsub.f32 %v6465, %v6548
        %v6554 = vsub.f32 %v6468, %v6548
        %v6555 = vsub.f32 %v6473, %v6548
        %v6556 = vsub.f32 %v6476, %v6548
        %v6557 = vsub.f32 %v6481, %v6548
        %v6558 = vsub.f32 %v6484, %v6548
        %v6559 = vsub.f32 %v6489, %v6548
        %v6560 = vsub.f32 %v6492, %v6548
        %v6561 = vsub.f32 %v6497, %v6548
        %v6562 = vsub.f32 %v6500, %v6548
        %v6563 = vsub.f32 %v6505, %v6548
        %v6564 = vsub.f32 %v6508, %v6548
        %v6565 = vmul.f32 %v6549, %v6549
        %v6566 = vmul.f32 %v6550, %v6550
        %v6567 = vmul.f32 %v6551, %v6551
        %v6568 = vmul.f32 %v6552, %v6552
        %v6569 = vmul.f32 %v6553, %v6553
        %v6570 = vmul.f32 %v6554, %v6554
        %v6571 = vmul.f32 %v6555, %v6555
        %v6572 = vmul.f32 %v6556, %v6556
        %v6573 = vmul.f32 %v6557, %v6557
        %v6574 = vmul.f32 %v6558, %v6558
        %v6575 = vmul.f32 %v6559, %v6559
        %v6576 = vmul.f32 %v6560, %v6560
        %v6577 = vmul.f32 %v6561, %v6561
        %v6578 = vmul.f32 %v6562, %v6562
        %v6579 = vmul.f32 %v6563, %v6563
        %v6580 = vmul.f32 %v6564, %v6564
        %v6581 = vsel %vm1211, %v6565, 0.0
        %v6582 = vsel %vm1211, %v6566, 0.0
        %v6583 = vadd.f32 %v6581, %v6582
        %v6584 = vsel %vm1211, %v6567, 0.0
        %v6585 = vadd.f32 %v6583, %v6584
        %v6586 = vsel %vm1211, %v6568, 0.0
        %v6587 = vadd.f32 %v6585, %v6586
        %v6588 = vsel %vm1211, %v6569, 0.0
        %v6589 = vadd.f32 %v6587, %v6588
        %v6590 = vsel %vm1211, %v6570, 0.0
        %v6591 = vadd.f32 %v6589, %v6590
        %v6592 = vsel %vm1211, %v6571, 0.0
        %v6593 = vadd.f32 %v6591, %v6592
        %v6594 = vsel %vm1211, %v6572, 0.0
        %v6595 = vadd.f32 %v6593, %v6594
        %v6596 = vsel %vm1211, %v6573, 0.0
        %v6597 = vadd.f32 %v6595, %v6596
        %v6598 = vsel %vm1211, %v6574, 0.0
        %v6599 = vadd.f32 %v6597, %v6598
        %v6600 = vsel %vm1211, %v6575, 0.0
        %v6601 = vadd.f32 %v6599, %v6600
        %v6602 = vsel %vm1211, %v6576, 0.0
        %v6603 = vadd.f32 %v6601, %v6602
        %v6604 = vsel %vm1211, %v6577, 0.0
        %v6605 = vadd.f32 %v6603, %v6604
        %v6606 = vsel %vm1211, %v6578, 0.0
        %v6607 = vadd.f32 %v6605, %v6606
        %v6608 = vsel %vm1211, %v6579, 0.0
        %v6609 = vadd.f32 %v6607, %v6608
        %v6610 = vsel %vm1211, %v6580, 0.0
        %v6611 = vadd.f32 %v6609, %v6610
        %v6612 = vrot.slane %v6611, 4
        %v6613 = vadd.f32 %v6611, %v6612
        %v6614 = vrot.slane %v6613, 2
        %v6615 = vadd.f32 %v6613, %v6614
        %v6616 = vrot.slane %v6615, 1
        %v6617 = vadd.f32 %v6615, %v6616
        %v6618 = vmul.f32 %v6617, %v3725
        %v6619 = vadd.f32 %v6618, 1e-05
        %v6620 = vrsqrt.pop %v6619
        %v6621 = vmul.f32 %v6549, %v6620
        %v6622 = vmul.f32 %v6550, %v6620
        %v6623 = vmul.f32 %v6551, %v6620
        %v6624 = vmul.f32 %v6552, %v6620
        %v6625 = vmul.f32 %v6553, %v6620
        %v6626 = vmul.f32 %v6554, %v6620
        %v6627 = vmul.f32 %v6555, %v6620
        %v6628 = vmul.f32 %v6556, %v6620
        %v6629 = vmul.f32 %v6557, %v6620
        %v6630 = vmul.f32 %v6558, %v6620
        %v6631 = vmul.f32 %v6559, %v6620
        %v6632 = vmul.f32 %v6560, %v6620
        %v6633 = vmul.f32 %v6561, %v6620
        %v6634 = vmul.f32 %v6562, %v6620
        %v6635 = vmul.f32 %v6563, %v6620
        %v6636 = vmul.f32 %v6564, %v6620
        %v6637 = vlaneseq
        %v6638 = vshrl.u32 %v6637, 7
        %v6639 = vsub.s32 4, %v6638
        %v6640 = vrot.slane %v830, %v6639
        %v6641 = vmul.f32 %v6621, %v6640
        %v6642 = vmul.f32 %v6622, %v6640
        %v6643 = vmul.f32 %v6623, %v6640
        %v6644 = vmul.f32 %v6624, %v6640
        %v6645 = vmul.f32 %v6625, %v6640
        %v6646 = vmul.f32 %v6626, %v6640
        %v6647 = vmul.f32 %v6627, %v6640
        %v6648 = vmul.f32 %v6628, %v6640
        %v6649 = vmul.f32 %v6629, %v6640
        %v6650 = vmul.f32 %v6630, %v6640
        %v6651 = vmul.f32 %v6631, %v6640
        %v6652 = vmul.f32 %v6632, %v6640
        %v6653 = vmul.f32 %v6633, %v6640
        %v6654 = vmul.f32 %v6634, %v6640
        %v6655 = vmul.f32 %v6635, %v6640
        %v6656 = vmul.f32 %v6636, %v6640
        %v6657 = vlaneseq
        %v6658 = vshrl.u32 %v6657, 7
        %v6659 = vsub.s32 5, %v6658
        %v6660 = vrot.slane %v830, %v6659
        %v6661 = vadd.f32 %v6641, %v6660
        %v6662 = vadd.f32 %v6642, %v6660
        %v6663 = vadd.f32 %v6643, %v6660
        %v6664 = vadd.f32 %v6644, %v6660
        %v6665 = vadd.f32 %v6645, %v6660
        %v6666 = vadd.f32 %v6646, %v6660
        %v6667 = vadd.f32 %v6647, %v6660
        %v6668 = vadd.f32 %v6648, %v6660
        %v6669 = vadd.f32 %v6649, %v6660
        %v6670 = vadd.f32 %v6650, %v6660
        %v6671 = vadd.f32 %v6651, %v6660
        %v6672 = vadd.f32 %v6652, %v6660
        %v6673 = vadd.f32 %v6653, %v6660
        %v6674 = vadd.f32 %v6654, %v6660
        %v6675 = vadd.f32 %v6655, %v6660
        %v6676 = vadd.f32 %v6656, %v6660
        %s6677 = sld [smem:[#allocation4 + %s29]]
        %p6678 = scmp.eq.s32.totalorder %s6677, 1
        %s6679 = scalar_select %p6678, 1, 0
        %s6680 = scvt.s32.f32 %s6679
        %v6681 = vstv %s6680
        %v6682 = vmul.f32 %v6681, %v6661
        %v6683 = vmul.f32 %v6681, %v6662
        %v6684 = vmul.f32 %v6681, %v6663
        %v6685 = vmul.f32 %v6681, %v6664
        %v6686 = vmul.f32 %v6681, %v6665
        %v6687 = vmul.f32 %v6681, %v6666
        %v6688 = vmul.f32 %v6681, %v6667
        %v6689 = vmul.f32 %v6681, %v6668
        %v6690 = vmul.f32 %v6681, %v6669
        %v6691 = vmul.f32 %v6681, %v6670
        %v6692 = vmul.f32 %v6681, %v6671
        %v6693 = vmul.f32 %v6681, %v6672
        %v6694 = vmul.f32 %v6681, %v6673
        %v6695 = vmul.f32 %v6681, %v6674
        %v6696 = vmul.f32 %v6681, %v6675
        %v6697 = vmul.f32 %v6681, %v6676
        %s6698 = ssub.f32 1.0, %s6680
        %v6699 = vstv %s6698
        %v6700 = vmul.f32 %v6699, %v806
        %v6701 = vmul.f32 %v6699, %v807
        %v6702 = vmul.f32 %v6699, %v808
        %v6703 = vmul.f32 %v6699, %v809
        %v6704 = vmul.f32 %v6699, %v810
        %v6705 = vmul.f32 %v6699, %v811
        %v6706 = vmul.f32 %v6699, %v812
        %v6707 = vmul.f32 %v6699, %v813
        %v6708 = vmul.f32 %v6699, %v814
        %v6709 = vmul.f32 %v6699, %v815
        %v6710 = vmul.f32 %v6699, %v816
        %v6711 = vmul.f32 %v6699, %v817
        %v6712 = vmul.f32 %v6699, %v818
        %v6713 = vmul.f32 %v6699, %v819
        %v6714 = vmul.f32 %v6699, %v820
        %v6715 = vmul.f32 %v6699, %v821
        %v6716 = vadd.f32 %v6682, %v6700
        %v6717 = vadd.f32 %v6683, %v6701
        %v6718 = vadd.f32 %v6684, %v6702
        %v6719 = vadd.f32 %v6685, %v6703
        %v6720 = vadd.f32 %v6686, %v6704
        %v6721 = vadd.f32 %v6687, %v6705
        %v6722 = vadd.f32 %v6688, %v6706
        %v6723 = vadd.f32 %v6689, %v6707
        %v6724 = vadd.f32 %v6690, %v6708
        %v6725 = vadd.f32 %v6691, %v6709
        %v6726 = vadd.f32 %v6692, %v6710
        %v6727 = vadd.f32 %v6693, %v6711
        %v6728 = vadd.f32 %v6694, %v6712
        %v6729 = vadd.f32 %v6695, %v6713
        %v6730 = vadd.f32 %v6696, %v6714
        %v6731 = vadd.f32 %v6697, %v6715
        %v6732 = vadd.f32 %v6366, %v6716
        %v6733 = vadd.f32 %v6367, %v6717
        %v6734 = vadd.f32 %v6368, %v6718
        %v6735 = vadd.f32 %v6369, %v6719
        %v6736 = vadd.f32 %v6370, %v6720
        %v6737 = vadd.f32 %v6371, %v6721
        %v6738 = vadd.f32 %v6372, %v6722
        %v6739 = vadd.f32 %v6373, %v6723
        %v6740 = vadd.f32 %v6374, %v6724
        %v6741 = vadd.f32 %v6375, %v6725
        %v6742 = vadd.f32 %v6376, %v6726
        %v6743 = vadd.f32 %v6377, %v6727
        %v6744 = vadd.f32 %v6378, %v6728
        %v6745 = vadd.f32 %v6379, %v6729
        %v6746 = vadd.f32 %v6380, %v6730
        %v6747 = vadd.f32 %v6381, %v6731
        %v6748 = vmax.f32 %v6732, 0.0
        %v6749 = vmax.f32 %v6733, 0.0
        %v6750 = vmax.f32 %v6734, 0.0
        %v6751 = vmax.f32 %v6735, 0.0
        %v6752 = vmax.f32 %v6736, 0.0
        %v6753 = vmax.f32 %v6737, 0.0
        %v6754 = vmax.f32 %v6738, 0.0
        %v6755 = vmax.f32 %v6739, 0.0
        %v6756 = vmax.f32 %v6740, 0.0
        %v6757 = vmax.f32 %v6741, 0.0
        %v6758 = vmax.f32 %v6742, 0.0
        %v6759 = vmax.f32 %v6743, 0.0
        %v6760 = vmax.f32 %v6744, 0.0
        %v6761 = vmax.f32 %v6745, 0.0
        %v6762 = vmax.f32 %v6746, 0.0
        %v6763 = vmax.f32 %v6747, 0.0
        %6764 = vst.msk [vmem:[#allocation2] sm:$0xff] %vm1211, %v6748
        %6765 = vst.msk [vmem:[#allocation2 + $0x8] sm:$0xff] %vm1211, %v6749
        %6766 = vst.msk [vmem:[#allocation2 + $0x10] sm:$0xff] %vm1211, %v6750
        %6767 = vst.msk [vmem:[#allocation2 + $0x18] sm:$0xff] %vm1211, %v6751
        %6768 = vst.msk [vmem:[#allocation2 + $0x20] sm:$0xff] %vm1211, %v6752
        %6769 = vst.msk [vmem:[#allocation2 + $0x28] sm:$0xff] %vm1211, %v6753
        %6770 = vst.msk [vmem:[#allocation2 + $0x30] sm:$0xff] %vm1211, %v6754
        %6771 = vst.msk [vmem:[#allocation2 + $0x38] sm:$0xff] %vm1211, %v6755
        %6772 = vst.msk [vmem:[#allocation2 + $0x40] sm:$0xff] %vm1211, %v6756
        %6773 = vst.msk [vmem:[#allocation2 + $0x48] sm:$0xff] %vm1211, %v6757
        %6774 = vst.msk [vmem:[#allocation2 + $0x50] sm:$0xff] %vm1211, %v6758
        %6775 = vst.msk [vmem:[#allocation2 + $0x58] sm:$0xff] %vm1211, %v6759
        %6776 = vst.msk [vmem:[#allocation2 + $0x60] sm:$0xff] %vm1211, %v6760
        %6777 = vst.msk [vmem:[#allocation2 + $0x68] sm:$0xff] %vm1211, %v6761
        %6778 = vst.msk [vmem:[#allocation2 + $0x70] sm:$0xff] %vm1211, %v6762
        %6779 = vst.msk [vmem:[#allocation2 + $0x78] sm:$0xff] %vm1211, %v6763
        %p6780 = scmp.eq.s32.totalorder %s29, 13
        // Predicated region
        $region61: #{net_forward.2} parent=51 // pred_check
          %p6781 = pneg %p6780
        $region62: #{net_forward.2} parent=51 // pred_check_branch
          %6783 = sbr.rel (%p6781) target = $region64
        $region63: #{net_forward.2} parent=51 // pred_region
          %6784 = vst.msk [vmem:[%s9] sm:$0xff] %vm1211, %v6748
          %6785 = vst.msk [vmem:[%s9 + $0x8] sm:$0xff] %vm1211, %v6749
          %6786 = vst.msk [vmem:[%s9 + $0x10] sm:$0xff] %vm1211, %v6750
          %6787 = vst.msk [vmem:[%s9 + $0x18] sm:$0xff] %vm1211, %v6751
          %6788 = vst.msk [vmem:[%s9 + $0x20] sm:$0xff] %vm1211, %v6752
          %6789 = vst.msk [vmem:[%s9 + $0x28] sm:$0xff] %vm1211, %v6753
          %6790 = vst.msk [vmem:[%s9 + $0x30] sm:$0xff] %vm1211, %v6754
          %6791 = vst.msk [vmem:[%s9 + $0x38] sm:$0xff] %vm1211, %v6755
          %6792 = vst.msk [vmem:[%s9 + $0x40] sm:$0xff] %vm1211, %v6756
          %6793 = vst.msk [vmem:[%s9 + $0x48] sm:$0xff] %vm1211, %v6757
          %6794 = vst.msk [vmem:[%s9 + $0x50] sm:$0xff] %vm1211, %v6758
          %6795 = vst.msk [vmem:[%s9 + $0x58] sm:$0xff] %vm1211, %v6759
          %6796 = vst.msk [vmem:[%s9 + $0x60] sm:$0xff] %vm1211, %v6760
          %6797 = vst.msk [vmem:[%s9 + $0x68] sm:$0xff] %vm1211, %v6761
          %6798 = vst.msk [vmem:[%s9 + $0x70] sm:$0xff] %vm1211, %v6762
          %6799 = vst.msk [vmem:[%s9 + $0x78] sm:$0xff] %vm1211, %v6763
        $region64: #{net_forward.2} parent=51 // pred_fallthru
          _
        // Predicated region
        $region65: #{net_forward.2} parent=51 // pred_check
          %p6800 = pneg %p230
        $region66: #{net_forward.2} parent=51 // pred_check_branch
          %6802 = sbr.rel (%p6800) target = $region68
        $region67: #{net_forward.2} parent=51 // pred_region
          _
        $region68: #{net_forward.2} parent=51 // pred_fallthru
          _
        // Predicated region
        $region69: #{net_forward.2} parent=51 // pred_check
          %p6803 = pneg %p230
        $region70: #{net_forward.2} parent=51 // pred_check_branch
          %6805 = sbr.rel (%p6803) target = $region72
        $region71: #{net_forward.2} parent=51 // pred_region
          _
        $region72: #{net_forward.2} parent=51 // pred_fallthru
          _
      $region52: #{net_forward.2} parent=5 // pred_fallthru
        _
      %p6806 = scmp.le.s32.totalorder 2, %s24
      // Predicated region
      $region73: #{net_forward.2} parent=5 // pred_check
        %p6807 = pneg %p6806
      $region74: #{net_forward.2} parent=5 // pred_check_branch
        %6809 = sbr.rel (%p6807) target = $region76
      $region75: #{net_forward.2} parent=5 // pred_region
        %s6810 = ssub.s32 %s24, 2
      $region76: #{net_forward.2} parent=5 // pred_fallthru
        _
    $region6: #{net_forward.2} parent=1 // loop_footer
      %s28 = sadd.s32 1, %s24
    $region7: #{net_forward.2} parent=1 // loop_footer_branch
      %23 = sbr.rel target = $region3
    $region8: #{net_forward.2} parent=1 // loop_exit
      _
    %6811 = vsyncpa [#allocation6], 1
    %s6812 = scalar_lea.sflag [#allocation6], 1
    %6813 = vsyncpa %s6812, 1

</llo_original>
